<compile_context>
chip_gen: v5e
topology: v5e:2x2
jax: 0.10.0
libtpu: 0.0.40
codegen_flags: <defaults>
</compile_context>

<pallas_src>
from functools import partial

import numpy as np
import jax
import jax.numpy as jnp
from jax import lax
from jax.experimental import pallas as pl
from jax.experimental.pallas import tpu as pltpu

LN_EPS = 1e-5


# ----------------------------------------------------------------------------
# small helpers
# ----------------------------------------------------------------------------
def _round_up(n, m):
    return ((n + m - 1) // m) * m


def _divisor_tile(n, target):
    """Largest divisor d of n with d <= target and (d % 8 == 0 or d == n)."""
    for d in range(min(target, n), 0, -1):
        if n % d == 0 and (d == n or d % 8 == 0):
            return d
    return n


def _leading_tile(n, target):
    for d in range(min(target, n), 0, -1):
        if n % d == 0:
            return d
    return 1


# ----------------------------------------------------------------------------
# Row-tiled fused kernels (LN + projection, transitions, plain linear)
# ----------------------------------------------------------------------------
def _ln_linear_kernel(x_ref, lnw_ref, lnb_ref, w_ref, b_ref, o_ref, *, eps):
    x = x_ref[...].astype(jnp.float32)
    mu = jnp.mean(x, axis=-1, keepdims=True)
    xc = x - mu
    var = jnp.mean(xc * xc, axis=-1, keepdims=True)
    xn = xc * lax.rsqrt(var + eps) * lnw_ref[...] + lnb_ref[...]
    o_ref[...] = (
        jnp.dot(xn.astype(jnp.bfloat16), w_ref[...],
                preferred_element_type=jnp.float32) + b_ref[...]
    )


def _ln_linear_scale_kernel(x_ref, s_ref, lnw_ref, lnb_ref, w_ref, b_ref, o_ref,
                            *, eps):
    x = x_ref[...].astype(jnp.float32)
    mu = jnp.mean(x, axis=-1, keepdims=True)
    xc = x - mu
    var = jnp.mean(xc * xc, axis=-1, keepdims=True)
    xn = xc * lax.rsqrt(var + eps) * lnw_ref[...] + lnb_ref[...]
    y = (
        jnp.dot(xn.astype(jnp.bfloat16), w_ref[...],
                preferred_element_type=jnp.float32) + b_ref[...]
    )
    o_ref[...] = y * s_ref[...]


def _linear_kernel(x_ref, w_ref, b_ref, o_ref):
    o_ref[...] = (
        jnp.dot(x_ref[...].astype(jnp.bfloat16), w_ref[...],
                preferred_element_type=jnp.float32) + b_ref[...]
    )


def _linear_scale_kernel(x_ref, s_ref, w_ref, b_ref, o_ref):
    y = (
        jnp.dot(x_ref[...].astype(jnp.bfloat16), w_ref[...],
                preferred_element_type=jnp.float32) + b_ref[...]
    )
    o_ref[...] = y * s_ref[...]


def _transition_kernel(x_ref, m_ref, lnw_ref, lnb_ref, w1_ref, b1_ref,
                       w2_ref, b2_ref, o_ref, *, eps):
    x = x_ref[...].astype(jnp.float32)
    mu = jnp.mean(x, axis=-1, keepdims=True)
    xc = x - mu
    var = jnp.mean(xc * xc, axis=-1, keepdims=True)
    xn = xc * lax.rsqrt(var + eps) * lnw_ref[...] + lnb_ref[...]
    h = (
        jnp.dot(xn.astype(jnp.bfloat16), w1_ref[...],
                preferred_element_type=jnp.float32) + b1_ref[...]
    )
    h = jnp.maximum(h, 0.0)
    y = (
        jnp.dot(h.astype(jnp.bfloat16), w2_ref[...],
                preferred_element_type=jnp.float32) + b2_ref[...]
    )
    o_ref[...] = y * m_ref[...]


def _tiled_rows_call(kernel, row_arrays, const_arrays, out_cols, *, row_tile=512):
    """Run `kernel` over row-tiles.

    row_arrays : list of (rows, w_i) arrays, tiled along rows.
    const_arrays: list of 2-D arrays passed as whole resident blocks.
    Kernel ref order: row refs..., const refs..., out ref.
    """
    rows = row_arrays[0].shape[0]
    rt = min(row_tile, _round_up(rows, 8))
    rows_p = _round_up(rows, rt)
    if rows_p != rows:
        row_arrays = [jnp.pad(a, ((0, rows_p - rows), (0, 0))) for a in row_arrays]
    grid = (rows_p // rt,)

    in_specs = []
    for a in row_arrays:
        in_specs.append(pl.BlockSpec((rt, a.shape[1]), lambda i: (i, 0)))
    for c in const_arrays:
        in_specs.append(pl.BlockSpec(c.shape, lambda i: (0, 0)))

    out = pl.pallas_call(
        kernel,
        out_shape=jax.ShapeDtypeStruct((rows_p, out_cols), jnp.float32),
        grid=grid,
        in_specs=in_specs,
        out_specs=pl.BlockSpec((rt, out_cols), lambda i: (i, 0)),
        compiler_params=pltpu.CompilerParams(dimension_semantics=("parallel",)),
    )(*row_arrays, *const_arrays)
    return out[:rows]


def ln_linear(x, ln_w, ln_b, w, b=None, row_scale=None):
    """y = LayerNorm(x) @ w + b  (optionally * per-row scale), fused in one kernel."""
    lead = x.shape[:-1]
    cin = x.shape[-1]
    cout = w.shape[-1]
    rows = int(np.prod(lead)) if lead else 1
    x2 = x.reshape(rows, cin)
    b_arr = (jnp.zeros((cout,), jnp.float32) if b is None else b)
    consts = [
        ln_w.reshape(1, cin).astype(jnp.float32),
        ln_b.reshape(1, cin).astype(jnp.float32),
        w.astype(jnp.bfloat16),
        b_arr.reshape(1, cout).astype(jnp.float32),
    ]
    if row_scale is None:
        out = _tiled_rows_call(partial(_ln_linear_kernel, eps=LN_EPS),
                               [x2], consts, cout)
    else:
        s2 = row_scale.reshape(rows, 1).astype(jnp.float32)
        out = _tiled_rows_call(partial(_ln_linear_scale_kernel, eps=LN_EPS),
                               [x2, s2], consts, cout)
    return out.reshape(*lead, cout)


def linear(x, w, b=None, row_scale=None):
    lead = x.shape[:-1]
    cin = x.shape[-1]
    cout = w.shape[-1]
    rows = int(np.prod(lead)) if lead else 1
    x2 = x.reshape(rows, cin)
    b_arr = (jnp.zeros((cout,), jnp.float32) if b is None else b)
    consts = [w.astype(jnp.bfloat16), b_arr.reshape(1, cout).astype(jnp.float32)]
    if row_scale is None:
        out = _tiled_rows_call(_linear_kernel, [x2], consts, cout)
    else:
        s2 = row_scale.reshape(rows, 1).astype(jnp.float32)
        out = _tiled_rows_call(_linear_scale_kernel, [x2, s2], consts, cout)
    return out.reshape(*lead, cout)


def transition(x, mask, p):
    """Fused LN -> linear1 -> relu -> linear2 -> *mask (hidden never hits HBM)."""
    lead = x.shape[:-1]
    cin = x.shape[-1]
    cout = p["w2"].shape[-1]
    rows = int(np.prod(lead))
    x2 = x.reshape(rows, cin)
    m2 = mask.reshape(rows, 1).astype(jnp.float32)
    consts = [
        p["ln_w"].reshape(1, cin).astype(jnp.float32),
        p["ln_b"].reshape(1, cin).astype(jnp.float32),
        p["w1"].astype(jnp.bfloat16),
        p["b1"].reshape(1, -1).astype(jnp.float32),
        p["w2"].astype(jnp.bfloat16),
        p["b2"].reshape(1, cout).astype(jnp.float32),
    ]
    out = _tiled_rows_call(partial(_transition_kernel, eps=LN_EPS),
                           [x2, m2], consts, cout)
    return out.reshape(*lead, cout)


# ----------------------------------------------------------------------------
# Attention kernels (bias computed in-kernel, all heads per grid step)
# ----------------------------------------------------------------------------
def _attn_pairbias_kernel(q_ref, k_ref, v_ref, pb_ref, mask_ref, o_ref,
                          *, scale, inf):
    _, TS, H, L, D = q_ref.shape
    q = q_ref[0].reshape(TS * H, L, D)
    k = k_ref[0].reshape(TS * H, L, D)
    s = jnp.einsum("bqd,bkd->bqk", q, k,
                   preferred_element_type=jnp.float32) * scale
    s = s.reshape(TS, H, L, L)
    s = s + pb_ref[0][None, :, :, :]
    s = s + (mask_ref[0][:, :, None, :] - 1.0) * inf
    s = s - jnp.max(s, axis=-1, keepdims=True)
    p = jnp.exp(s)
    p = p * pl.reciprocal(jnp.sum(p, axis=-1, keepdims=True), approx=True)
    p = p.reshape(TS * H, L, L).astype(jnp.bfloat16)
    v = v_ref[0].reshape(TS * H, L, D)
    o = jnp.einsum("bqk,bkd->bqd", p, v, preferred_element_type=jnp.float32)
    o_ref[0] = o.reshape(TS, H, L, D)


def pallas_attention_pairbias(q, k, v, pair_bias, mask, *, scale, inf, s_tile=16):
    """softmax(q@k^T*scale + pair_bias + (mask-1)*inf) @ v.

    q/k/v : [B, S, H, L, D], pair_bias: [B, H, L, L] (shared over S),
    mask  : [B, S, L] (over keys).
    """
    B, S, H, L, D = q.shape
    TS = _divisor_tile(S, s_tile)
    grid = (B, S // TS)
    mask4 = mask.reshape(B, S, 1, L).astype(jnp.float32)
    out = pl.pallas_call(
        partial(_attn_pairbias_kernel, scale=scale, inf=inf),
        out_shape=jax.ShapeDtypeStruct((B, S, H, L, D), jnp.float32),
        grid=grid,
        in_specs=[
            pl.BlockSpec((1, TS, H, L, D), lambda b, s: (b, s, 0, 0, 0)),
            pl.BlockSpec((1, TS, H, L, D), lambda b, s: (b, s, 0, 0, 0)),
            pl.BlockSpec((1, TS, H, L, D), lambda b, s: (b, s, 0, 0, 0)),
            pl.BlockSpec((1, H, L, L), lambda b, s: (b, 0, 0, 0)),
            pl.BlockSpec((1, TS, 1, L), lambda b, s: (b, s, 0, 0)),
        ],
        out_specs=pl.BlockSpec((1, TS, H, L, D), lambda b, s: (b, s, 0, 0, 0)),
        compiler_params=pltpu.CompilerParams(
            dimension_semantics=("parallel", "parallel")),
    )(q.astype(jnp.bfloat16), k.astype(jnp.bfloat16), v.astype(jnp.bfloat16),
      pair_bias.astype(jnp.float32), mask4)
    return out


def _global_attn_kernel(q_ref, k_ref, v_ref, mask_ref, o_ref, *, scale, inf):
    q = q_ref[0]          # (TI, H, D) bf16
    k = k_ref[0]          # (TI, S, D) bf16
    v = v_ref[0]
    s = jnp.einsum("ihd,isd->ihs", q, k,
                   preferred_element_type=jnp.float32) * scale
    s = s + (mask_ref[0][:, None, :] - 1.0) * inf
    s = s - jnp.max(s, axis=-1, keepdims=True)
    p = jnp.exp(s)
    p = p * pl.reciprocal(jnp.sum(p, axis=-1, keepdims=True), approx=True)
    o = jnp.einsum("ihs,isd->ihd", p.astype(jnp.bfloat16), v,
                   preferred_element_type=jnp.float32)
    o_ref[0] = o


def pallas_global_attention(q, k, v, mask, *, scale, inf, i_tile=64):
    """Global (single k/v head) attention: q [B,I,H,D], k/v [B,I,S,D], mask [B,I,S]."""
    B, I, H, D = q.shape
    S = k.shape[2]
    TI = _divisor_tile(I, i_tile)
    grid = (B, I // TI)
    out = pl.pallas_call(
        partial(_global_attn_kernel, scale=scale, inf=inf),
        out_shape=jax.ShapeDtypeStruct((B, I, H, D), jnp.float32),
        grid=grid,
        in_specs=[
            pl.BlockSpec((1, TI, H, D), lambda b, i: (b, i, 0, 0)),
            pl.BlockSpec((1, TI, S, D), lambda b, i: (b, i, 0, 0)),
            pl.BlockSpec((1, TI, S, D), lambda b, i: (b, i, 0, 0)),
            pl.BlockSpec((1, TI, S), lambda b, i: (b, i, 0)),
        ],
        out_specs=pl.BlockSpec((1, TI, H, D), lambda b, i: (b, i, 0, 0)),
        compiler_params=pltpu.CompilerParams(
            dimension_semantics=("parallel", "parallel")),
    )(q.astype(jnp.bfloat16), k.astype(jnp.bfloat16), v.astype(jnp.bfloat16),
      mask.astype(jnp.float32))
    return out


# ----------------------------------------------------------------------------
# Batched matmul (triangle multiplication core)
# ----------------------------------------------------------------------------
def _bmm_kernel(a_ref, b_ref, o_ref):
    o_ref[...] = jnp.einsum("gmk,gkn->gmn", a_ref[...], b_ref[...],
                            preferred_element_type=jnp.float32)


def pallas_bmm(a, b, *, g_tile=8):
    """a [G, M, K] @ b [G, K, N] -> [G, M, N], batched over channel tiles."""
    G, M, K = a.shape
    N = b.shape[-1]
    TG = _leading_tile(G, g_tile)
    grid = (G // TG,)
    return pl.pallas_call(
        _bmm_kernel,
        out_shape=jax.ShapeDtypeStruct((G, M, N), jnp.float32),
        grid=grid,
        in_specs=[
            pl.BlockSpec((TG, M, K), lambda g: (g, 0, 0)),
            pl.BlockSpec((TG, K, N), lambda g: (g, 0, 0)),
        ],
        out_specs=pl.BlockSpec((TG, M, N), lambda g: (g, 0, 0)),
        compiler_params=pltpu.CompilerParams(dimension_semantics=("parallel",)),
    )(a.astype(jnp.bfloat16), b.astype(jnp.bfloat16))


# ----------------------------------------------------------------------------
# Outer-product-mean: S-tiled accumulation with VMEM f32 accumulator
# ----------------------------------------------------------------------------
def _opm_outer_kernel(a_ref, b_ref, o_ref, acc_ref):
    ss = pl.program_id(2)

    @pl.when(ss == 0)
    def _():
        acc_ref[...] = jnp.zeros_like(acc_ref)

    # a: (TS, TI*c), b: (TS, I*c) -> acc += a^T @ b
    acc_ref[...] += lax.dot_general(
        a_ref[0], b_ref[0],
        dimension_numbers=(((0,), (0,)), ((), ())),
        preferred_element_type=jnp.float32)

    @pl.when(ss == pl.num_programs(2) - 1)
    def _():
        o_ref[0] = acc_ref[...]


def pallas_opm_outer(a_flat, b_flat, *, c, i_tile=16, s_tile=128):
    """outer[(i,ca),(j,cb)] = sum_s a[s,i,ca] * b[s,j,cb], tiled over (i, s)."""
    B, S, IC = a_flat.shape
    I = IC // c
    TI = I
    for d in range(min(i_tile, I), 0, -1):
        if I % d == 0 and (d == I or (d * c) % 128 == 0):
            TI = d
            break
    TS = _divisor_tile(S, s_tile)
    grid = (B, I // TI, S // TS)
    return pl.pallas_call(
        _opm_outer_kernel,
        out_shape=jax.ShapeDtypeStruct((B, I * c, I * c), jnp.float32),
        grid=grid,
        in_specs=[
            pl.BlockSpec((1, TS, TI * c), lambda bb, ii, ss: (bb, ss, ii)),
            pl.BlockSpec((1, TS, I * c), lambda bb, ii, ss: (bb, ss, 0)),
        ],
        out_specs=pl.BlockSpec((1, TI * c, I * c), lambda bb, ii, ss: (bb, ii, 0)),
        scratch_shapes=[pltpu.VMEM((TI * c, I * c), jnp.float32)],
        compiler_params=pltpu.CompilerParams(
            dimension_semantics=("parallel", "parallel", "arbitrary")),
    )(a_flat.astype(jnp.bfloat16), b_flat.astype(jnp.bfloat16))


# ----------------------------------------------------------------------------
# Plain-JAX glue
# ----------------------------------------------------------------------------
def layer_norm(x, w, b, eps=LN_EPS):
    mu = jnp.mean(x, axis=-1, keepdims=True)
    var = jnp.mean((x - mu) ** 2, axis=-1, keepdims=True)
    return (x - mu) / jnp.sqrt(var + eps) * w + b


# ----------------------------------------------------------------------------
# Submodules
# ----------------------------------------------------------------------------
def msa_row_attention_with_pair_bias(m, z, msa_mask, p, cfg):
    B, S, I, Ce = m.shape
    H, D = cfg["num_heads_msa"], cfg["c_hidden_msa_att"]

    # Fused LN + [q|k|v|g] projection.
    w_qkvg = jnp.concatenate([p["w_q"], p["w_k"], p["w_v"], p["w_g"]], axis=1)
    b_qkvg = jnp.concatenate(
        [jnp.zeros((3 * H * D,), jnp.float32), p["b_g"]], axis=0)
    qkvg = ln_linear(m, p["ln_m_w"], p["ln_m_b"], w_qkvg, b_qkvg)
    qkvg = qkvg.reshape(B, S, I, 4, H, D)
    q = jnp.transpose(qkvg[..., 0, :, :], (0, 1, 3, 2, 4))   # [B,S,H,I,D]
    k = jnp.transpose(qkvg[..., 1, :, :], (0, 1, 3, 2, 4))
    v = jnp.transpose(qkvg[..., 2, :, :], (0, 1, 3, 2, 4))
    g = jax.nn.sigmoid(qkvg[..., 3, :, :])                    # [B,S,I,H,D]

    # Fused LN(z) + pair-bias projection (shared across S inside the kernel).
    zb = ln_linear(z, p["ln_z_w"], p["ln_z_b"], p["w_z"], None)   # [B,I,J,H]
    zb = jnp.transpose(zb, (0, 3, 1, 2))                           # [B,H,I,J]

    o = pallas_attention_pairbias(q, k, v, zb, msa_mask,
                                  scale=D ** -0.5, inf=cfg["inf"])
    o = jnp.transpose(o, (0, 1, 3, 2, 4)) * g                      # [B,S,I,H,D]
    return linear(o.reshape(B, S, I, H * D), p["w_o"], p["b_o"])


def msa_column_global_attention(m, msa_mask, p, cfg):
    B, S, I, C = m.shape
    H, D = cfg["num_heads_msa"], cfg["c_hidden_msa_att"]
    eps, inf = cfg["eps"], cfg["inf"]
    mt = jnp.swapaxes(m, -2, -3)              # [B, I, S, C]
    maskt = jnp.swapaxes(msa_mask, -1, -2)     # [B, I, S]

    # TODO(synk): LN not fused here: the LN output feeds both the k/v/g
    # projection and the masked mean used for the global query.
    m_ln = layer_norm(mt, p["ln_w"], p["ln_b"])

    w_kvg = jnp.concatenate([p["w_k"], p["w_v"], p["w_g"]], axis=1)
    b_kvg = jnp.concatenate(
        [jnp.zeros((2 * D,), jnp.float32), p["b_g"]], axis=0)
    kvg = linear(m_ln, w_kvg, b_kvg)          # [B, I, S, 2D + HD]
    k = kvg[..., :D]
    v = kvg[..., D:2 * D]
    g = jax.nn.sigmoid(kvg[..., 2 * D:]).reshape(B, I, S, H, D)

    q_avg = jnp.sum(m_ln * maskt[..., None], axis=-2) / (
        jnp.sum(maskt, axis=-1, keepdims=True) + eps)              # [B, I, C]
    q = linear(q_avg, p["w_q"], None).reshape(B, I, H, D)

    o = pallas_global_attention(q, k, v, maskt, scale=D ** -0.5, inf=inf)
    o = o[:, :, None, :, :] * g                                    # [B,I,S,H,D]
    out = linear(o.reshape(B, I, S, H * D), p["w_o"], p["b_o"])    # [B,I,S,C]
    return jnp.swapaxes(out, -2, -3)                               # [B,S,I,C]


def outer_product_mean(m, msa_mask, z, p, cfg):
    B, S, I, _ = m.shape
    c = cfg["c_hidden_opm"]
    cz = z.shape[-1]
    eps = cfg["eps_opm"]

    # Fused LN + [a|b] projection, masked per row.
    w_ab = jnp.concatenate([p["w_a"], p["w_b"]], axis=1)
    b_ab = jnp.concatenate([p["b_a"], p["b_b"]], axis=0)
    ab = ln_linear(m, p["ln_w"], p["ln_b"], w_ab, b_ab, row_scale=msa_mask)
    a = ab[..., :c].reshape(B, S, I * c)
    bmat = ab[..., c:].reshape(B, S, I * c)

    outer2d = pallas_opm_outer(a, bmat, c=c)                 # [B, I*c, I*c]
    outer = outer2d.reshape(B, I, c, I, c)
    outer = jnp.transpose(outer, (0, 1, 3, 2, 4)).reshape(B, I, I, c * c)

    norm = jnp.einsum("bsi,bsj->bij", msa_mask, msa_mask) + eps
    upd = linear(outer, p["w_o"], p["b_o"], row_scale=1.0 / norm)  # [B,I,I,cz]
    return z + upd


def triangle_multiplication(z, pair_mask, p, cfg, outgoing=True):
    B, N, _, _ = z.shape
    c = cfg["c_hidden_tri_mul"]

    # Fused LN + [a_g|a_p|b_g|b_p|g] projection.
    w_all = jnp.concatenate(
        [p["w_a_g"], p["w_a_p"], p["w_b_g"], p["w_b_p"], p["w_g"]], axis=1)
    b_all = jnp.concatenate(
        [p["b_a_g"], p["b_a_p"], p["b_b_g"], p["b_b_p"], p["b_g"]], axis=0)
    proj = ln_linear(z, p["ln_in_w"], p["ln_in_b"], w_all, b_all)
    mask = pair_mask[..., None]
    a = mask * jax.nn.sigmoid(proj[..., 0:c]) * proj[..., c:2 * c]
    b = mask * jax.nn.sigmoid(proj[..., 2 * c:3 * c]) * proj[..., 3 * c:4 * c]
    g = jax.nn.sigmoid(proj[..., 4 * c:])

    # TODO(synk): the channel-major relayouts below stay in XLA; expressing
    # them through index_map would need a lane-sliced BlockSpec on the c dim.
    if outgoing:
        lhs = jnp.transpose(a, (0, 3, 1, 2))   # [B, c, i, k]
        rhs = jnp.transpose(b, (0, 3, 2, 1))   # [B, c, k, j]
    else:
        lhs = jnp.transpose(b, (0, 3, 2, 1))
        rhs = jnp.transpose(a, (0, 3, 1, 2))
    x = pallas_bmm(lhs.reshape(B * c, N, N), rhs.reshape(B * c, N, N))
    x = jnp.transpose(x.reshape(B, c, N, N), (0, 2, 3, 1))   # [B, i, j, c]

    # Fused output LN + projection.
    x = ln_linear(x, p["ln_out_w"], p["ln_out_b"], p["w_o"], p["b_o"])
    return x * g


def triangle_attention(z, pair_mask, p, cfg, starting=True):
    if not starting:
        z = jnp.swapaxes(z, -2, -3)
        pair_mask = jnp.swapaxes(pair_mask, -1, -2)
    B, I, J, _ = z.shape
    H, D = cfg["num_heads_tri"], cfg["c_hidden_tri_att"]

    # Fused LN + [q|k|v|g|triangle-bias] projection.
    w_all = jnp.concatenate(
        [p["w_q"], p["w_k"], p["w_v"], p["w_g"], p["w_b"]], axis=1)
    b_all = jnp.concatenate(
        [jnp.zeros((3 * H * D,), jnp.float32), p["b_g"],
         jnp.zeros((H,), jnp.float32)], axis=0)
    proj = ln_linear(z, p["ln_w"], p["ln_b"], w_all, b_all)
    qkvg = proj[..., :4 * H * D].reshape(B, I, J, 4, H, D)
    tri_bias = proj[..., 4 * H * D:]                        # [B, I, J, H]

    q = jnp.transpose(qkvg[..., 0, :, :], (0, 1, 3, 2, 4))   # [B,I,H,J,D]
    k = jnp.transpose(qkvg[..., 1, :, :], (0, 1, 3, 2, 4))
    v = jnp.transpose(qkvg[..., 2, :, :], (0, 1, 3, 2, 4))
    g = jax.nn.sigmoid(qkvg[..., 3, :, :])                   # [B,I,J,H,D]
    pb = jnp.transpose(tri_bias, (0, 3, 1, 2))               # [B,H,J,J]

    o = pallas_attention_pairbias(q, k, v, pb, pair_mask,
                                  scale=D ** -0.5, inf=cfg["inf"])
    o = jnp.transpose(o, (0, 1, 3, 2, 4)) * g
    out = linear(o.reshape(B, I, J, H * D), p["w_o"], p["b_o"])
    if not starting:
        out = jnp.swapaxes(out, -2, -3)
    return out


# ----------------------------------------------------------------------------
# ExtraMSABlock forward (mp disabled, opm_first=False, dropout rates = 0)
# ----------------------------------------------------------------------------
def extra_msa_block(m, z, msa_mask, pair_mask, params, cfg):
    m = m + msa_row_attention_with_pair_bias(m, z, msa_mask,
                                             params["msa_att_row"], cfg)
    m = m + msa_column_global_attention(m, msa_mask, params["msa_att_col"], cfg)
    m = m + transition(m, msa_mask, params["msa_transition"])
    z = outer_product_mean(m, msa_mask, z, params["opm"], cfg)
    z = z + triangle_multiplication(z, pair_mask, params["tri_mul_out"], cfg,
                                    outgoing=True)
    z = z + triangle_multiplication(z, pair_mask, params["tri_mul_in"], cfg,
                                    outgoing=False)
    z = z + triangle_attention(z, pair_mask, params["tri_att_start"], cfg,
                               starting=True)
    z = z + triangle_attention(z, pair_mask, params["tri_att_end"], cfg,
                               starting=False)
    z = z + transition(z, pair_mask, params["pair_transition"])
    return m, z


# ----------------------------------------------------------------------------
# Deterministic parameter init
# ----------------------------------------------------------------------------
def init_params(key, cfg):
    state = {"key": key}

    def nk():
        state["key"], sub = jax.random.split(state["key"])
        return sub

    def lin(cin, cout, bias=True, gate=False):
        w = jax.random.normal(nk(), (cin, cout), jnp.float32) * 0.1
        if not bias:
            return w, None
        b = jnp.full((cout,), 1.0 if gate else 0.0, jnp.float32)
        return w, b

    def ln(c):
        return jnp.ones((c,), jnp.float32), jnp.zeros((c,), jnp.float32)

    ce, cz = cfg["c_e"], cfg["c_z"]
    hm, dm = cfg["num_heads_msa"], cfg["c_hidden_msa_att"]
    ht, dt = cfg["num_heads_tri"], cfg["c_hidden_tri_att"]
    copm, cmul = cfg["c_hidden_opm"], cfg["c_hidden_tri_mul"]
    n = cfg["transition_n"]
    P = {}

    p = {}
    p["ln_m_w"], p["ln_m_b"] = ln(ce)
    p["ln_z_w"], p["ln_z_b"] = ln(cz)
    p["w_z"], _ = lin(cz, hm, bias=False)
    p["w_q"], _ = lin(ce, hm * dm, bias=False)
    p["w_k"], _ = lin(ce, hm * dm, bias=False)
    p["w_v"], _ = lin(ce, hm * dm, bias=False)
    p["w_g"], p["b_g"] = lin(ce, hm * dm, gate=True)
    p["w_o"], p["b_o"] = lin(hm * dm, ce)
    P["msa_att_row"] = p

    p = {}
    p["ln_w"], p["ln_b"] = ln(ce)
    p["w_q"], _ = lin(ce, hm * dm, bias=False)
    p["w_k"], _ = lin(ce, dm, bias=False)
    p["w_v"], _ = lin(ce, dm, bias=False)
    p["w_g"], p["b_g"] = lin(ce, hm * dm, gate=True)
    p["w_o"], p["b_o"] = lin(hm * dm, ce)
    P["msa_att_col"] = p

    p = {}
    p["ln_w"], p["ln_b"] = ln(ce)
    p["w1"], p["b1"] = lin(ce, n * ce)
    p["w2"], p["b2"] = lin(n * ce, ce)
    P["msa_transition"] = p

    p = {}
    p["ln_w"], p["ln_b"] = ln(ce)
    p["w_a"], p["b_a"] = lin(ce, copm)
    p["w_b"], p["b_b"] = lin(ce, copm)
    p["w_o"], p["b_o"] = lin(copm * copm, cz)
    P["opm"] = p

    for name in ("tri_mul_out", "tri_mul_in"):
        p = {}
        p["ln_in_w"], p["ln_in_b"] = ln(cz)
        p["w_a_p"], p["b_a_p"] = lin(cz, cmul)
        p["w_a_g"], p["b_a_g"] = lin(cz, cmul, gate=True)
        p["w_b_p"], p["b_b_p"] = lin(cz, cmul)
        p["w_b_g"], p["b_b_g"] = lin(cz, cmul, gate=True)
        p["ln_out_w"], p["ln_out_b"] = ln(cmul)
        p["w_g"], p["b_g"] = lin(cz, cz, gate=True)
        p["w_o"], p["b_o"] = lin(cmul, cz)
        P[name] = p

    for name in ("tri_att_start", "tri_att_end"):
        p = {}
        p["ln_w"], p["ln_b"] = ln(cz)
        p["w_q"], _ = lin(cz, ht * dt, bias=False)
        p["w_k"], _ = lin(cz, ht * dt, bias=False)
        p["w_v"], _ = lin(cz, ht * dt, bias=False)
        p["w_b"], _ = lin(cz, ht, bias=False)
        p["w_g"], p["b_g"] = lin(cz, ht * dt, gate=True)
        p["w_o"], p["b_o"] = lin(ht * dt, cz)
        P[name] = p

    p = {}
    p["ln_w"], p["ln_b"] = ln(cz)
    p["w1"], p["b1"] = lin(cz, n * cz)
    p["w2"], p["b2"] = lin(n * cz, cz)
    P["pair_transition"] = p

    return P


# ----------------------------------------------------------------------------
# Driver
# ----------------------------------------------------------------------------
if __name__ == "__main__":
    CFG = dict(
        c_e=8,
        c_z=16,
        c_hidden_msa_att=8,
        c_hidden_opm=8,
        c_hidden_tri_mul=16,
        c_hidden_tri_att=8,
        num_heads_msa=2,
        num_heads_tri=2,
        transition_n=2,
        inf=1e9,
        eps=1e-10,
        eps_opm=1e-3,
    )

    B, S, N = 1, 8, 8  # batch, N_extra_seq, N_res

    key = jax.random.PRNGKey(0)
    k_m, k_z, k_mm, k_pm = jax.random.split(key, 4)
    m = jax.random.normal(k_m, (B, S, N, CFG["c_e"]), jnp.float32)
    z = jax.random.normal(k_z, (B, N, N, CFG["c_z"]), jnp.float32)
    msa_mask = (jax.random.uniform(k_mm, (B, S, N)) > 0.1).astype(jnp.float32)
    pair_mask = (jax.random.uniform(k_pm, (B, N, N)) > 0.1).astype(jnp.float32)

    params = init_params(jax.random.PRNGKey(42), CFG)

    fwd = jax.jit(lambda m_, z_, mm_, pm_, p_: extra_msa_block(m_, z_, mm_, pm_, p_, CFG))
    m_out, z_out = fwd(m, z, msa_mask, pair_mask, params)
    m_out = jax.block_until_ready(m_out)
    z_out = jax.block_until_ready(z_out)

    assert m_out.shape == (B, S, N, CFG["c_e"])
    assert z_out.shape == (B, N, N, CFG["c_z"])
    assert bool(jnp.all(jnp.isfinite(m_out))) and bool(jnp.all(jnp.isfinite(z_out)))
    print("KERNEL_OK")
</pallas_src>

<mosaic_0001>
module attributes {stable_mosaic.version = 11 : i64} {
  func.func @_ln_linear_kernel(%arg0: i32, %arg1: memref<64x8xf32, #tpu.memory_space<vmem>>, %arg2: memref<1x8xf32, #tpu.memory_space<vmem>>, %arg3: memref<1x8xf32, #tpu.memory_space<vmem>>, %arg4: memref<8x64xbf16, #tpu.memory_space<vmem>>, %arg5: memref<1x64xf32, #tpu.memory_space<vmem>>, %arg6: memref<64x64xf32, #tpu.memory_space<vmem>>) attributes {dimension_semantics = [#tpu.dimension_semantics<parallel>], iteration_bounds = array<i64: 1>, scalar_prefetch = 0 : i64, scratch_operands = 0 : i64, tpu.core_type = #tpu.core_type<tc>, window_params = [{transform_indices = @transform_0, window_bounds = array<i64: 64, 8>}, {pipeline_mode = #tpu.pipeline_mode<synchronous>, transform_indices = @transform_1, window_bounds = array<i64: 1, 8>}, {pipeline_mode = #tpu.pipeline_mode<synchronous>, transform_indices = @transform_2, window_bounds = array<i64: 1, 8>}, {pipeline_mode = #tpu.pipeline_mode<synchronous>, transform_indices = @transform_3, window_bounds = array<i64: 8, 64>}, {pipeline_mode = #tpu.pipeline_mode<synchronous>, transform_indices = @transform_4, window_bounds = array<i64: 1, 64>}, {transform_indices = @transform_5, window_bounds = array<i64: 64, 64>}]} {
    %c0 = arith.constant 0 : index
    %c0_0 = arith.constant 0 : index
    %0 = vector.load %arg1[%c0, %c0_0] : memref<64x8xf32, #tpu.memory_space<vmem>>, vector<64x8xf32>
    %cst = arith.constant dense<0.000000e+00> : vector<64xf32>
    %1 = vector.multi_reduction <add>, %0, %cst [1] : vector<64x8xf32> to vector<64xf32>
    %2 = vector.shape_cast %1 : vector<64xf32> to vector<64x1xf32>
    %cst_1 = arith.constant 8.000000e+00 : f32
    %3 = vector.broadcast %cst_1 : f32 to vector<64x1xf32>
    %4 = arith.divf %2, %3 : vector<64x1xf32>
    %5 = vector.broadcast %4 : vector<64x1xf32> to vector<64x8xf32>
    %6 = arith.subf %0, %5 : vector<64x8xf32>
    %7 = arith.mulf %6, %6 : vector<64x8xf32>
    %cst_2 = arith.constant dense<0.000000e+00> : vector<64xf32>
    %8 = vector.multi_reduction <add>, %7, %cst_2 [1] : vector<64x8xf32> to vector<64xf32>
    %9 = vector.shape_cast %8 : vector<64xf32> to vector<64x1xf32>
    %cst_3 = arith.constant 8.000000e+00 : f32
    %10 = vector.broadcast %cst_3 : f32 to vector<64x1xf32>
    %11 = arith.divf %9, %10 : vector<64x1xf32>
    %cst_4 = arith.constant 9.99999974E-6 : f32
    %12 = vector.broadcast %cst_4 : f32 to vector<64x1xf32>
    %13 = arith.addf %11, %12 : vector<64x1xf32>
    %14 = math.rsqrt %13 : vector<64x1xf32>
    %15 = vector.broadcast %14 : vector<64x1xf32> to vector<64x8xf32>
    %16 = arith.mulf %6, %15 : vector<64x8xf32>
    %c0_5 = arith.constant 0 : index
    %c0_6 = arith.constant 0 : index
    %17 = vector.load %arg2[%c0_5, %c0_6] : memref<1x8xf32, #tpu.memory_space<vmem>>, vector<1x8xf32>
    %18 = vector.broadcast %17 : vector<1x8xf32> to vector<64x8xf32>
    %19 = arith.mulf %16, %18 : vector<64x8xf32>
    %c0_7 = arith.constant 0 : index
    %c0_8 = arith.constant 0 : index
    %20 = vector.load %arg3[%c0_7, %c0_8] : memref<1x8xf32, #tpu.memory_space<vmem>>, vector<1x8xf32>
    %21 = vector.broadcast %20 : vector<1x8xf32> to vector<64x8xf32>
    %22 = arith.addf %19, %21 : vector<64x8xf32>
    %23 = arith.truncf %22 : vector<64x8xf32> to vector<64x8xbf16>
    %c0_9 = arith.constant 0 : index
    %c0_10 = arith.constant 0 : index
    %24 = vector.load %arg4[%c0_9, %c0_10] : memref<8x64xbf16, #tpu.memory_space<vmem>>, vector<8x64xbf16>
    %cst_11 = arith.constant dense<0.000000e+00> : vector<64x64xf32>
    %25 = tpu.matmul %23, %24, %cst_11 {dimension_numbers = #tpu.dot_dimension_numbers<[1], [0], [0], [1], [0, 0, 1, 1], [], []>} : vector<64x8xbf16>, vector<8x64xbf16>, vector<64x64xf32> -> vector<64x64xf32>
    %c0_12 = arith.constant 0 : index
    %c0_13 = arith.constant 0 : index
    %26 = vector.load %arg5[%c0_12, %c0_13] : memref<1x64xf32, #tpu.memory_space<vmem>>, vector<1x64xf32>
    %27 = vector.broadcast %26 : vector<1x64xf32> to vector<64x64xf32>
    %28 = arith.addf %25, %27 : vector<64x64xf32>
    %c0_14 = arith.constant 0 : index
    %c0_15 = arith.constant 0 : index
    %29 = vector.load %arg6[%c0_14, %c0_15] : memref<64x64xf32, #tpu.memory_space<vmem>>, vector<64x64xf32>
    tpu.vector_store %arg6[%c0_14, %c0_15], %28 {strides = array<i32>} : memref<64x64xf32, #tpu.memory_space<vmem>>, vector<64x64xf32>,
    return
  }
  func.func @transform_0(%arg0: i32) -> (i32, i32) {
    %c0_i32 = arith.constant 0 : i32
    %c0_i32_0 = arith.constant 0 : i32
    return %arg0, %c0_i32 : i32, i32
  }
  func.func @transform_1(%arg0: i32) -> (i32, i32) {
    %c0_i32 = arith.constant 0 : i32
    %c0_i32_0 = arith.constant 0 : i32
    %c0_i32_1 = arith.constant 0 : i32
    return %c0_i32, %c0_i32_0 : i32, i32
  }
  func.func @transform_2(%arg0: i32) -> (i32, i32) {
    %c0_i32 = arith.constant 0 : i32
    %c0_i32_0 = arith.constant 0 : i32
    %c0_i32_1 = arith.constant 0 : i32
    return %c0_i32, %c0_i32_0 : i32, i32
  }
  func.func @transform_3(%arg0: i32) -> (i32, i32) {
    %c0_i32 = arith.constant 0 : i32
    %c0_i32_0 = arith.constant 0 : i32
    %c0_i32_1 = arith.constant 0 : i32
    return %c0_i32, %c0_i32_0 : i32, i32
  }
  func.func @transform_4(%arg0: i32) -> (i32, i32) {
    %c0_i32 = arith.constant 0 : i32
    %c0_i32_0 = arith.constant 0 : i32
    %c0_i32_1 = arith.constant 0 : i32
    return %c0_i32, %c0_i32_0 : i32, i32
  }
  func.func @transform_5(%arg0: i32) -> (i32, i32) {
    %c0_i32 = arith.constant 0 : i32
    %c0_i32_0 = arith.constant 0 : i32
    return %arg0, %c0_i32 : i32, i32
  }
}

module attributes {stable_mosaic.version = 11 : i64} {
  func.func @_ln_linear_kernel(%arg0: i32, %arg1: memref<64x16xf32, #tpu.memory_space<vmem>>, %arg2: memref<1x16xf32, #tpu.memory_space<vmem>>, %arg3: memref<1x16xf32, #tpu.memory_space<vmem>>, %arg4: memref<16x2xbf16, #tpu.memory_space<vmem>>, %arg5: memref<1x2xf32, #tpu.memory_space<vmem>>, %arg6: memref<64x2xf32, #tpu.memory_space<vmem>>) attributes {dimension_semantics = [#tpu.dimension_semantics<parallel>], iteration_bounds = array<i64: 1>, scalar_prefetch = 0 : i64, scratch_operands = 0 : i64, tpu.core_type = #tpu.core_type<tc>, window_params = [{transform_indices = @transform_0, window_bounds = array<i64: 64, 16>}, {pipeline_mode = #tpu.pipeline_mode<synchronous>, transform_indices = @transform_1, window_bounds = array<i64: 1, 16>}, {pipeline_mode = #tpu.pipeline_mode<synchronous>, transform_indices = @transform_2, window_bounds = array<i64: 1, 16>}, {pipeline_mode = #tpu.pipeline_mode<synchronous>, transform_indices = @transform_3, window_bounds = array<i64: 16, 2>}, {pipeline_mode = #tpu.pipeline_mode<synchronous>, transform_indices = @transform_4, window_bounds = array<i64: 1, 2>}, {transform_indices = @transform_5, window_bounds = array<i64: 64, 2>}]} {
    %c0 = arith.constant 0 : index
    %c0_0 = arith.constant 0 : index
    %0 = vector.load %arg1[%c0, %c0_0] : memref<64x16xf32, #tpu.memory_space<vmem>>, vector<64x16xf32>
    %cst = arith.constant dense<0.000000e+00> : vector<64xf32>
    %1 = vector.multi_reduction <add>, %0, %cst [1] : vector<64x16xf32> to vector<64xf32>
    %2 = vector.shape_cast %1 : vector<64xf32> to vector<64x1xf32>
    %cst_1 = arith.constant 1.600000e+01 : f32
    %3 = vector.broadcast %cst_1 : f32 to vector<64x1xf32>
    %4 = arith.divf %2, %3 : vector<64x1xf32>
    %5 = vector.broadcast %4 : vector<64x1xf32> to vector<64x16xf32>
    %6 = arith.subf %0, %5 : vector<64x16xf32>
    %7 = arith.mulf %6, %6 : vector<64x16xf32>
    %cst_2 = arith.constant dense<0.000000e+00> : vector<64xf32>
    %8 = vector.multi_reduction <add>, %7, %cst_2 [1] : vector<64x16xf32> to vector<64xf32>
    %9 = vector.shape_cast %8 : vector<64xf32> to vector<64x1xf32>
    %cst_3 = arith.constant 1.600000e+01 : f32
    %10 = vector.broadcast %cst_3 : f32 to vector<64x1xf32>
    %11 = arith.divf %9, %10 : vector<64x1xf32>
    %cst_4 = arith.constant 9.99999974E-6 : f32
    %12 = vector.broadcast %cst_4 : f32 to vector<64x1xf32>
    %13 = arith.addf %11, %12 : vector<64x1xf32>
    %14 = math.rsqrt %13 : vector<64x1xf32>
    %15 = vector.broadcast %14 : vector<64x1xf32> to vector<64x16xf32>
    %16 = arith.mulf %6, %15 : vector<64x16xf32>
    %c0_5 = arith.constant 0 : index
    %c0_6 = arith.constant 0 : index
    %17 = vector.load %arg2[%c0_5, %c0_6] : memref<1x16xf32, #tpu.memory_space<vmem>>, vector<1x16xf32>
    %18 = vector.broadcast %17 : vector<1x16xf32> to vector<64x16xf32>
    %19 = arith.mulf %16, %18 : vector<64x16xf32>
    %c0_7 = arith.constant 0 : index
    %c0_8 = arith.constant 0 : index
    %20 = vector.load %arg3[%c0_7, %c0_8] : memref<1x16xf32, #tpu.memory_space<vmem>>, vector<1x16xf32>
    %21 = vector.broadcast %20 : vector<1x16xf32> to vector<64x16xf32>
    %22 = arith.addf %19, %21 : vector<64x16xf32>
    %23 = arith.truncf %22 : vector<64x16xf32> to vector<64x16xbf16>
    %c0_9 = arith.constant 0 : index
    %c0_10 = arith.constant 0 : index
    %24 = vector.load %arg4[%c0_9, %c0_10] : memref<16x2xbf16, #tpu.memory_space<vmem>>, vector<16x2xbf16>
    %cst_11 = arith.constant dense<0.000000e+00> : vector<64x2xf32>
    %25 = tpu.matmul %23, %24, %cst_11 {dimension_numbers = #tpu.dot_dimension_numbers<[1], [0], [0], [1], [0, 0, 1, 1], [], []>} : vector<64x16xbf16>, vector<16x2xbf16>, vector<64x2xf32> -> vector<64x2xf32>
    %c0_12 = arith.constant 0 : index
    %c0_13 = arith.constant 0 : index
    %26 = vector.load %arg5[%c0_12, %c0_13] : memref<1x2xf32, #tpu.memory_space<vmem>>, vector<1x2xf32>
    %27 = vector.broadcast %26 : vector<1x2xf32> to vector<64x2xf32>
    %28 = arith.addf %25, %27 : vector<64x2xf32>
    %c0_14 = arith.constant 0 : index
    %c0_15 = arith.constant 0 : index
    %29 = vector.load %arg6[%c0_14, %c0_15] : memref<64x2xf32, #tpu.memory_space<vmem>>, vector<64x2xf32>
    tpu.vector_store %arg6[%c0_14, %c0_15], %28 {strides = array<i32>} : memref<64x2xf32, #tpu.memory_space<vmem>>, vector<64x2xf32>,
    return
  }
  func.func @transform_0(%arg0: i32) -> (i32, i32) {
    %c0_i32 = arith.constant 0 : i32
    %c0_i32_0 = arith.constant 0 : i32
    return %arg0, %c0_i32 : i32, i32
  }
  func.func @transform_1(%arg0: i32) -> (i32, i32) {
    %c0_i32 = arith.constant 0 : i32
    %c0_i32_0 = arith.constant 0 : i32
    %c0_i32_1 = arith.constant 0 : i32
    return %c0_i32, %c0_i32_0 : i32, i32
  }
  func.func @transform_2(%arg0: i32) -> (i32, i32) {
    %c0_i32 = arith.constant 0 : i32
    %c0_i32_0 = arith.constant 0 : i32
    %c0_i32_1 = arith.constant 0 : i32
    return %c0_i32, %c0_i32_0 : i32, i32
  }
  func.func @transform_3(%arg0: i32) -> (i32, i32) {
    %c0_i32 = arith.constant 0 : i32
    %c0_i32_0 = arith.constant 0 : i32
    %c0_i32_1 = arith.constant 0 : i32
    return %c0_i32, %c0_i32_0 : i32, i32
  }
  func.func @transform_4(%arg0: i32) -> (i32, i32) {
    %c0_i32 = arith.constant 0 : i32
    %c0_i32_0 = arith.constant 0 : i32
    %c0_i32_1 = arith.constant 0 : i32
    return %c0_i32, %c0_i32_0 : i32, i32
  }
  func.func @transform_5(%arg0: i32) -> (i32, i32) {
    %c0_i32 = arith.constant 0 : i32
    %c0_i32_0 = arith.constant 0 : i32
    return %arg0, %c0_i32 : i32, i32
  }
}

module attributes {stable_mosaic.version = 11 : i64} {
  func.func @_attn_pairbias_kernel(%arg0: i32, %arg1: i32, %arg2: memref<1x8x2x8x8xbf16, #tpu.memory_space<vmem>>, %arg3: memref<1x8x2x8x8xbf16, #tpu.memory_space<vmem>>, %arg4: memref<1x8x2x8x8xbf16, #tpu.memory_space<vmem>>, %arg5: memref<1x2x8x8xf32, #tpu.memory_space<vmem>>, %arg6: memref<1x8x1x8xf32, #tpu.memory_space<vmem>>, %arg7: memref<1x8x2x8x8xf32, #tpu.memory_space<vmem>>) attributes {dimension_semantics = [#tpu.dimension_semantics<parallel>, #tpu.dimension_semantics<parallel>], iteration_bounds = array<i64: 1, 1>, scalar_prefetch = 0 : i64, scratch_operands = 0 : i64, tpu.core_type = #tpu.core_type<tc>, window_params = [{transform_indices = @transform_0, window_bounds = array<i64: 1, 8, 2, 8, 8>}, {transform_indices = @transform_1, window_bounds = array<i64: 1, 8, 2, 8, 8>}, {transform_indices = @transform_2, window_bounds = array<i64: 1, 8, 2, 8, 8>}, {transform_indices = @transform_3, window_bounds = array<i64: 1, 2, 8, 8>}, {transform_indices = @transform_4, window_bounds = array<i64: 1, 8, 1, 8>}, {transform_indices = @transform_5, window_bounds = array<i64: 1, 8, 2, 8, 8>}]} {
    %c0 = arith.constant 0 : index
    %c0_0 = arith.constant 0 : index
    %c0_1 = arith.constant 0 : index
    %c0_2 = arith.constant 0 : index
    %c0_3 = arith.constant 0 : index
    %0 = vector.load %arg2[%c0, %c0_0, %c0_1, %c0_2, %c0_3] : memref<1x8x2x8x8xbf16, #tpu.memory_space<vmem>>, vector<1x8x2x8x8xbf16>
    %1 = vector.shape_cast %0 : vector<1x8x2x8x8xbf16> to vector<8x2x8x8xbf16>
    %2 = vector.shape_cast %1 : vector<8x2x8x8xbf16> to vector<16x8x8xbf16>
    %c0_4 = arith.constant 0 : index
    %c0_5 = arith.constant 0 : index
    %c0_6 = arith.constant 0 : index
    %c0_7 = arith.constant 0 : index
    %c0_8 = arith.constant 0 : index
    %3 = vector.load %arg3[%c0_4, %c0_5, %c0_6, %c0_7, %c0_8] : memref<1x8x2x8x8xbf16, #tpu.memory_space<vmem>>, vector<1x8x2x8x8xbf16>
    %4 = vector.shape_cast %3 : vector<1x8x2x8x8xbf16> to vector<8x2x8x8xbf16>
    %5 = vector.shape_cast %4 : vector<8x2x8x8xbf16> to vector<16x8x8xbf16>
    "tpu.trace_start"() <{level = 10 : i32, message = "bqd,bkd->bqk"}> : () -> ()
    %cst = arith.constant dense<0.000000e+00> : vector<16x8x8xf32>
    %6 = tpu.matmul %2, %5, %cst {dimension_numbers = #tpu.dot_dimension_numbers<[2], [2], [1], [1], [0, 0, 0, 1, 1, 1], [0], [0]>} : vector<16x8x8xbf16>, vector<16x8x8xbf16>, vector<16x8x8xf32> -> vector<16x8x8xf32>
    "tpu.trace_stop"() : () -> ()
    %cst_9 = arith.constant 0.353553385 : f32
    %7 = vector.broadcast %cst_9 : f32 to vector<16x8x8xf32>
    %8 = arith.mulf %6, %7 : vector<16x8x8xf32>
    %9 = vector.shape_cast %8 : vector<16x8x8xf32> to vector<8x2x8x8xf32>
    %c0_10 = arith.constant 0 : index
    %c0_11 = arith.constant 0 : index
    %c0_12 = arith.constant 0 : index
    %c0_13 = arith.constant 0 : index
    %10 = vector.load %arg5[%c0_10, %c0_11, %c0_12, %c0_13] : memref<1x2x8x8xf32, #tpu.memory_space<vmem>>, vector<1x2x8x8xf32>
    %11 = vector.shape_cast %10 : vector<1x2x8x8xf32> to vector<2x8x8xf32>
    %12 = vector.shape_cast %11 : vector<2x8x8xf32> to vector<1x2x8x8xf32>
    %13 = vector.broadcast %12 : vector<1x2x8x8xf32> to vector<8x2x8x8xf32>
    %14 = arith.addf %9, %13 : vector<8x2x8x8xf32>
    %c0_14 = arith.constant 0 : index
    %c0_15 = arith.constant 0 : index
    %c0_16 = arith.constant 0 : index
    %c0_17 = arith.constant 0 : index
    %15 = vector.load %arg6[%c0_14, %c0_15, %c0_16, %c0_17] : memref<1x8x1x8xf32, #tpu.memory_space<vmem>>, vector<1x8x1x8xf32>
    %16 = vector.shape_cast %15 : vector<1x8x1x8xf32> to vector<8x1x8xf32>
    %17 = vector.shape_cast %16 : vector<8x1x8xf32> to vector<8x1x1x8xf32>
    %cst_18 = arith.constant 1.000000e+00 : f32
    %18 = vector.broadcast %cst_18 : f32 to vector<8x1x1x8xf32>
    %19 = arith.subf %17, %18 : vector<8x1x1x8xf32>
    %cst_19 = arith.constant 1.000000e+09 : f32
    %20 = vector.broadcast %cst_19 : f32 to vector<8x1x1x8xf32>
    %21 = arith.mulf %19, %20 : vector<8x1x1x8xf32>
    %22 = vector.broadcast %21 : vector<8x1x1x8xf32> to vector<8x2x8x8xf32>
    %23 = arith.addf %14, %22 : vector<8x2x8x8xf32>
    %cst_20 = arith.constant dense<0xFF800000> : vector<8x2x8xf32>
    %24 = vector.multi_reduction <maximumf>, %23, %cst_20 [3] : vector<8x2x8x8xf32> to vector<8x2x8xf32>
    %25 = vector.shape_cast %24 : vector<8x2x8xf32> to vector<8x2x8x1xf32>
    %26 = vector.broadcast %25 : vector<8x2x8x1xf32> to vector<8x2x8x8xf32>
    %27 = arith.subf %23, %26 : vector<8x2x8x8xf32>
    %28 = math.exp %27 : vector<8x2x8x8xf32>
    %cst_21 = arith.constant dense<0.000000e+00> : vector<8x2x8xf32>
    %29 = vector.multi_reduction <add>, %28, %cst_21 [3] : vector<8x2x8x8xf32> to vector<8x2x8xf32>
    %30 = vector.shape_cast %29 : vector<8x2x8xf32> to vector<8x2x8x1xf32>
    %31 = tpu.reciprocal %30 {approx = true} : vector<8x2x8x1xf32> -> vector<8x2x8x1xf32>
    %32 = vector.broadcast %31 : vector<8x2x8x1xf32> to vector<8x2x8x8xf32>
    %33 = arith.mulf %28, %32 : vector<8x2x8x8xf32>
    %34 = vector.shape_cast %33 : vector<8x2x8x8xf32> to vector<16x8x8xf32>
    %35 = arith.truncf %34 : vector<16x8x8xf32> to vector<16x8x8xbf16>
    %c0_22 = arith.constant 0 : index
    %c0_23 = arith.constant 0 : index
    %c0_24 = arith.constant 0 : index
    %c0_25 = arith.constant 0 : index
    %c0_26 = arith.constant 0 : index
    %36 = vector.load %arg4[%c0_22, %c0_23, %c0_24, %c0_25, %c0_26] : memref<1x8x2x8x8xbf16, #tpu.memory_space<vmem>>, vector<1x8x2x8x8xbf16>
    %37 = vector.shape_cast %36 : vector<1x8x2x8x8xbf16> to vector<8x2x8x8xbf16>
    %38 = vector.shape_cast %37 : vector<8x2x8x8xbf16> to vector<16x8x8xbf16>
    "tpu.trace_start"() <{level = 10 : i32, message = "bqk,bkd->bqd"}> : () -> ()
    %cst_27 = arith.constant dense<0.000000e+00> : vector<16x8x8xf32>
    %39 = tpu.matmul %35, %38, %cst_27 {dimension_numbers = #tpu.dot_dimension_numbers<[2], [1], [1], [2], [0, 0, 0, 1, 1, 2], [0], [0]>} : vector<16x8x8xbf16>, vector<16x8x8xbf16>, vector<16x8x8xf32> -> vector<16x8x8xf32>
    "tpu.trace_stop"() : () -> ()
    %40 = vector.shape_cast %39 : vector<16x8x8xf32> to vector<8x2x8x8xf32>
    %c0_28 = arith.constant 0 : index
    %c0_29 = arith.constant 0 : index
    %c0_30 = arith.constant 0 : index
    %c0_31 = arith.constant 0 : index
    %c0_32 = arith.constant 0 : index
    %41 = vector.load %arg7[%c0_28, %c0_29, %c0_30, %c0_31, %c0_32] : memref<1x8x2x8x8xf32, #tpu.memory_space<vmem>>, vector<1x8x2x8x8xf32>
    %42 = vector.shape_cast %41 : vector<1x8x2x8x8xf32> to vector<8x2x8x8xf32>
    %43 = vector.shape_cast %40 : vector<8x2x8x8xf32> to vector<1x8x2x8x8xf32>
    tpu.vector_store %arg7[%c0_28, %c0_29, %c0_30, %c0_31, %c0_32], %43 {strides = array<i32>} : memref<1x8x2x8x8xf32, #tpu.memory_space<vmem>>, vector<1x8x2x8x8xf32>,
    return
  }
  func.func @transform_0(%arg0: i32, %arg1: i32) -> (i32, i32, i32, i32, i32) {
    %c0_i32 = arith.constant 0 : i32
    %c0_i32_0 = arith.constant 0 : i32
    %c0_i32_1 = arith.constant 0 : i32
    %c0_i32_2 = arith.constant 0 : i32
    return %arg0, %arg1, %c0_i32, %c0_i32_0, %c0_i32_1 : i32, i32, i32, i32, i32
  }
  func.func @transform_1(%arg0: i32, %arg1: i32) -> (i32, i32, i32, i32, i32) {
    %c0_i32 = arith.constant 0 : i32
    %c0_i32_0 = arith.constant 0 : i32
    %c0_i32_1 = arith.constant 0 : i32
    %c0_i32_2 = arith.constant 0 : i32
    return %arg0, %arg1, %c0_i32, %c0_i32_0, %c0_i32_1 : i32, i32, i32, i32, i32
  }
  func.func @transform_2(%arg0: i32, %arg1: i32) -> (i32, i32, i32, i32, i32) {
    %c0_i32 = arith.constant 0 : i32
    %c0_i32_0 = arith.constant 0 : i32
    %c0_i32_1 = arith.constant 0 : i32
    %c0_i32_2 = arith.constant 0 : i32
    return %arg0, %arg1, %c0_i32, %c0_i32_0, %c0_i32_1 : i32, i32, i32, i32, i32
  }
  func.func @transform_3(%arg0: i32, %arg1: i32) -> (i32, i32, i32, i32) {
    %c0_i32 = arith.constant 0 : i32
    %c0_i32_0 = arith.constant 0 : i32
    %c0_i32_1 = arith.constant 0 : i32
    %c0_i32_2 = arith.constant 0 : i32
    return %arg0, %c0_i32, %c0_i32_0, %c0_i32_1 : i32, i32, i32, i32
  }
  func.func @transform_4(%arg0: i32, %arg1: i32) -> (i32, i32, i32, i32) {
    %c0_i32 = arith.constant 0 : i32
    %c0_i32_0 = arith.constant 0 : i32
    %c0_i32_1 = arith.constant 0 : i32
    return %arg0, %arg1, %c0_i32, %c0_i32_0 : i32, i32, i32, i32
  }
  func.func @transform_5(%arg0: i32, %arg1: i32) -> (i32, i32, i32, i32, i32) {
    %c0_i32 = arith.constant 0 : i32
    %c0_i32_0 = arith.constant 0 : i32
    %c0_i32_1 = arith.constant 0 : i32
    %c0_i32_2 = arith.constant 0 : i32
    return %arg0, %arg1, %c0_i32, %c0_i32_0, %c0_i32_1 : i32, i32, i32, i32, i32
  }
}

module attributes {stable_mosaic.version = 11 : i64} {
  func.func @_linear_kernel(%arg0: i32, %arg1: memref<64x16xf32, #tpu.memory_space<vmem>>, %arg2: memref<16x8xbf16, #tpu.memory_space<vmem>>, %arg3: memref<1x8xf32, #tpu.memory_space<vmem>>, %arg4: memref<64x8xf32, #tpu.memory_space<vmem>>) attributes {dimension_semantics = [#tpu.dimension_semantics<parallel>], iteration_bounds = array<i64: 1>, scalar_prefetch = 0 : i64, scratch_operands = 0 : i64, tpu.core_type = #tpu.core_type<tc>, window_params = [{transform_indices = @transform_0, window_bounds = array<i64: 64, 16>}, {pipeline_mode = #tpu.pipeline_mode<synchronous>, transform_indices = @transform_1, window_bounds = array<i64: 16, 8>}, {pipeline_mode = #tpu.pipeline_mode<synchronous>, transform_indices = @transform_2, window_bounds = array<i64: 1, 8>}, {transform_indices = @transform_3, window_bounds = array<i64: 64, 8>}]} {
    %c0 = arith.constant 0 : index
    %c0_0 = arith.constant 0 : index
    %0 = vector.load %arg1[%c0, %c0_0] : memref<64x16xf32, #tpu.memory_space<vmem>>, vector<64x16xf32>
    %1 = arith.truncf %0 : vector<64x16xf32> to vector<64x16xbf16>
    %c0_1 = arith.constant 0 : index
    %c0_2 = arith.constant 0 : index
    %2 = vector.load %arg2[%c0_1, %c0_2] : memref<16x8xbf16, #tpu.memory_space<vmem>>, vector<16x8xbf16>
    %cst = arith.constant dense<0.000000e+00> : vector<64x8xf32>
    %3 = tpu.matmul %1, %2, %cst {dimension_numbers = #tpu.dot_dimension_numbers<[1], [0], [0], [1], [0, 0, 1, 1], [], []>} : vector<64x16xbf16>, vector<16x8xbf16>, vector<64x8xf32> -> vector<64x8xf32>
    %c0_3 = arith.constant 0 : index
    %c0_4 = arith.constant 0 : index
    %4 = vector.load %arg3[%c0_3, %c0_4] : memref<1x8xf32, #tpu.memory_space<vmem>>, vector<1x8xf32>
    %5 = vector.broadcast %4 : vector<1x8xf32> to vector<64x8xf32>
    %6 = arith.addf %3, %5 : vector<64x8xf32>
    %c0_5 = arith.constant 0 : index
    %c0_6 = arith.constant 0 : index
    %7 = vector.load %arg4[%c0_5, %c0_6] : memref<64x8xf32, #tpu.memory_space<vmem>>, vector<64x8xf32>
    tpu.vector_store %arg4[%c0_5, %c0_6], %6 {strides = array<i32>} : memref<64x8xf32, #tpu.memory_space<vmem>>, vector<64x8xf32>,
    return
  }
  func.func @transform_0(%arg0: i32) -> (i32, i32) {
    %c0_i32 = arith.constant 0 : i32
    %c0_i32_0 = arith.constant 0 : i32
    return %arg0, %c0_i32 : i32, i32
  }
  func.func @transform_1(%arg0: i32) -> (i32, i32) {
    %c0_i32 = arith.constant 0 : i32
    %c0_i32_0 = arith.constant 0 : i32
    %c0_i32_1 = arith.constant 0 : i32
    return %c0_i32, %c0_i32_0 : i32, i32
  }
  func.func @transform_2(%arg0: i32) -> (i32, i32) {
    %c0_i32 = arith.constant 0 : i32
    %c0_i32_0 = arith.constant 0 : i32
    %c0_i32_1 = arith.constant 0 : i32
    return %c0_i32, %c0_i32_0 : i32, i32
  }
  func.func @transform_3(%arg0: i32) -> (i32, i32) {
    %c0_i32 = arith.constant 0 : i32
    %c0_i32_0 = arith.constant 0 : i32
    return %arg0, %c0_i32 : i32, i32
  }
}

module attributes {stable_mosaic.version = 11 : i64} {
  func.func @_linear_kernel(%arg0: i32, %arg1: memref<64x8xf32, #tpu.memory_space<vmem>>, %arg2: memref<8x32xbf16, #tpu.memory_space<vmem>>, %arg3: memref<1x32xf32, #tpu.memory_space<vmem>>, %arg4: memref<64x32xf32, #tpu.memory_space<vmem>>) attributes {dimension_semantics = [#tpu.dimension_semantics<parallel>], iteration_bounds = array<i64: 1>, scalar_prefetch = 0 : i64, scratch_operands = 0 : i64, tpu.core_type = #tpu.core_type<tc>, window_params = [{transform_indices = @transform_0, window_bounds = array<i64: 64, 8>}, {pipeline_mode = #tpu.pipeline_mode<synchronous>, transform_indices = @transform_1, window_bounds = array<i64: 8, 32>}, {pipeline_mode = #tpu.pipeline_mode<synchronous>, transform_indices = @transform_2, window_bounds = array<i64: 1, 32>}, {transform_indices = @transform_3, window_bounds = array<i64: 64, 32>}]} {
    %c0 = arith.constant 0 : index
    %c0_0 = arith.constant 0 : index
    %0 = vector.load %arg1[%c0, %c0_0] : memref<64x8xf32, #tpu.memory_space<vmem>>, vector<64x8xf32>
    %1 = arith.truncf %0 : vector<64x8xf32> to vector<64x8xbf16>
    %c0_1 = arith.constant 0 : index
    %c0_2 = arith.constant 0 : index
    %2 = vector.load %arg2[%c0_1, %c0_2] : memref<8x32xbf16, #tpu.memory_space<vmem>>, vector<8x32xbf16>
    %cst = arith.constant dense<0.000000e+00> : vector<64x32xf32>
    %3 = tpu.matmul %1, %2, %cst {dimension_numbers = #tpu.dot_dimension_numbers<[1], [0], [0], [1], [0, 0, 1, 1], [], []>} : vector<64x8xbf16>, vector<8x32xbf16>, vector<64x32xf32> -> vector<64x32xf32>
    %c0_3 = arith.constant 0 : index
    %c0_4 = arith.constant 0 : index
    %4 = vector.load %arg3[%c0_3, %c0_4] : memref<1x32xf32, #tpu.memory_space<vmem>>, vector<1x32xf32>
    %5 = vector.broadcast %4 : vector<1x32xf32> to vector<64x32xf32>
    %6 = arith.addf %3, %5 : vector<64x32xf32>
    %c0_5 = arith.constant 0 : index
    %c0_6 = arith.constant 0 : index
    %7 = vector.load %arg4[%c0_5, %c0_6] : memref<64x32xf32, #tpu.memory_space<vmem>>, vector<64x32xf32>
    tpu.vector_store %arg4[%c0_5, %c0_6], %6 {strides = array<i32>} : memref<64x32xf32, #tpu.memory_space<vmem>>, vector<64x32xf32>,
    return
  }
  func.func @transform_0(%arg0: i32) -> (i32, i32) {
    %c0_i32 = arith.constant 0 : i32
    %c0_i32_0 = arith.constant 0 : i32
    return %arg0, %c0_i32 : i32, i32
  }
  func.func @transform_1(%arg0: i32) -> (i32, i32) {
    %c0_i32 = arith.constant 0 : i32
    %c0_i32_0 = arith.constant 0 : i32
    %c0_i32_1 = arith.constant 0 : i32
    return %c0_i32, %c0_i32_0 : i32, i32
  }
  func.func @transform_2(%arg0: i32) -> (i32, i32) {
    %c0_i32 = arith.constant 0 : i32
    %c0_i32_0 = arith.constant 0 : i32
    %c0_i32_1 = arith.constant 0 : i32
    return %c0_i32, %c0_i32_0 : i32, i32
  }
  func.func @transform_3(%arg0: i32) -> (i32, i32) {
    %c0_i32 = arith.constant 0 : i32
    %c0_i32_0 = arith.constant 0 : i32
    return %arg0, %c0_i32 : i32, i32
  }
}

module attributes {stable_mosaic.version = 11 : i64} {
  func.func @_linear_kernel(%arg0: i32, %arg1: memref<8x8xf32, #tpu.memory_space<vmem>>, %arg2: memref<8x16xbf16, #tpu.memory_space<vmem>>, %arg3: memref<1x16xf32, #tpu.memory_space<vmem>>, %arg4: memref<8x16xf32, #tpu.memory_space<vmem>>) attributes {dimension_semantics = [#tpu.dimension_semantics<parallel>], iteration_bounds = array<i64: 1>, scalar_prefetch = 0 : i64, scratch_operands = 0 : i64, tpu.core_type = #tpu.core_type<tc>, window_params = [{transform_indices = @transform_0, window_bounds = array<i64: 8, 8>}, {pipeline_mode = #tpu.pipeline_mode<synchronous>, transform_indices = @transform_1, window_bounds = array<i64: 8, 16>}, {pipeline_mode = #tpu.pipeline_mode<synchronous>, transform_indices = @transform_2, window_bounds = array<i64: 1, 16>}, {transform_indices = @transform_3, window_bounds = array<i64: 8, 16>}]} {
    %c0 = arith.constant 0 : index
    %c0_0 = arith.constant 0 : index
    %0 = vector.load %arg1[%c0, %c0_0] : memref<8x8xf32, #tpu.memory_space<vmem>>, vector<8x8xf32>
    %1 = arith.truncf %0 : vector<8x8xf32> to vector<8x8xbf16>
    %c0_1 = arith.constant 0 : index
    %c0_2 = arith.constant 0 : index
    %2 = vector.load %arg2[%c0_1, %c0_2] : memref<8x16xbf16, #tpu.memory_space<vmem>>, vector<8x16xbf16>
    %cst = arith.constant dense<0.000000e+00> : vector<8x16xf32>
    %3 = tpu.matmul %1, %2, %cst {dimension_numbers = #tpu.dot_dimension_numbers<[1], [0], [0], [1], [0, 0, 1, 1], [], []>} : vector<8x8xbf16>, vector<8x16xbf16>, vector<8x16xf32> -> vector<8x16xf32>
    %c0_3 = arith.constant 0 : index
    %c0_4 = arith.constant 0 : index
    %4 = vector.load %arg3[%c0_3, %c0_4] : memref<1x16xf32, #tpu.memory_space<vmem>>, vector<1x16xf32>
    %5 = vector.broadcast %4 : vector<1x16xf32> to vector<8x16xf32>
    %6 = arith.addf %3, %5 : vector<8x16xf32>
    %c0_5 = arith.constant 0 : index
    %c0_6 = arith.constant 0 : index
    %7 = vector.load %arg4[%c0_5, %c0_6] : memref<8x16xf32, #tpu.memory_space<vmem>>, vector<8x16xf32>
    tpu.vector_store %arg4[%c0_5, %c0_6], %6 {strides = array<i32>} : memref<8x16xf32, #tpu.memory_space<vmem>>, vector<8x16xf32>,
    return
  }
  func.func @transform_0(%arg0: i32) -> (i32, i32) {
    %c0_i32 = arith.constant 0 : i32
    %c0_i32_0 = arith.constant 0 : i32
    return %arg0, %c0_i32 : i32, i32
  }
  func.func @transform_1(%arg0: i32) -> (i32, i32) {
    %c0_i32 = arith.constant 0 : i32
    %c0_i32_0 = arith.constant 0 : i32
    %c0_i32_1 = arith.constant 0 : i32
    return %c0_i32, %c0_i32_0 : i32, i32
  }
  func.func @transform_2(%arg0: i32) -> (i32, i32) {
    %c0_i32 = arith.constant 0 : i32
    %c0_i32_0 = arith.constant 0 : i32
    %c0_i32_1 = arith.constant 0 : i32
    return %c0_i32, %c0_i32_0 : i32, i32
  }
  func.func @transform_3(%arg0: i32) -> (i32, i32) {
    %c0_i32 = arith.constant 0 : i32
    %c0_i32_0 = arith.constant 0 : i32
    return %arg0, %c0_i32 : i32, i32
  }
}

module attributes {stable_mosaic.version = 11 : i64} {
  func.func @_global_attn_kernel(%arg0: i32, %arg1: i32, %arg2: memref<1x8x2x8xbf16, #tpu.memory_space<vmem>>, %arg3: memref<1x8x8x8xbf16, #tpu.memory_space<vmem>>, %arg4: memref<1x8x8x8xbf16, #tpu.memory_space<vmem>>, %arg5: memref<1x8x8xf32, #tpu.memory_space<vmem>>, %arg6: memref<1x8x2x8xf32, #tpu.memory_space<vmem>>) attributes {dimension_semantics = [#tpu.dimension_semantics<parallel>, #tpu.dimension_semantics<parallel>], iteration_bounds = array<i64: 1, 1>, scalar_prefetch = 0 : i64, scratch_operands = 0 : i64, tpu.core_type = #tpu.core_type<tc>, window_params = [{transform_indices = @transform_0, window_bounds = array<i64: 1, 8, 2, 8>}, {transform_indices = @transform_1, window_bounds = array<i64: 1, 8, 8, 8>}, {transform_indices = @transform_2, window_bounds = array<i64: 1, 8, 8, 8>}, {transform_indices = @transform_3, window_bounds = array<i64: 1, 8, 8>}, {transform_indices = @transform_4, window_bounds = array<i64: 1, 8, 2, 8>}]} {
    %c0 = arith.constant 0 : index
    %c0_0 = arith.constant 0 : index
    %c0_1 = arith.constant 0 : index
    %c0_2 = arith.constant 0 : index
    %0 = vector.load %arg2[%c0, %c0_0, %c0_1, %c0_2] : memref<1x8x2x8xbf16, #tpu.memory_space<vmem>>, vector<1x8x2x8xbf16>
    %1 = vector.shape_cast %0 : vector<1x8x2x8xbf16> to vector<8x2x8xbf16>
    %c0_3 = arith.constant 0 : index
    %c0_4 = arith.constant 0 : index
    %c0_5 = arith.constant 0 : index
    %c0_6 = arith.constant 0 : index
    %2 = vector.load %arg3[%c0_3, %c0_4, %c0_5, %c0_6] : memref<1x8x8x8xbf16, #tpu.memory_space<vmem>>, vector<1x8x8x8xbf16>
    %3 = vector.shape_cast %2 : vector<1x8x8x8xbf16> to vector<8x8x8xbf16>
    %c0_7 = arith.constant 0 : index
    %c0_8 = arith.constant 0 : index
    %c0_9 = arith.constant 0 : index
    %c0_10 = arith.constant 0 : index
    %4 = vector.load %arg4[%c0_7, %c0_8, %c0_9, %c0_10] : memref<1x8x8x8xbf16, #tpu.memory_space<vmem>>, vector<1x8x8x8xbf16>
    %5 = vector.shape_cast %4 : vector<1x8x8x8xbf16> to vector<8x8x8xbf16>
    "tpu.trace_start"() <{level = 10 : i32, message = "ihd,isd->ihs"}> : () -> ()
    %cst = arith.constant dense<0.000000e+00> : vector<8x2x8xf32>
    %6 = tpu.matmul %1, %3, %cst {dimension_numbers = #tpu.dot_dimension_numbers<[2], [2], [1], [1], [0, 0, 0, 1, 1, 1], [0], [0]>} : vector<8x2x8xbf16>, vector<8x8x8xbf16>, vector<8x2x8xf32> -> vector<8x2x8xf32>
    "tpu.trace_stop"() : () -> ()
    %cst_11 = arith.constant 0.353553385 : f32
    %7 = vector.broadcast %cst_11 : f32 to vector<8x2x8xf32>
    %8 = arith.mulf %6, %7 : vector<8x2x8xf32>
    %c0_12 = arith.constant 0 : index
    %c0_13 = arith.constant 0 : index
    %c0_14 = arith.constant 0 : index
    %9 = vector.load %arg5[%c0_12, %c0_13, %c0_14] : memref<1x8x8xf32, #tpu.memory_space<vmem>>, vector<1x8x8xf32>
    %10 = vector.shape_cast %9 : vector<1x8x8xf32> to vector<8x8xf32>
    %11 = vector.shape_cast %10 : vector<8x8xf32> to vector<8x1x8xf32>
    %cst_15 = arith.constant 1.000000e+00 : f32
    %12 = vector.broadcast %cst_15 : f32 to vector<8x1x8xf32>
    %13 = arith.subf %11, %12 : vector<8x1x8xf32>
    %cst_16 = arith.constant 1.000000e+09 : f32
    %14 = vector.broadcast %cst_16 : f32 to vector<8x1x8xf32>
    %15 = arith.mulf %13, %14 : vector<8x1x8xf32>
    %16 = vector.broadcast %15 : vector<8x1x8xf32> to vector<8x2x8xf32>
    %17 = arith.addf %8, %16 : vector<8x2x8xf32>
    %cst_17 = arith.constant dense<0xFF800000> : vector<8x2xf32>
    %18 = vector.multi_reduction <maximumf>, %17, %cst_17 [2] : vector<8x2x8xf32> to vector<8x2xf32>
    %19 = vector.shape_cast %18 : vector<8x2xf32> to vector<8x2x1xf32>
    %20 = vector.broadcast %19 : vector<8x2x1xf32> to vector<8x2x8xf32>
    %21 = arith.subf %17, %20 : vector<8x2x8xf32>
    %22 = math.exp %21 : vector<8x2x8xf32>
    %cst_18 = arith.constant dense<0.000000e+00> : vector<8x2xf32>
    %23 = vector.multi_reduction <add>, %22, %cst_18 [2] : vector<8x2x8xf32> to vector<8x2xf32>
    %24 = vector.shape_cast %23 : vector<8x2xf32> to vector<8x2x1xf32>
    %25 = tpu.reciprocal %24 {approx = true} : vector<8x2x1xf32> -> vector<8x2x1xf32>
    %26 = vector.broadcast %25 : vector<8x2x1xf32> to vector<8x2x8xf32>
    %27 = arith.mulf %22, %26 : vector<8x2x8xf32>
    %28 = arith.truncf %27 : vector<8x2x8xf32> to vector<8x2x8xbf16>
    "tpu.trace_start"() <{level = 10 : i32, message = "ihs,isd->ihd"}> : () -> ()
    %cst_19 = arith.constant dense<0.000000e+00> : vector<8x2x8xf32>
    %29 = tpu.matmul %28, %5, %cst_19 {dimension_numbers = #tpu.dot_dimension_numbers<[2], [1], [1], [2], [0, 0, 0, 1, 1, 2], [0], [0]>} : vector<8x2x8xbf16>, vector<8x8x8xbf16>, vector<8x2x8xf32> -> vector<8x2x8xf32>
    "tpu.trace_stop"() : () -> ()
    %c0_20 = arith.constant 0 : index
    %c0_21 = arith.constant 0 : index
    %c0_22 = arith.constant 0 : index
    %c0_23 = arith.constant 0 : index
    %30 = vector.load %arg6[%c0_20, %c0_21, %c0_22, %c0_23] : memref<1x8x2x8xf32, #tpu.memory_space<vmem>>, vector<1x8x2x8xf32>
    %31 = vector.shape_cast %30 : vector<1x8x2x8xf32> to vector<8x2x8xf32>
    %32 = vector.shape_cast %29 : vector<8x2x8xf32> to vector<1x8x2x8xf32>
    tpu.vector_store %arg6[%c0_20, %c0_21, %c0_22, %c0_23], %32 {strides = array<i32>} : memref<1x8x2x8xf32, #tpu.memory_space<vmem>>, vector<1x8x2x8xf32>,
    return
  }
  func.func @transform_0(%arg0: i32, %arg1: i32) -> (i32, i32, i32, i32) {
    %c0_i32 = arith.constant 0 : i32
    %c0_i32_0 = arith.constant 0 : i32
    %c0_i32_1 = arith.constant 0 : i32
    return %arg0, %arg1, %c0_i32, %c0_i32_0 : i32, i32, i32, i32
  }
  func.func @transform_1(%arg0: i32, %arg1: i32) -> (i32, i32, i32, i32) {
    %c0_i32 = arith.constant 0 : i32
    %c0_i32_0 = arith.constant 0 : i32
    %c0_i32_1 = arith.constant 0 : i32
    return %arg0, %arg1, %c0_i32, %c0_i32_0 : i32, i32, i32, i32
  }
  func.func @transform_2(%arg0: i32, %arg1: i32) -> (i32, i32, i32, i32) {
    %c0_i32 = arith.constant 0 : i32
    %c0_i32_0 = arith.constant 0 : i32
    %c0_i32_1 = arith.constant 0 : i32
    return %arg0, %arg1, %c0_i32, %c0_i32_0 : i32, i32, i32, i32
  }
  func.func @transform_3(%arg0: i32, %arg1: i32) -> (i32, i32, i32) {
    %c0_i32 = arith.constant 0 : i32
    %c0_i32_0 = arith.constant 0 : i32
    return %arg0, %arg1, %c0_i32 : i32, i32, i32
  }
  func.func @transform_4(%arg0: i32, %arg1: i32) -> (i32, i32, i32, i32) {
    %c0_i32 = arith.constant 0 : i32
    %c0_i32_0 = arith.constant 0 : i32
    %c0_i32_1 = arith.constant 0 : i32
    return %arg0, %arg1, %c0_i32, %c0_i32_0 : i32, i32, i32, i32
  }
}

module attributes {stable_mosaic.version = 11 : i64} {
  func.func @_transition_kernel(%arg0: i32, %arg1: memref<64x8xf32, #tpu.memory_space<vmem>>, %arg2: memref<64x1xf32, #tpu.memory_space<vmem>>, %arg3: memref<1x8xf32, #tpu.memory_space<vmem>>, %arg4: memref<1x8xf32, #tpu.memory_space<vmem>>, %arg5: memref<8x16xbf16, #tpu.memory_space<vmem>>, %arg6: memref<1x16xf32, #tpu.memory_space<vmem>>, %arg7: memref<16x8xbf16, #tpu.memory_space<vmem>>, %arg8: memref<1x8xf32, #tpu.memory_space<vmem>>, %arg9: memref<64x8xf32, #tpu.memory_space<vmem>>) attributes {dimension_semantics = [#tpu.dimension_semantics<parallel>], iteration_bounds = array<i64: 1>, scalar_prefetch = 0 : i64, scratch_operands = 0 : i64, tpu.core_type = #tpu.core_type<tc>, window_params = [{transform_indices = @transform_0, window_bounds = array<i64: 64, 8>}, {transform_indices = @transform_1, window_bounds = array<i64: 64, 1>}, {pipeline_mode = #tpu.pipeline_mode<synchronous>, transform_indices = @transform_2, window_bounds = array<i64: 1, 8>}, {pipeline_mode = #tpu.pipeline_mode<synchronous>, transform_indices = @transform_3, window_bounds = array<i64: 1, 8>}, {pipeline_mode = #tpu.pipeline_mode<synchronous>, transform_indices = @transform_4, window_bounds = array<i64: 8, 16>}, {pipeline_mode = #tpu.pipeline_mode<synchronous>, transform_indices = @transform_5, window_bounds = array<i64: 1, 16>}, {pipeline_mode = #tpu.pipeline_mode<synchronous>, transform_indices = @transform_6, window_bounds = array<i64: 16, 8>}, {pipeline_mode = #tpu.pipeline_mode<synchronous>, transform_indices = @transform_7, window_bounds = array<i64: 1, 8>}, {transform_indices = @transform_8, window_bounds = array<i64: 64, 8>}]} {
    %c0 = arith.constant 0 : index
    %c0_0 = arith.constant 0 : index
    %0 = vector.load %arg1[%c0, %c0_0] : memref<64x8xf32, #tpu.memory_space<vmem>>, vector<64x8xf32>
    %cst = arith.constant dense<0.000000e+00> : vector<64xf32>
    %1 = vector.multi_reduction <add>, %0, %cst [1] : vector<64x8xf32> to vector<64xf32>
    %2 = vector.shape_cast %1 : vector<64xf32> to vector<64x1xf32>
    %cst_1 = arith.constant 8.000000e+00 : f32
    %3 = vector.broadcast %cst_1 : f32 to vector<64x1xf32>
    %4 = arith.divf %2, %3 : vector<64x1xf32>
    %5 = vector.broadcast %4 : vector<64x1xf32> to vector<64x8xf32>
    %6 = arith.subf %0, %5 : vector<64x8xf32>
    %7 = arith.mulf %6, %6 : vector<64x8xf32>
    %cst_2 = arith.constant dense<0.000000e+00> : vector<64xf32>
    %8 = vector.multi_reduction <add>, %7, %cst_2 [1] : vector<64x8xf32> to vector<64xf32>
    %9 = vector.shape_cast %8 : vector<64xf32> to vector<64x1xf32>
    %cst_3 = arith.constant 8.000000e+00 : f32
    %10 = vector.broadcast %cst_3 : f32 to vector<64x1xf32>
    %11 = arith.divf %9, %10 : vector<64x1xf32>
    %cst_4 = arith.constant 9.99999974E-6 : f32
    %12 = vector.broadcast %cst_4 : f32 to vector<64x1xf32>
    %13 = arith.addf %11, %12 : vector<64x1xf32>
    %14 = math.rsqrt %13 : vector<64x1xf32>
    %15 = vector.broadcast %14 : vector<64x1xf32> to vector<64x8xf32>
    %16 = arith.mulf %6, %15 : vector<64x8xf32>
    %c0_5 = arith.constant 0 : index
    %c0_6 = arith.constant 0 : index
    %17 = vector.load %arg3[%c0_5, %c0_6] : memref<1x8xf32, #tpu.memory_space<vmem>>, vector<1x8xf32>
    %18 = vector.broadcast %17 : vector<1x8xf32> to vector<64x8xf32>
    %19 = arith.mulf %16, %18 : vector<64x8xf32>
    %c0_7 = arith.constant 0 : index
    %c0_8 = arith.constant 0 : index
    %20 = vector.load %arg4[%c0_7, %c0_8] : memref<1x8xf32, #tpu.memory_space<vmem>>, vector<1x8xf32>
    %21 = vector.broadcast %20 : vector<1x8xf32> to vector<64x8xf32>
    %22 = arith.addf %19, %21 : vector<64x8xf32>
    %23 = arith.truncf %22 : vector<64x8xf32> to vector<64x8xbf16>
    %c0_9 = arith.constant 0 : index
    %c0_10 = arith.constant 0 : index
    %24 = vector.load %arg5[%c0_9, %c0_10] : memref<8x16xbf16, #tpu.memory_space<vmem>>, vector<8x16xbf16>
    %cst_11 = arith.constant dense<0.000000e+00> : vector<64x16xf32>
    %25 = tpu.matmul %23, %24, %cst_11 {dimension_numbers = #tpu.dot_dimension_numbers<[1], [0], [0], [1], [0, 0, 1, 1], [], []>} : vector<64x8xbf16>, vector<8x16xbf16>, vector<64x16xf32> -> vector<64x16xf32>
    %c0_12 = arith.constant 0 : index
    %c0_13 = arith.constant 0 : index
    %26 = vector.load %arg6[%c0_12, %c0_13] : memref<1x16xf32, #tpu.memory_space<vmem>>, vector<1x16xf32>
    %27 = vector.broadcast %26 : vector<1x16xf32> to vector<64x16xf32>
    %28 = arith.addf %25, %27 : vector<64x16xf32>
    %cst_14 = arith.constant 0.000000e+00 : f32
    %29 = vector.broadcast %cst_14 : f32 to vector<64x16xf32>
    %30 = arith.maximumf %28, %29 : vector<64x16xf32>
    %31 = arith.truncf %30 : vector<64x16xf32> to vector<64x16xbf16>
    %c0_15 = arith.constant 0 : index
    %c0_16 = arith.constant 0 : index
    %32 = vector.load %arg7[%c0_15, %c0_16] : memref<16x8xbf16, #tpu.memory_space<vmem>>, vector<16x8xbf16>
    %cst_17 = arith.constant dense<0.000000e+00> : vector<64x8xf32>
    %33 = tpu.matmul %31, %32, %cst_17 {dimension_numbers = #tpu.dot_dimension_numbers<[1], [0], [0], [1], [0, 0, 1, 1], [], []>} : vector<64x16xbf16>, vector<16x8xbf16>, vector<64x8xf32> -> vector<64x8xf32>
    %c0_18 = arith.constant 0 : index
    %c0_19 = arith.constant 0 : index
    %34 = vector.load %arg8[%c0_18, %c0_19] : memref<1x8xf32, #tpu.memory_space<vmem>>, vector<1x8xf32>
    %35 = vector.broadcast %34 : vector<1x8xf32> to vector<64x8xf32>
    %36 = arith.addf %33, %35 : vector<64x8xf32>
    %c0_20 = arith.constant 0 : index
    %c0_21 = arith.constant 0 : index
    %37 = vector.load %arg2[%c0_20, %c0_21] : memref<64x1xf32, #tpu.memory_space<vmem>>, vector<64x1xf32>
    %38 = vector.broadcast %37 : vector<64x1xf32> to vector<64x8xf32>
    %39 = arith.mulf %36, %38 : vector<64x8xf32>
    %c0_22 = arith.constant 0 : index
    %c0_23 = arith.constant 0 : index
    %40 = vector.load %arg9[%c0_22, %c0_23] : memref<64x8xf32, #tpu.memory_space<vmem>>, vector<64x8xf32>
    tpu.vector_store %arg9[%c0_22, %c0_23], %39 {strides = array<i32>} : memref<64x8xf32, #tpu.memory_space<vmem>>, vector<64x8xf32>,
    return
  }
  func.func @transform_0(%arg0: i32) -> (i32, i32) {
    %c0_i32 = arith.constant 0 : i32
    %c0_i32_0 = arith.constant 0 : i32
    return %arg0, %c0_i32 : i32, i32
  }
  func.func @transform_1(%arg0: i32) -> (i32, i32) {
    %c0_i32 = arith.constant 0 : i32
    %c0_i32_0 = arith.constant 0 : i32
    return %arg0, %c0_i32 : i32, i32
  }
  func.func @transform_2(%arg0: i32) -> (i32, i32) {
    %c0_i32 = arith.constant 0 : i32
    %c0_i32_0 = arith.constant 0 : i32
    %c0_i32_1 = arith.constant 0 : i32
    return %c0_i32, %c0_i32_0 : i32, i32
  }
  func.func @transform_3(%arg0: i32) -> (i32, i32) {
    %c0_i32 = arith.constant 0 : i32
    %c0_i32_0 = arith.constant 0 : i32
    %c0_i32_1 = arith.constant 0 : i32
    return %c0_i32, %c0_i32_0 : i32, i32
  }
  func.func @transform_4(%arg0: i32) -> (i32, i32) {
    %c0_i32 = arith.constant 0 : i32
    %c0_i32_0 = arith.constant 0 : i32
    %c0_i32_1 = arith.constant 0 : i32
    return %c0_i32, %c0_i32_0 : i32, i32
  }
  func.func @transform_5(%arg0: i32) -> (i32, i32) {
    %c0_i32 = arith.constant 0 : i32
    %c0_i32_0 = arith.constant 0 : i32
    %c0_i32_1 = arith.constant 0 : i32
    return %c0_i32, %c0_i32_0 : i32, i32
  }
  func.func @transform_6(%arg0: i32) -> (i32, i32) {
    %c0_i32 = arith.constant 0 : i32
    %c0_i32_0 = arith.constant 0 : i32
    %c0_i32_1 = arith.constant 0 : i32
    return %c0_i32, %c0_i32_0 : i32, i32
  }
  func.func @transform_7(%arg0: i32) -> (i32, i32) {
    %c0_i32 = arith.constant 0 : i32
    %c0_i32_0 = arith.constant 0 : i32
    %c0_i32_1 = arith.constant 0 : i32
    return %c0_i32, %c0_i32_0 : i32, i32
  }
  func.func @transform_8(%arg0: i32) -> (i32, i32) {
    %c0_i32 = arith.constant 0 : i32
    %c0_i32_0 = arith.constant 0 : i32
    return %arg0, %c0_i32 : i32, i32
  }
}

module attributes {stable_mosaic.version = 11 : i64} {
  func.func @_ln_linear_scale_kernel(%arg0: i32, %arg1: memref<64x8xf32, #tpu.memory_space<vmem>>, %arg2: memref<64x1xf32, #tpu.memory_space<vmem>>, %arg3: memref<1x8xf32, #tpu.memory_space<vmem>>, %arg4: memref<1x8xf32, #tpu.memory_space<vmem>>, %arg5: memref<8x16xbf16, #tpu.memory_space<vmem>>, %arg6: memref<1x16xf32, #tpu.memory_space<vmem>>, %arg7: memref<64x16xf32, #tpu.memory_space<vmem>>) attributes {dimension_semantics = [#tpu.dimension_semantics<parallel>], iteration_bounds = array<i64: 1>, scalar_prefetch = 0 : i64, scratch_operands = 0 : i64, tpu.core_type = #tpu.core_type<tc>, window_params = [{transform_indices = @transform_0, window_bounds = array<i64: 64, 8>}, {transform_indices = @transform_1, window_bounds = array<i64: 64, 1>}, {pipeline_mode = #tpu.pipeline_mode<synchronous>, transform_indices = @transform_2, window_bounds = array<i64: 1, 8>}, {pipeline_mode = #tpu.pipeline_mode<synchronous>, transform_indices = @transform_3, window_bounds = array<i64: 1, 8>}, {pipeline_mode = #tpu.pipeline_mode<synchronous>, transform_indices = @transform_4, window_bounds = array<i64: 8, 16>}, {pipeline_mode = #tpu.pipeline_mode<synchronous>, transform_indices = @transform_5, window_bounds = array<i64: 1, 16>}, {transform_indices = @transform_6, window_bounds = array<i64: 64, 16>}]} {
    %c0 = arith.constant 0 : index
    %c0_0 = arith.constant 0 : index
    %0 = vector.load %arg1[%c0, %c0_0] : memref<64x8xf32, #tpu.memory_space<vmem>>, vector<64x8xf32>
    %cst = arith.constant dense<0.000000e+00> : vector<64xf32>
    %1 = vector.multi_reduction <add>, %0, %cst [1] : vector<64x8xf32> to vector<64xf32>
    %2 = vector.shape_cast %1 : vector<64xf32> to vector<64x1xf32>
    %cst_1 = arith.constant 8.000000e+00 : f32
    %3 = vector.broadcast %cst_1 : f32 to vector<64x1xf32>
    %4 = arith.divf %2, %3 : vector<64x1xf32>
    %5 = vector.broadcast %4 : vector<64x1xf32> to vector<64x8xf32>
    %6 = arith.subf %0, %5 : vector<64x8xf32>
    %7 = arith.mulf %6, %6 : vector<64x8xf32>
    %cst_2 = arith.constant dense<0.000000e+00> : vector<64xf32>
    %8 = vector.multi_reduction <add>, %7, %cst_2 [1] : vector<64x8xf32> to vector<64xf32>
    %9 = vector.shape_cast %8 : vector<64xf32> to vector<64x1xf32>
    %cst_3 = arith.constant 8.000000e+00 : f32
    %10 = vector.broadcast %cst_3 : f32 to vector<64x1xf32>
    %11 = arith.divf %9, %10 : vector<64x1xf32>
    %cst_4 = arith.constant 9.99999974E-6 : f32
    %12 = vector.broadcast %cst_4 : f32 to vector<64x1xf32>
    %13 = arith.addf %11, %12 : vector<64x1xf32>
    %14 = math.rsqrt %13 : vector<64x1xf32>
    %15 = vector.broadcast %14 : vector<64x1xf32> to vector<64x8xf32>
    %16 = arith.mulf %6, %15 : vector<64x8xf32>
    %c0_5 = arith.constant 0 : index
    %c0_6 = arith.constant 0 : index
    %17 = vector.load %arg3[%c0_5, %c0_6] : memref<1x8xf32, #tpu.memory_space<vmem>>, vector<1x8xf32>
    %18 = vector.broadcast %17 : vector<1x8xf32> to vector<64x8xf32>
    %19 = arith.mulf %16, %18 : vector<64x8xf32>
    %c0_7 = arith.constant 0 : index
    %c0_8 = arith.constant 0 : index
    %20 = vector.load %arg4[%c0_7, %c0_8] : memref<1x8xf32, #tpu.memory_space<vmem>>, vector<1x8xf32>
    %21 = vector.broadcast %20 : vector<1x8xf32> to vector<64x8xf32>
    %22 = arith.addf %19, %21 : vector<64x8xf32>
    %23 = arith.truncf %22 : vector<64x8xf32> to vector<64x8xbf16>
    %c0_9 = arith.constant 0 : index
    %c0_10 = arith.constant 0 : index
    %24 = vector.load %arg5[%c0_9, %c0_10] : memref<8x16xbf16, #tpu.memory_space<vmem>>, vector<8x16xbf16>
    %cst_11 = arith.constant dense<0.000000e+00> : vector<64x16xf32>
    %25 = tpu.matmul %23, %24, %cst_11 {dimension_numbers = #tpu.dot_dimension_numbers<[1], [0], [0], [1], [0, 0, 1, 1], [], []>} : vector<64x8xbf16>, vector<8x16xbf16>, vector<64x16xf32> -> vector<64x16xf32>
    %c0_12 = arith.constant 0 : index
    %c0_13 = arith.constant 0 : index
    %26 = vector.load %arg6[%c0_12, %c0_13] : memref<1x16xf32, #tpu.memory_space<vmem>>, vector<1x16xf32>
    %27 = vector.broadcast %26 : vector<1x16xf32> to vector<64x16xf32>
    %28 = arith.addf %25, %27 : vector<64x16xf32>
    %c0_14 = arith.constant 0 : index
    %c0_15 = arith.constant 0 : index
    %29 = vector.load %arg2[%c0_14, %c0_15] : memref<64x1xf32, #tpu.memory_space<vmem>>, vector<64x1xf32>
    %30 = vector.broadcast %29 : vector<64x1xf32> to vector<64x16xf32>
    %31 = arith.mulf %28, %30 : vector<64x16xf32>
    %c0_16 = arith.constant 0 : index
    %c0_17 = arith.constant 0 : index
    %32 = vector.load %arg7[%c0_16, %c0_17] : memref<64x16xf32, #tpu.memory_space<vmem>>, vector<64x16xf32>
    tpu.vector_store %arg7[%c0_16, %c0_17], %31 {strides = array<i32>} : memref<64x16xf32, #tpu.memory_space<vmem>>, vector<64x16xf32>,
    return
  }
  func.func @transform_0(%arg0: i32) -> (i32, i32) {
    %c0_i32 = arith.constant 0 : i32
    %c0_i32_0 = arith.constant 0 : i32
    return %arg0, %c0_i32 : i32, i32
  }
  func.func @transform_1(%arg0: i32) -> (i32, i32) {
    %c0_i32 = arith.constant 0 : i32
    %c0_i32_0 = arith.constant 0 : i32
    return %arg0, %c0_i32 : i32, i32
  }
  func.func @transform_2(%arg0: i32) -> (i32, i32) {
    %c0_i32 = arith.constant 0 : i32
    %c0_i32_0 = arith.constant 0 : i32
    %c0_i32_1 = arith.constant 0 : i32
    return %c0_i32, %c0_i32_0 : i32, i32
  }
  func.func @transform_3(%arg0: i32) -> (i32, i32) {
    %c0_i32 = arith.constant 0 : i32
    %c0_i32_0 = arith.constant 0 : i32
    %c0_i32_1 = arith.constant 0 : i32
    return %c0_i32, %c0_i32_0 : i32, i32
  }
  func.func @transform_4(%arg0: i32) -> (i32, i32) {
    %c0_i32 = arith.constant 0 : i32
    %c0_i32_0 = arith.constant 0 : i32
    %c0_i32_1 = arith.constant 0 : i32
    return %c0_i32, %c0_i32_0 : i32, i32
  }
  func.func @transform_5(%arg0: i32) -> (i32, i32) {
    %c0_i32 = arith.constant 0 : i32
    %c0_i32_0 = arith.constant 0 : i32
    %c0_i32_1 = arith.constant 0 : i32
    return %c0_i32, %c0_i32_0 : i32, i32
  }
  func.func @transform_6(%arg0: i32) -> (i32, i32) {
    %c0_i32 = arith.constant 0 : i32
    %c0_i32_0 = arith.constant 0 : i32
    return %arg0, %c0_i32 : i32, i32
  }
}

module attributes {stable_mosaic.version = 11 : i64} {
  func.func @_opm_outer_kernel(%arg0: i32, %arg1: i32, %arg2: i32, %arg3: memref<1x8x64xbf16, #tpu.memory_space<vmem>>, %arg4: memref<1x8x64xbf16, #tpu.memory_space<vmem>>, %arg5: memref<1x64x64xf32, #tpu.memory_space<vmem>>, %arg6: memref<64x64xf32, #tpu.memory_space<vmem>>) attributes {dimension_semantics = [#tpu.dimension_semantics<parallel>, #tpu.dimension_semantics<parallel>, #tpu.dimension_semantics<arbitrary>], iteration_bounds = array<i64: 1, 1, 1>, scalar_prefetch = 0 : i64, scratch_operands = 1 : i64, tpu.core_type = #tpu.core_type<tc>, window_params = [{transform_indices = @transform_0, window_bounds = array<i64: 1, 8, 64>}, {transform_indices = @transform_1, window_bounds = array<i64: 1, 8, 64>}, {transform_indices = @transform_2, window_bounds = array<i64: 1, 64, 64>}]} {
    %c0_i32 = arith.constant 0 : i32
    %0 = arith.cmpi eq, %arg2, %c0_i32 : i32
    %1 = arith.extui %0 : i1 to i32
    %c0_i32_0 = arith.constant 0 : i32
    %2 = arith.cmpi ne, %1, %c0_i32_0 : i32
    scf.if %2 {
      %cst_12 = arith.constant 0.000000e+00 : f32
      %14 = vector.broadcast %cst_12 : f32 to vector<64x64xf32>
      %c0_13 = arith.constant 0 : index
      %c0_14 = arith.constant 0 : index
      %15 = vector.load %arg6[%c0_13, %c0_14] : memref<64x64xf32, #tpu.memory_space<vmem>>, vector<64x64xf32>
      tpu.vector_store %arg6[%c0_13, %c0_14], %14 {strides = array<i32>} : memref<64x64xf32, #tpu.memory_space<vmem>>, vector<64x64xf32>,
    } else {
    }
    %c0 = arith.constant 0 : index
    %c0_1 = arith.constant 0 : index
    %3 = vector.load %arg6[%c0, %c0_1] : memref<64x64xf32, #tpu.memory_space<vmem>>, vector<64x64xf32>
    %c0_2 = arith.constant 0 : index
    %c0_3 = arith.constant 0 : index
    %c0_4 = arith.constant 0 : index
    %4 = vector.load %arg3[%c0_2, %c0_3, %c0_4] : memref<1x8x64xbf16, #tpu.memory_space<vmem>>, vector<1x8x64xbf16>
    %5 = vector.shape_cast %4 : vector<1x8x64xbf16> to vector<8x64xbf16>
    %c0_5 = arith.constant 0 : index
    %c0_6 = arith.constant 0 : index
    %c0_7 = arith.constant 0 : index
    %6 = vector.load %arg4[%c0_5, %c0_6, %c0_7] : memref<1x8x64xbf16, #tpu.memory_space<vmem>>, vector<1x8x64xbf16>
    %7 = vector.shape_cast %6 : vector<1x8x64xbf16> to vector<8x64xbf16>
    %cst = arith.constant dense<0.000000e+00> : vector<64x64xf32>
    %8 = tpu.matmul %5, %7, %cst {dimension_numbers = #tpu.dot_dimension_numbers<[0], [0], [1], [1], [0, 1, 1, 1], [], []>} : vector<8x64xbf16>, vector<8x64xbf16>, vector<64x64xf32> -> vector<64x64xf32>
    %9 = arith.addf %3, %8 : vector<64x64xf32>
    %c0_8 = arith.constant 0 : index
    %c0_9 = arith.constant 0 : index
    %10 = vector.load %arg6[%c0_8, %c0_9] : memref<64x64xf32, #tpu.memory_space<vmem>>, vector<64x64xf32>
    tpu.vector_store %arg6[%c0_8, %c0_9], %9 {strides = array<i32>} : memref<64x64xf32, #tpu.memory_space<vmem>>, vector<64x64xf32>,
    %c0_i32_10 = arith.constant 0 : i32
    %11 = arith.cmpi eq, %arg2, %c0_i32_10 : i32
    %12 = arith.extui %11 : i1 to i32
    %c0_i32_11 = arith.constant 0 : i32
    %13 = arith.cmpi ne, %12, %c0_i32_11 : i32
    scf.if %13 {
      %c0_12 = arith.constant 0 : index
      %c0_13 = arith.constant 0 : index
      %14 = vector.load %arg6[%c0_12, %c0_13] : memref<64x64xf32, #tpu.memory_space<vmem>>, vector<64x64xf32>
      %c0_14 = arith.constant 0 : index
      %c0_15 = arith.constant 0 : index
      %c0_16 = arith.constant 0 : index
      %15 = vector.load %arg5[%c0_14, %c0_15, %c0_16] : memref<1x64x64xf32, #tpu.memory_space<vmem>>, vector<1x64x64xf32>
      %16 = vector.shape_cast %15 : vector<1x64x64xf32> to vector<64x64xf32>
      %17 = vector.shape_cast %14 : vector<64x64xf32> to vector<1x64x64xf32>
      tpu.vector_store %arg5[%c0_14, %c0_15, %c0_16], %17 {strides = array<i32>} : memref<1x64x64xf32, #tpu.memory_space<vmem>>, vector<1x64x64xf32>,
    } else {
    }
    return
  }
  func.func @transform_0(%arg0: i32, %arg1: i32, %arg2: i32) -> (i32, i32, i32) {
    %c0_i32 = arith.constant 0 : i32
    return %arg0, %arg2, %arg1 : i32, i32, i32
  }
  func.func @transform_1(%arg0: i32, %arg1: i32, %arg2: i32) -> (i32, i32, i32) {
    %c0_i32 = arith.constant 0 : i32
    %c0_i32_0 = arith.constant 0 : i32
    return %arg0, %arg2, %c0_i32 : i32, i32, i32
  }
  func.func @transform_2(%arg0: i32, %arg1: i32, %arg2: i32) -> (i32, i32, i32) {
    %c0_i32 = arith.constant 0 : i32
    %c0_i32_0 = arith.constant 0 : i32
    return %arg0, %arg1, %c0_i32 : i32, i32, i32
  }
}

module attributes {stable_mosaic.version = 11 : i64} {
  func.func @_linear_scale_kernel(%arg0: i32, %arg1: memref<64x64xf32, #tpu.memory_space<vmem>>, %arg2: memref<64x1xf32, #tpu.memory_space<vmem>>, %arg3: memref<64x16xbf16, #tpu.memory_space<vmem>>, %arg4: memref<1x16xf32, #tpu.memory_space<vmem>>, %arg5: memref<64x16xf32, #tpu.memory_space<vmem>>) attributes {dimension_semantics = [#tpu.dimension_semantics<parallel>], iteration_bounds = array<i64: 1>, scalar_prefetch = 0 : i64, scratch_operands = 0 : i64, tpu.core_type = #tpu.core_type<tc>, window_params = [{transform_indices = @transform_0, window_bounds = array<i64: 64, 64>}, {transform_indices = @transform_1, window_bounds = array<i64: 64, 1>}, {pipeline_mode = #tpu.pipeline_mode<synchronous>, transform_indices = @transform_2, window_bounds = array<i64: 64, 16>}, {pipeline_mode = #tpu.pipeline_mode<synchronous>, transform_indices = @transform_3, window_bounds = array<i64: 1, 16>}, {transform_indices = @transform_4, window_bounds = array<i64: 64, 16>}]} {
    %c0 = arith.constant 0 : index
    %c0_0 = arith.constant 0 : index
    %0 = vector.load %arg1[%c0, %c0_0] : memref<64x64xf32, #tpu.memory_space<vmem>>, vector<64x64xf32>
    %1 = arith.truncf %0 : vector<64x64xf32> to vector<64x64xbf16>
    %c0_1 = arith.constant 0 : index
    %c0_2 = arith.constant 0 : index
    %2 = vector.load %arg3[%c0_1, %c0_2] : memref<64x16xbf16, #tpu.memory_space<vmem>>, vector<64x16xbf16>
    %cst = arith.constant dense<0.000000e+00> : vector<64x16xf32>
    %3 = tpu.matmul %1, %2, %cst {dimension_numbers = #tpu.dot_dimension_numbers<[1], [0], [0], [1], [0, 0, 1, 1], [], []>} : vector<64x64xbf16>, vector<64x16xbf16>, vector<64x16xf32> -> vector<64x16xf32>
    %c0_3 = arith.constant 0 : index
    %c0_4 = arith.constant 0 : index
    %4 = vector.load %arg4[%c0_3, %c0_4] : memref<1x16xf32, #tpu.memory_space<vmem>>, vector<1x16xf32>
    %5 = vector.broadcast %4 : vector<1x16xf32> to vector<64x16xf32>
    %6 = arith.addf %3, %5 : vector<64x16xf32>
    %c0_5 = arith.constant 0 : index
    %c0_6 = arith.constant 0 : index
    %7 = vector.load %arg2[%c0_5, %c0_6] : memref<64x1xf32, #tpu.memory_space<vmem>>, vector<64x1xf32>
    %8 = vector.broadcast %7 : vector<64x1xf32> to vector<64x16xf32>
    %9 = arith.mulf %6, %8 : vector<64x16xf32>
    %c0_7 = arith.constant 0 : index
    %c0_8 = arith.constant 0 : index
    %10 = vector.load %arg5[%c0_7, %c0_8] : memref<64x16xf32, #tpu.memory_space<vmem>>, vector<64x16xf32>
    tpu.vector_store %arg5[%c0_7, %c0_8], %9 {strides = array<i32>} : memref<64x16xf32, #tpu.memory_space<vmem>>, vector<64x16xf32>,
    return
  }
  func.func @transform_0(%arg0: i32) -> (i32, i32) {
    %c0_i32 = arith.constant 0 : i32
    %c0_i32_0 = arith.constant 0 : i32
    return %arg0, %c0_i32 : i32, i32
  }
  func.func @transform_1(%arg0: i32) -> (i32, i32) {
    %c0_i32 = arith.constant 0 : i32
    %c0_i32_0 = arith.constant 0 : i32
    return %arg0, %c0_i32 : i32, i32
  }
  func.func @transform_2(%arg0: i32) -> (i32, i32) {
    %c0_i32 = arith.constant 0 : i32
    %c0_i32_0 = arith.constant 0 : i32
    %c0_i32_1 = arith.constant 0 : i32
    return %c0_i32, %c0_i32_0 : i32, i32
  }
  func.func @transform_3(%arg0: i32) -> (i32, i32) {
    %c0_i32 = arith.constant 0 : i32
    %c0_i32_0 = arith.constant 0 : i32
    %c0_i32_1 = arith.constant 0 : i32
    return %c0_i32, %c0_i32_0 : i32, i32
  }
  func.func @transform_4(%arg0: i32) -> (i32, i32) {
    %c0_i32 = arith.constant 0 : i32
    %c0_i32_0 = arith.constant 0 : i32
    return %arg0, %c0_i32 : i32, i32
  }
}

module attributes {stable_mosaic.version = 11 : i64} {
  func.func @_ln_linear_kernel(%arg0: i32, %arg1: memref<64x16xf32, #tpu.memory_space<vmem>>, %arg2: memref<1x16xf32, #tpu.memory_space<vmem>>, %arg3: memref<1x16xf32, #tpu.memory_space<vmem>>, %arg4: memref<16x80xbf16, #tpu.memory_space<vmem>>, %arg5: memref<1x80xf32, #tpu.memory_space<vmem>>, %arg6: memref<64x80xf32, #tpu.memory_space<vmem>>) attributes {dimension_semantics = [#tpu.dimension_semantics<parallel>], iteration_bounds = array<i64: 1>, scalar_prefetch = 0 : i64, scratch_operands = 0 : i64, tpu.core_type = #tpu.core_type<tc>, window_params = [{transform_indices = @transform_0, window_bounds = array<i64: 64, 16>}, {pipeline_mode = #tpu.pipeline_mode<synchronous>, transform_indices = @transform_1, window_bounds = array<i64: 1, 16>}, {pipeline_mode = #tpu.pipeline_mode<synchronous>, transform_indices = @transform_2, window_bounds = array<i64: 1, 16>}, {pipeline_mode = #tpu.pipeline_mode<synchronous>, transform_indices = @transform_3, window_bounds = array<i64: 16, 80>}, {pipeline_mode = #tpu.pipeline_mode<synchronous>, transform_indices = @transform_4, window_bounds = array<i64: 1, 80>}, {transform_indices = @transform_5, window_bounds = array<i64: 64, 80>}]} {
    %c0 = arith.constant 0 : index
    %c0_0 = arith.constant 0 : index
    %0 = vector.load %arg1[%c0, %c0_0] : memref<64x16xf32, #tpu.memory_space<vmem>>, vector<64x16xf32>
    %cst = arith.constant dense<0.000000e+00> : vector<64xf32>
    %1 = vector.multi_reduction <add>, %0, %cst [1] : vector<64x16xf32> to vector<64xf32>
    %2 = vector.shape_cast %1 : vector<64xf32> to vector<64x1xf32>
    %cst_1 = arith.constant 1.600000e+01 : f32
    %3 = vector.broadcast %cst_1 : f32 to vector<64x1xf32>
    %4 = arith.divf %2, %3 : vector<64x1xf32>
    %5 = vector.broadcast %4 : vector<64x1xf32> to vector<64x16xf32>
    %6 = arith.subf %0, %5 : vector<64x16xf32>
    %7 = arith.mulf %6, %6 : vector<64x16xf32>
    %cst_2 = arith.constant dense<0.000000e+00> : vector<64xf32>
    %8 = vector.multi_reduction <add>, %7, %cst_2 [1] : vector<64x16xf32> to vector<64xf32>
    %9 = vector.shape_cast %8 : vector<64xf32> to vector<64x1xf32>
    %cst_3 = arith.constant 1.600000e+01 : f32
    %10 = vector.broadcast %cst_3 : f32 to vector<64x1xf32>
    %11 = arith.divf %9, %10 : vector<64x1xf32>
    %cst_4 = arith.constant 9.99999974E-6 : f32
    %12 = vector.broadcast %cst_4 : f32 to vector<64x1xf32>
    %13 = arith.addf %11, %12 : vector<64x1xf32>
    %14 = math.rsqrt %13 : vector<64x1xf32>
    %15 = vector.broadcast %14 : vector<64x1xf32> to vector<64x16xf32>
    %16 = arith.mulf %6, %15 : vector<64x16xf32>
    %c0_5 = arith.constant 0 : index
    %c0_6 = arith.constant 0 : index
    %17 = vector.load %arg2[%c0_5, %c0_6] : memref<1x16xf32, #tpu.memory_space<vmem>>, vector<1x16xf32>
    %18 = vector.broadcast %17 : vector<1x16xf32> to vector<64x16xf32>
    %19 = arith.mulf %16, %18 : vector<64x16xf32>
    %c0_7 = arith.constant 0 : index
    %c0_8 = arith.constant 0 : index
    %20 = vector.load %arg3[%c0_7, %c0_8] : memref<1x16xf32, #tpu.memory_space<vmem>>, vector<1x16xf32>
    %21 = vector.broadcast %20 : vector<1x16xf32> to vector<64x16xf32>
    %22 = arith.addf %19, %21 : vector<64x16xf32>
    %23 = arith.truncf %22 : vector<64x16xf32> to vector<64x16xbf16>
    %c0_9 = arith.constant 0 : index
    %c0_10 = arith.constant 0 : index
    %24 = vector.load %arg4[%c0_9, %c0_10] : memref<16x80xbf16, #tpu.memory_space<vmem>>, vector<16x80xbf16>
    %cst_11 = arith.constant dense<0.000000e+00> : vector<64x80xf32>
    %25 = tpu.matmul %23, %24, %cst_11 {dimension_numbers = #tpu.dot_dimension_numbers<[1], [0], [0], [1], [0, 0, 1, 1], [], []>} : vector<64x16xbf16>, vector<16x80xbf16>, vector<64x80xf32> -> vector<64x80xf32>
    %c0_12 = arith.constant 0 : index
    %c0_13 = arith.constant 0 : index
    %26 = vector.load %arg5[%c0_12, %c0_13] : memref<1x80xf32, #tpu.memory_space<vmem>>, vector<1x80xf32>
    %27 = vector.broadcast %26 : vector<1x80xf32> to vector<64x80xf32>
    %28 = arith.addf %25, %27 : vector<64x80xf32>
    %c0_14 = arith.constant 0 : index
    %c0_15 = arith.constant 0 : index
    %29 = vector.load %arg6[%c0_14, %c0_15] : memref<64x80xf32, #tpu.memory_space<vmem>>, vector<64x80xf32>
    tpu.vector_store %arg6[%c0_14, %c0_15], %28 {strides = array<i32>} : memref<64x80xf32, #tpu.memory_space<vmem>>, vector<64x80xf32>,
    return
  }
  func.func @transform_0(%arg0: i32) -> (i32, i32) {
    %c0_i32 = arith.constant 0 : i32
    %c0_i32_0 = arith.constant 0 : i32
    return %arg0, %c0_i32 : i32, i32
  }
  func.func @transform_1(%arg0: i32) -> (i32, i32) {
    %c0_i32 = arith.constant 0 : i32
    %c0_i32_0 = arith.constant 0 : i32
    %c0_i32_1 = arith.constant 0 : i32
    return %c0_i32, %c0_i32_0 : i32, i32
  }
  func.func @transform_2(%arg0: i32) -> (i32, i32) {
    %c0_i32 = arith.constant 0 : i32
    %c0_i32_0 = arith.constant 0 : i32
    %c0_i32_1 = arith.constant 0 : i32
    return %c0_i32, %c0_i32_0 : i32, i32
  }
  func.func @transform_3(%arg0: i32) -> (i32, i32) {
    %c0_i32 = arith.constant 0 : i32
    %c0_i32_0 = arith.constant 0 : i32
    %c0_i32_1 = arith.constant 0 : i32
    return %c0_i32, %c0_i32_0 : i32, i32
  }
  func.func @transform_4(%arg0: i32) -> (i32, i32) {
    %c0_i32 = arith.constant 0 : i32
    %c0_i32_0 = arith.constant 0 : i32
    %c0_i32_1 = arith.constant 0 : i32
    return %c0_i32, %c0_i32_0 : i32, i32
  }
  func.func @transform_5(%arg0: i32) -> (i32, i32) {
    %c0_i32 = arith.constant 0 : i32
    %c0_i32_0 = arith.constant 0 : i32
    return %arg0, %c0_i32 : i32, i32
  }
}

module attributes {stable_mosaic.version = 11 : i64} {
  func.func @_bmm_kernel(%arg0: i32, %arg1: memref<8x8x8xbf16, #tpu.memory_space<vmem>>, %arg2: memref<8x8x8xbf16, #tpu.memory_space<vmem>>, %arg3: memref<8x8x8xf32, #tpu.memory_space<vmem>>) attributes {dimension_semantics = [#tpu.dimension_semantics<parallel>], iteration_bounds = array<i64: 2>, scalar_prefetch = 0 : i64, scratch_operands = 0 : i64, tpu.core_type = #tpu.core_type<tc>, window_params = [{transform_indices = @transform_0, window_bounds = array<i64: 8, 8, 8>}, {transform_indices = @transform_1, window_bounds = array<i64: 8, 8, 8>}, {transform_indices = @transform_2, window_bounds = array<i64: 8, 8, 8>}]} {
    %c0 = arith.constant 0 : index
    %c0_0 = arith.constant 0 : index
    %c0_1 = arith.constant 0 : index
    %0 = vector.load %arg1[%c0, %c0_0, %c0_1] : memref<8x8x8xbf16, #tpu.memory_space<vmem>>, vector<8x8x8xbf16>
    %c0_2 = arith.constant 0 : index
    %c0_3 = arith.constant 0 : index
    %c0_4 = arith.constant 0 : index
    %1 = vector.load %arg2[%c0_2, %c0_3, %c0_4] : memref<8x8x8xbf16, #tpu.memory_space<vmem>>, vector<8x8x8xbf16>
    "tpu.trace_start"() <{level = 10 : i32, message = "gmk,gkn->gmn"}> : () -> ()
    %cst = arith.constant dense<0.000000e+00> : vector<8x8x8xf32>
    %2 = tpu.matmul %0, %1, %cst {dimension_numbers = #tpu.dot_dimension_numbers<[2], [1], [1], [2], [0, 0, 0, 1, 1, 2], [0], [0]>} : vector<8x8x8xbf16>, vector<8x8x8xbf16>, vector<8x8x8xf32> -> vector<8x8x8xf32>
    "tpu.trace_stop"() : () -> ()
    %c0_5 = arith.constant 0 : index
    %c0_6 = arith.constant 0 : index
    %c0_7 = arith.constant 0 : index
    %3 = vector.load %arg3[%c0_5, %c0_6, %c0_7] : memref<8x8x8xf32, #tpu.memory_space<vmem>>, vector<8x8x8xf32>
    tpu.vector_store %arg3[%c0_5, %c0_6, %c0_7], %2 {strides = array<i32>} : memref<8x8x8xf32, #tpu.memory_space<vmem>>, vector<8x8x8xf32>,
    return
  }
  func.func @transform_0(%arg0: i32) -> (i32, i32, i32) {
    %c0_i32 = arith.constant 0 : i32
    %c0_i32_0 = arith.constant 0 : i32
    %c0_i32_1 = arith.constant 0 : i32
    return %arg0, %c0_i32, %c0_i32_0 : i32, i32, i32
  }
  func.func @transform_1(%arg0: i32) -> (i32, i32, i32) {
    %c0_i32 = arith.constant 0 : i32
    %c0_i32_0 = arith.constant 0 : i32
    %c0_i32_1 = arith.constant 0 : i32
    return %arg0, %c0_i32, %c0_i32_0 : i32, i32, i32
  }
  func.func @transform_2(%arg0: i32) -> (i32, i32, i32) {
    %c0_i32 = arith.constant 0 : i32
    %c0_i32_0 = arith.constant 0 : i32
    %c0_i32_1 = arith.constant 0 : i32
    return %arg0, %c0_i32, %c0_i32_0 : i32, i32, i32
  }
}

module attributes {stable_mosaic.version = 11 : i64} {
  func.func @_ln_linear_kernel(%arg0: i32, %arg1: memref<64x16xf32, #tpu.memory_space<vmem>>, %arg2: memref<1x16xf32, #tpu.memory_space<vmem>>, %arg3: memref<1x16xf32, #tpu.memory_space<vmem>>, %arg4: memref<16x16xbf16, #tpu.memory_space<vmem>>, %arg5: memref<1x16xf32, #tpu.memory_space<vmem>>, %arg6: memref<64x16xf32, #tpu.memory_space<vmem>>) attributes {dimension_semantics = [#tpu.dimension_semantics<parallel>], iteration_bounds = array<i64: 1>, scalar_prefetch = 0 : i64, scratch_operands = 0 : i64, tpu.core_type = #tpu.core_type<tc>, window_params = [{transform_indices = @transform_0, window_bounds = array<i64: 64, 16>}, {pipeline_mode = #tpu.pipeline_mode<synchronous>, transform_indices = @transform_1, window_bounds = array<i64: 1, 16>}, {pipeline_mode = #tpu.pipeline_mode<synchronous>, transform_indices = @transform_2, window_bounds = array<i64: 1, 16>}, {pipeline_mode = #tpu.pipeline_mode<synchronous>, transform_indices = @transform_3, window_bounds = array<i64: 16, 16>}, {pipeline_mode = #tpu.pipeline_mode<synchronous>, transform_indices = @transform_4, window_bounds = array<i64: 1, 16>}, {transform_indices = @transform_5, window_bounds = array<i64: 64, 16>}]} {
    %c0 = arith.constant 0 : index
    %c0_0 = arith.constant 0 : index
    %0 = vector.load %arg1[%c0, %c0_0] : memref<64x16xf32, #tpu.memory_space<vmem>>, vector<64x16xf32>
    %cst = arith.constant dense<0.000000e+00> : vector<64xf32>
    %1 = vector.multi_reduction <add>, %0, %cst [1] : vector<64x16xf32> to vector<64xf32>
    %2 = vector.shape_cast %1 : vector<64xf32> to vector<64x1xf32>
    %cst_1 = arith.constant 1.600000e+01 : f32
    %3 = vector.broadcast %cst_1 : f32 to vector<64x1xf32>
    %4 = arith.divf %2, %3 : vector<64x1xf32>
    %5 = vector.broadcast %4 : vector<64x1xf32> to vector<64x16xf32>
    %6 = arith.subf %0, %5 : vector<64x16xf32>
    %7 = arith.mulf %6, %6 : vector<64x16xf32>
    %cst_2 = arith.constant dense<0.000000e+00> : vector<64xf32>
    %8 = vector.multi_reduction <add>, %7, %cst_2 [1] : vector<64x16xf32> to vector<64xf32>
    %9 = vector.shape_cast %8 : vector<64xf32> to vector<64x1xf32>
    %cst_3 = arith.constant 1.600000e+01 : f32
    %10 = vector.broadcast %cst_3 : f32 to vector<64x1xf32>
    %11 = arith.divf %9, %10 : vector<64x1xf32>
    %cst_4 = arith.constant 9.99999974E-6 : f32
    %12 = vector.broadcast %cst_4 : f32 to vector<64x1xf32>
    %13 = arith.addf %11, %12 : vector<64x1xf32>
    %14 = math.rsqrt %13 : vector<64x1xf32>
    %15 = vector.broadcast %14 : vector<64x1xf32> to vector<64x16xf32>
    %16 = arith.mulf %6, %15 : vector<64x16xf32>
    %c0_5 = arith.constant 0 : index
    %c0_6 = arith.constant 0 : index
    %17 = vector.load %arg2[%c0_5, %c0_6] : memref<1x16xf32, #tpu.memory_space<vmem>>, vector<1x16xf32>
    %18 = vector.broadcast %17 : vector<1x16xf32> to vector<64x16xf32>
    %19 = arith.mulf %16, %18 : vector<64x16xf32>
    %c0_7 = arith.constant 0 : index
    %c0_8 = arith.constant 0 : index
    %20 = vector.load %arg3[%c0_7, %c0_8] : memref<1x16xf32, #tpu.memory_space<vmem>>, vector<1x16xf32>
    %21 = vector.broadcast %20 : vector<1x16xf32> to vector<64x16xf32>
    %22 = arith.addf %19, %21 : vector<64x16xf32>
    %23 = arith.truncf %22 : vector<64x16xf32> to vector<64x16xbf16>
    %c0_9 = arith.constant 0 : index
    %c0_10 = arith.constant 0 : index
    %24 = vector.load %arg4[%c0_9, %c0_10] : memref<16x16xbf16, #tpu.memory_space<vmem>>, vector<16x16xbf16>
    %cst_11 = arith.constant dense<0.000000e+00> : vector<64x16xf32>
    %25 = tpu.matmul %23, %24, %cst_11 {dimension_numbers = #tpu.dot_dimension_numbers<[1], [0], [0], [1], [0, 0, 1, 1], [], []>} : vector<64x16xbf16>, vector<16x16xbf16>, vector<64x16xf32> -> vector<64x16xf32>
    %c0_12 = arith.constant 0 : index
    %c0_13 = arith.constant 0 : index
    %26 = vector.load %arg5[%c0_12, %c0_13] : memref<1x16xf32, #tpu.memory_space<vmem>>, vector<1x16xf32>
    %27 = vector.broadcast %26 : vector<1x16xf32> to vector<64x16xf32>
    %28 = arith.addf %25, %27 : vector<64x16xf32>
    %c0_14 = arith.constant 0 : index
    %c0_15 = arith.constant 0 : index
    %29 = vector.load %arg6[%c0_14, %c0_15] : memref<64x16xf32, #tpu.memory_space<vmem>>, vector<64x16xf32>
    tpu.vector_store %arg6[%c0_14, %c0_15], %28 {strides = array<i32>} : memref<64x16xf32, #tpu.memory_space<vmem>>, vector<64x16xf32>,
    return
  }
  func.func @transform_0(%arg0: i32) -> (i32, i32) {
    %c0_i32 = arith.constant 0 : i32
    %c0_i32_0 = arith.constant 0 : i32
    return %arg0, %c0_i32 : i32, i32
  }
  func.func @transform_1(%arg0: i32) -> (i32, i32) {
    %c0_i32 = arith.constant 0 : i32
    %c0_i32_0 = arith.constant 0 : i32
    %c0_i32_1 = arith.constant 0 : i32
    return %c0_i32, %c0_i32_0 : i32, i32
  }
  func.func @transform_2(%arg0: i32) -> (i32, i32) {
    %c0_i32 = arith.constant 0 : i32
    %c0_i32_0 = arith.constant 0 : i32
    %c0_i32_1 = arith.constant 0 : i32
    return %c0_i32, %c0_i32_0 : i32, i32
  }
  func.func @transform_3(%arg0: i32) -> (i32, i32) {
    %c0_i32 = arith.constant 0 : i32
    %c0_i32_0 = arith.constant 0 : i32
    %c0_i32_1 = arith.constant 0 : i32
    return %c0_i32, %c0_i32_0 : i32, i32
  }
  func.func @transform_4(%arg0: i32) -> (i32, i32) {
    %c0_i32 = arith.constant 0 : i32
    %c0_i32_0 = arith.constant 0 : i32
    %c0_i32_1 = arith.constant 0 : i32
    return %c0_i32, %c0_i32_0 : i32, i32
  }
  func.func @transform_5(%arg0: i32) -> (i32, i32) {
    %c0_i32 = arith.constant 0 : i32
    %c0_i32_0 = arith.constant 0 : i32
    return %arg0, %c0_i32 : i32, i32
  }
}

module attributes {stable_mosaic.version = 11 : i64} {
  func.func @_linear_kernel(%arg0: i32, %arg1: memref<64x16xf32, #tpu.memory_space<vmem>>, %arg2: memref<16x16xbf16, #tpu.memory_space<vmem>>, %arg3: memref<1x16xf32, #tpu.memory_space<vmem>>, %arg4: memref<64x16xf32, #tpu.memory_space<vmem>>) attributes {dimension_semantics = [#tpu.dimension_semantics<parallel>], iteration_bounds = array<i64: 1>, scalar_prefetch = 0 : i64, scratch_operands = 0 : i64, tpu.core_type = #tpu.core_type<tc>, window_params = [{transform_indices = @transform_0, window_bounds = array<i64: 64, 16>}, {pipeline_mode = #tpu.pipeline_mode<synchronous>, transform_indices = @transform_1, window_bounds = array<i64: 16, 16>}, {pipeline_mode = #tpu.pipeline_mode<synchronous>, transform_indices = @transform_2, window_bounds = array<i64: 1, 16>}, {transform_indices = @transform_3, window_bounds = array<i64: 64, 16>}]} {
    %c0 = arith.constant 0 : index
    %c0_0 = arith.constant 0 : index
    %0 = vector.load %arg1[%c0, %c0_0] : memref<64x16xf32, #tpu.memory_space<vmem>>, vector<64x16xf32>
    %1 = arith.truncf %0 : vector<64x16xf32> to vector<64x16xbf16>
    %c0_1 = arith.constant 0 : index
    %c0_2 = arith.constant 0 : index
    %2 = vector.load %arg2[%c0_1, %c0_2] : memref<16x16xbf16, #tpu.memory_space<vmem>>, vector<16x16xbf16>
    %cst = arith.constant dense<0.000000e+00> : vector<64x16xf32>
    %3 = tpu.matmul %1, %2, %cst {dimension_numbers = #tpu.dot_dimension_numbers<[1], [0], [0], [1], [0, 0, 1, 1], [], []>} : vector<64x16xbf16>, vector<16x16xbf16>, vector<64x16xf32> -> vector<64x16xf32>
    %c0_3 = arith.constant 0 : index
    %c0_4 = arith.constant 0 : index
    %4 = vector.load %arg3[%c0_3, %c0_4] : memref<1x16xf32, #tpu.memory_space<vmem>>, vector<1x16xf32>
    %5 = vector.broadcast %4 : vector<1x16xf32> to vector<64x16xf32>
    %6 = arith.addf %3, %5 : vector<64x16xf32>
    %c0_5 = arith.constant 0 : index
    %c0_6 = arith.constant 0 : index
    %7 = vector.load %arg4[%c0_5, %c0_6] : memref<64x16xf32, #tpu.memory_space<vmem>>, vector<64x16xf32>
    tpu.vector_store %arg4[%c0_5, %c0_6], %6 {strides = array<i32>} : memref<64x16xf32, #tpu.memory_space<vmem>>, vector<64x16xf32>,
    return
  }
  func.func @transform_0(%arg0: i32) -> (i32, i32) {
    %c0_i32 = arith.constant 0 : i32
    %c0_i32_0 = arith.constant 0 : i32
    return %arg0, %c0_i32 : i32, i32
  }
  func.func @transform_1(%arg0: i32) -> (i32, i32) {
    %c0_i32 = arith.constant 0 : i32
    %c0_i32_0 = arith.constant 0 : i32
    %c0_i32_1 = arith.constant 0 : i32
    return %c0_i32, %c0_i32_0 : i32, i32
  }
  func.func @transform_2(%arg0: i32) -> (i32, i32) {
    %c0_i32 = arith.constant 0 : i32
    %c0_i32_0 = arith.constant 0 : i32
    %c0_i32_1 = arith.constant 0 : i32
    return %c0_i32, %c0_i32_0 : i32, i32
  }
  func.func @transform_3(%arg0: i32) -> (i32, i32) {
    %c0_i32 = arith.constant 0 : i32
    %c0_i32_0 = arith.constant 0 : i32
    return %arg0, %c0_i32 : i32, i32
  }
}

module attributes {stable_mosaic.version = 11 : i64} {
  func.func @_ln_linear_kernel(%arg0: i32, %arg1: memref<64x16xf32, #tpu.memory_space<vmem>>, %arg2: memref<1x16xf32, #tpu.memory_space<vmem>>, %arg3: memref<1x16xf32, #tpu.memory_space<vmem>>, %arg4: memref<16x66xbf16, #tpu.memory_space<vmem>>, %arg5: memref<1x66xf32, #tpu.memory_space<vmem>>, %arg6: memref<64x66xf32, #tpu.memory_space<vmem>>) attributes {dimension_semantics = [#tpu.dimension_semantics<parallel>], iteration_bounds = array<i64: 1>, scalar_prefetch = 0 : i64, scratch_operands = 0 : i64, tpu.core_type = #tpu.core_type<tc>, window_params = [{transform_indices = @transform_0, window_bounds = array<i64: 64, 16>}, {pipeline_mode = #tpu.pipeline_mode<synchronous>, transform_indices = @transform_1, window_bounds = array<i64: 1, 16>}, {pipeline_mode = #tpu.pipeline_mode<synchronous>, transform_indices = @transform_2, window_bounds = array<i64: 1, 16>}, {pipeline_mode = #tpu.pipeline_mode<synchronous>, transform_indices = @transform_3, window_bounds = array<i64: 16, 66>}, {pipeline_mode = #tpu.pipeline_mode<synchronous>, transform_indices = @transform_4, window_bounds = array<i64: 1, 66>}, {transform_indices = @transform_5, window_bounds = array<i64: 64, 66>}]} {
    %c0 = arith.constant 0 : index
    %c0_0 = arith.constant 0 : index
    %0 = vector.load %arg1[%c0, %c0_0] : memref<64x16xf32, #tpu.memory_space<vmem>>, vector<64x16xf32>
    %cst = arith.constant dense<0.000000e+00> : vector<64xf32>
    %1 = vector.multi_reduction <add>, %0, %cst [1] : vector<64x16xf32> to vector<64xf32>
    %2 = vector.shape_cast %1 : vector<64xf32> to vector<64x1xf32>
    %cst_1 = arith.constant 1.600000e+01 : f32
    %3 = vector.broadcast %cst_1 : f32 to vector<64x1xf32>
    %4 = arith.divf %2, %3 : vector<64x1xf32>
    %5 = vector.broadcast %4 : vector<64x1xf32> to vector<64x16xf32>
    %6 = arith.subf %0, %5 : vector<64x16xf32>
    %7 = arith.mulf %6, %6 : vector<64x16xf32>
    %cst_2 = arith.constant dense<0.000000e+00> : vector<64xf32>
    %8 = vector.multi_reduction <add>, %7, %cst_2 [1] : vector<64x16xf32> to vector<64xf32>
    %9 = vector.shape_cast %8 : vector<64xf32> to vector<64x1xf32>
    %cst_3 = arith.constant 1.600000e+01 : f32
    %10 = vector.broadcast %cst_3 : f32 to vector<64x1xf32>
    %11 = arith.divf %9, %10 : vector<64x1xf32>
    %cst_4 = arith.constant 9.99999974E-6 : f32
    %12 = vector.broadcast %cst_4 : f32 to vector<64x1xf32>
    %13 = arith.addf %11, %12 : vector<64x1xf32>
    %14 = math.rsqrt %13 : vector<64x1xf32>
    %15 = vector.broadcast %14 : vector<64x1xf32> to vector<64x16xf32>
    %16 = arith.mulf %6, %15 : vector<64x16xf32>
    %c0_5 = arith.constant 0 : index
    %c0_6 = arith.constant 0 : index
    %17 = vector.load %arg2[%c0_5, %c0_6] : memref<1x16xf32, #tpu.memory_space<vmem>>, vector<1x16xf32>
    %18 = vector.broadcast %17 : vector<1x16xf32> to vector<64x16xf32>
    %19 = arith.mulf %16, %18 : vector<64x16xf32>
    %c0_7 = arith.constant 0 : index
    %c0_8 = arith.constant 0 : index
    %20 = vector.load %arg3[%c0_7, %c0_8] : memref<1x16xf32, #tpu.memory_space<vmem>>, vector<1x16xf32>
    %21 = vector.broadcast %20 : vector<1x16xf32> to vector<64x16xf32>
    %22 = arith.addf %19, %21 : vector<64x16xf32>
    %23 = arith.truncf %22 : vector<64x16xf32> to vector<64x16xbf16>
    %c0_9 = arith.constant 0 : index
    %c0_10 = arith.constant 0 : index
    %24 = vector.load %arg4[%c0_9, %c0_10] : memref<16x66xbf16, #tpu.memory_space<vmem>>, vector<16x66xbf16>
    %cst_11 = arith.constant dense<0.000000e+00> : vector<64x66xf32>
    %25 = tpu.matmul %23, %24, %cst_11 {dimension_numbers = #tpu.dot_dimension_numbers<[1], [0], [0], [1], [0, 0, 1, 1], [], []>} : vector<64x16xbf16>, vector<16x66xbf16>, vector<64x66xf32> -> vector<64x66xf32>
    %c0_12 = arith.constant 0 : index
    %c0_13 = arith.constant 0 : index
    %26 = vector.load %arg5[%c0_12, %c0_13] : memref<1x66xf32, #tpu.memory_space<vmem>>, vector<1x66xf32>
    %27 = vector.broadcast %26 : vector<1x66xf32> to vector<64x66xf32>
    %28 = arith.addf %25, %27 : vector<64x66xf32>
    %c0_14 = arith.constant 0 : index
    %c0_15 = arith.constant 0 : index
    %29 = vector.load %arg6[%c0_14, %c0_15] : memref<64x66xf32, #tpu.memory_space<vmem>>, vector<64x66xf32>
    tpu.vector_store %arg6[%c0_14, %c0_15], %28 {strides = array<i32>} : memref<64x66xf32, #tpu.memory_space<vmem>>, vector<64x66xf32>,
    return
  }
  func.func @transform_0(%arg0: i32) -> (i32, i32) {
    %c0_i32 = arith.constant 0 : i32
    %c0_i32_0 = arith.constant 0 : i32
    return %arg0, %c0_i32 : i32, i32
  }
  func.func @transform_1(%arg0: i32) -> (i32, i32) {
    %c0_i32 = arith.constant 0 : i32
    %c0_i32_0 = arith.constant 0 : i32
    %c0_i32_1 = arith.constant 0 : i32
    return %c0_i32, %c0_i32_0 : i32, i32
  }
  func.func @transform_2(%arg0: i32) -> (i32, i32) {
    %c0_i32 = arith.constant 0 : i32
    %c0_i32_0 = arith.constant 0 : i32
    %c0_i32_1 = arith.constant 0 : i32
    return %c0_i32, %c0_i32_0 : i32, i32
  }
  func.func @transform_3(%arg0: i32) -> (i32, i32) {
    %c0_i32 = arith.constant 0 : i32
    %c0_i32_0 = arith.constant 0 : i32
    %c0_i32_1 = arith.constant 0 : i32
    return %c0_i32, %c0_i32_0 : i32, i32
  }
  func.func @transform_4(%arg0: i32) -> (i32, i32) {
    %c0_i32 = arith.constant 0 : i32
    %c0_i32_0 = arith.constant 0 : i32
    %c0_i32_1 = arith.constant 0 : i32
    return %c0_i32, %c0_i32_0 : i32, i32
  }
  func.func @transform_5(%arg0: i32) -> (i32, i32) {
    %c0_i32 = arith.constant 0 : i32
    %c0_i32_0 = arith.constant 0 : i32
    return %arg0, %c0_i32 : i32, i32
  }
}

module attributes {stable_mosaic.version = 11 : i64} {
  func.func @_transition_kernel(%arg0: i32, %arg1: memref<64x16xf32, #tpu.memory_space<vmem>>, %arg2: memref<64x1xf32, #tpu.memory_space<vmem>>, %arg3: memref<1x16xf32, #tpu.memory_space<vmem>>, %arg4: memref<1x16xf32, #tpu.memory_space<vmem>>, %arg5: memref<16x32xbf16, #tpu.memory_space<vmem>>, %arg6: memref<1x32xf32, #tpu.memory_space<vmem>>, %arg7: memref<32x16xbf16, #tpu.memory_space<vmem>>, %arg8: memref<1x16xf32, #tpu.memory_space<vmem>>, %arg9: memref<64x16xf32, #tpu.memory_space<vmem>>) attributes {dimension_semantics = [#tpu.dimension_semantics<parallel>], iteration_bounds = array<i64: 1>, scalar_prefetch = 0 : i64, scratch_operands = 0 : i64, tpu.core_type = #tpu.core_type<tc>, window_params = [{transform_indices = @transform_0, window_bounds = array<i64: 64, 16>}, {transform_indices = @transform_1, window_bounds = array<i64: 64, 1>}, {pipeline_mode = #tpu.pipeline_mode<synchronous>, transform_indices = @transform_2, window_bounds = array<i64: 1, 16>}, {pipeline_mode = #tpu.pipeline_mode<synchronous>, transform_indices = @transform_3, window_bounds = array<i64: 1, 16>}, {pipeline_mode = #tpu.pipeline_mode<synchronous>, transform_indices = @transform_4, window_bounds = array<i64: 16, 32>}, {pipeline_mode = #tpu.pipeline_mode<synchronous>, transform_indices = @transform_5, window_bounds = array<i64: 1, 32>}, {pipeline_mode = #tpu.pipeline_mode<synchronous>, transform_indices = @transform_6, window_bounds = array<i64: 32, 16>}, {pipeline_mode = #tpu.pipeline_mode<synchronous>, transform_indices = @transform_7, window_bounds = array<i64: 1, 16>}, {transform_indices = @transform_8, window_bounds = array<i64: 64, 16>}]} {
    %c0 = arith.constant 0 : index
    %c0_0 = arith.constant 0 : index
    %0 = vector.load %arg1[%c0, %c0_0] : memref<64x16xf32, #tpu.memory_space<vmem>>, vector<64x16xf32>
    %cst = arith.constant dense<0.000000e+00> : vector<64xf32>
    %1 = vector.multi_reduction <add>, %0, %cst [1] : vector<64x16xf32> to vector<64xf32>
    %2 = vector.shape_cast %1 : vector<64xf32> to vector<64x1xf32>
    %cst_1 = arith.constant 1.600000e+01 : f32
    %3 = vector.broadcast %cst_1 : f32 to vector<64x1xf32>
    %4 = arith.divf %2, %3 : vector<64x1xf32>
    %5 = vector.broadcast %4 : vector<64x1xf32> to vector<64x16xf32>
    %6 = arith.subf %0, %5 : vector<64x16xf32>
    %7 = arith.mulf %6, %6 : vector<64x16xf32>
    %cst_2 = arith.constant dense<0.000000e+00> : vector<64xf32>
    %8 = vector.multi_reduction <add>, %7, %cst_2 [1] : vector<64x16xf32> to vector<64xf32>
    %9 = vector.shape_cast %8 : vector<64xf32> to vector<64x1xf32>
    %cst_3 = arith.constant 1.600000e+01 : f32
    %10 = vector.broadcast %cst_3 : f32 to vector<64x1xf32>
    %11 = arith.divf %9, %10 : vector<64x1xf32>
    %cst_4 = arith.constant 9.99999974E-6 : f32
    %12 = vector.broadcast %cst_4 : f32 to vector<64x1xf32>
    %13 = arith.addf %11, %12 : vector<64x1xf32>
    %14 = math.rsqrt %13 : vector<64x1xf32>
    %15 = vector.broadcast %14 : vector<64x1xf32> to vector<64x16xf32>
    %16 = arith.mulf %6, %15 : vector<64x16xf32>
    %c0_5 = arith.constant 0 : index
    %c0_6 = arith.constant 0 : index
    %17 = vector.load %arg3[%c0_5, %c0_6] : memref<1x16xf32, #tpu.memory_space<vmem>>, vector<1x16xf32>
    %18 = vector.broadcast %17 : vector<1x16xf32> to vector<64x16xf32>
    %19 = arith.mulf %16, %18 : vector<64x16xf32>
    %c0_7 = arith.constant 0 : index
    %c0_8 = arith.constant 0 : index
    %20 = vector.load %arg4[%c0_7, %c0_8] : memref<1x16xf32, #tpu.memory_space<vmem>>, vector<1x16xf32>
    %21 = vector.broadcast %20 : vector<1x16xf32> to vector<64x16xf32>
    %22 = arith.addf %19, %21 : vector<64x16xf32>
    %23 = arith.truncf %22 : vector<64x16xf32> to vector<64x16xbf16>
    %c0_9 = arith.constant 0 : index
    %c0_10 = arith.constant 0 : index
    %24 = vector.load %arg5[%c0_9, %c0_10] : memref<16x32xbf16, #tpu.memory_space<vmem>>, vector<16x32xbf16>
    %cst_11 = arith.constant dense<0.000000e+00> : vector<64x32xf32>
    %25 = tpu.matmul %23, %24, %cst_11 {dimension_numbers = #tpu.dot_dimension_numbers<[1], [0], [0], [1], [0, 0, 1, 1], [], []>} : vector<64x16xbf16>, vector<16x32xbf16>, vector<64x32xf32> -> vector<64x32xf32>
    %c0_12 = arith.constant 0 : index
    %c0_13 = arith.constant 0 : index
    %26 = vector.load %arg6[%c0_12, %c0_13] : memref<1x32xf32, #tpu.memory_space<vmem>>, vector<1x32xf32>
    %27 = vector.broadcast %26 : vector<1x32xf32> to vector<64x32xf32>
    %28 = arith.addf %25, %27 : vector<64x32xf32>
    %cst_14 = arith.constant 0.000000e+00 : f32
    %29 = vector.broadcast %cst_14 : f32 to vector<64x32xf32>
    %30 = arith.maximumf %28, %29 : vector<64x32xf32>
    %31 = arith.truncf %30 : vector<64x32xf32> to vector<64x32xbf16>
    %c0_15 = arith.constant 0 : index
    %c0_16 = arith.constant 0 : index
    %32 = vector.load %arg7[%c0_15, %c0_16] : memref<32x16xbf16, #tpu.memory_space<vmem>>, vector<32x16xbf16>
    %cst_17 = arith.constant dense<0.000000e+00> : vector<64x16xf32>
    %33 = tpu.matmul %31, %32, %cst_17 {dimension_numbers = #tpu.dot_dimension_numbers<[1], [0], [0], [1], [0, 0, 1, 1], [], []>} : vector<64x32xbf16>, vector<32x16xbf16>, vector<64x16xf32> -> vector<64x16xf32>
    %c0_18 = arith.constant 0 : index
    %c0_19 = arith.constant 0 : index
    %34 = vector.load %arg8[%c0_18, %c0_19] : memref<1x16xf32, #tpu.memory_space<vmem>>, vector<1x16xf32>
    %35 = vector.broadcast %34 : vector<1x16xf32> to vector<64x16xf32>
    %36 = arith.addf %33, %35 : vector<64x16xf32>
    %c0_20 = arith.constant 0 : index
    %c0_21 = arith.constant 0 : index
    %37 = vector.load %arg2[%c0_20, %c0_21] : memref<64x1xf32, #tpu.memory_space<vmem>>, vector<64x1xf32>
    %38 = vector.broadcast %37 : vector<64x1xf32> to vector<64x16xf32>
    %39 = arith.mulf %36, %38 : vector<64x16xf32>
    %c0_22 = arith.constant 0 : index
    %c0_23 = arith.constant 0 : index
    %40 = vector.load %arg9[%c0_22, %c0_23] : memref<64x16xf32, #tpu.memory_space<vmem>>, vector<64x16xf32>
    tpu.vector_store %arg9[%c0_22, %c0_23], %39 {strides = array<i32>} : memref<64x16xf32, #tpu.memory_space<vmem>>, vector<64x16xf32>,
    return
  }
  func.func @transform_0(%arg0: i32) -> (i32, i32) {
    %c0_i32 = arith.constant 0 : i32
    %c0_i32_0 = arith.constant 0 : i32
    return %arg0, %c0_i32 : i32, i32
  }
  func.func @transform_1(%arg0: i32) -> (i32, i32) {
    %c0_i32 = arith.constant 0 : i32
    %c0_i32_0 = arith.constant 0 : i32
    return %arg0, %c0_i32 : i32, i32
  }
  func.func @transform_2(%arg0: i32) -> (i32, i32) {
    %c0_i32 = arith.constant 0 : i32
    %c0_i32_0 = arith.constant 0 : i32
    %c0_i32_1 = arith.constant 0 : i32
    return %c0_i32, %c0_i32_0 : i32, i32
  }
  func.func @transform_3(%arg0: i32) -> (i32, i32) {
    %c0_i32 = arith.constant 0 : i32
    %c0_i32_0 = arith.constant 0 : i32
    %c0_i32_1 = arith.constant 0 : i32
    return %c0_i32, %c0_i32_0 : i32, i32
  }
  func.func @transform_4(%arg0: i32) -> (i32, i32) {
    %c0_i32 = arith.constant 0 : i32
    %c0_i32_0 = arith.constant 0 : i32
    %c0_i32_1 = arith.constant 0 : i32
    return %c0_i32, %c0_i32_0 : i32, i32
  }
  func.func @transform_5(%arg0: i32) -> (i32, i32) {
    %c0_i32 = arith.constant 0 : i32
    %c0_i32_0 = arith.constant 0 : i32
    %c0_i32_1 = arith.constant 0 : i32
    return %c0_i32, %c0_i32_0 : i32, i32
  }
  func.func @transform_6(%arg0: i32) -> (i32, i32) {
    %c0_i32 = arith.constant 0 : i32
    %c0_i32_0 = arith.constant 0 : i32
    %c0_i32_1 = arith.constant 0 : i32
    return %c0_i32, %c0_i32_0 : i32, i32
  }
  func.func @transform_7(%arg0: i32) -> (i32, i32) {
    %c0_i32 = arith.constant 0 : i32
    %c0_i32_0 = arith.constant 0 : i32
    %c0_i32_1 = arith.constant 0 : i32
    return %c0_i32, %c0_i32_0 : i32, i32
  }
  func.func @transform_8(%arg0: i32) -> (i32, i32) {
    %c0_i32 = arith.constant 0 : i32
    %c0_i32_0 = arith.constant 0 : i32
    return %arg0, %c0_i32 : i32, i32
  }
}

</mosaic_0001>

<llo_original>
// kernel: _lambda_.26
$region0: #{_lambda_.26}
  #allocation0 [shape = 'u32[]', space=smem, size = 0x4, offset = 0x4, fixed_abs, tag = 'smem constant byte address 0x4 - core index']
  #allocation1 [shape = 'u32[72,128]{1,0:T(1,128)}', space=vmem, size = 0x9000, scoped, tag = 'internal scratch']
  %s0 = inlined_call_operand.vmem [shape: f32[64,16], index: 0, kind: input, shape index: {}]
  %s1 = inlined_call_operand.vmem [shape: f32[1,16], index: 1, kind: input, shape index: {}]
  %s2 = inlined_call_operand.vmem [shape: f32[1,16], index: 2, kind: input, shape index: {}]
  %s3 = inlined_call_operand.vmem [shape: bf16[16,2], index: 3, kind: input, shape index: {}]
  %s4 = inlined_call_operand.vmem [shape: f32[1,2], index: 4, kind: input, shape index: {}]
  %s5 = inlined_call_operand.vmem [shape: f32[64,2], index: 5, kind: output, shape index: {}]
  %s6 = sld [smem:[#allocation0]]
  $region30: #{_lambda_.26} parent=0
    _
  %s8 = ssub.s32 1, %s6
  %s9 = scalar_select 0, %s8, %s6
  // Predicated region
  $region2: #{_lambda_.26} parent=0 // pred_check
    _
  $region3: #{_lambda_.26} parent=0 // pred_check_branch
    %11 = sbr.rel (0) target = $region5
  $region4: #{_lambda_.26} parent=0 // pred_region
    _
  $region5: #{_lambda_.26} parent=0 // pred_fallthru
    _
  // Predicated region
  $region6: #{_lambda_.26} parent=0 // pred_check
    _
  $region7: #{_lambda_.26} parent=0 // pred_check_branch
    %13 = sbr.rel (0) target = $region9
  $region8: #{_lambda_.26} parent=0 // pred_region
    _
  $region9: #{_lambda_.26} parent=0 // pred_fallthru
    _
  // Predicated region
  $region10: #{_lambda_.26} parent=0 // pred_check
    _
  $region11: #{_lambda_.26} parent=0 // pred_check_branch
    %15 = sbr.rel (0) target = $region13
  $region12: #{_lambda_.26} parent=0 // pred_region
    _
  $region13: #{_lambda_.26} parent=0 // pred_fallthru
    _
  // Predicated region
  $region14: #{_lambda_.26} parent=0 // pred_check
    _
  $region15: #{_lambda_.26} parent=0 // pred_check_branch
    %17 = sbr.rel (0) target = $region17
  $region16: #{_lambda_.26} parent=0 // pred_region
    _
  $region17: #{_lambda_.26} parent=0 // pred_fallthru
    _
  // Predicated region
  $region18: #{_lambda_.26} parent=0 // pred_check
    _
  $region19: #{_lambda_.26} parent=0 // pred_check_branch
    %19 = sbr.rel (0) target = $region21
  $region20: #{_lambda_.26} parent=0 // pred_region
    _
  $region21: #{_lambda_.26} parent=0 // pred_fallthru
    _
  %v21 = vld [vmem:[%s0] sm:$0xff]
  %v22 = vld [vmem:[%s0 + $0x8] sm:$0xff]
  %v23 = vld [vmem:[%s0 + $0x10] sm:$0xff]
  %v24 = vld [vmem:[%s0 + $0x18] sm:$0xff]
  %v25 = vld [vmem:[%s0 + $0x20] sm:$0xff]
  %v26 = vld [vmem:[%s0 + $0x28] sm:$0xff]
  %v27 = vld [vmem:[%s0 + $0x30] sm:$0xff]
  %v28 = vld [vmem:[%s0 + $0x38] sm:$0xff]
  %vm29 = vcmask 130048
  %v30 = vsel %vm29, %v21, 0.0
  %31 = vadd.xlane.f32.xlu0 %v30
  %v32 = vpop.xlane.xlu0 %31
  %v33 = vsel %vm29, %v22, 0.0
  %34 = vadd.xlane.f32.xlu0 %v33
  %v35 = vpop.xlane.xlu0 %34
  %v36 = vsel %vm29, %v23, 0.0
  %37 = vadd.xlane.f32.xlu0 %v36
  %v38 = vpop.xlane.xlu0 %37
  %v39 = vsel %vm29, %v24, 0.0
  %40 = vadd.xlane.f32.xlu0 %v39
  %v41 = vpop.xlane.xlu0 %40
  %v42 = vsel %vm29, %v25, 0.0
  %43 = vadd.xlane.f32.xlu0 %v42
  %v44 = vpop.xlane.xlu0 %43
  %v45 = vsel %vm29, %v26, 0.0
  %46 = vadd.xlane.f32.xlu0 %v45
  %v47 = vpop.xlane.xlu0 %46
  %v48 = vsel %vm29, %v27, 0.0
  %49 = vadd.xlane.f32.xlu0 %v48
  %v50 = vpop.xlane.xlu0 %49
  %v51 = vsel %vm29, %v28, 0.0
  %52 = vadd.xlane.f32.xlu0 %v51
  %v53 = vpop.xlane.xlu0 %52
  %v54 = vrcp.pop 16.0
  %v55 = vmul.f32 16.0, %v54
  %v56 = vsub.f32 1.0, %v55
  %v57 = vmul.f32 %v54, %v56
  %v58 = vadd.f32 %v54, %v57
  %vm59 = vweird.f32 %v54
  %v60 = vsel %vm59, %v54, %v58
  %v61 = vmul.f32 %v32, %v60
  %v62 = vmul.f32 %v35, %v60
  %v63 = vmul.f32 %v38, %v60
  %v64 = vmul.f32 %v41, %v60
  %v65 = vmul.f32 %v44, %v60
  %v66 = vmul.f32 %v47, %v60
  %v67 = vmul.f32 %v50, %v60
  %v68 = vmul.f32 %v53, %v60
  %v69 = vsub.f32 %v21, %v61
  %v70 = vsub.f32 %v22, %v62
  %v71 = vsub.f32 %v23, %v63
  %v72 = vsub.f32 %v24, %v64
  %v73 = vsub.f32 %v25, %v65
  %v74 = vsub.f32 %v26, %v66
  %v75 = vsub.f32 %v27, %v67
  %v76 = vsub.f32 %v28, %v68
  %v77 = vmul.f32 %v69, %v69
  %v78 = vmul.f32 %v70, %v70
  %v79 = vmul.f32 %v71, %v71
  %v80 = vmul.f32 %v72, %v72
  %v81 = vmul.f32 %v73, %v73
  %v82 = vmul.f32 %v74, %v74
  %v83 = vmul.f32 %v75, %v75
  %v84 = vmul.f32 %v76, %v76
  %v85 = vsel %vm29, %v77, 0.0
  %86 = vadd.xlane.f32.xlu0 %v85
  %v87 = vpop.xlane.xlu0 %86
  %v88 = vsel %vm29, %v78, 0.0
  %89 = vadd.xlane.f32.xlu0 %v88
  %v90 = vpop.xlane.xlu0 %89
  %v91 = vsel %vm29, %v79, 0.0
  %92 = vadd.xlane.f32.xlu0 %v91
  %v93 = vpop.xlane.xlu0 %92
  %v94 = vsel %vm29, %v80, 0.0
  %95 = vadd.xlane.f32.xlu0 %v94
  %v96 = vpop.xlane.xlu0 %95
  %v97 = vsel %vm29, %v81, 0.0
  %98 = vadd.xlane.f32.xlu0 %v97
  %v99 = vpop.xlane.xlu0 %98
  %v100 = vsel %vm29, %v82, 0.0
  %101 = vadd.xlane.f32.xlu0 %v100
  %v102 = vpop.xlane.xlu0 %101
  %v103 = vsel %vm29, %v83, 0.0
  %104 = vadd.xlane.f32.xlu0 %v103
  %v105 = vpop.xlane.xlu0 %104
  %v106 = vsel %vm29, %v84, 0.0
  %107 = vadd.xlane.f32.xlu0 %v106
  %v108 = vpop.xlane.xlu0 %107
  %v109 = vmul.f32 %v87, %v60
  %v110 = vmul.f32 %v90, %v60
  %v111 = vmul.f32 %v93, %v60
  %v112 = vmul.f32 %v96, %v60
  %v113 = vmul.f32 %v99, %v60
  %v114 = vmul.f32 %v102, %v60
  %v115 = vmul.f32 %v105, %v60
  %v116 = vmul.f32 %v108, %v60
  %v117 = vadd.f32 %v109, 1e-05
  %v118 = vadd.f32 %v110, 1e-05
  %v119 = vadd.f32 %v111, 1e-05
  %v120 = vadd.f32 %v112, 1e-05
  %v121 = vadd.f32 %v113, 1e-05
  %v122 = vadd.f32 %v114, 1e-05
  %v123 = vadd.f32 %v115, 1e-05
  %v124 = vadd.f32 %v116, 1e-05
  %v125 = vrsqrt.pop %v117
  %v126 = vmul.f32 %v125, %v117
  %v127 = vmul.f32 %v126, %v125
  %v128 = vmul.f32 0.5, %v127
  %v129 = vsub.f32 1.5, %v128
  %v130 = vmul.f32 %v125, %v129
  %vm131 = vweird.f32 %v117
  %vm132 = vweird.f32 %v125
  %vm133 = vmor %vm131, %vm132
  %v134 = vsel %vm133, %v125, %v130
  %v135 = vrsqrt.pop %v118
  %v136 = vmul.f32 %v135, %v118
  %v137 = vmul.f32 %v136, %v135
  %v138 = vmul.f32 0.5, %v137
  %v139 = vsub.f32 1.5, %v138
  %v140 = vmul.f32 %v135, %v139
  %vm141 = vweird.f32 %v118
  %vm142 = vweird.f32 %v135
  %vm143 = vmor %vm141, %vm142
  %v144 = vsel %vm143, %v135, %v140
  %v145 = vrsqrt.pop %v119
  %v146 = vmul.f32 %v145, %v119
  %v147 = vmul.f32 %v146, %v145
  %v148 = vmul.f32 0.5, %v147
  %v149 = vsub.f32 1.5, %v148
  %v150 = vmul.f32 %v145, %v149
  %vm151 = vweird.f32 %v119
  %vm152 = vweird.f32 %v145
  %vm153 = vmor %vm151, %vm152
  %v154 = vsel %vm153, %v145, %v150
  %v155 = vrsqrt.pop %v120
  %v156 = vmul.f32 %v155, %v120
  %v157 = vmul.f32 %v156, %v155
  %v158 = vmul.f32 0.5, %v157
  %v159 = vsub.f32 1.5, %v158
  %v160 = vmul.f32 %v155, %v159
  %vm161 = vweird.f32 %v120
  %vm162 = vweird.f32 %v155
  %vm163 = vmor %vm161, %vm162
  %v164 = vsel %vm163, %v155, %v160
  %v165 = vrsqrt.pop %v121
  %v166 = vmul.f32 %v165, %v121
  %v167 = vmul.f32 %v166, %v165
  %v168 = vmul.f32 0.5, %v167
  %v169 = vsub.f32 1.5, %v168
  %v170 = vmul.f32 %v165, %v169
  %vm171 = vweird.f32 %v121
  %vm172 = vweird.f32 %v165
  %vm173 = vmor %vm171, %vm172
  %v174 = vsel %vm173, %v165, %v170
  %v175 = vrsqrt.pop %v122
  %v176 = vmul.f32 %v175, %v122
  %v177 = vmul.f32 %v176, %v175
  %v178 = vmul.f32 0.5, %v177
  %v179 = vsub.f32 1.5, %v178
  %v180 = vmul.f32 %v175, %v179
  %vm181 = vweird.f32 %v122
  %vm182 = vweird.f32 %v175
  %vm183 = vmor %vm181, %vm182
  %v184 = vsel %vm183, %v175, %v180
  %v185 = vrsqrt.pop %v123
  %v186 = vmul.f32 %v185, %v123
  %v187 = vmul.f32 %v186, %v185
  %v188 = vmul.f32 0.5, %v187
  %v189 = vsub.f32 1.5, %v188
  %v190 = vmul.f32 %v185, %v189
  %vm191 = vweird.f32 %v123
  %vm192 = vweird.f32 %v185
  %vm193 = vmor %vm191, %vm192
  %v194 = vsel %vm193, %v185, %v190
  %v195 = vrsqrt.pop %v124
  %v196 = vmul.f32 %v195, %v124
  %v197 = vmul.f32 %v196, %v195
  %v198 = vmul.f32 0.5, %v197
  %v199 = vsub.f32 1.5, %v198
  %v200 = vmul.f32 %v195, %v199
  %vm201 = vweird.f32 %v124
  %vm202 = vweird.f32 %v195
  %vm203 = vmor %vm201, %vm202
  %v204 = vsel %vm203, %v195, %v200
  %v205 = vmul.f32 %v69, %v134
  %v206 = vmul.f32 %v70, %v144
  %v207 = vmul.f32 %v71, %v154
  %v208 = vmul.f32 %v72, %v164
  %v209 = vmul.f32 %v73, %v174
  %v210 = vmul.f32 %v74, %v184
  %v211 = vmul.f32 %v75, %v194
  %v212 = vmul.f32 %v76, %v204
  %v213 = vld [vmem:[%s1] sm:$0x1]
  %v215 = vperm.slane %v213, 0
  %v217 = vmul.f32 %v205, %v215
  %v218 = vmul.f32 %v206, %v215
  %v219 = vmul.f32 %v207, %v215
  %v220 = vmul.f32 %v208, %v215
  %v221 = vmul.f32 %v209, %v215
  %v222 = vmul.f32 %v210, %v215
  %v223 = vmul.f32 %v211, %v215
  %v224 = vmul.f32 %v212, %v215
  %v225 = vld [vmem:[%s2] sm:$0x1]
  %v227 = vperm.slane %v225, 0
  %v229 = vadd.f32 %v217, %v227
  %v230 = vadd.f32 %v218, %v227
  %v231 = vadd.f32 %v219, %v227
  %v232 = vadd.f32 %v220, %v227
  %v233 = vadd.f32 %v221, %v227
  %v234 = vadd.f32 %v222, %v227
  %v235 = vadd.f32 %v223, %v227
  %v236 = vadd.f32 %v224, %v227
  %v237 = vpack.c.bf16 %v230, %v229
  %v238 = vpack.c.bf16 %v232, %v231
  %v239 = vpack.c.bf16 %v234, %v233
  %v240 = vpack.c.bf16 %v236, %v235
  %v241 = vld [vmem:[%s3] sm:$0xf]
  %v242 = vld [vmem:[%s3 + $0x4] sm:$0xf]
  %v243 = vld [vmem:[%s4] sm:$0x1]
  %v245 = vperm.slane %v243, 0
  %v249 = vunpack.c.l.b16 %v241
  %v250 = vunpack.c.l.b16 %v242
  %v251 = vpack.c.b16 %v250, %v249
  %v254 = vsel %vm29, %v237, 0
  %v257 = vsel %vm29, %v238, 0
  %v260 = vsel %vm29, %v239, 0
  %v263 = vsel %vm29, %v240, 0
  %265 = vmatpush.bf16.msra.mxu0 0
  %266 = vmatpush.bf16.msra.mxu0 0
  %267 = vmatpush.bf16.msra.mxu0 0
  %268 = vmatpush.bf16.msra.mxu0 0
  %269 = vmatpush.bf16.msra.mxu0 0
  %270 = vmatpush.bf16.msra.mxu0 0
  %271 = vmatpush.bf16.msra.mxu0 0
  %272 = vmatpush.bf16.msra.mxu0 %v251
  %273 = vmatmul.bf16.gmra.mxu0 %v254
  %v274 = vpop.f32.mrf.mxu0
  %v275 = vadd.f32 %v245, %v274
  %v276 = vpop.f32.mrf.mxu0
  %v277 = vadd.f32 %v245, %v276
  %278 = vmatmul.bf16.gmra.mxu0 %v257
  %v279 = vpop.f32.mrf.mxu0
  %v280 = vadd.f32 %v245, %v279
  %v281 = vpop.f32.mrf.mxu0
  %v282 = vadd.f32 %v245, %v281
  %283 = vmatmul.bf16.gmra.mxu0 %v260
  %v284 = vpop.f32.mrf.mxu0
  %v285 = vadd.f32 %v245, %v284
  %v286 = vpop.f32.mrf.mxu0
  %v287 = vadd.f32 %v245, %v286
  %288 = vmatmul.bf16.gmra.mxu0 %v263
  %v289 = vpop.f32.mrf.mxu0
  %v290 = vadd.f32 %v245, %v289
  %v291 = vpop.f32.mrf.mxu0
  %v292 = vadd.f32 %v245, %v291
  %293 = vdwg.mxu0
  %vm294 = vcmask 15360
  %295 = vst.msk [vmem:[%s5] sm:$0xff] %vm294, %v275
  %296 = vst.msk [vmem:[%s5 + $0x8] sm:$0xff] %vm294, %v277
  %297 = vst.msk [vmem:[%s5 + $0x10] sm:$0xff] %vm294, %v280
  %298 = vst.msk [vmem:[%s5 + $0x18] sm:$0xff] %vm294, %v282
  %299 = vst.msk [vmem:[%s5 + $0x20] sm:$0xff] %vm294, %v285
  %300 = vst.msk [vmem:[%s5 + $0x28] sm:$0xff] %vm294, %v287
  %301 = vst.msk [vmem:[%s5 + $0x30] sm:$0xff] %vm294, %v290
  %302 = vst.msk [vmem:[%s5 + $0x38] sm:$0xff] %vm294, %v292
  // Predicated region
  $region22: #{_lambda_.26} parent=0 // pred_check
    _
  $region23: #{_lambda_.26} parent=0 // pred_check_branch
    %304 = sbr.rel (0) target = $region25
  $region24: #{_lambda_.26} parent=0 // pred_region
    _
  $region25: #{_lambda_.26} parent=0 // pred_fallthru
    _
  // Predicated region
  $region26: #{_lambda_.26} parent=0 // pred_check
    _
  $region27: #{_lambda_.26} parent=0 // pred_check_branch
    %306 = sbr.rel (0) target = $region29
  $region28: #{_lambda_.26} parent=0 // pred_region
    _
  $region29: #{_lambda_.26} parent=0 // pred_fallthru
    _

// kernel: _lambda_.25
$region0: #{_lambda_.25}
  #allocation0 [shape = 'u32[]', space=smem, size = 0x4, offset = 0x4, fixed_abs, tag = 'smem constant byte address 0x4 - core index']
  #allocation1 [shape = 'u32[72,128]{1,0:T(1,128)}', space=vmem, size = 0x9000, scoped, tag = 'internal scratch']
  %s0 = inlined_call_operand.vmem [shape: f32[64,8], index: 0, kind: input, shape index: {}]
  %s1 = inlined_call_operand.vmem [shape: f32[1,8], index: 1, kind: input, shape index: {}]
  %s2 = inlined_call_operand.vmem [shape: f32[1,8], index: 2, kind: input, shape index: {}]
  %s3 = inlined_call_operand.vmem [shape: bf16[8,64], index: 3, kind: input, shape index: {}]
  %s4 = inlined_call_operand.vmem [shape: f32[1,64], index: 4, kind: input, shape index: {}]
  %s5 = inlined_call_operand.vmem [shape: f32[64,64], index: 5, kind: output, shape index: {}]
  %s6 = sld [smem:[#allocation0]]
  $region30: #{_lambda_.25} parent=0
    _
  %s8 = ssub.s32 1, %s6
  %s9 = scalar_select 0, %s8, %s6
  // Predicated region
  $region2: #{_lambda_.25} parent=0 // pred_check
    _
  $region3: #{_lambda_.25} parent=0 // pred_check_branch
    %11 = sbr.rel (0) target = $region5
  $region4: #{_lambda_.25} parent=0 // pred_region
    _
  $region5: #{_lambda_.25} parent=0 // pred_fallthru
    _
  // Predicated region
  $region6: #{_lambda_.25} parent=0 // pred_check
    _
  $region7: #{_lambda_.25} parent=0 // pred_check_branch
    %13 = sbr.rel (0) target = $region9
  $region8: #{_lambda_.25} parent=0 // pred_region
    _
  $region9: #{_lambda_.25} parent=0 // pred_fallthru
    _
  // Predicated region
  $region10: #{_lambda_.25} parent=0 // pred_check
    _
  $region11: #{_lambda_.25} parent=0 // pred_check_branch
    %15 = sbr.rel (0) target = $region13
  $region12: #{_lambda_.25} parent=0 // pred_region
    _
  $region13: #{_lambda_.25} parent=0 // pred_fallthru
    _
  // Predicated region
  $region14: #{_lambda_.25} parent=0 // pred_check
    _
  $region15: #{_lambda_.25} parent=0 // pred_check_branch
    %17 = sbr.rel (0) target = $region17
  $region16: #{_lambda_.25} parent=0 // pred_region
    _
  $region17: #{_lambda_.25} parent=0 // pred_fallthru
    _
  // Predicated region
  $region18: #{_lambda_.25} parent=0 // pred_check
    _
  $region19: #{_lambda_.25} parent=0 // pred_check_branch
    %19 = sbr.rel (0) target = $region21
  $region20: #{_lambda_.25} parent=0 // pred_region
    _
  $region21: #{_lambda_.25} parent=0 // pred_fallthru
    _
  %v21 = vld [vmem:[%s0] sm:$0xff]
  %v22 = vld [vmem:[%s0 + $0x8] sm:$0xff]
  %v23 = vld [vmem:[%s0 + $0x10] sm:$0xff]
  %v24 = vld [vmem:[%s0 + $0x18] sm:$0xff]
  %v25 = vld [vmem:[%s0 + $0x20] sm:$0xff]
  %v26 = vld [vmem:[%s0 + $0x28] sm:$0xff]
  %v27 = vld [vmem:[%s0 + $0x30] sm:$0xff]
  %v28 = vld [vmem:[%s0 + $0x38] sm:$0xff]
  %vm29 = vcmask 64512
  %v30 = vsel %vm29, %v21, 0.0
  %31 = vadd.xlane.f32.xlu0 %v30
  %v32 = vpop.xlane.xlu0 %31
  %v33 = vsel %vm29, %v22, 0.0
  %34 = vadd.xlane.f32.xlu0 %v33
  %v35 = vpop.xlane.xlu0 %34
  %v36 = vsel %vm29, %v23, 0.0
  %37 = vadd.xlane.f32.xlu0 %v36
  %v38 = vpop.xlane.xlu0 %37
  %v39 = vsel %vm29, %v24, 0.0
  %40 = vadd.xlane.f32.xlu0 %v39
  %v41 = vpop.xlane.xlu0 %40
  %v42 = vsel %vm29, %v25, 0.0
  %43 = vadd.xlane.f32.xlu0 %v42
  %v44 = vpop.xlane.xlu0 %43
  %v45 = vsel %vm29, %v26, 0.0
  %46 = vadd.xlane.f32.xlu0 %v45
  %v47 = vpop.xlane.xlu0 %46
  %v48 = vsel %vm29, %v27, 0.0
  %49 = vadd.xlane.f32.xlu0 %v48
  %v50 = vpop.xlane.xlu0 %49
  %v51 = vsel %vm29, %v28, 0.0
  %52 = vadd.xlane.f32.xlu0 %v51
  %v53 = vpop.xlane.xlu0 %52
  %v54 = vrcp.pop 8.0
  %v55 = vmul.f32 8.0, %v54
  %v56 = vsub.f32 1.0, %v55
  %v57 = vmul.f32 %v54, %v56
  %v58 = vadd.f32 %v54, %v57
  %vm59 = vweird.f32 %v54
  %v60 = vsel %vm59, %v54, %v58
  %v61 = vmul.f32 %v32, %v60
  %v62 = vmul.f32 %v35, %v60
  %v63 = vmul.f32 %v38, %v60
  %v64 = vmul.f32 %v41, %v60
  %v65 = vmul.f32 %v44, %v60
  %v66 = vmul.f32 %v47, %v60
  %v67 = vmul.f32 %v50, %v60
  %v68 = vmul.f32 %v53, %v60
  %v69 = vsub.f32 %v21, %v61
  %v70 = vsub.f32 %v22, %v62
  %v71 = vsub.f32 %v23, %v63
  %v72 = vsub.f32 %v24, %v64
  %v73 = vsub.f32 %v25, %v65
  %v74 = vsub.f32 %v26, %v66
  %v75 = vsub.f32 %v27, %v67
  %v76 = vsub.f32 %v28, %v68
  %v77 = vmul.f32 %v69, %v69
  %v78 = vmul.f32 %v70, %v70
  %v79 = vmul.f32 %v71, %v71
  %v80 = vmul.f32 %v72, %v72
  %v81 = vmul.f32 %v73, %v73
  %v82 = vmul.f32 %v74, %v74
  %v83 = vmul.f32 %v75, %v75
  %v84 = vmul.f32 %v76, %v76
  %v85 = vsel %vm29, %v77, 0.0
  %86 = vadd.xlane.f32.xlu0 %v85
  %v87 = vpop.xlane.xlu0 %86
  %v88 = vsel %vm29, %v78, 0.0
  %89 = vadd.xlane.f32.xlu0 %v88
  %v90 = vpop.xlane.xlu0 %89
  %v91 = vsel %vm29, %v79, 0.0
  %92 = vadd.xlane.f32.xlu0 %v91
  %v93 = vpop.xlane.xlu0 %92
  %v94 = vsel %vm29, %v80, 0.0
  %95 = vadd.xlane.f32.xlu0 %v94
  %v96 = vpop.xlane.xlu0 %95
  %v97 = vsel %vm29, %v81, 0.0
  %98 = vadd.xlane.f32.xlu0 %v97
  %v99 = vpop.xlane.xlu0 %98
  %v100 = vsel %vm29, %v82, 0.0
  %101 = vadd.xlane.f32.xlu0 %v100
  %v102 = vpop.xlane.xlu0 %101
  %v103 = vsel %vm29, %v83, 0.0
  %104 = vadd.xlane.f32.xlu0 %v103
  %v105 = vpop.xlane.xlu0 %104
  %v106 = vsel %vm29, %v84, 0.0
  %107 = vadd.xlane.f32.xlu0 %v106
  %v108 = vpop.xlane.xlu0 %107
  %v109 = vmul.f32 %v87, %v60
  %v110 = vmul.f32 %v90, %v60
  %v111 = vmul.f32 %v93, %v60
  %v112 = vmul.f32 %v96, %v60
  %v113 = vmul.f32 %v99, %v60
  %v114 = vmul.f32 %v102, %v60
  %v115 = vmul.f32 %v105, %v60
  %v116 = vmul.f32 %v108, %v60
  %v117 = vadd.f32 %v109, 1e-05
  %v118 = vadd.f32 %v110, 1e-05
  %v119 = vadd.f32 %v111, 1e-05
  %v120 = vadd.f32 %v112, 1e-05
  %v121 = vadd.f32 %v113, 1e-05
  %v122 = vadd.f32 %v114, 1e-05
  %v123 = vadd.f32 %v115, 1e-05
  %v124 = vadd.f32 %v116, 1e-05
  %v125 = vrsqrt.pop %v117
  %v126 = vmul.f32 %v125, %v117
  %v127 = vmul.f32 %v126, %v125
  %v128 = vmul.f32 0.5, %v127
  %v129 = vsub.f32 1.5, %v128
  %v130 = vmul.f32 %v125, %v129
  %vm131 = vweird.f32 %v117
  %vm132 = vweird.f32 %v125
  %vm133 = vmor %vm131, %vm132
  %v134 = vsel %vm133, %v125, %v130
  %v135 = vrsqrt.pop %v118
  %v136 = vmul.f32 %v135, %v118
  %v137 = vmul.f32 %v136, %v135
  %v138 = vmul.f32 0.5, %v137
  %v139 = vsub.f32 1.5, %v138
  %v140 = vmul.f32 %v135, %v139
  %vm141 = vweird.f32 %v118
  %vm142 = vweird.f32 %v135
  %vm143 = vmor %vm141, %vm142
  %v144 = vsel %vm143, %v135, %v140
  %v145 = vrsqrt.pop %v119
  %v146 = vmul.f32 %v145, %v119
  %v147 = vmul.f32 %v146, %v145
  %v148 = vmul.f32 0.5, %v147
  %v149 = vsub.f32 1.5, %v148
  %v150 = vmul.f32 %v145, %v149
  %vm151 = vweird.f32 %v119
  %vm152 = vweird.f32 %v145
  %vm153 = vmor %vm151, %vm152
  %v154 = vsel %vm153, %v145, %v150
  %v155 = vrsqrt.pop %v120
  %v156 = vmul.f32 %v155, %v120
  %v157 = vmul.f32 %v156, %v155
  %v158 = vmul.f32 0.5, %v157
  %v159 = vsub.f32 1.5, %v158
  %v160 = vmul.f32 %v155, %v159
  %vm161 = vweird.f32 %v120
  %vm162 = vweird.f32 %v155
  %vm163 = vmor %vm161, %vm162
  %v164 = vsel %vm163, %v155, %v160
  %v165 = vrsqrt.pop %v121
  %v166 = vmul.f32 %v165, %v121
  %v167 = vmul.f32 %v166, %v165
  %v168 = vmul.f32 0.5, %v167
  %v169 = vsub.f32 1.5, %v168
  %v170 = vmul.f32 %v165, %v169
  %vm171 = vweird.f32 %v121
  %vm172 = vweird.f32 %v165
  %vm173 = vmor %vm171, %vm172
  %v174 = vsel %vm173, %v165, %v170
  %v175 = vrsqrt.pop %v122
  %v176 = vmul.f32 %v175, %v122
  %v177 = vmul.f32 %v176, %v175
  %v178 = vmul.f32 0.5, %v177
  %v179 = vsub.f32 1.5, %v178
  %v180 = vmul.f32 %v175, %v179
  %vm181 = vweird.f32 %v122
  %vm182 = vweird.f32 %v175
  %vm183 = vmor %vm181, %vm182
  %v184 = vsel %vm183, %v175, %v180
  %v185 = vrsqrt.pop %v123
  %v186 = vmul.f32 %v185, %v123
  %v187 = vmul.f32 %v186, %v185
  %v188 = vmul.f32 0.5, %v187
  %v189 = vsub.f32 1.5, %v188
  %v190 = vmul.f32 %v185, %v189
  %vm191 = vweird.f32 %v123
  %vm192 = vweird.f32 %v185
  %vm193 = vmor %vm191, %vm192
  %v194 = vsel %vm193, %v185, %v190
  %v195 = vrsqrt.pop %v124
  %v196 = vmul.f32 %v195, %v124
  %v197 = vmul.f32 %v196, %v195
  %v198 = vmul.f32 0.5, %v197
  %v199 = vsub.f32 1.5, %v198
  %v200 = vmul.f32 %v195, %v199
  %vm201 = vweird.f32 %v124
  %vm202 = vweird.f32 %v195
  %vm203 = vmor %vm201, %vm202
  %v204 = vsel %vm203, %v195, %v200
  %v205 = vmul.f32 %v69, %v134
  %v206 = vmul.f32 %v70, %v144
  %v207 = vmul.f32 %v71, %v154
  %v208 = vmul.f32 %v72, %v164
  %v209 = vmul.f32 %v73, %v174
  %v210 = vmul.f32 %v74, %v184
  %v211 = vmul.f32 %v75, %v194
  %v212 = vmul.f32 %v76, %v204
  %v213 = vld [vmem:[%s1] sm:$0x1]
  %v215 = vperm.slane %v213, 0
  %v217 = vmul.f32 %v205, %v215
  %v218 = vmul.f32 %v206, %v215
  %v219 = vmul.f32 %v207, %v215
  %v220 = vmul.f32 %v208, %v215
  %v221 = vmul.f32 %v209, %v215
  %v222 = vmul.f32 %v210, %v215
  %v223 = vmul.f32 %v211, %v215
  %v224 = vmul.f32 %v212, %v215
  %v225 = vld [vmem:[%s2] sm:$0x1]
  %v227 = vperm.slane %v225, 0
  %v229 = vadd.f32 %v217, %v227
  %v230 = vadd.f32 %v218, %v227
  %v231 = vadd.f32 %v219, %v227
  %v232 = vadd.f32 %v220, %v227
  %v233 = vadd.f32 %v221, %v227
  %v234 = vadd.f32 %v222, %v227
  %v235 = vadd.f32 %v223, %v227
  %v236 = vadd.f32 %v224, %v227
  %v237 = vpack.c.bf16 %v230, %v229
  %v238 = vpack.c.bf16 %v232, %v231
  %v239 = vpack.c.bf16 %v234, %v233
  %v240 = vpack.c.bf16 %v236, %v235
  %v241 = vld [vmem:[%s3] sm:$0xf]
  %v242 = vld [vmem:[%s4] sm:$0x1]
  %v244 = vperm.slane %v242, 0
  %v247 = vsel %vm29, %v237, 0
  %v250 = vsel %vm29, %v238, 0
  %v253 = vsel %vm29, %v239, 0
  %v256 = vsel %vm29, %v240, 0
  %vm258 = vcmask 1043456
  %v260 = vsel %vm258, %v241, 0
  %262 = vmatpush.bf16.msra.mxu0 0
  %263 = vmatpush.bf16.msra.mxu0 0
  %264 = vmatpush.bf16.msra.mxu0 0
  %265 = vmatpush.bf16.msra.mxu0 0
  %266 = vmatpush.bf16.msra.mxu0 0
  %267 = vmatpush.bf16.msra.mxu0 0
  %268 = vmatpush.bf16.msra.mxu0 0
  %269 = vmatpush.bf16.msra.mxu0 %v260
  %270 = vmatmul.bf16.gmra.mxu0 %v247
  %v271 = vpop.f32.mrf.mxu0
  %v272 = vadd.f32 %v244, %v271
  %v273 = vpop.f32.mrf.mxu0
  %v274 = vadd.f32 %v244, %v273
  %275 = vmatmul.bf16.gmra.mxu0 %v250
  %v276 = vpop.f32.mrf.mxu0
  %v277 = vadd.f32 %v244, %v276
  %v278 = vpop.f32.mrf.mxu0
  %v279 = vadd.f32 %v244, %v278
  %280 = vmatmul.bf16.gmra.mxu0 %v253
  %v281 = vpop.f32.mrf.mxu0
  %v282 = vadd.f32 %v244, %v281
  %v283 = vpop.f32.mrf.mxu0
  %v284 = vadd.f32 %v244, %v283
  %285 = vmatmul.bf16.gmra.mxu0 %v256
  %v286 = vpop.f32.mrf.mxu0
  %v287 = vadd.f32 %v244, %v286
  %v288 = vpop.f32.mrf.mxu0
  %v289 = vadd.f32 %v244, %v288
  %290 = vdwg.mxu0
  %vm291 = vcmask 523264
  %292 = vst.msk [vmem:[%s5] sm:$0xff] %vm291, %v272
  %293 = vst.msk [vmem:[%s5 + $0x8] sm:$0xff] %vm291, %v274
  %294 = vst.msk [vmem:[%s5 + $0x10] sm:$0xff] %vm291, %v277
  %295 = vst.msk [vmem:[%s5 + $0x18] sm:$0xff] %vm291, %v279
  %296 = vst.msk [vmem:[%s5 + $0x20] sm:$0xff] %vm291, %v282
  %297 = vst.msk [vmem:[%s5 + $0x28] sm:$0xff] %vm291, %v284
  %298 = vst.msk [vmem:[%s5 + $0x30] sm:$0xff] %vm291, %v287
  %299 = vst.msk [vmem:[%s5 + $0x38] sm:$0xff] %vm291, %v289
  // Predicated region
  $region22: #{_lambda_.25} parent=0 // pred_check
    _
  $region23: #{_lambda_.25} parent=0 // pred_check_branch
    %301 = sbr.rel (0) target = $region25
  $region24: #{_lambda_.25} parent=0 // pred_region
    _
  $region25: #{_lambda_.25} parent=0 // pred_fallthru
    _
  // Predicated region
  $region26: #{_lambda_.25} parent=0 // pred_check
    _
  $region27: #{_lambda_.25} parent=0 // pred_check_branch
    %303 = sbr.rel (0) target = $region29
  $region28: #{_lambda_.25} parent=0 // pred_region
    _
  $region29: #{_lambda_.25} parent=0 // pred_fallthru
    _

// kernel: _lambda_.28
$region0: #{_lambda_.28}
  #allocation0 [shape = 'u32[]', space=smem, size = 0x4, offset = 0x4, fixed_abs, tag = 'smem constant byte address 0x4 - core index']
  #allocation1 [shape = 'u32[72,128]{1,0:T(1,128)}', space=vmem, size = 0x9000, scoped, tag = 'internal scratch']
  %s0 = inlined_call_operand.vmem [shape: f32[64,16], index: 0, kind: input, shape index: {}]
  %s1 = inlined_call_operand.vmem [shape: bf16[16,8], index: 1, kind: input, shape index: {}]
  %s2 = inlined_call_operand.vmem [shape: f32[1,8], index: 2, kind: input, shape index: {}]
  %s3 = inlined_call_operand.vmem [shape: f32[64,8], index: 3, kind: output, shape index: {}]
  %s4 = sld [smem:[#allocation0]]
  $region22: #{_lambda_.28} parent=0
    _
  %s6 = ssub.s32 1, %s4
  %s7 = scalar_select 0, %s6, %s4
  // Predicated region
  $region2: #{_lambda_.28} parent=0 // pred_check
    _
  $region3: #{_lambda_.28} parent=0 // pred_check_branch
    %9 = sbr.rel (0) target = $region5
  $region4: #{_lambda_.28} parent=0 // pred_region
    _
  $region5: #{_lambda_.28} parent=0 // pred_fallthru
    _
  // Predicated region
  $region6: #{_lambda_.28} parent=0 // pred_check
    _
  $region7: #{_lambda_.28} parent=0 // pred_check_branch
    %11 = sbr.rel (0) target = $region9
  $region8: #{_lambda_.28} parent=0 // pred_region
    _
  $region9: #{_lambda_.28} parent=0 // pred_fallthru
    _
  // Predicated region
  $region10: #{_lambda_.28} parent=0 // pred_check
    _
  $region11: #{_lambda_.28} parent=0 // pred_check_branch
    %13 = sbr.rel (0) target = $region13
  $region12: #{_lambda_.28} parent=0 // pred_region
    _
  $region13: #{_lambda_.28} parent=0 // pred_fallthru
    _
  %v15 = vld [vmem:[%s0] sm:$0xff]
  %v16 = vld [vmem:[%s0 + $0x8] sm:$0xff]
  %v17 = vld [vmem:[%s0 + $0x10] sm:$0xff]
  %v18 = vld [vmem:[%s0 + $0x18] sm:$0xff]
  %v19 = vld [vmem:[%s0 + $0x20] sm:$0xff]
  %v20 = vld [vmem:[%s0 + $0x28] sm:$0xff]
  %v21 = vld [vmem:[%s0 + $0x30] sm:$0xff]
  %v22 = vld [vmem:[%s0 + $0x38] sm:$0xff]
  %v23 = vpack.c.bf16 %v16, %v15
  %v24 = vpack.c.bf16 %v18, %v17
  %v25 = vpack.c.bf16 %v20, %v19
  %v26 = vpack.c.bf16 %v22, %v21
  %v27 = vld [vmem:[%s1] sm:$0xf]
  %v28 = vld [vmem:[%s1 + $0x4] sm:$0xf]
  %v29 = vld [vmem:[%s2] sm:$0x1]
  %v31 = vperm.slane %v29, 0
  %v35 = vunpack.c.l.b16 %v27
  %v36 = vunpack.c.l.b16 %v28
  %v37 = vpack.c.b16 %v36, %v35
  %vm39 = vcmask 130048
  %v41 = vsel %vm39, %v23, 0
  %v44 = vsel %vm39, %v24, 0
  %v47 = vsel %vm39, %v25, 0
  %v50 = vsel %vm39, %v26, 0
  %52 = vmatpush.bf16.msra.mxu0 0
  %53 = vmatpush.bf16.msra.mxu0 0
  %54 = vmatpush.bf16.msra.mxu0 0
  %55 = vmatpush.bf16.msra.mxu0 0
  %56 = vmatpush.bf16.msra.mxu0 0
  %57 = vmatpush.bf16.msra.mxu0 0
  %58 = vmatpush.bf16.msra.mxu0 0
  %59 = vmatpush.bf16.msra.mxu0 %v37
  %60 = vmatmul.bf16.gmra.mxu0 %v41
  %v61 = vpop.f32.mrf.mxu0
  %v62 = vadd.f32 %v31, %v61
  %v63 = vpop.f32.mrf.mxu0
  %v64 = vadd.f32 %v31, %v63
  %65 = vmatmul.bf16.gmra.mxu0 %v44
  %v66 = vpop.f32.mrf.mxu0
  %v67 = vadd.f32 %v31, %v66
  %v68 = vpop.f32.mrf.mxu0
  %v69 = vadd.f32 %v31, %v68
  %70 = vmatmul.bf16.gmra.mxu0 %v47
  %v71 = vpop.f32.mrf.mxu0
  %v72 = vadd.f32 %v31, %v71
  %v73 = vpop.f32.mrf.mxu0
  %v74 = vadd.f32 %v31, %v73
  %75 = vmatmul.bf16.gmra.mxu0 %v50
  %v76 = vpop.f32.mrf.mxu0
  %v77 = vadd.f32 %v31, %v76
  %v78 = vpop.f32.mrf.mxu0
  %v79 = vadd.f32 %v31, %v78
  %80 = vdwg.mxu0
  %vm81 = vcmask 64512
  %82 = vst.msk [vmem:[%s3] sm:$0xff] %vm81, %v62
  %83 = vst.msk [vmem:[%s3 + $0x8] sm:$0xff] %vm81, %v64
  %84 = vst.msk [vmem:[%s3 + $0x10] sm:$0xff] %vm81, %v67
  %85 = vst.msk [vmem:[%s3 + $0x18] sm:$0xff] %vm81, %v69
  %86 = vst.msk [vmem:[%s3 + $0x20] sm:$0xff] %vm81, %v72
  %87 = vst.msk [vmem:[%s3 + $0x28] sm:$0xff] %vm81, %v74
  %88 = vst.msk [vmem:[%s3 + $0x30] sm:$0xff] %vm81, %v77
  %89 = vst.msk [vmem:[%s3 + $0x38] sm:$0xff] %vm81, %v79
  // Predicated region
  $region14: #{_lambda_.28} parent=0 // pred_check
    _
  $region15: #{_lambda_.28} parent=0 // pred_check_branch
    %91 = sbr.rel (0) target = $region17
  $region16: #{_lambda_.28} parent=0 // pred_region
    _
  $region17: #{_lambda_.28} parent=0 // pred_fallthru
    _
  // Predicated region
  $region18: #{_lambda_.28} parent=0 // pred_check
    _
  $region19: #{_lambda_.28} parent=0 // pred_check_branch
    %93 = sbr.rel (0) target = $region21
  $region20: #{_lambda_.28} parent=0 // pred_region
    _
  $region21: #{_lambda_.28} parent=0 // pred_fallthru
    _

// kernel: _lambda_.27
$region0: #{_lambda_.27}
  #allocation0 [shape = 'u32[]', space=smem, size = 0x4, offset = 0x4, fixed_abs, tag = 'smem constant byte address 0x4 - core index']
  #allocation1 [shape = 'u32[72,128]{1,0:T(1,128)}', space=vmem, size = 0x9000, scoped, tag = 'internal scratch']
  %s0 = inlined_call_operand.vmem [shape: bf16[1,8,2,8,8], index: 0, kind: input, shape index: {}]
  %s1 = inlined_call_operand.vmem [shape: bf16[1,8,2,8,8], index: 1, kind: input, shape index: {}]
  %s2 = inlined_call_operand.vmem [shape: bf16[1,8,2,8,8], index: 2, kind: input, shape index: {}]
  %s3 = inlined_call_operand.vmem [shape: f32[1,2,8,8], index: 3, kind: input, shape index: {}]
  %s4 = inlined_call_operand.vmem [shape: f32[1,8,1,8], index: 4, kind: input, shape index: {}]
  %s5 = inlined_call_operand.vmem [shape: f32[1,8,2,8,8], index: 5, kind: output, shape index: {}]
  %s6 = sld [smem:[#allocation0]]
  $region30: #{_lambda_.27} parent=0
    _
  %s8 = ssub.s32 1, %s6
  %s9 = scalar_select 0, %s8, %s6
  // Predicated region
  $region2: #{_lambda_.27} parent=0 // pred_check
    _
  $region3: #{_lambda_.27} parent=0 // pred_check_branch
    %11 = sbr.rel (0) target = $region5
  $region4: #{_lambda_.27} parent=0 // pred_region
    _
  $region5: #{_lambda_.27} parent=0 // pred_fallthru
    _
  // Predicated region
  $region6: #{_lambda_.27} parent=0 // pred_check
    _
  $region7: #{_lambda_.27} parent=0 // pred_check_branch
    %13 = sbr.rel (0) target = $region9
  $region8: #{_lambda_.27} parent=0 // pred_region
    _
  $region9: #{_lambda_.27} parent=0 // pred_fallthru
    _
  // Predicated region
  $region10: #{_lambda_.27} parent=0 // pred_check
    _
  $region11: #{_lambda_.27} parent=0 // pred_check_branch
    %15 = sbr.rel (0) target = $region13
  $region12: #{_lambda_.27} parent=0 // pred_region
    _
  $region13: #{_lambda_.27} parent=0 // pred_fallthru
    _
  // Predicated region
  $region14: #{_lambda_.27} parent=0 // pred_check
    _
  $region15: #{_lambda_.27} parent=0 // pred_check_branch
    %17 = sbr.rel (0) target = $region17
  $region16: #{_lambda_.27} parent=0 // pred_region
    _
  $region17: #{_lambda_.27} parent=0 // pred_fallthru
    _
  // Predicated region
  $region18: #{_lambda_.27} parent=0 // pred_check
    _
  $region19: #{_lambda_.27} parent=0 // pred_check_branch
    %19 = sbr.rel (0) target = $region21
  $region20: #{_lambda_.27} parent=0 // pred_region
    _
  $region21: #{_lambda_.27} parent=0 // pred_fallthru
    _
  %v21 = vld [vmem:[%s0] sm:$0xf]
  %v22 = vld [vmem:[%s0 + $0x4] sm:$0xf]
  %v23 = vld [vmem:[%s0 + $0x8] sm:$0xf]
  %v24 = vld [vmem:[%s0 + $0xc] sm:$0xf]
  %v25 = vld [vmem:[%s0 + $0x10] sm:$0xf]
  %v26 = vld [vmem:[%s0 + $0x14] sm:$0xf]
  %v27 = vld [vmem:[%s0 + $0x18] sm:$0xf]
  %v28 = vld [vmem:[%s0 + $0x1c] sm:$0xf]
  %v29 = vld [vmem:[%s0 + $0x20] sm:$0xf]
  %v30 = vld [vmem:[%s0 + $0x24] sm:$0xf]
  %v31 = vld [vmem:[%s0 + $0x28] sm:$0xf]
  %v32 = vld [vmem:[%s0 + $0x2c] sm:$0xf]
  %v33 = vld [vmem:[%s0 + $0x30] sm:$0xf]
  %v34 = vld [vmem:[%s0 + $0x34] sm:$0xf]
  %v35 = vld [vmem:[%s0 + $0x38] sm:$0xf]
  %v36 = vld [vmem:[%s0 + $0x3c] sm:$0xf]
  %v37 = vld [vmem:[%s1] sm:$0xf]
  %v38 = vld [vmem:[%s1 + $0x4] sm:$0xf]
  %v39 = vld [vmem:[%s1 + $0x8] sm:$0xf]
  %v40 = vld [vmem:[%s1 + $0xc] sm:$0xf]
  %v41 = vld [vmem:[%s1 + $0x10] sm:$0xf]
  %v42 = vld [vmem:[%s1 + $0x14] sm:$0xf]
  %v43 = vld [vmem:[%s1 + $0x18] sm:$0xf]
  %v44 = vld [vmem:[%s1 + $0x1c] sm:$0xf]
  %v45 = vld [vmem:[%s1 + $0x20] sm:$0xf]
  %v46 = vld [vmem:[%s1 + $0x24] sm:$0xf]
  %v47 = vld [vmem:[%s1 + $0x28] sm:$0xf]
  %v48 = vld [vmem:[%s1 + $0x2c] sm:$0xf]
  %v49 = vld [vmem:[%s1 + $0x30] sm:$0xf]
  %v50 = vld [vmem:[%s1 + $0x34] sm:$0xf]
  %v51 = vld [vmem:[%s1 + $0x38] sm:$0xf]
  %v52 = vld [vmem:[%s1 + $0x3c] sm:$0xf]
  %vm53 = vcmask 64512
  %v55 = vsel %vm53, %v21, 0
  %v58 = vsel %vm53, %v37, 0
  %60 = vmatpush.bf16.xpose.msra.mxu0 0
  %61 = vmatpush.bf16.xpose.msra.mxu0 0
  %62 = vmatpush.bf16.xpose.msra.mxu0 0
  %63 = vmatpush.bf16.xpose.msra.mxu0 0
  %64 = vmatpush.bf16.xpose.msra.mxu0 0
  %65 = vmatpush.bf16.xpose.msra.mxu0 0
  %66 = vmatpush.bf16.xpose.msra.mxu0 0
  %67 = vmatpush.bf16.xpose.msra.mxu0 %v58
  %68 = vmatmul.bf16.gmra.mxu0 %v55
  %v69 = vpop.f32.mrf.mxu0
  %v70 = vadd.f32 0.0, %v69
  %v71 = vpop.f32.mrf.mxu0
  %72 = vdwg.mxu0
  %v74 = vsel %vm53, %v22, 0
  %v77 = vsel %vm53, %v38, 0
  %79 = vmatpush.bf16.xpose.msra.mxu0 0
  %80 = vmatpush.bf16.xpose.msra.mxu0 0
  %81 = vmatpush.bf16.xpose.msra.mxu0 0
  %82 = vmatpush.bf16.xpose.msra.mxu0 0
  %83 = vmatpush.bf16.xpose.msra.mxu0 0
  %84 = vmatpush.bf16.xpose.msra.mxu0 0
  %85 = vmatpush.bf16.xpose.msra.mxu0 0
  %86 = vmatpush.bf16.xpose.msra.mxu0 %v77
  %87 = vmatmul.bf16.gmra.mxu0 %v74
  %v88 = vpop.f32.mrf.mxu0
  %v89 = vadd.f32 0.0, %v88
  %v90 = vpop.f32.mrf.mxu0
  %91 = vdwg.mxu0
  %v93 = vsel %vm53, %v23, 0
  %v96 = vsel %vm53, %v39, 0
  %98 = vmatpush.bf16.xpose.msra.mxu0 0
  %99 = vmatpush.bf16.xpose.msra.mxu0 0
  %100 = vmatpush.bf16.xpose.msra.mxu0 0
  %101 = vmatpush.bf16.xpose.msra.mxu0 0
  %102 = vmatpush.bf16.xpose.msra.mxu0 0
  %103 = vmatpush.bf16.xpose.msra.mxu0 0
  %104 = vmatpush.bf16.xpose.msra.mxu0 0
  %105 = vmatpush.bf16.xpose.msra.mxu0 %v96
  %106 = vmatmul.bf16.gmra.mxu0 %v93
  %v107 = vpop.f32.mrf.mxu0
  %v108 = vadd.f32 0.0, %v107
  %v109 = vpop.f32.mrf.mxu0
  %110 = vdwg.mxu0
  %v112 = vsel %vm53, %v24, 0
  %v115 = vsel %vm53, %v40, 0
  %117 = vmatpush.bf16.xpose.msra.mxu0 0
  %118 = vmatpush.bf16.xpose.msra.mxu0 0
  %119 = vmatpush.bf16.xpose.msra.mxu0 0
  %120 = vmatpush.bf16.xpose.msra.mxu0 0
  %121 = vmatpush.bf16.xpose.msra.mxu0 0
  %122 = vmatpush.bf16.xpose.msra.mxu0 0
  %123 = vmatpush.bf16.xpose.msra.mxu0 0
  %124 = vmatpush.bf16.xpose.msra.mxu0 %v115
  %125 = vmatmul.bf16.gmra.mxu0 %v112
  %v126 = vpop.f32.mrf.mxu0
  %v127 = vadd.f32 0.0, %v126
  %v128 = vpop.f32.mrf.mxu0
  %129 = vdwg.mxu0
  %v131 = vsel %vm53, %v25, 0
  %v134 = vsel %vm53, %v41, 0
  %136 = vmatpush.bf16.xpose.msra.mxu0 0
  %137 = vmatpush.bf16.xpose.msra.mxu0 0
  %138 = vmatpush.bf16.xpose.msra.mxu0 0
  %139 = vmatpush.bf16.xpose.msra.mxu0 0
  %140 = vmatpush.bf16.xpose.msra.mxu0 0
  %141 = vmatpush.bf16.xpose.msra.mxu0 0
  %142 = vmatpush.bf16.xpose.msra.mxu0 0
  %143 = vmatpush.bf16.xpose.msra.mxu0 %v134
  %144 = vmatmul.bf16.gmra.mxu0 %v131
  %v145 = vpop.f32.mrf.mxu0
  %v146 = vadd.f32 0.0, %v145
  %v147 = vpop.f32.mrf.mxu0
  %148 = vdwg.mxu0
  %v150 = vsel %vm53, %v26, 0
  %v153 = vsel %vm53, %v42, 0
  %155 = vmatpush.bf16.xpose.msra.mxu0 0
  %156 = vmatpush.bf16.xpose.msra.mxu0 0
  %157 = vmatpush.bf16.xpose.msra.mxu0 0
  %158 = vmatpush.bf16.xpose.msra.mxu0 0
  %159 = vmatpush.bf16.xpose.msra.mxu0 0
  %160 = vmatpush.bf16.xpose.msra.mxu0 0
  %161 = vmatpush.bf16.xpose.msra.mxu0 0
  %162 = vmatpush.bf16.xpose.msra.mxu0 %v153
  %163 = vmatmul.bf16.gmra.mxu0 %v150
  %v164 = vpop.f32.mrf.mxu0
  %v165 = vadd.f32 0.0, %v164
  %v166 = vpop.f32.mrf.mxu0
  %167 = vdwg.mxu0
  %v169 = vsel %vm53, %v27, 0
  %v172 = vsel %vm53, %v43, 0
  %174 = vmatpush.bf16.xpose.msra.mxu0 0
  %175 = vmatpush.bf16.xpose.msra.mxu0 0
  %176 = vmatpush.bf16.xpose.msra.mxu0 0
  %177 = vmatpush.bf16.xpose.msra.mxu0 0
  %178 = vmatpush.bf16.xpose.msra.mxu0 0
  %179 = vmatpush.bf16.xpose.msra.mxu0 0
  %180 = vmatpush.bf16.xpose.msra.mxu0 0
  %181 = vmatpush.bf16.xpose.msra.mxu0 %v172
  %182 = vmatmul.bf16.gmra.mxu0 %v169
  %v183 = vpop.f32.mrf.mxu0
  %v184 = vadd.f32 0.0, %v183
  %v185 = vpop.f32.mrf.mxu0
  %186 = vdwg.mxu0
  %v188 = vsel %vm53, %v28, 0
  %v191 = vsel %vm53, %v44, 0
  %193 = vmatpush.bf16.xpose.msra.mxu0 0
  %194 = vmatpush.bf16.xpose.msra.mxu0 0
  %195 = vmatpush.bf16.xpose.msra.mxu0 0
  %196 = vmatpush.bf16.xpose.msra.mxu0 0
  %197 = vmatpush.bf16.xpose.msra.mxu0 0
  %198 = vmatpush.bf16.xpose.msra.mxu0 0
  %199 = vmatpush.bf16.xpose.msra.mxu0 0
  %200 = vmatpush.bf16.xpose.msra.mxu0 %v191
  %201 = vmatmul.bf16.gmra.mxu0 %v188
  %v202 = vpop.f32.mrf.mxu0
  %v203 = vadd.f32 0.0, %v202
  %v204 = vpop.f32.mrf.mxu0
  %205 = vdwg.mxu0
  %v207 = vsel %vm53, %v29, 0
  %v210 = vsel %vm53, %v45, 0
  %212 = vmatpush.bf16.xpose.msra.mxu0 0
  %213 = vmatpush.bf16.xpose.msra.mxu0 0
  %214 = vmatpush.bf16.xpose.msra.mxu0 0
  %215 = vmatpush.bf16.xpose.msra.mxu0 0
  %216 = vmatpush.bf16.xpose.msra.mxu0 0
  %217 = vmatpush.bf16.xpose.msra.mxu0 0
  %218 = vmatpush.bf16.xpose.msra.mxu0 0
  %219 = vmatpush.bf16.xpose.msra.mxu0 %v210
  %220 = vmatmul.bf16.gmra.mxu0 %v207
  %v221 = vpop.f32.mrf.mxu0
  %v222 = vadd.f32 0.0, %v221
  %v223 = vpop.f32.mrf.mxu0
  %224 = vdwg.mxu0
  %v226 = vsel %vm53, %v30, 0
  %v229 = vsel %vm53, %v46, 0
  %231 = vmatpush.bf16.xpose.msra.mxu0 0
  %232 = vmatpush.bf16.xpose.msra.mxu0 0
  %233 = vmatpush.bf16.xpose.msra.mxu0 0
  %234 = vmatpush.bf16.xpose.msra.mxu0 0
  %235 = vmatpush.bf16.xpose.msra.mxu0 0
  %236 = vmatpush.bf16.xpose.msra.mxu0 0
  %237 = vmatpush.bf16.xpose.msra.mxu0 0
  %238 = vmatpush.bf16.xpose.msra.mxu0 %v229
  %239 = vmatmul.bf16.gmra.mxu0 %v226
  %v240 = vpop.f32.mrf.mxu0
  %v241 = vadd.f32 0.0, %v240
  %v242 = vpop.f32.mrf.mxu0
  %243 = vdwg.mxu0
  %v245 = vsel %vm53, %v31, 0
  %v248 = vsel %vm53, %v47, 0
  %250 = vmatpush.bf16.xpose.msra.mxu0 0
  %251 = vmatpush.bf16.xpose.msra.mxu0 0
  %252 = vmatpush.bf16.xpose.msra.mxu0 0
  %253 = vmatpush.bf16.xpose.msra.mxu0 0
  %254 = vmatpush.bf16.xpose.msra.mxu0 0
  %255 = vmatpush.bf16.xpose.msra.mxu0 0
  %256 = vmatpush.bf16.xpose.msra.mxu0 0
  %257 = vmatpush.bf16.xpose.msra.mxu0 %v248
  %258 = vmatmul.bf16.gmra.mxu0 %v245
  %v259 = vpop.f32.mrf.mxu0
  %v260 = vadd.f32 0.0, %v259
  %v261 = vpop.f32.mrf.mxu0
  %262 = vdwg.mxu0
  %v264 = vsel %vm53, %v32, 0
  %v267 = vsel %vm53, %v48, 0
  %269 = vmatpush.bf16.xpose.msra.mxu0 0
  %270 = vmatpush.bf16.xpose.msra.mxu0 0
  %271 = vmatpush.bf16.xpose.msra.mxu0 0
  %272 = vmatpush.bf16.xpose.msra.mxu0 0
  %273 = vmatpush.bf16.xpose.msra.mxu0 0
  %274 = vmatpush.bf16.xpose.msra.mxu0 0
  %275 = vmatpush.bf16.xpose.msra.mxu0 0
  %276 = vmatpush.bf16.xpose.msra.mxu0 %v267
  %277 = vmatmul.bf16.gmra.mxu0 %v264
  %v278 = vpop.f32.mrf.mxu0
  %v279 = vadd.f32 0.0, %v278
  %v280 = vpop.f32.mrf.mxu0
  %281 = vdwg.mxu0
  %v283 = vsel %vm53, %v33, 0
  %v286 = vsel %vm53, %v49, 0
  %288 = vmatpush.bf16.xpose.msra.mxu0 0
  %289 = vmatpush.bf16.xpose.msra.mxu0 0
  %290 = vmatpush.bf16.xpose.msra.mxu0 0
  %291 = vmatpush.bf16.xpose.msra.mxu0 0
  %292 = vmatpush.bf16.xpose.msra.mxu0 0
  %293 = vmatpush.bf16.xpose.msra.mxu0 0
  %294 = vmatpush.bf16.xpose.msra.mxu0 0
  %295 = vmatpush.bf16.xpose.msra.mxu0 %v286
  %296 = vmatmul.bf16.gmra.mxu0 %v283
  %v297 = vpop.f32.mrf.mxu0
  %v298 = vadd.f32 0.0, %v297
  %v299 = vpop.f32.mrf.mxu0
  %300 = vdwg.mxu0
  %v302 = vsel %vm53, %v34, 0
  %v305 = vsel %vm53, %v50, 0
  %307 = vmatpush.bf16.xpose.msra.mxu0 0
  %308 = vmatpush.bf16.xpose.msra.mxu0 0
  %309 = vmatpush.bf16.xpose.msra.mxu0 0
  %310 = vmatpush.bf16.xpose.msra.mxu0 0
  %311 = vmatpush.bf16.xpose.msra.mxu0 0
  %312 = vmatpush.bf16.xpose.msra.mxu0 0
  %313 = vmatpush.bf16.xpose.msra.mxu0 0
  %314 = vmatpush.bf16.xpose.msra.mxu0 %v305
  %315 = vmatmul.bf16.gmra.mxu0 %v302
  %v316 = vpop.f32.mrf.mxu0
  %v317 = vadd.f32 0.0, %v316
  %v318 = vpop.f32.mrf.mxu0
  %319 = vdwg.mxu0
  %v321 = vsel %vm53, %v35, 0
  %v324 = vsel %vm53, %v51, 0
  %326 = vmatpush.bf16.xpose.msra.mxu0 0
  %327 = vmatpush.bf16.xpose.msra.mxu0 0
  %328 = vmatpush.bf16.xpose.msra.mxu0 0
  %329 = vmatpush.bf16.xpose.msra.mxu0 0
  %330 = vmatpush.bf16.xpose.msra.mxu0 0
  %331 = vmatpush.bf16.xpose.msra.mxu0 0
  %332 = vmatpush.bf16.xpose.msra.mxu0 0
  %333 = vmatpush.bf16.xpose.msra.mxu0 %v324
  %334 = vmatmul.bf16.gmra.mxu0 %v321
  %v335 = vpop.f32.mrf.mxu0
  %v336 = vadd.f32 0.0, %v335
  %v337 = vpop.f32.mrf.mxu0
  %338 = vdwg.mxu0
  %v340 = vsel %vm53, %v36, 0
  %v343 = vsel %vm53, %v52, 0
  %345 = vmatpush.bf16.xpose.msra.mxu0 0
  %346 = vmatpush.bf16.xpose.msra.mxu0 0
  %347 = vmatpush.bf16.xpose.msra.mxu0 0
  %348 = vmatpush.bf16.xpose.msra.mxu0 0
  %349 = vmatpush.bf16.xpose.msra.mxu0 0
  %350 = vmatpush.bf16.xpose.msra.mxu0 0
  %351 = vmatpush.bf16.xpose.msra.mxu0 0
  %352 = vmatpush.bf16.xpose.msra.mxu0 %v343
  %353 = vmatmul.bf16.gmra.mxu0 %v340
  %v354 = vpop.f32.mrf.mxu0
  %v355 = vadd.f32 0.0, %v354
  %v356 = vpop.f32.mrf.mxu0
  %357 = vdwg.mxu0
  %v358 = vmul.f32 %v70, 0.35355338
  %v359 = vmul.f32 %v89, 0.35355338
  %v360 = vmul.f32 %v108, 0.35355338
  %v361 = vmul.f32 %v127, 0.35355338
  %v362 = vmul.f32 %v146, 0.35355338
  %v363 = vmul.f32 %v165, 0.35355338
  %v364 = vmul.f32 %v184, 0.35355338
  %v365 = vmul.f32 %v203, 0.35355338
  %v366 = vmul.f32 %v222, 0.35355338
  %v367 = vmul.f32 %v241, 0.35355338
  %v368 = vmul.f32 %v260, 0.35355338
  %v369 = vmul.f32 %v279, 0.35355338
  %v370 = vmul.f32 %v298, 0.35355338
  %v371 = vmul.f32 %v317, 0.35355338
  %v372 = vmul.f32 %v336, 0.35355338
  %v373 = vmul.f32 %v355, 0.35355338
  %v374 = vld [vmem:[%s3] sm:$0xff]
  %v375 = vld [vmem:[%s3 + $0x8] sm:$0xff]
  %v376 = vadd.f32 %v358, %v374
  %v377 = vadd.f32 %v359, %v375
  %v378 = vadd.f32 %v360, %v374
  %v379 = vadd.f32 %v361, %v375
  %v380 = vadd.f32 %v362, %v374
  %v381 = vadd.f32 %v363, %v375
  %v382 = vadd.f32 %v364, %v374
  %v383 = vadd.f32 %v365, %v375
  %v384 = vadd.f32 %v366, %v374
  %v385 = vadd.f32 %v367, %v375
  %v386 = vadd.f32 %v368, %v374
  %v387 = vadd.f32 %v369, %v375
  %v388 = vadd.f32 %v370, %v374
  %v389 = vadd.f32 %v371, %v375
  %v390 = vadd.f32 %v372, %v374
  %v391 = vadd.f32 %v373, %v375
  %v392 = vld [vmem:[%s4] sm:$0x1]
  %v393 = vld [vmem:[%s4 + $0x1] sm:$0x1]
  %v394 = vld [vmem:[%s4 + $0x2] sm:$0x1]
  %v395 = vld [vmem:[%s4 + $0x3] sm:$0x1]
  %v396 = vld [vmem:[%s4 + $0x4] sm:$0x1]
  %v397 = vld [vmem:[%s4 + $0x5] sm:$0x1]
  %v398 = vld [vmem:[%s4 + $0x6] sm:$0x1]
  %v399 = vld [vmem:[%s4 + $0x7] sm:$0x1]
  %v400 = vsub.f32 %v392, 1.0
  %v401 = vsub.f32 %v393, 1.0
  %v402 = vsub.f32 %v394, 1.0
  %v403 = vsub.f32 %v395, 1.0
  %v404 = vsub.f32 %v396, 1.0
  %v405 = vsub.f32 %v397, 1.0
  %v406 = vsub.f32 %v398, 1.0
  %v407 = vsub.f32 %v399, 1.0
  %v408 = vmul.f32 %v400, 1e+09
  %v409 = vmul.f32 %v401, 1e+09
  %v410 = vmul.f32 %v402, 1e+09
  %v411 = vmul.f32 %v403, 1e+09
  %v412 = vmul.f32 %v404, 1e+09
  %v413 = vmul.f32 %v405, 1e+09
  %v414 = vmul.f32 %v406, 1e+09
  %v415 = vmul.f32 %v407, 1e+09
  %v424 = vperm.slane %v408, 0
  %v425 = vperm.slane %v409, 0
  %v426 = vperm.slane %v410, 0
  %v427 = vperm.slane %v411, 0
  %v428 = vperm.slane %v412, 0
  %v429 = vperm.slane %v413, 0
  %v430 = vperm.slane %v414, 0
  %v431 = vperm.slane %v415, 0
  %v440 = vadd.f32 %v376, %v424
  %v441 = vadd.f32 %v377, %v424
  %v442 = vadd.f32 %v378, %v425
  %v443 = vadd.f32 %v379, %v425
  %v444 = vadd.f32 %v380, %v426
  %v445 = vadd.f32 %v381, %v426
  %v446 = vadd.f32 %v382, %v427
  %v447 = vadd.f32 %v383, %v427
  %v448 = vadd.f32 %v384, %v428
  %v449 = vadd.f32 %v385, %v428
  %v450 = vadd.f32 %v386, %v429
  %v451 = vadd.f32 %v387, %v429
  %v452 = vadd.f32 %v388, %v430
  %v453 = vadd.f32 %v389, %v430
  %v454 = vadd.f32 %v390, %v431
  %v455 = vadd.f32 %v391, %v431
  %v456 = vsel %vm53, %v440, -inf
  %457 = vmax.xlane.f32.xlu0 %v456
  %v458 = vpop.xlane.xlu0 %457
  %v459 = vsel %vm53, %v441, -inf
  %460 = vmax.xlane.f32.xlu0 %v459
  %v461 = vpop.xlane.xlu0 %460
  %v462 = vsel %vm53, %v442, -inf
  %463 = vmax.xlane.f32.xlu0 %v462
  %v464 = vpop.xlane.xlu0 %463
  %v465 = vsel %vm53, %v443, -inf
  %466 = vmax.xlane.f32.xlu0 %v465
  %v467 = vpop.xlane.xlu0 %466
  %v468 = vsel %vm53, %v444, -inf
  %469 = vmax.xlane.f32.xlu0 %v468
  %v470 = vpop.xlane.xlu0 %469
  %v471 = vsel %vm53, %v445, -inf
  %472 = vmax.xlane.f32.xlu0 %v471
  %v473 = vpop.xlane.xlu0 %472
  %v474 = vsel %vm53, %v446, -inf
  %475 = vmax.xlane.f32.xlu0 %v474
  %v476 = vpop.xlane.xlu0 %475
  %v477 = vsel %vm53, %v447, -inf
  %478 = vmax.xlane.f32.xlu0 %v477
  %v479 = vpop.xlane.xlu0 %478
  %v480 = vsel %vm53, %v448, -inf
  %481 = vmax.xlane.f32.xlu0 %v480
  %v482 = vpop.xlane.xlu0 %481
  %v483 = vsel %vm53, %v449, -inf
  %484 = vmax.xlane.f32.xlu0 %v483
  %v485 = vpop.xlane.xlu0 %484
  %v486 = vsel %vm53, %v450, -inf
  %487 = vmax.xlane.f32.xlu0 %v486
  %v488 = vpop.xlane.xlu0 %487
  %v489 = vsel %vm53, %v451, -inf
  %490 = vmax.xlane.f32.xlu0 %v489
  %v491 = vpop.xlane.xlu0 %490
  %v492 = vsel %vm53, %v452, -inf
  %493 = vmax.xlane.f32.xlu0 %v492
  %v494 = vpop.xlane.xlu0 %493
  %v495 = vsel %vm53, %v453, -inf
  %496 = vmax.xlane.f32.xlu0 %v495
  %v497 = vpop.xlane.xlu0 %496
  %v498 = vsel %vm53, %v454, -inf
  %499 = vmax.xlane.f32.xlu0 %v498
  %v500 = vpop.xlane.xlu0 %499
  %v501 = vsel %vm53, %v455, -inf
  %502 = vmax.xlane.f32.xlu0 %v501
  %v503 = vpop.xlane.xlu0 %502
  %v504 = vsub.f32 %v440, %v458
  %v505 = vsub.f32 %v441, %v461
  %v506 = vsub.f32 %v442, %v464
  %v507 = vsub.f32 %v443, %v467
  %v508 = vsub.f32 %v444, %v470
  %v509 = vsub.f32 %v445, %v473
  %v510 = vsub.f32 %v446, %v476
  %v511 = vsub.f32 %v447, %v479
  %v512 = vsub.f32 %v448, %v482
  %v513 = vsub.f32 %v449, %v485
  %v514 = vsub.f32 %v450, %v488
  %v515 = vsub.f32 %v451, %v491
  %v516 = vsub.f32 %v452, %v494
  %v517 = vsub.f32 %v453, %v497
  %v518 = vsub.f32 %v454, %v500
  %v519 = vsub.f32 %v455, %v503
  %v520 = vmul.f32 %v504, 1.442695
  %v521 = vpow.pop %v520
  %v522 = vmul.f32 %v505, 1.442695
  %v523 = vpow.pop %v522
  %v524 = vmul.f32 %v506, 1.442695
  %v525 = vpow.pop %v524
  %v526 = vmul.f32 %v507, 1.442695
  %v527 = vpow.pop %v526
  %v528 = vmul.f32 %v508, 1.442695
  %v529 = vpow.pop %v528
  %v530 = vmul.f32 %v509, 1.442695
  %v531 = vpow.pop %v530
  %v532 = vmul.f32 %v510, 1.442695
  %v533 = vpow.pop %v532
  %v534 = vmul.f32 %v511, 1.442695
  %v535 = vpow.pop %v534
  %v536 = vmul.f32 %v512, 1.442695
  %v537 = vpow.pop %v536
  %v538 = vmul.f32 %v513, 1.442695
  %v539 = vpow.pop %v538
  %v540 = vmul.f32 %v514, 1.442695
  %v541 = vpow.pop %v540
  %v542 = vmul.f32 %v515, 1.442695
  %v543 = vpow.pop %v542
  %v544 = vmul.f32 %v516, 1.442695
  %v545 = vpow.pop %v544
  %v546 = vmul.f32 %v517, 1.442695
  %v547 = vpow.pop %v546
  %v548 = vmul.f32 %v518, 1.442695
  %v549 = vpow.pop %v548
  %v550 = vmul.f32 %v519, 1.442695
  %v551 = vpow.pop %v550
  %v552 = vsel %vm53, %v521, 0.0
  %553 = vadd.xlane.f32.xlu0 %v552
  %v554 = vpop.xlane.xlu0 %553
  %v555 = vsel %vm53, %v523, 0.0
  %556 = vadd.xlane.f32.xlu0 %v555
  %v557 = vpop.xlane.xlu0 %556
  %v558 = vsel %vm53, %v525, 0.0
  %559 = vadd.xlane.f32.xlu0 %v558
  %v560 = vpop.xlane.xlu0 %559
  %v561 = vsel %vm53, %v527, 0.0
  %562 = vadd.xlane.f32.xlu0 %v561
  %v563 = vpop.xlane.xlu0 %562
  %v564 = vsel %vm53, %v529, 0.0
  %565 = vadd.xlane.f32.xlu0 %v564
  %v566 = vpop.xlane.xlu0 %565
  %v567 = vsel %vm53, %v531, 0.0
  %568 = vadd.xlane.f32.xlu0 %v567
  %v569 = vpop.xlane.xlu0 %568
  %v570 = vsel %vm53, %v533, 0.0
  %571 = vadd.xlane.f32.xlu0 %v570
  %v572 = vpop.xlane.xlu0 %571
  %v573 = vsel %vm53, %v535, 0.0
  %574 = vadd.xlane.f32.xlu0 %v573
  %v575 = vpop.xlane.xlu0 %574
  %v576 = vsel %vm53, %v537, 0.0
  %577 = vadd.xlane.f32.xlu0 %v576
  %v578 = vpop.xlane.xlu0 %577
  %v579 = vsel %vm53, %v539, 0.0
  %580 = vadd.xlane.f32.xlu0 %v579
  %v581 = vpop.xlane.xlu0 %580
  %v582 = vsel %vm53, %v541, 0.0
  %583 = vadd.xlane.f32.xlu0 %v582
  %v584 = vpop.xlane.xlu0 %583
  %v585 = vsel %vm53, %v543, 0.0
  %586 = vadd.xlane.f32.xlu0 %v585
  %v587 = vpop.xlane.xlu0 %586
  %v588 = vsel %vm53, %v545, 0.0
  %589 = vadd.xlane.f32.xlu0 %v588
  %v590 = vpop.xlane.xlu0 %589
  %v591 = vsel %vm53, %v547, 0.0
  %592 = vadd.xlane.f32.xlu0 %v591
  %v593 = vpop.xlane.xlu0 %592
  %v594 = vsel %vm53, %v549, 0.0
  %595 = vadd.xlane.f32.xlu0 %v594
  %v596 = vpop.xlane.xlu0 %595
  %v597 = vsel %vm53, %v551, 0.0
  %598 = vadd.xlane.f32.xlu0 %v597
  %v599 = vpop.xlane.xlu0 %598
  %v600 = vrcp.pop %v554
  %v601 = vrcp.pop %v557
  %v602 = vrcp.pop %v560
  %v603 = vrcp.pop %v563
  %v604 = vrcp.pop %v566
  %v605 = vrcp.pop %v569
  %v606 = vrcp.pop %v572
  %v607 = vrcp.pop %v575
  %v608 = vrcp.pop %v578
  %v609 = vrcp.pop %v581
  %v610 = vrcp.pop %v584
  %v611 = vrcp.pop %v587
  %v612 = vrcp.pop %v590
  %v613 = vrcp.pop %v593
  %v614 = vrcp.pop %v596
  %v615 = vrcp.pop %v599
  %v616 = vmul.f32 %v521, %v600
  %v617 = vmul.f32 %v523, %v601
  %v618 = vmul.f32 %v525, %v602
  %v619 = vmul.f32 %v527, %v603
  %v620 = vmul.f32 %v529, %v604
  %v621 = vmul.f32 %v531, %v605
  %v622 = vmul.f32 %v533, %v606
  %v623 = vmul.f32 %v535, %v607
  %v624 = vmul.f32 %v537, %v608
  %v625 = vmul.f32 %v539, %v609
  %v626 = vmul.f32 %v541, %v610
  %v627 = vmul.f32 %v543, %v611
  %v628 = vmul.f32 %v545, %v612
  %v629 = vmul.f32 %v547, %v613
  %v630 = vmul.f32 %v549, %v614
  %v631 = vmul.f32 %v551, %v615
  %v632 = vpack.c.bf16 %v616, %v616
  %v633 = vpack.c.bf16 %v617, %v617
  %v634 = vpack.c.bf16 %v618, %v618
  %v635 = vpack.c.bf16 %v619, %v619
  %v636 = vpack.c.bf16 %v620, %v620
  %v637 = vpack.c.bf16 %v621, %v621
  %v638 = vpack.c.bf16 %v622, %v622
  %v639 = vpack.c.bf16 %v623, %v623
  %v640 = vpack.c.bf16 %v624, %v624
  %v641 = vpack.c.bf16 %v625, %v625
  %v642 = vpack.c.bf16 %v626, %v626
  %v643 = vpack.c.bf16 %v627, %v627
  %v644 = vpack.c.bf16 %v628, %v628
  %v645 = vpack.c.bf16 %v629, %v629
  %v646 = vpack.c.bf16 %v630, %v630
  %v647 = vpack.c.bf16 %v631, %v631
  %v648 = vld [vmem:[%s2] sm:$0xf]
  %v649 = vld [vmem:[%s2 + $0x4] sm:$0xf]
  %v650 = vld [vmem:[%s2 + $0x8] sm:$0xf]
  %v651 = vld [vmem:[%s2 + $0xc] sm:$0xf]
  %v652 = vld [vmem:[%s2 + $0x10] sm:$0xf]
  %v653 = vld [vmem:[%s2 + $0x14] sm:$0xf]
  %v654 = vld [vmem:[%s2 + $0x18] sm:$0xf]
  %v655 = vld [vmem:[%s2 + $0x1c] sm:$0xf]
  %v656 = vld [vmem:[%s2 + $0x20] sm:$0xf]
  %v657 = vld [vmem:[%s2 + $0x24] sm:$0xf]
  %v658 = vld [vmem:[%s2 + $0x28] sm:$0xf]
  %v659 = vld [vmem:[%s2 + $0x2c] sm:$0xf]
  %v660 = vld [vmem:[%s2 + $0x30] sm:$0xf]
  %v661 = vld [vmem:[%s2 + $0x34] sm:$0xf]
  %v662 = vld [vmem:[%s2 + $0x38] sm:$0xf]
  %v663 = vld [vmem:[%s2 + $0x3c] sm:$0xf]
  %v665 = vsel %vm53, %v632, 0
  %vm667 = vcmask 1043456
  %v669 = vsel %vm667, %v648, 0
  %671 = vmatpush.bf16.msra.mxu0 0
  %672 = vmatpush.bf16.msra.mxu0 0
  %673 = vmatpush.bf16.msra.mxu0 0
  %674 = vmatpush.bf16.msra.mxu0 0
  %675 = vmatpush.bf16.msra.mxu0 0
  %676 = vmatpush.bf16.msra.mxu0 0
  %677 = vmatpush.bf16.msra.mxu0 0
  %678 = vmatpush.bf16.msra.mxu0 %v669
  %679 = vmatmul.bf16.gmra.mxu0 %v665
  %v680 = vpop.f32.mrf.mxu0
  %v681 = vadd.f32 0.0, %v680
  %v682 = vpop.f32.mrf.mxu0
  %683 = vdwg.mxu0
  %v685 = vsel %vm53, %v633, 0
  %v688 = vsel %vm667, %v649, 0
  %690 = vmatpush.bf16.msra.mxu0 0
  %691 = vmatpush.bf16.msra.mxu0 0
  %692 = vmatpush.bf16.msra.mxu0 0
  %693 = vmatpush.bf16.msra.mxu0 0
  %694 = vmatpush.bf16.msra.mxu0 0
  %695 = vmatpush.bf16.msra.mxu0 0
  %696 = vmatpush.bf16.msra.mxu0 0
  %697 = vmatpush.bf16.msra.mxu0 %v688
  %698 = vmatmul.bf16.gmra.mxu0 %v685
  %v699 = vpop.f32.mrf.mxu0
  %v700 = vadd.f32 0.0, %v699
  %v701 = vpop.f32.mrf.mxu0
  %702 = vdwg.mxu0
  %v704 = vsel %vm53, %v634, 0
  %v707 = vsel %vm667, %v650, 0
  %709 = vmatpush.bf16.msra.mxu0 0
  %710 = vmatpush.bf16.msra.mxu0 0
  %711 = vmatpush.bf16.msra.mxu0 0
  %712 = vmatpush.bf16.msra.mxu0 0
  %713 = vmatpush.bf16.msra.mxu0 0
  %714 = vmatpush.bf16.msra.mxu0 0
  %715 = vmatpush.bf16.msra.mxu0 0
  %716 = vmatpush.bf16.msra.mxu0 %v707
  %717 = vmatmul.bf16.gmra.mxu0 %v704
  %v718 = vpop.f32.mrf.mxu0
  %v719 = vadd.f32 0.0, %v718
  %v720 = vpop.f32.mrf.mxu0
  %721 = vdwg.mxu0
  %v723 = vsel %vm53, %v635, 0
  %v726 = vsel %vm667, %v651, 0
  %728 = vmatpush.bf16.msra.mxu0 0
  %729 = vmatpush.bf16.msra.mxu0 0
  %730 = vmatpush.bf16.msra.mxu0 0
  %731 = vmatpush.bf16.msra.mxu0 0
  %732 = vmatpush.bf16.msra.mxu0 0
  %733 = vmatpush.bf16.msra.mxu0 0
  %734 = vmatpush.bf16.msra.mxu0 0
  %735 = vmatpush.bf16.msra.mxu0 %v726
  %736 = vmatmul.bf16.gmra.mxu0 %v723
  %v737 = vpop.f32.mrf.mxu0
  %v738 = vadd.f32 0.0, %v737
  %v739 = vpop.f32.mrf.mxu0
  %740 = vdwg.mxu0
  %v742 = vsel %vm53, %v636, 0
  %v745 = vsel %vm667, %v652, 0
  %747 = vmatpush.bf16.msra.mxu0 0
  %748 = vmatpush.bf16.msra.mxu0 0
  %749 = vmatpush.bf16.msra.mxu0 0
  %750 = vmatpush.bf16.msra.mxu0 0
  %751 = vmatpush.bf16.msra.mxu0 0
  %752 = vmatpush.bf16.msra.mxu0 0
  %753 = vmatpush.bf16.msra.mxu0 0
  %754 = vmatpush.bf16.msra.mxu0 %v745
  %755 = vmatmul.bf16.gmra.mxu0 %v742
  %v756 = vpop.f32.mrf.mxu0
  %v757 = vadd.f32 0.0, %v756
  %v758 = vpop.f32.mrf.mxu0
  %759 = vdwg.mxu0
  %v761 = vsel %vm53, %v637, 0
  %v764 = vsel %vm667, %v653, 0
  %766 = vmatpush.bf16.msra.mxu0 0
  %767 = vmatpush.bf16.msra.mxu0 0
  %768 = vmatpush.bf16.msra.mxu0 0
  %769 = vmatpush.bf16.msra.mxu0 0
  %770 = vmatpush.bf16.msra.mxu0 0
  %771 = vmatpush.bf16.msra.mxu0 0
  %772 = vmatpush.bf16.msra.mxu0 0
  %773 = vmatpush.bf16.msra.mxu0 %v764
  %774 = vmatmul.bf16.gmra.mxu0 %v761
  %v775 = vpop.f32.mrf.mxu0
  %v776 = vadd.f32 0.0, %v775
  %v777 = vpop.f32.mrf.mxu0
  %778 = vdwg.mxu0
  %v780 = vsel %vm53, %v638, 0
  %v783 = vsel %vm667, %v654, 0
  %785 = vmatpush.bf16.msra.mxu0 0
  %786 = vmatpush.bf16.msra.mxu0 0
  %787 = vmatpush.bf16.msra.mxu0 0
  %788 = vmatpush.bf16.msra.mxu0 0
  %789 = vmatpush.bf16.msra.mxu0 0
  %790 = vmatpush.bf16.msra.mxu0 0
  %791 = vmatpush.bf16.msra.mxu0 0
  %792 = vmatpush.bf16.msra.mxu0 %v783
  %793 = vmatmul.bf16.gmra.mxu0 %v780
  %v794 = vpop.f32.mrf.mxu0
  %v795 = vadd.f32 0.0, %v794
  %v796 = vpop.f32.mrf.mxu0
  %797 = vdwg.mxu0
  %v799 = vsel %vm53, %v639, 0
  %v802 = vsel %vm667, %v655, 0
  %804 = vmatpush.bf16.msra.mxu0 0
  %805 = vmatpush.bf16.msra.mxu0 0
  %806 = vmatpush.bf16.msra.mxu0 0
  %807 = vmatpush.bf16.msra.mxu0 0
  %808 = vmatpush.bf16.msra.mxu0 0
  %809 = vmatpush.bf16.msra.mxu0 0
  %810 = vmatpush.bf16.msra.mxu0 0
  %811 = vmatpush.bf16.msra.mxu0 %v802
  %812 = vmatmul.bf16.gmra.mxu0 %v799
  %v813 = vpop.f32.mrf.mxu0
  %v814 = vadd.f32 0.0, %v813
  %v815 = vpop.f32.mrf.mxu0
  %816 = vdwg.mxu0
  %v818 = vsel %vm53, %v640, 0
  %v821 = vsel %vm667, %v656, 0
  %823 = vmatpush.bf16.msra.mxu0 0
  %824 = vmatpush.bf16.msra.mxu0 0
  %825 = vmatpush.bf16.msra.mxu0 0
  %826 = vmatpush.bf16.msra.mxu0 0
  %827 = vmatpush.bf16.msra.mxu0 0
  %828 = vmatpush.bf16.msra.mxu0 0
  %829 = vmatpush.bf16.msra.mxu0 0
  %830 = vmatpush.bf16.msra.mxu0 %v821
  %831 = vmatmul.bf16.gmra.mxu0 %v818
  %v832 = vpop.f32.mrf.mxu0
  %v833 = vadd.f32 0.0, %v832
  %v834 = vpop.f32.mrf.mxu0
  %835 = vdwg.mxu0
  %v837 = vsel %vm53, %v641, 0
  %v840 = vsel %vm667, %v657, 0
  %842 = vmatpush.bf16.msra.mxu0 0
  %843 = vmatpush.bf16.msra.mxu0 0
  %844 = vmatpush.bf16.msra.mxu0 0
  %845 = vmatpush.bf16.msra.mxu0 0
  %846 = vmatpush.bf16.msra.mxu0 0
  %847 = vmatpush.bf16.msra.mxu0 0
  %848 = vmatpush.bf16.msra.mxu0 0
  %849 = vmatpush.bf16.msra.mxu0 %v840
  %850 = vmatmul.bf16.gmra.mxu0 %v837
  %v851 = vpop.f32.mrf.mxu0
  %v852 = vadd.f32 0.0, %v851
  %v853 = vpop.f32.mrf.mxu0
  %854 = vdwg.mxu0
  %v856 = vsel %vm53, %v642, 0
  %v859 = vsel %vm667, %v658, 0
  %861 = vmatpush.bf16.msra.mxu0 0
  %862 = vmatpush.bf16.msra.mxu0 0
  %863 = vmatpush.bf16.msra.mxu0 0
  %864 = vmatpush.bf16.msra.mxu0 0
  %865 = vmatpush.bf16.msra.mxu0 0
  %866 = vmatpush.bf16.msra.mxu0 0
  %867 = vmatpush.bf16.msra.mxu0 0
  %868 = vmatpush.bf16.msra.mxu0 %v859
  %869 = vmatmul.bf16.gmra.mxu0 %v856
  %v870 = vpop.f32.mrf.mxu0
  %v871 = vadd.f32 0.0, %v870
  %v872 = vpop.f32.mrf.mxu0
  %873 = vdwg.mxu0
  %v875 = vsel %vm53, %v643, 0
  %v878 = vsel %vm667, %v659, 0
  %880 = vmatpush.bf16.msra.mxu0 0
  %881 = vmatpush.bf16.msra.mxu0 0
  %882 = vmatpush.bf16.msra.mxu0 0
  %883 = vmatpush.bf16.msra.mxu0 0
  %884 = vmatpush.bf16.msra.mxu0 0
  %885 = vmatpush.bf16.msra.mxu0 0
  %886 = vmatpush.bf16.msra.mxu0 0
  %887 = vmatpush.bf16.msra.mxu0 %v878
  %888 = vmatmul.bf16.gmra.mxu0 %v875
  %v889 = vpop.f32.mrf.mxu0
  %v890 = vadd.f32 0.0, %v889
  %v891 = vpop.f32.mrf.mxu0
  %892 = vdwg.mxu0
  %v894 = vsel %vm53, %v644, 0
  %v897 = vsel %vm667, %v660, 0
  %899 = vmatpush.bf16.msra.mxu0 0
  %900 = vmatpush.bf16.msra.mxu0 0
  %901 = vmatpush.bf16.msra.mxu0 0
  %902 = vmatpush.bf16.msra.mxu0 0
  %903 = vmatpush.bf16.msra.mxu0 0
  %904 = vmatpush.bf16.msra.mxu0 0
  %905 = vmatpush.bf16.msra.mxu0 0
  %906 = vmatpush.bf16.msra.mxu0 %v897
  %907 = vmatmul.bf16.gmra.mxu0 %v894
  %v908 = vpop.f32.mrf.mxu0
  %v909 = vadd.f32 0.0, %v908
  %v910 = vpop.f32.mrf.mxu0
  %911 = vdwg.mxu0
  %v913 = vsel %vm53, %v645, 0
  %v916 = vsel %vm667, %v661, 0
  %918 = vmatpush.bf16.msra.mxu0 0
  %919 = vmatpush.bf16.msra.mxu0 0
  %920 = vmatpush.bf16.msra.mxu0 0
  %921 = vmatpush.bf16.msra.mxu0 0
  %922 = vmatpush.bf16.msra.mxu0 0
  %923 = vmatpush.bf16.msra.mxu0 0
  %924 = vmatpush.bf16.msra.mxu0 0
  %925 = vmatpush.bf16.msra.mxu0 %v916
  %926 = vmatmul.bf16.gmra.mxu0 %v913
  %v927 = vpop.f32.mrf.mxu0
  %v928 = vadd.f32 0.0, %v927
  %v929 = vpop.f32.mrf.mxu0
  %930 = vdwg.mxu0
  %v932 = vsel %vm53, %v646, 0
  %v935 = vsel %vm667, %v662, 0
  %937 = vmatpush.bf16.msra.mxu0 0
  %938 = vmatpush.bf16.msra.mxu0 0
  %939 = vmatpush.bf16.msra.mxu0 0
  %940 = vmatpush.bf16.msra.mxu0 0
  %941 = vmatpush.bf16.msra.mxu0 0
  %942 = vmatpush.bf16.msra.mxu0 0
  %943 = vmatpush.bf16.msra.mxu0 0
  %944 = vmatpush.bf16.msra.mxu0 %v935
  %945 = vmatmul.bf16.gmra.mxu0 %v932
  %v946 = vpop.f32.mrf.mxu0
  %v947 = vadd.f32 0.0, %v946
  %v948 = vpop.f32.mrf.mxu0
  %949 = vdwg.mxu0
  %v951 = vsel %vm53, %v647, 0
  %v954 = vsel %vm667, %v663, 0
  %956 = vmatpush.bf16.msra.mxu0 0
  %957 = vmatpush.bf16.msra.mxu0 0
  %958 = vmatpush.bf16.msra.mxu0 0
  %959 = vmatpush.bf16.msra.mxu0 0
  %960 = vmatpush.bf16.msra.mxu0 0
  %961 = vmatpush.bf16.msra.mxu0 0
  %962 = vmatpush.bf16.msra.mxu0 0
  %963 = vmatpush.bf16.msra.mxu0 %v954
  %964 = vmatmul.bf16.gmra.mxu0 %v951
  %v965 = vpop.f32.mrf.mxu0
  %v966 = vadd.f32 0.0, %v965
  %v967 = vpop.f32.mrf.mxu0
  %968 = vdwg.mxu0
  %969 = vst.msk [vmem:[%s5] sm:$0xff] %vm53, %v681
  %970 = vst.msk [vmem:[%s5 + $0x8] sm:$0xff] %vm53, %v700
  %971 = vst.msk [vmem:[%s5 + $0x10] sm:$0xff] %vm53, %v719
  %972 = vst.msk [vmem:[%s5 + $0x18] sm:$0xff] %vm53, %v738
  %973 = vst.msk [vmem:[%s5 + $0x20] sm:$0xff] %vm53, %v757
  %974 = vst.msk [vmem:[%s5 + $0x28] sm:$0xff] %vm53, %v776
  %975 = vst.msk [vmem:[%s5 + $0x30] sm:$0xff] %vm53, %v795
  %976 = vst.msk [vmem:[%s5 + $0x38] sm:$0xff] %vm53, %v814
  %977 = vst.msk [vmem:[%s5 + $0x40] sm:$0xff] %vm53, %v833
  %978 = vst.msk [vmem:[%s5 + $0x48] sm:$0xff] %vm53, %v852
  %979 = vst.msk [vmem:[%s5 + $0x50] sm:$0xff] %vm53, %v871
  %980 = vst.msk [vmem:[%s5 + $0x58] sm:$0xff] %vm53, %v890
  %981 = vst.msk [vmem:[%s5 + $0x60] sm:$0xff] %vm53, %v909
  %982 = vst.msk [vmem:[%s5 + $0x68] sm:$0xff] %vm53, %v928
  %983 = vst.msk [vmem:[%s5 + $0x70] sm:$0xff] %vm53, %v947
  %984 = vst.msk [vmem:[%s5 + $0x78] sm:$0xff] %vm53, %v966
  // Predicated region
  $region22: #{_lambda_.27} parent=0 // pred_check
    _
  $region23: #{_lambda_.27} parent=0 // pred_check_branch
    %986 = sbr.rel (0) target = $region25
  $region24: #{_lambda_.27} parent=0 // pred_region
    _
  $region25: #{_lambda_.27} parent=0 // pred_fallthru
    _
  // Predicated region
  $region26: #{_lambda_.27} parent=0 // pred_check
    _
  $region27: #{_lambda_.27} parent=0 // pred_check_branch
    %988 = sbr.rel (0) target = $region29
  $region28: #{_lambda_.27} parent=0 // pred_region
    _
  $region29: #{_lambda_.27} parent=0 // pred_fallthru
    _

// kernel: _lambda_.29
$region0: #{_lambda_.29}
  #allocation0 [shape = 'u32[]', space=smem, size = 0x4, offset = 0x4, fixed_abs, tag = 'smem constant byte address 0x4 - core index']
  #allocation1 [shape = 'u32[72,128]{1,0:T(1,128)}', space=vmem, size = 0x9000, scoped, tag = 'internal scratch']
  %s0 = inlined_call_operand.vmem [shape: f32[64,8], index: 0, kind: input, shape index: {}]
  %s1 = inlined_call_operand.vmem [shape: bf16[8,32], index: 1, kind: input, shape index: {}]
  %s2 = inlined_call_operand.vmem [shape: f32[1,32], index: 2, kind: input, shape index: {}]
  %s3 = inlined_call_operand.vmem [shape: f32[64,32], index: 3, kind: output, shape index: {}]
  %s4 = sld [smem:[#allocation0]]
  $region22: #{_lambda_.29} parent=0
    _
  %s6 = ssub.s32 1, %s4
  %s7 = scalar_select 0, %s6, %s4
  // Predicated region
  $region2: #{_lambda_.29} parent=0 // pred_check
    _
  $region3: #{_lambda_.29} parent=0 // pred_check_branch
    %9 = sbr.rel (0) target = $region5
  $region4: #{_lambda_.29} parent=0 // pred_region
    _
  $region5: #{_lambda_.29} parent=0 // pred_fallthru
    _
  // Predicated region
  $region6: #{_lambda_.29} parent=0 // pred_check
    _
  $region7: #{_lambda_.29} parent=0 // pred_check_branch
    %11 = sbr.rel (0) target = $region9
  $region8: #{_lambda_.29} parent=0 // pred_region
    _
  $region9: #{_lambda_.29} parent=0 // pred_fallthru
    _
  // Predicated region
  $region10: #{_lambda_.29} parent=0 // pred_check
    _
  $region11: #{_lambda_.29} parent=0 // pred_check_branch
    %13 = sbr.rel (0) target = $region13
  $region12: #{_lambda_.29} parent=0 // pred_region
    _
  $region13: #{_lambda_.29} parent=0 // pred_fallthru
    _
  %v15 = vld [vmem:[%s0] sm:$0xff]
  %v16 = vld [vmem:[%s0 + $0x8] sm:$0xff]
  %v17 = vld [vmem:[%s0 + $0x10] sm:$0xff]
  %v18 = vld [vmem:[%s0 + $0x18] sm:$0xff]
  %v19 = vld [vmem:[%s0 + $0x20] sm:$0xff]
  %v20 = vld [vmem:[%s0 + $0x28] sm:$0xff]
  %v21 = vld [vmem:[%s0 + $0x30] sm:$0xff]
  %v22 = vld [vmem:[%s0 + $0x38] sm:$0xff]
  %v23 = vpack.c.bf16 %v16, %v15
  %v24 = vpack.c.bf16 %v18, %v17
  %v25 = vpack.c.bf16 %v20, %v19
  %v26 = vpack.c.bf16 %v22, %v21
  %v27 = vld [vmem:[%s1] sm:$0xf]
  %v28 = vld [vmem:[%s2] sm:$0x1]
  %v30 = vperm.slane %v28, 0
  %vm32 = vcmask 64512
  %v34 = vsel %vm32, %v23, 0
  %v37 = vsel %vm32, %v24, 0
  %v40 = vsel %vm32, %v25, 0
  %v43 = vsel %vm32, %v26, 0
  %vm45 = vcmask 1043456
  %v47 = vsel %vm45, %v27, 0
  %49 = vmatpush.bf16.msra.mxu0 0
  %50 = vmatpush.bf16.msra.mxu0 0
  %51 = vmatpush.bf16.msra.mxu0 0
  %52 = vmatpush.bf16.msra.mxu0 0
  %53 = vmatpush.bf16.msra.mxu0 0
  %54 = vmatpush.bf16.msra.mxu0 0
  %55 = vmatpush.bf16.msra.mxu0 0
  %56 = vmatpush.bf16.msra.mxu0 %v47
  %57 = vmatmul.bf16.gmra.mxu0 %v34
  %v58 = vpop.f32.mrf.mxu0
  %v59 = vadd.f32 %v30, %v58
  %v60 = vpop.f32.mrf.mxu0
  %v61 = vadd.f32 %v30, %v60
  %62 = vmatmul.bf16.gmra.mxu0 %v37
  %v63 = vpop.f32.mrf.mxu0
  %v64 = vadd.f32 %v30, %v63
  %v65 = vpop.f32.mrf.mxu0
  %v66 = vadd.f32 %v30, %v65
  %67 = vmatmul.bf16.gmra.mxu0 %v40
  %v68 = vpop.f32.mrf.mxu0
  %v69 = vadd.f32 %v30, %v68
  %v70 = vpop.f32.mrf.mxu0
  %v71 = vadd.f32 %v30, %v70
  %72 = vmatmul.bf16.gmra.mxu0 %v43
  %v73 = vpop.f32.mrf.mxu0
  %v74 = vadd.f32 %v30, %v73
  %v75 = vpop.f32.mrf.mxu0
  %v76 = vadd.f32 %v30, %v75
  %77 = vdwg.mxu0
  %vm78 = vcmask 261120
  %79 = vst.msk [vmem:[%s3] sm:$0xff] %vm78, %v59
  %80 = vst.msk [vmem:[%s3 + $0x8] sm:$0xff] %vm78, %v61
  %81 = vst.msk [vmem:[%s3 + $0x10] sm:$0xff] %vm78, %v64
  %82 = vst.msk [vmem:[%s3 + $0x18] sm:$0xff] %vm78, %v66
  %83 = vst.msk [vmem:[%s3 + $0x20] sm:$0xff] %vm78, %v69
  %84 = vst.msk [vmem:[%s3 + $0x28] sm:$0xff] %vm78, %v71
  %85 = vst.msk [vmem:[%s3 + $0x30] sm:$0xff] %vm78, %v74
  %86 = vst.msk [vmem:[%s3 + $0x38] sm:$0xff] %vm78, %v76
  // Predicated region
  $region14: #{_lambda_.29} parent=0 // pred_check
    _
  $region15: #{_lambda_.29} parent=0 // pred_check_branch
    %88 = sbr.rel (0) target = $region17
  $region16: #{_lambda_.29} parent=0 // pred_region
    _
  $region17: #{_lambda_.29} parent=0 // pred_fallthru
    _
  // Predicated region
  $region18: #{_lambda_.29} parent=0 // pred_check
    _
  $region19: #{_lambda_.29} parent=0 // pred_check_branch
    %90 = sbr.rel (0) target = $region21
  $region20: #{_lambda_.29} parent=0 // pred_region
    _
  $region21: #{_lambda_.29} parent=0 // pred_fallthru
    _

// kernel: _lambda_.30
$region0: #{_lambda_.30}
  #allocation0 [shape = 'u32[]', space=smem, size = 0x4, offset = 0x4, fixed_abs, tag = 'smem constant byte address 0x4 - core index']
  #allocation1 [shape = 'u32[72,128]{1,0:T(1,128)}', space=vmem, size = 0x9000, scoped, tag = 'internal scratch']
  %s0 = inlined_call_operand.vmem [shape: f32[8,8], index: 0, kind: input, shape index: {}]
  %s1 = inlined_call_operand.vmem [shape: bf16[8,16], index: 1, kind: input, shape index: {}]
  %s2 = inlined_call_operand.vmem [shape: f32[1,16], index: 2, kind: input, shape index: {}]
  %s3 = inlined_call_operand.vmem [shape: f32[8,16], index: 3, kind: output, shape index: {}]
  %s4 = sld [smem:[#allocation0]]
  $region22: #{_lambda_.30} parent=0
    _
  %s6 = ssub.s32 1, %s4
  %s7 = scalar_select 0, %s6, %s4
  // Predicated region
  $region2: #{_lambda_.30} parent=0 // pred_check
    _
  $region3: #{_lambda_.30} parent=0 // pred_check_branch
    %9 = sbr.rel (0) target = $region5
  $region4: #{_lambda_.30} parent=0 // pred_region
    _
  $region5: #{_lambda_.30} parent=0 // pred_fallthru
    _
  // Predicated region
  $region6: #{_lambda_.30} parent=0 // pred_check
    _
  $region7: #{_lambda_.30} parent=0 // pred_check_branch
    %11 = sbr.rel (0) target = $region9
  $region8: #{_lambda_.30} parent=0 // pred_region
    _
  $region9: #{_lambda_.30} parent=0 // pred_fallthru
    _
  // Predicated region
  $region10: #{_lambda_.30} parent=0 // pred_check
    _
  $region11: #{_lambda_.30} parent=0 // pred_check_branch
    %13 = sbr.rel (0) target = $region13
  $region12: #{_lambda_.30} parent=0 // pred_region
    _
  $region13: #{_lambda_.30} parent=0 // pred_fallthru
    _
  %v15 = vld [vmem:[%s0] sm:$0xff]
  %v16 = vpack.c.bf16 %v15, %v15
  %v17 = vld [vmem:[%s1] sm:$0xf]
  %v18 = vld [vmem:[%s2] sm:$0x1]
  %v20 = vperm.slane %v18, 0
  %vm22 = vcmask 64512
  %v24 = vsel %vm22, %v16, 0
  %vm26 = vcmask 1043456
  %v28 = vsel %vm26, %v17, 0
  %30 = vmatpush.bf16.msra.mxu0 0
  %31 = vmatpush.bf16.msra.mxu0 0
  %32 = vmatpush.bf16.msra.mxu0 0
  %33 = vmatpush.bf16.msra.mxu0 0
  %34 = vmatpush.bf16.msra.mxu0 0
  %35 = vmatpush.bf16.msra.mxu0 0
  %36 = vmatpush.bf16.msra.mxu0 0
  %37 = vmatpush.bf16.msra.mxu0 %v28
  %38 = vmatmul.bf16.gmra.mxu0 %v24
  %v39 = vpop.f32.mrf.mxu0
  %v40 = vadd.f32 %v20, %v39
  %v41 = vpop.f32.mrf.mxu0
  %42 = vdwg.mxu0
  %vm43 = vcmask 130048
  %44 = vst.msk [vmem:[%s3] sm:$0xff] %vm43, %v40
  // Predicated region
  $region14: #{_lambda_.30} parent=0 // pred_check
    _
  $region15: #{_lambda_.30} parent=0 // pred_check_branch
    %46 = sbr.rel (0) target = $region17
  $region16: #{_lambda_.30} parent=0 // pred_region
    _
  $region17: #{_lambda_.30} parent=0 // pred_fallthru
    _
  // Predicated region
  $region18: #{_lambda_.30} parent=0 // pred_check
    _
  $region19: #{_lambda_.30} parent=0 // pred_check_branch
    %48 = sbr.rel (0) target = $region21
  $region20: #{_lambda_.30} parent=0 // pred_region
    _
  $region21: #{_lambda_.30} parent=0 // pred_fallthru
    _

// kernel: _lambda_.31
$region0: #{_lambda_.31}
  #allocation0 [shape = 'u32[]', space=smem, size = 0x4, offset = 0x4, fixed_abs, tag = 'smem constant byte address 0x4 - core index']
  #allocation1 [shape = 'u32[72,128]{1,0:T(1,128)}', space=vmem, size = 0x9000, scoped, tag = 'internal scratch']
  %s0 = inlined_call_operand.vmem [shape: bf16[1,8,2,8], index: 0, kind: input, shape index: {}]
  %s1 = inlined_call_operand.vmem [shape: bf16[1,8,8,8], index: 1, kind: input, shape index: {}]
  %s2 = inlined_call_operand.vmem [shape: bf16[1,8,8,8], index: 2, kind: input, shape index: {}]
  %s3 = inlined_call_operand.vmem [shape: f32[1,8,8], index: 3, kind: input, shape index: {}]
  %s4 = inlined_call_operand.vmem [shape: f32[1,8,2,8], index: 4, kind: output, shape index: {}]
  %s5 = sld [smem:[#allocation0]]
  $region26: #{_lambda_.31} parent=0
    _
  %s7 = ssub.s32 1, %s5
  %s8 = scalar_select 0, %s7, %s5
  // Predicated region
  $region2: #{_lambda_.31} parent=0 // pred_check
    _
  $region3: #{_lambda_.31} parent=0 // pred_check_branch
    %10 = sbr.rel (0) target = $region5
  $region4: #{_lambda_.31} parent=0 // pred_region
    _
  $region5: #{_lambda_.31} parent=0 // pred_fallthru
    _
  // Predicated region
  $region6: #{_lambda_.31} parent=0 // pred_check
    _
  $region7: #{_lambda_.31} parent=0 // pred_check_branch
    %12 = sbr.rel (0) target = $region9
  $region8: #{_lambda_.31} parent=0 // pred_region
    _
  $region9: #{_lambda_.31} parent=0 // pred_fallthru
    _
  // Predicated region
  $region10: #{_lambda_.31} parent=0 // pred_check
    _
  $region11: #{_lambda_.31} parent=0 // pred_check_branch
    %14 = sbr.rel (0) target = $region13
  $region12: #{_lambda_.31} parent=0 // pred_region
    _
  $region13: #{_lambda_.31} parent=0 // pred_fallthru
    _
  // Predicated region
  $region14: #{_lambda_.31} parent=0 // pred_check
    _
  $region15: #{_lambda_.31} parent=0 // pred_check_branch
    %16 = sbr.rel (0) target = $region17
  $region16: #{_lambda_.31} parent=0 // pred_region
    _
  $region17: #{_lambda_.31} parent=0 // pred_fallthru
    _
  %v18 = vld [vmem:[%s0] sm:$0x1]
  %v19 = vld [vmem:[%s0 + $0x1] sm:$0x1]
  %v20 = vld [vmem:[%s0 + $0x2] sm:$0x1]
  %v21 = vld [vmem:[%s0 + $0x3] sm:$0x1]
  %v22 = vld [vmem:[%s0 + $0x4] sm:$0x1]
  %v23 = vld [vmem:[%s0 + $0x5] sm:$0x1]
  %v24 = vld [vmem:[%s0 + $0x6] sm:$0x1]
  %v25 = vld [vmem:[%s0 + $0x7] sm:$0x1]
  %v26 = vld [vmem:[%s1] sm:$0xf]
  %v27 = vld [vmem:[%s1 + $0x4] sm:$0xf]
  %v28 = vld [vmem:[%s1 + $0x8] sm:$0xf]
  %v29 = vld [vmem:[%s1 + $0xc] sm:$0xf]
  %v30 = vld [vmem:[%s1 + $0x10] sm:$0xf]
  %v31 = vld [vmem:[%s1 + $0x14] sm:$0xf]
  %v32 = vld [vmem:[%s1 + $0x18] sm:$0xf]
  %v33 = vld [vmem:[%s1 + $0x1c] sm:$0xf]
  %v34 = vld [vmem:[%s2] sm:$0xf]
  %v35 = vld [vmem:[%s2 + $0x4] sm:$0xf]
  %v36 = vld [vmem:[%s2 + $0x8] sm:$0xf]
  %v37 = vld [vmem:[%s2 + $0xc] sm:$0xf]
  %v38 = vld [vmem:[%s2 + $0x10] sm:$0xf]
  %v39 = vld [vmem:[%s2 + $0x14] sm:$0xf]
  %v40 = vld [vmem:[%s2 + $0x18] sm:$0xf]
  %v41 = vld [vmem:[%s2 + $0x1c] sm:$0xf]
  %vm42 = vcmask 64512
  %v44 = vsel %vm42, %v18, 0
  %v47 = vsel %vm42, %v26, 0
  %49 = vmatpush.bf16.xpose.msra.mxu0 0
  %50 = vmatpush.bf16.xpose.msra.mxu0 0
  %51 = vmatpush.bf16.xpose.msra.mxu0 0
  %52 = vmatpush.bf16.xpose.msra.mxu0 0
  %53 = vmatpush.bf16.xpose.msra.mxu0 0
  %54 = vmatpush.bf16.xpose.msra.mxu0 0
  %55 = vmatpush.bf16.xpose.msra.mxu0 0
  %56 = vmatpush.bf16.xpose.msra.mxu0 %v47
  %57 = vmatmul.bf16.gmra.mxu0 %v44
  %v58 = vpop.f32.mrf.mxu0
  %v59 = vadd.f32 0.0, %v58
  %v60 = vpop.f32.mrf.mxu0
  %61 = vdwg.mxu0
  %v63 = vsel %vm42, %v19, 0
  %v66 = vsel %vm42, %v27, 0
  %68 = vmatpush.bf16.xpose.msra.mxu0 0
  %69 = vmatpush.bf16.xpose.msra.mxu0 0
  %70 = vmatpush.bf16.xpose.msra.mxu0 0
  %71 = vmatpush.bf16.xpose.msra.mxu0 0
  %72 = vmatpush.bf16.xpose.msra.mxu0 0
  %73 = vmatpush.bf16.xpose.msra.mxu0 0
  %74 = vmatpush.bf16.xpose.msra.mxu0 0
  %75 = vmatpush.bf16.xpose.msra.mxu0 %v66
  %76 = vmatmul.bf16.gmra.mxu0 %v63
  %v77 = vpop.f32.mrf.mxu0
  %v78 = vadd.f32 0.0, %v77
  %v79 = vpop.f32.mrf.mxu0
  %80 = vdwg.mxu0
  %v82 = vsel %vm42, %v20, 0
  %v85 = vsel %vm42, %v28, 0
  %87 = vmatpush.bf16.xpose.msra.mxu0 0
  %88 = vmatpush.bf16.xpose.msra.mxu0 0
  %89 = vmatpush.bf16.xpose.msra.mxu0 0
  %90 = vmatpush.bf16.xpose.msra.mxu0 0
  %91 = vmatpush.bf16.xpose.msra.mxu0 0
  %92 = vmatpush.bf16.xpose.msra.mxu0 0
  %93 = vmatpush.bf16.xpose.msra.mxu0 0
  %94 = vmatpush.bf16.xpose.msra.mxu0 %v85
  %95 = vmatmul.bf16.gmra.mxu0 %v82
  %v96 = vpop.f32.mrf.mxu0
  %v97 = vadd.f32 0.0, %v96
  %v98 = vpop.f32.mrf.mxu0
  %99 = vdwg.mxu0
  %v101 = vsel %vm42, %v21, 0
  %v104 = vsel %vm42, %v29, 0
  %106 = vmatpush.bf16.xpose.msra.mxu0 0
  %107 = vmatpush.bf16.xpose.msra.mxu0 0
  %108 = vmatpush.bf16.xpose.msra.mxu0 0
  %109 = vmatpush.bf16.xpose.msra.mxu0 0
  %110 = vmatpush.bf16.xpose.msra.mxu0 0
  %111 = vmatpush.bf16.xpose.msra.mxu0 0
  %112 = vmatpush.bf16.xpose.msra.mxu0 0
  %113 = vmatpush.bf16.xpose.msra.mxu0 %v104
  %114 = vmatmul.bf16.gmra.mxu0 %v101
  %v115 = vpop.f32.mrf.mxu0
  %v116 = vadd.f32 0.0, %v115
  %v117 = vpop.f32.mrf.mxu0
  %118 = vdwg.mxu0
  %v120 = vsel %vm42, %v22, 0
  %v123 = vsel %vm42, %v30, 0
  %125 = vmatpush.bf16.xpose.msra.mxu0 0
  %126 = vmatpush.bf16.xpose.msra.mxu0 0
  %127 = vmatpush.bf16.xpose.msra.mxu0 0
  %128 = vmatpush.bf16.xpose.msra.mxu0 0
  %129 = vmatpush.bf16.xpose.msra.mxu0 0
  %130 = vmatpush.bf16.xpose.msra.mxu0 0
  %131 = vmatpush.bf16.xpose.msra.mxu0 0
  %132 = vmatpush.bf16.xpose.msra.mxu0 %v123
  %133 = vmatmul.bf16.gmra.mxu0 %v120
  %v134 = vpop.f32.mrf.mxu0
  %v135 = vadd.f32 0.0, %v134
  %v136 = vpop.f32.mrf.mxu0
  %137 = vdwg.mxu0
  %v139 = vsel %vm42, %v23, 0
  %v142 = vsel %vm42, %v31, 0
  %144 = vmatpush.bf16.xpose.msra.mxu0 0
  %145 = vmatpush.bf16.xpose.msra.mxu0 0
  %146 = vmatpush.bf16.xpose.msra.mxu0 0
  %147 = vmatpush.bf16.xpose.msra.mxu0 0
  %148 = vmatpush.bf16.xpose.msra.mxu0 0
  %149 = vmatpush.bf16.xpose.msra.mxu0 0
  %150 = vmatpush.bf16.xpose.msra.mxu0 0
  %151 = vmatpush.bf16.xpose.msra.mxu0 %v142
  %152 = vmatmul.bf16.gmra.mxu0 %v139
  %v153 = vpop.f32.mrf.mxu0
  %v154 = vadd.f32 0.0, %v153
  %v155 = vpop.f32.mrf.mxu0
  %156 = vdwg.mxu0
  %v158 = vsel %vm42, %v24, 0
  %v161 = vsel %vm42, %v32, 0
  %163 = vmatpush.bf16.xpose.msra.mxu0 0
  %164 = vmatpush.bf16.xpose.msra.mxu0 0
  %165 = vmatpush.bf16.xpose.msra.mxu0 0
  %166 = vmatpush.bf16.xpose.msra.mxu0 0
  %167 = vmatpush.bf16.xpose.msra.mxu0 0
  %168 = vmatpush.bf16.xpose.msra.mxu0 0
  %169 = vmatpush.bf16.xpose.msra.mxu0 0
  %170 = vmatpush.bf16.xpose.msra.mxu0 %v161
  %171 = vmatmul.bf16.gmra.mxu0 %v158
  %v172 = vpop.f32.mrf.mxu0
  %v173 = vadd.f32 0.0, %v172
  %v174 = vpop.f32.mrf.mxu0
  %175 = vdwg.mxu0
  %v177 = vsel %vm42, %v25, 0
  %v180 = vsel %vm42, %v33, 0
  %182 = vmatpush.bf16.xpose.msra.mxu0 0
  %183 = vmatpush.bf16.xpose.msra.mxu0 0
  %184 = vmatpush.bf16.xpose.msra.mxu0 0
  %185 = vmatpush.bf16.xpose.msra.mxu0 0
  %186 = vmatpush.bf16.xpose.msra.mxu0 0
  %187 = vmatpush.bf16.xpose.msra.mxu0 0
  %188 = vmatpush.bf16.xpose.msra.mxu0 0
  %189 = vmatpush.bf16.xpose.msra.mxu0 %v180
  %190 = vmatmul.bf16.gmra.mxu0 %v177
  %v191 = vpop.f32.mrf.mxu0
  %v192 = vadd.f32 0.0, %v191
  %v193 = vpop.f32.mrf.mxu0
  %194 = vdwg.mxu0
  %v195 = vmul.f32 %v59, 0.35355338
  %v196 = vmul.f32 %v78, 0.35355338
  %v197 = vmul.f32 %v97, 0.35355338
  %v198 = vmul.f32 %v116, 0.35355338
  %v199 = vmul.f32 %v135, 0.35355338
  %v200 = vmul.f32 %v154, 0.35355338
  %v201 = vmul.f32 %v173, 0.35355338
  %v202 = vmul.f32 %v192, 0.35355338
  %v203 = vld [vmem:[%s3] sm:$0xff]
  %v205 = vrot.slane %v203, 1
  %v206 = vrot.slane %v203, 2
  %v207 = vrot.slane %v203, 3
  %v208 = vrot.slane %v203, 4
  %v209 = vrot.slane %v203, 5
  %v210 = vrot.slane %v203, 6
  %v211 = vrot.slane %v203, 7
  %v219 = vsub.f32 %v203, 1.0
  %v220 = vsub.f32 %v205, 1.0
  %v221 = vsub.f32 %v206, 1.0
  %v222 = vsub.f32 %v207, 1.0
  %v223 = vsub.f32 %v208, 1.0
  %v224 = vsub.f32 %v209, 1.0
  %v225 = vsub.f32 %v210, 1.0
  %v226 = vsub.f32 %v211, 1.0
  %v227 = vmul.f32 %v219, 1e+09
  %v228 = vmul.f32 %v220, 1e+09
  %v229 = vmul.f32 %v221, 1e+09
  %v230 = vmul.f32 %v222, 1e+09
  %v231 = vmul.f32 %v223, 1e+09
  %v232 = vmul.f32 %v224, 1e+09
  %v233 = vmul.f32 %v225, 1e+09
  %v234 = vmul.f32 %v226, 1e+09
  %v243 = vperm.slane %v227, 0
  %v244 = vperm.slane %v228, 0
  %v245 = vperm.slane %v229, 0
  %v246 = vperm.slane %v230, 0
  %v247 = vperm.slane %v231, 0
  %v248 = vperm.slane %v232, 0
  %v249 = vperm.slane %v233, 0
  %v250 = vperm.slane %v234, 0
  %v259 = vadd.f32 %v195, %v243
  %v260 = vadd.f32 %v196, %v244
  %v261 = vadd.f32 %v197, %v245
  %v262 = vadd.f32 %v198, %v246
  %v263 = vadd.f32 %v199, %v247
  %v264 = vadd.f32 %v200, %v248
  %v265 = vadd.f32 %v201, %v249
  %v266 = vadd.f32 %v202, %v250
  %vm267 = vcmask 58368
  %v268 = vsel %vm267, %v259, -inf
  %269 = vmax.xlane.f32.xlu0 %v268
  %v270 = vpop.xlane.xlu0 %269
  %v271 = vsel %vm267, %v260, -inf
  %272 = vmax.xlane.f32.xlu0 %v271
  %v273 = vpop.xlane.xlu0 %272
  %v274 = vsel %vm267, %v261, -inf
  %275 = vmax.xlane.f32.xlu0 %v274
  %v276 = vpop.xlane.xlu0 %275
  %v277 = vsel %vm267, %v262, -inf
  %278 = vmax.xlane.f32.xlu0 %v277
  %v279 = vpop.xlane.xlu0 %278
  %v280 = vsel %vm267, %v263, -inf
  %281 = vmax.xlane.f32.xlu0 %v280
  %v282 = vpop.xlane.xlu0 %281
  %v283 = vsel %vm267, %v264, -inf
  %284 = vmax.xlane.f32.xlu0 %v283
  %v285 = vpop.xlane.xlu0 %284
  %v286 = vsel %vm267, %v265, -inf
  %287 = vmax.xlane.f32.xlu0 %v286
  %v288 = vpop.xlane.xlu0 %287
  %v289 = vsel %vm267, %v266, -inf
  %290 = vmax.xlane.f32.xlu0 %v289
  %v291 = vpop.xlane.xlu0 %290
  %v292 = vsub.f32 %v259, %v270
  %v293 = vsub.f32 %v260, %v273
  %v294 = vsub.f32 %v261, %v276
  %v295 = vsub.f32 %v262, %v279
  %v296 = vsub.f32 %v263, %v282
  %v297 = vsub.f32 %v264, %v285
  %v298 = vsub.f32 %v265, %v288
  %v299 = vsub.f32 %v266, %v291
  %v300 = vmul.f32 %v292, 1.442695
  %v301 = vpow.pop %v300
  %v302 = vmul.f32 %v293, 1.442695
  %v303 = vpow.pop %v302
  %v304 = vmul.f32 %v294, 1.442695
  %v305 = vpow.pop %v304
  %v306 = vmul.f32 %v295, 1.442695
  %v307 = vpow.pop %v306
  %v308 = vmul.f32 %v296, 1.442695
  %v309 = vpow.pop %v308
  %v310 = vmul.f32 %v297, 1.442695
  %v311 = vpow.pop %v310
  %v312 = vmul.f32 %v298, 1.442695
  %v313 = vpow.pop %v312
  %v314 = vmul.f32 %v299, 1.442695
  %v315 = vpow.pop %v314
  %v316 = vsel %vm267, %v301, 0.0
  %317 = vadd.xlane.f32.xlu0 %v316
  %v318 = vpop.xlane.xlu0 %317
  %v319 = vsel %vm267, %v303, 0.0
  %320 = vadd.xlane.f32.xlu0 %v319
  %v321 = vpop.xlane.xlu0 %320
  %v322 = vsel %vm267, %v305, 0.0
  %323 = vadd.xlane.f32.xlu0 %v322
  %v324 = vpop.xlane.xlu0 %323
  %v325 = vsel %vm267, %v307, 0.0
  %326 = vadd.xlane.f32.xlu0 %v325
  %v327 = vpop.xlane.xlu0 %326
  %v328 = vsel %vm267, %v309, 0.0
  %329 = vadd.xlane.f32.xlu0 %v328
  %v330 = vpop.xlane.xlu0 %329
  %v331 = vsel %vm267, %v311, 0.0
  %332 = vadd.xlane.f32.xlu0 %v331
  %v333 = vpop.xlane.xlu0 %332
  %v334 = vsel %vm267, %v313, 0.0
  %335 = vadd.xlane.f32.xlu0 %v334
  %v336 = vpop.xlane.xlu0 %335
  %v337 = vsel %vm267, %v315, 0.0
  %338 = vadd.xlane.f32.xlu0 %v337
  %v339 = vpop.xlane.xlu0 %338
  %v340 = vrcp.pop %v318
  %v341 = vrcp.pop %v321
  %v342 = vrcp.pop %v324
  %v343 = vrcp.pop %v327
  %v344 = vrcp.pop %v330
  %v345 = vrcp.pop %v333
  %v346 = vrcp.pop %v336
  %v347 = vrcp.pop %v339
  %v348 = vmul.f32 %v301, %v340
  %v349 = vmul.f32 %v303, %v341
  %v350 = vmul.f32 %v305, %v342
  %v351 = vmul.f32 %v307, %v343
  %v352 = vmul.f32 %v309, %v344
  %v353 = vmul.f32 %v311, %v345
  %v354 = vmul.f32 %v313, %v346
  %v355 = vmul.f32 %v315, %v347
  %v356 = vpack.c.bf16 %v348, %v348
  %v357 = vpack.c.bf16 %v349, %v349
  %v358 = vpack.c.bf16 %v350, %v350
  %v359 = vpack.c.bf16 %v351, %v351
  %v360 = vpack.c.bf16 %v352, %v352
  %v361 = vpack.c.bf16 %v353, %v353
  %v362 = vpack.c.bf16 %v354, %v354
  %v363 = vpack.c.bf16 %v355, %v355
  %v365 = vsel %vm42, %v356, 0
  %vm367 = vcmask 1043456
  %v369 = vsel %vm367, %v34, 0
  %371 = vmatpush.bf16.msra.mxu0 0
  %372 = vmatpush.bf16.msra.mxu0 0
  %373 = vmatpush.bf16.msra.mxu0 0
  %374 = vmatpush.bf16.msra.mxu0 0
  %375 = vmatpush.bf16.msra.mxu0 0
  %376 = vmatpush.bf16.msra.mxu0 0
  %377 = vmatpush.bf16.msra.mxu0 0
  %378 = vmatpush.bf16.msra.mxu0 %v369
  %379 = vmatmul.bf16.gmra.mxu0 %v365
  %v380 = vpop.f32.mrf.mxu0
  %v381 = vadd.f32 0.0, %v380
  %v382 = vpop.f32.mrf.mxu0
  %383 = vdwg.mxu0
  %v385 = vsel %vm42, %v357, 0
  %v388 = vsel %vm367, %v35, 0
  %390 = vmatpush.bf16.msra.mxu0 0
  %391 = vmatpush.bf16.msra.mxu0 0
  %392 = vmatpush.bf16.msra.mxu0 0
  %393 = vmatpush.bf16.msra.mxu0 0
  %394 = vmatpush.bf16.msra.mxu0 0
  %395 = vmatpush.bf16.msra.mxu0 0
  %396 = vmatpush.bf16.msra.mxu0 0
  %397 = vmatpush.bf16.msra.mxu0 %v388
  %398 = vmatmul.bf16.gmra.mxu0 %v385
  %v399 = vpop.f32.mrf.mxu0
  %v400 = vadd.f32 0.0, %v399
  %v401 = vpop.f32.mrf.mxu0
  %402 = vdwg.mxu0
  %v404 = vsel %vm42, %v358, 0
  %v407 = vsel %vm367, %v36, 0
  %409 = vmatpush.bf16.msra.mxu0 0
  %410 = vmatpush.bf16.msra.mxu0 0
  %411 = vmatpush.bf16.msra.mxu0 0
  %412 = vmatpush.bf16.msra.mxu0 0
  %413 = vmatpush.bf16.msra.mxu0 0
  %414 = vmatpush.bf16.msra.mxu0 0
  %415 = vmatpush.bf16.msra.mxu0 0
  %416 = vmatpush.bf16.msra.mxu0 %v407
  %417 = vmatmul.bf16.gmra.mxu0 %v404
  %v418 = vpop.f32.mrf.mxu0
  %v419 = vadd.f32 0.0, %v418
  %v420 = vpop.f32.mrf.mxu0
  %421 = vdwg.mxu0
  %v423 = vsel %vm42, %v359, 0
  %v426 = vsel %vm367, %v37, 0
  %428 = vmatpush.bf16.msra.mxu0 0
  %429 = vmatpush.bf16.msra.mxu0 0
  %430 = vmatpush.bf16.msra.mxu0 0
  %431 = vmatpush.bf16.msra.mxu0 0
  %432 = vmatpush.bf16.msra.mxu0 0
  %433 = vmatpush.bf16.msra.mxu0 0
  %434 = vmatpush.bf16.msra.mxu0 0
  %435 = vmatpush.bf16.msra.mxu0 %v426
  %436 = vmatmul.bf16.gmra.mxu0 %v423
  %v437 = vpop.f32.mrf.mxu0
  %v438 = vadd.f32 0.0, %v437
  %v439 = vpop.f32.mrf.mxu0
  %440 = vdwg.mxu0
  %v442 = vsel %vm42, %v360, 0
  %v445 = vsel %vm367, %v38, 0
  %447 = vmatpush.bf16.msra.mxu0 0
  %448 = vmatpush.bf16.msra.mxu0 0
  %449 = vmatpush.bf16.msra.mxu0 0
  %450 = vmatpush.bf16.msra.mxu0 0
  %451 = vmatpush.bf16.msra.mxu0 0
  %452 = vmatpush.bf16.msra.mxu0 0
  %453 = vmatpush.bf16.msra.mxu0 0
  %454 = vmatpush.bf16.msra.mxu0 %v445
  %455 = vmatmul.bf16.gmra.mxu0 %v442
  %v456 = vpop.f32.mrf.mxu0
  %v457 = vadd.f32 0.0, %v456
  %v458 = vpop.f32.mrf.mxu0
  %459 = vdwg.mxu0
  %v461 = vsel %vm42, %v361, 0
  %v464 = vsel %vm367, %v39, 0
  %466 = vmatpush.bf16.msra.mxu0 0
  %467 = vmatpush.bf16.msra.mxu0 0
  %468 = vmatpush.bf16.msra.mxu0 0
  %469 = vmatpush.bf16.msra.mxu0 0
  %470 = vmatpush.bf16.msra.mxu0 0
  %471 = vmatpush.bf16.msra.mxu0 0
  %472 = vmatpush.bf16.msra.mxu0 0
  %473 = vmatpush.bf16.msra.mxu0 %v464
  %474 = vmatmul.bf16.gmra.mxu0 %v461
  %v475 = vpop.f32.mrf.mxu0
  %v476 = vadd.f32 0.0, %v475
  %v477 = vpop.f32.mrf.mxu0
  %478 = vdwg.mxu0
  %v480 = vsel %vm42, %v362, 0
  %v483 = vsel %vm367, %v40, 0
  %485 = vmatpush.bf16.msra.mxu0 0
  %486 = vmatpush.bf16.msra.mxu0 0
  %487 = vmatpush.bf16.msra.mxu0 0
  %488 = vmatpush.bf16.msra.mxu0 0
  %489 = vmatpush.bf16.msra.mxu0 0
  %490 = vmatpush.bf16.msra.mxu0 0
  %491 = vmatpush.bf16.msra.mxu0 0
  %492 = vmatpush.bf16.msra.mxu0 %v483
  %493 = vmatmul.bf16.gmra.mxu0 %v480
  %v494 = vpop.f32.mrf.mxu0
  %v495 = vadd.f32 0.0, %v494
  %v496 = vpop.f32.mrf.mxu0
  %497 = vdwg.mxu0
  %v499 = vsel %vm42, %v363, 0
  %v502 = vsel %vm367, %v41, 0
  %504 = vmatpush.bf16.msra.mxu0 0
  %505 = vmatpush.bf16.msra.mxu0 0
  %506 = vmatpush.bf16.msra.mxu0 0
  %507 = vmatpush.bf16.msra.mxu0 0
  %508 = vmatpush.bf16.msra.mxu0 0
  %509 = vmatpush.bf16.msra.mxu0 0
  %510 = vmatpush.bf16.msra.mxu0 0
  %511 = vmatpush.bf16.msra.mxu0 %v502
  %512 = vmatmul.bf16.gmra.mxu0 %v499
  %v513 = vpop.f32.mrf.mxu0
  %v514 = vadd.f32 0.0, %v513
  %v515 = vpop.f32.mrf.mxu0
  %516 = vdwg.mxu0
  %517 = vst.msk [vmem:[%s4] sm:$0x3] %vm267, %v381
  %518 = vst.msk [vmem:[%s4 + $0x2] sm:$0x3] %vm267, %v400
  %519 = vst.msk [vmem:[%s4 + $0x4] sm:$0x3] %vm267, %v419
  %520 = vst.msk [vmem:[%s4 + $0x6] sm:$0x3] %vm267, %v438
  %521 = vst.msk [vmem:[%s4 + $0x8] sm:$0x3] %vm267, %v457
  %522 = vst.msk [vmem:[%s4 + $0xa] sm:$0x3] %vm267, %v476
  %523 = vst.msk [vmem:[%s4 + $0xc] sm:$0x3] %vm267, %v495
  %524 = vst.msk [vmem:[%s4 + $0xe] sm:$0x3] %vm267, %v514
  // Predicated region
  $region18: #{_lambda_.31} parent=0 // pred_check
    _
  $region19: #{_lambda_.31} parent=0 // pred_check_branch
    %526 = sbr.rel (0) target = $region21
  $region20: #{_lambda_.31} parent=0 // pred_region
    _
  $region21: #{_lambda_.31} parent=0 // pred_fallthru
    _
  // Predicated region
  $region22: #{_lambda_.31} parent=0 // pred_check
    _
  $region23: #{_lambda_.31} parent=0 // pred_check_branch
    %528 = sbr.rel (0) target = $region25
  $region24: #{_lambda_.31} parent=0 // pred_region
    _
  $region25: #{_lambda_.31} parent=0 // pred_fallthru
    _

// kernel: _lambda_.34
$region0: #{_lambda_.34}
  #allocation0 [shape = 'u32[]', space=smem, size = 0x4, offset = 0x4, fixed_abs, tag = 'smem constant byte address 0x4 - core index']
  #allocation1 [shape = 'u32[72,128]{1,0:T(1,128)}', space=vmem, size = 0x9000, scoped, tag = 'internal scratch']
  %s0 = inlined_call_operand.vmem [shape: f32[64,8], index: 0, kind: input, shape index: {}]
  %s1 = inlined_call_operand.vmem [shape: f32[64,1], index: 1, kind: input, shape index: {}]
  %s2 = inlined_call_operand.vmem [shape: f32[1,8], index: 2, kind: input, shape index: {}]
  %s3 = inlined_call_operand.vmem [shape: f32[1,8], index: 3, kind: input, shape index: {}]
  %s4 = inlined_call_operand.vmem [shape: bf16[8,16], index: 4, kind: input, shape index: {}]
  %s5 = inlined_call_operand.vmem [shape: f32[1,16], index: 5, kind: input, shape index: {}]
  %s6 = inlined_call_operand.vmem [shape: f32[64,16], index: 6, kind: output, shape index: {}]
  %s7 = sld [smem:[#allocation0]]
  $region34: #{_lambda_.34} parent=0
    _
  %s9 = ssub.s32 1, %s7
  %s10 = scalar_select 0, %s9, %s7
  // Predicated region
  $region2: #{_lambda_.34} parent=0 // pred_check
    _
  $region3: #{_lambda_.34} parent=0 // pred_check_branch
    %12 = sbr.rel (0) target = $region5
  $region4: #{_lambda_.34} parent=0 // pred_region
    _
  $region5: #{_lambda_.34} parent=0 // pred_fallthru
    _
  // Predicated region
  $region6: #{_lambda_.34} parent=0 // pred_check
    _
  $region7: #{_lambda_.34} parent=0 // pred_check_branch
    %14 = sbr.rel (0) target = $region9
  $region8: #{_lambda_.34} parent=0 // pred_region
    _
  $region9: #{_lambda_.34} parent=0 // pred_fallthru
    _
  // Predicated region
  $region10: #{_lambda_.34} parent=0 // pred_check
    _
  $region11: #{_lambda_.34} parent=0 // pred_check_branch
    %16 = sbr.rel (0) target = $region13
  $region12: #{_lambda_.34} parent=0 // pred_region
    _
  $region13: #{_lambda_.34} parent=0 // pred_fallthru
    _
  // Predicated region
  $region14: #{_lambda_.34} parent=0 // pred_check
    _
  $region15: #{_lambda_.34} parent=0 // pred_check_branch
    %18 = sbr.rel (0) target = $region17
  $region16: #{_lambda_.34} parent=0 // pred_region
    _
  $region17: #{_lambda_.34} parent=0 // pred_fallthru
    _
  // Predicated region
  $region18: #{_lambda_.34} parent=0 // pred_check
    _
  $region19: #{_lambda_.34} parent=0 // pred_check_branch
    %20 = sbr.rel (0) target = $region21
  $region20: #{_lambda_.34} parent=0 // pred_region
    _
  $region21: #{_lambda_.34} parent=0 // pred_fallthru
    _
  // Predicated region
  $region22: #{_lambda_.34} parent=0 // pred_check
    _
  $region23: #{_lambda_.34} parent=0 // pred_check_branch
    %22 = sbr.rel (0) target = $region25
  $region24: #{_lambda_.34} parent=0 // pred_region
    _
  $region25: #{_lambda_.34} parent=0 // pred_fallthru
    _
  %v24 = vld [vmem:[%s0] sm:$0xff]
  %v25 = vld [vmem:[%s0 + $0x8] sm:$0xff]
  %v26 = vld [vmem:[%s0 + $0x10] sm:$0xff]
  %v27 = vld [vmem:[%s0 + $0x18] sm:$0xff]
  %v28 = vld [vmem:[%s0 + $0x20] sm:$0xff]
  %v29 = vld [vmem:[%s0 + $0x28] sm:$0xff]
  %v30 = vld [vmem:[%s0 + $0x30] sm:$0xff]
  %v31 = vld [vmem:[%s0 + $0x38] sm:$0xff]
  %vm32 = vcmask 64512
  %v33 = vsel %vm32, %v24, 0.0
  %34 = vadd.xlane.f32.xlu0 %v33
  %v35 = vpop.xlane.xlu0 %34
  %v36 = vsel %vm32, %v25, 0.0
  %37 = vadd.xlane.f32.xlu0 %v36
  %v38 = vpop.xlane.xlu0 %37
  %v39 = vsel %vm32, %v26, 0.0
  %40 = vadd.xlane.f32.xlu0 %v39
  %v41 = vpop.xlane.xlu0 %40
  %v42 = vsel %vm32, %v27, 0.0
  %43 = vadd.xlane.f32.xlu0 %v42
  %v44 = vpop.xlane.xlu0 %43
  %v45 = vsel %vm32, %v28, 0.0
  %46 = vadd.xlane.f32.xlu0 %v45
  %v47 = vpop.xlane.xlu0 %46
  %v48 = vsel %vm32, %v29, 0.0
  %49 = vadd.xlane.f32.xlu0 %v48
  %v50 = vpop.xlane.xlu0 %49
  %v51 = vsel %vm32, %v30, 0.0
  %52 = vadd.xlane.f32.xlu0 %v51
  %v53 = vpop.xlane.xlu0 %52
  %v54 = vsel %vm32, %v31, 0.0
  %55 = vadd.xlane.f32.xlu0 %v54
  %v56 = vpop.xlane.xlu0 %55
  %v57 = vrcp.pop 8.0
  %v58 = vmul.f32 8.0, %v57
  %v59 = vsub.f32 1.0, %v58
  %v60 = vmul.f32 %v57, %v59
  %v61 = vadd.f32 %v57, %v60
  %vm62 = vweird.f32 %v57
  %v63 = vsel %vm62, %v57, %v61
  %v64 = vmul.f32 %v35, %v63
  %v65 = vmul.f32 %v38, %v63
  %v66 = vmul.f32 %v41, %v63
  %v67 = vmul.f32 %v44, %v63
  %v68 = vmul.f32 %v47, %v63
  %v69 = vmul.f32 %v50, %v63
  %v70 = vmul.f32 %v53, %v63
  %v71 = vmul.f32 %v56, %v63
  %v72 = vsub.f32 %v24, %v64
  %v73 = vsub.f32 %v25, %v65
  %v74 = vsub.f32 %v26, %v66
  %v75 = vsub.f32 %v27, %v67
  %v76 = vsub.f32 %v28, %v68
  %v77 = vsub.f32 %v29, %v69
  %v78 = vsub.f32 %v30, %v70
  %v79 = vsub.f32 %v31, %v71
  %v80 = vmul.f32 %v72, %v72
  %v81 = vmul.f32 %v73, %v73
  %v82 = vmul.f32 %v74, %v74
  %v83 = vmul.f32 %v75, %v75
  %v84 = vmul.f32 %v76, %v76
  %v85 = vmul.f32 %v77, %v77
  %v86 = vmul.f32 %v78, %v78
  %v87 = vmul.f32 %v79, %v79
  %v88 = vsel %vm32, %v80, 0.0
  %89 = vadd.xlane.f32.xlu0 %v88
  %v90 = vpop.xlane.xlu0 %89
  %v91 = vsel %vm32, %v81, 0.0
  %92 = vadd.xlane.f32.xlu0 %v91
  %v93 = vpop.xlane.xlu0 %92
  %v94 = vsel %vm32, %v82, 0.0
  %95 = vadd.xlane.f32.xlu0 %v94
  %v96 = vpop.xlane.xlu0 %95
  %v97 = vsel %vm32, %v83, 0.0
  %98 = vadd.xlane.f32.xlu0 %v97
  %v99 = vpop.xlane.xlu0 %98
  %v100 = vsel %vm32, %v84, 0.0
  %101 = vadd.xlane.f32.xlu0 %v100
  %v102 = vpop.xlane.xlu0 %101
  %v103 = vsel %vm32, %v85, 0.0
  %104 = vadd.xlane.f32.xlu0 %v103
  %v105 = vpop.xlane.xlu0 %104
  %v106 = vsel %vm32, %v86, 0.0
  %107 = vadd.xlane.f32.xlu0 %v106
  %v108 = vpop.xlane.xlu0 %107
  %v109 = vsel %vm32, %v87, 0.0
  %110 = vadd.xlane.f32.xlu0 %v109
  %v111 = vpop.xlane.xlu0 %110
  %v112 = vmul.f32 %v90, %v63
  %v113 = vmul.f32 %v93, %v63
  %v114 = vmul.f32 %v96, %v63
  %v115 = vmul.f32 %v99, %v63
  %v116 = vmul.f32 %v102, %v63
  %v117 = vmul.f32 %v105, %v63
  %v118 = vmul.f32 %v108, %v63
  %v119 = vmul.f32 %v111, %v63
  %v120 = vadd.f32 %v112, 1e-05
  %v121 = vadd.f32 %v113, 1e-05
  %v122 = vadd.f32 %v114, 1e-05
  %v123 = vadd.f32 %v115, 1e-05
  %v124 = vadd.f32 %v116, 1e-05
  %v125 = vadd.f32 %v117, 1e-05
  %v126 = vadd.f32 %v118, 1e-05
  %v127 = vadd.f32 %v119, 1e-05
  %v128 = vrsqrt.pop %v120
  %v129 = vmul.f32 %v128, %v120
  %v130 = vmul.f32 %v129, %v128
  %v131 = vmul.f32 0.5, %v130
  %v132 = vsub.f32 1.5, %v131
  %v133 = vmul.f32 %v128, %v132
  %vm134 = vweird.f32 %v120
  %vm135 = vweird.f32 %v128
  %vm136 = vmor %vm134, %vm135
  %v137 = vsel %vm136, %v128, %v133
  %v138 = vrsqrt.pop %v121
  %v139 = vmul.f32 %v138, %v121
  %v140 = vmul.f32 %v139, %v138
  %v141 = vmul.f32 0.5, %v140
  %v142 = vsub.f32 1.5, %v141
  %v143 = vmul.f32 %v138, %v142
  %vm144 = vweird.f32 %v121
  %vm145 = vweird.f32 %v138
  %vm146 = vmor %vm144, %vm145
  %v147 = vsel %vm146, %v138, %v143
  %v148 = vrsqrt.pop %v122
  %v149 = vmul.f32 %v148, %v122
  %v150 = vmul.f32 %v149, %v148
  %v151 = vmul.f32 0.5, %v150
  %v152 = vsub.f32 1.5, %v151
  %v153 = vmul.f32 %v148, %v152
  %vm154 = vweird.f32 %v122
  %vm155 = vweird.f32 %v148
  %vm156 = vmor %vm154, %vm155
  %v157 = vsel %vm156, %v148, %v153
  %v158 = vrsqrt.pop %v123
  %v159 = vmul.f32 %v158, %v123
  %v160 = vmul.f32 %v159, %v158
  %v161 = vmul.f32 0.5, %v160
  %v162 = vsub.f32 1.5, %v161
  %v163 = vmul.f32 %v158, %v162
  %vm164 = vweird.f32 %v123
  %vm165 = vweird.f32 %v158
  %vm166 = vmor %vm164, %vm165
  %v167 = vsel %vm166, %v158, %v163
  %v168 = vrsqrt.pop %v124
  %v169 = vmul.f32 %v168, %v124
  %v170 = vmul.f32 %v169, %v168
  %v171 = vmul.f32 0.5, %v170
  %v172 = vsub.f32 1.5, %v171
  %v173 = vmul.f32 %v168, %v172
  %vm174 = vweird.f32 %v124
  %vm175 = vweird.f32 %v168
  %vm176 = vmor %vm174, %vm175
  %v177 = vsel %vm176, %v168, %v173
  %v178 = vrsqrt.pop %v125
  %v179 = vmul.f32 %v178, %v125
  %v180 = vmul.f32 %v179, %v178
  %v181 = vmul.f32 0.5, %v180
  %v182 = vsub.f32 1.5, %v181
  %v183 = vmul.f32 %v178, %v182
  %vm184 = vweird.f32 %v125
  %vm185 = vweird.f32 %v178
  %vm186 = vmor %vm184, %vm185
  %v187 = vsel %vm186, %v178, %v183
  %v188 = vrsqrt.pop %v126
  %v189 = vmul.f32 %v188, %v126
  %v190 = vmul.f32 %v189, %v188
  %v191 = vmul.f32 0.5, %v190
  %v192 = vsub.f32 1.5, %v191
  %v193 = vmul.f32 %v188, %v192
  %vm194 = vweird.f32 %v126
  %vm195 = vweird.f32 %v188
  %vm196 = vmor %vm194, %vm195
  %v197 = vsel %vm196, %v188, %v193
  %v198 = vrsqrt.pop %v127
  %v199 = vmul.f32 %v198, %v127
  %v200 = vmul.f32 %v199, %v198
  %v201 = vmul.f32 0.5, %v200
  %v202 = vsub.f32 1.5, %v201
  %v203 = vmul.f32 %v198, %v202
  %vm204 = vweird.f32 %v127
  %vm205 = vweird.f32 %v198
  %vm206 = vmor %vm204, %vm205
  %v207 = vsel %vm206, %v198, %v203
  %v208 = vmul.f32 %v72, %v137
  %v209 = vmul.f32 %v73, %v147
  %v210 = vmul.f32 %v74, %v157
  %v211 = vmul.f32 %v75, %v167
  %v212 = vmul.f32 %v76, %v177
  %v213 = vmul.f32 %v77, %v187
  %v214 = vmul.f32 %v78, %v197
  %v215 = vmul.f32 %v79, %v207
  %v216 = vld [vmem:[%s2] sm:$0x1]
  %v218 = vperm.slane %v216, 0
  %v220 = vmul.f32 %v208, %v218
  %v221 = vmul.f32 %v209, %v218
  %v222 = vmul.f32 %v210, %v218
  %v223 = vmul.f32 %v211, %v218
  %v224 = vmul.f32 %v212, %v218
  %v225 = vmul.f32 %v213, %v218
  %v226 = vmul.f32 %v214, %v218
  %v227 = vmul.f32 %v215, %v218
  %v228 = vld [vmem:[%s3] sm:$0x1]
  %v230 = vperm.slane %v228, 0
  %v232 = vadd.f32 %v220, %v230
  %v233 = vadd.f32 %v221, %v230
  %v234 = vadd.f32 %v222, %v230
  %v235 = vadd.f32 %v223, %v230
  %v236 = vadd.f32 %v224, %v230
  %v237 = vadd.f32 %v225, %v230
  %v238 = vadd.f32 %v226, %v230
  %v239 = vadd.f32 %v227, %v230
  %v240 = vpack.c.bf16 %v233, %v232
  %v241 = vpack.c.bf16 %v235, %v234
  %v242 = vpack.c.bf16 %v237, %v236
  %v243 = vpack.c.bf16 %v239, %v238
  %v244 = vld [vmem:[%s4] sm:$0xf]
  %v245 = vld [vmem:[%s5] sm:$0x1]
  %v247 = vperm.slane %v245, 0
  %v250 = vsel %vm32, %v240, 0
  %v253 = vsel %vm32, %v241, 0
  %v256 = vsel %vm32, %v242, 0
  %v259 = vsel %vm32, %v243, 0
  %vm261 = vcmask 1043456
  %v263 = vsel %vm261, %v244, 0
  %265 = vmatpush.bf16.msra.mxu0 0
  %266 = vmatpush.bf16.msra.mxu0 0
  %267 = vmatpush.bf16.msra.mxu0 0
  %268 = vmatpush.bf16.msra.mxu0 0
  %269 = vmatpush.bf16.msra.mxu0 0
  %270 = vmatpush.bf16.msra.mxu0 0
  %271 = vmatpush.bf16.msra.mxu0 0
  %272 = vmatpush.bf16.msra.mxu0 %v263
  %273 = vmatmul.bf16.gmra.mxu0 %v250
  %v274 = vpop.f32.mrf.mxu0
  %v275 = vadd.f32 %v247, %v274
  %v276 = vpop.f32.mrf.mxu0
  %v277 = vadd.f32 %v247, %v276
  %278 = vmatmul.bf16.gmra.mxu0 %v253
  %v279 = vpop.f32.mrf.mxu0
  %v280 = vadd.f32 %v247, %v279
  %v281 = vpop.f32.mrf.mxu0
  %v282 = vadd.f32 %v247, %v281
  %283 = vmatmul.bf16.gmra.mxu0 %v256
  %v284 = vpop.f32.mrf.mxu0
  %v285 = vadd.f32 %v247, %v284
  %v286 = vpop.f32.mrf.mxu0
  %v287 = vadd.f32 %v247, %v286
  %288 = vmatmul.bf16.gmra.mxu0 %v259
  %v289 = vpop.f32.mrf.mxu0
  %v290 = vadd.f32 %v247, %v289
  %v291 = vpop.f32.mrf.mxu0
  %v292 = vadd.f32 %v247, %v291
  %293 = vdwg.mxu0
  %v294 = vld [vmem:[%s1] sm:$0xff]
  %v295 = vld [vmem:[%s1 + $0x8] sm:$0xff]
  %v296 = vld [vmem:[%s1 + $0x10] sm:$0xff]
  %v297 = vld [vmem:[%s1 + $0x18] sm:$0xff]
  %v298 = vld [vmem:[%s1 + $0x20] sm:$0xff]
  %v299 = vld [vmem:[%s1 + $0x28] sm:$0xff]
  %v300 = vld [vmem:[%s1 + $0x30] sm:$0xff]
  %v301 = vld [vmem:[%s1 + $0x38] sm:$0xff]
  %303 = vset.pattern.permute.xlu0 0
  %304 = vperm.xlu0 %303, %v294
  %v305 = vpop.permute.xlu0 %304
  %308 = vset.pattern.permute.xlu0 0
  %309 = vperm.xlu0 %308, %v295
  %v310 = vpop.permute.xlu0 %309
  %313 = vset.pattern.permute.xlu0 0
  %314 = vperm.xlu0 %313, %v296
  %v315 = vpop.permute.xlu0 %314
  %318 = vset.pattern.permute.xlu0 0
  %319 = vperm.xlu0 %318, %v297
  %v320 = vpop.permute.xlu0 %319
  %323 = vset.pattern.permute.xlu0 0
  %324 = vperm.xlu0 %323, %v298
  %v325 = vpop.permute.xlu0 %324
  %328 = vset.pattern.permute.xlu0 0
  %329 = vperm.xlu0 %328, %v299
  %v330 = vpop.permute.xlu0 %329
  %333 = vset.pattern.permute.xlu0 0
  %334 = vperm.xlu0 %333, %v300
  %v335 = vpop.permute.xlu0 %334
  %338 = vset.pattern.permute.xlu0 0
  %339 = vperm.xlu0 %338, %v301
  %v340 = vpop.permute.xlu0 %339
  %v342 = vmul.f32 %v275, %v305
  %v343 = vmul.f32 %v277, %v310
  %v344 = vmul.f32 %v280, %v315
  %v345 = vmul.f32 %v282, %v320
  %v346 = vmul.f32 %v285, %v325
  %v347 = vmul.f32 %v287, %v330
  %v348 = vmul.f32 %v290, %v335
  %v349 = vmul.f32 %v292, %v340
  %vm350 = vcmask 130048
  %351 = vst.msk [vmem:[%s6] sm:$0xff] %vm350, %v342
  %352 = vst.msk [vmem:[%s6 + $0x8] sm:$0xff] %vm350, %v343
  %353 = vst.msk [vmem:[%s6 + $0x10] sm:$0xff] %vm350, %v344
  %354 = vst.msk [vmem:[%s6 + $0x18] sm:$0xff] %vm350, %v345
  %355 = vst.msk [vmem:[%s6 + $0x20] sm:$0xff] %vm350, %v346
  %356 = vst.msk [vmem:[%s6 + $0x28] sm:$0xff] %vm350, %v347
  %357 = vst.msk [vmem:[%s6 + $0x30] sm:$0xff] %vm350, %v348
  %358 = vst.msk [vmem:[%s6 + $0x38] sm:$0xff] %vm350, %v349
  // Predicated region
  $region26: #{_lambda_.34} parent=0 // pred_check
    _
  $region27: #{_lambda_.34} parent=0 // pred_check_branch
    %360 = sbr.rel (0) target = $region29
  $region28: #{_lambda_.34} parent=0 // pred_region
    _
  $region29: #{_lambda_.34} parent=0 // pred_fallthru
    _
  // Predicated region
  $region30: #{_lambda_.34} parent=0 // pred_check
    _
  $region31: #{_lambda_.34} parent=0 // pred_check_branch
    %362 = sbr.rel (0) target = $region33
  $region32: #{_lambda_.34} parent=0 // pred_region
    _
  $region33: #{_lambda_.34} parent=0 // pred_fallthru
    _

// kernel: _lambda_.33
$region0: #{_lambda_.33}
  #allocation0 [shape = 'u32[]', space=smem, size = 0x4, offset = 0x4, fixed_abs, tag = 'smem constant byte address 0x4 - core index']
  #allocation1 [shape = 'u32[72,128]{1,0:T(1,128)}', space=vmem, size = 0x9000, scoped, tag = 'internal scratch']
  %s0 = inlined_call_operand.vmem [shape: f32[64,8], index: 0, kind: input, shape index: {}]
  %s1 = inlined_call_operand.vmem [shape: f32[64,1], index: 1, kind: input, shape index: {}]
  %s2 = inlined_call_operand.vmem [shape: f32[1,8], index: 2, kind: input, shape index: {}]
  %s3 = inlined_call_operand.vmem [shape: f32[1,8], index: 3, kind: input, shape index: {}]
  %s4 = inlined_call_operand.vmem [shape: bf16[8,16], index: 4, kind: input, shape index: {}]
  %s5 = inlined_call_operand.vmem [shape: f32[1,16], index: 5, kind: input, shape index: {}]
  %s6 = inlined_call_operand.vmem [shape: bf16[16,8], index: 6, kind: input, shape index: {}]
  %s7 = inlined_call_operand.vmem [shape: f32[1,8], index: 7, kind: input, shape index: {}]
  %s8 = inlined_call_operand.vmem [shape: f32[64,8], index: 8, kind: output, shape index: {}]
  %s9 = sld [smem:[#allocation0]]
  $region42: #{_lambda_.33} parent=0
    _
  %s11 = ssub.s32 1, %s9
  %s12 = scalar_select 0, %s11, %s9
  // Predicated region
  $region2: #{_lambda_.33} parent=0 // pred_check
    _
  $region3: #{_lambda_.33} parent=0 // pred_check_branch
    %14 = sbr.rel (0) target = $region5
  $region4: #{_lambda_.33} parent=0 // pred_region
    _
  $region5: #{_lambda_.33} parent=0 // pred_fallthru
    _
  // Predicated region
  $region6: #{_lambda_.33} parent=0 // pred_check
    _
  $region7: #{_lambda_.33} parent=0 // pred_check_branch
    %16 = sbr.rel (0) target = $region9
  $region8: #{_lambda_.33} parent=0 // pred_region
    _
  $region9: #{_lambda_.33} parent=0 // pred_fallthru
    _
  // Predicated region
  $region10: #{_lambda_.33} parent=0 // pred_check
    _
  $region11: #{_lambda_.33} parent=0 // pred_check_branch
    %18 = sbr.rel (0) target = $region13
  $region12: #{_lambda_.33} parent=0 // pred_region
    _
  $region13: #{_lambda_.33} parent=0 // pred_fallthru
    _
  // Predicated region
  $region14: #{_lambda_.33} parent=0 // pred_check
    _
  $region15: #{_lambda_.33} parent=0 // pred_check_branch
    %20 = sbr.rel (0) target = $region17
  $region16: #{_lambda_.33} parent=0 // pred_region
    _
  $region17: #{_lambda_.33} parent=0 // pred_fallthru
    _
  // Predicated region
  $region18: #{_lambda_.33} parent=0 // pred_check
    _
  $region19: #{_lambda_.33} parent=0 // pred_check_branch
    %22 = sbr.rel (0) target = $region21
  $region20: #{_lambda_.33} parent=0 // pred_region
    _
  $region21: #{_lambda_.33} parent=0 // pred_fallthru
    _
  // Predicated region
  $region22: #{_lambda_.33} parent=0 // pred_check
    _
  $region23: #{_lambda_.33} parent=0 // pred_check_branch
    %24 = sbr.rel (0) target = $region25
  $region24: #{_lambda_.33} parent=0 // pred_region
    _
  $region25: #{_lambda_.33} parent=0 // pred_fallthru
    _
  // Predicated region
  $region26: #{_lambda_.33} parent=0 // pred_check
    _
  $region27: #{_lambda_.33} parent=0 // pred_check_branch
    %26 = sbr.rel (0) target = $region29
  $region28: #{_lambda_.33} parent=0 // pred_region
    _
  $region29: #{_lambda_.33} parent=0 // pred_fallthru
    _
  // Predicated region
  $region30: #{_lambda_.33} parent=0 // pred_check
    _
  $region31: #{_lambda_.33} parent=0 // pred_check_branch
    %28 = sbr.rel (0) target = $region33
  $region32: #{_lambda_.33} parent=0 // pred_region
    _
  $region33: #{_lambda_.33} parent=0 // pred_fallthru
    _
  %v30 = vld [vmem:[%s0] sm:$0xff]
  %v31 = vld [vmem:[%s0 + $0x8] sm:$0xff]
  %v32 = vld [vmem:[%s0 + $0x10] sm:$0xff]
  %v33 = vld [vmem:[%s0 + $0x18] sm:$0xff]
  %v34 = vld [vmem:[%s0 + $0x20] sm:$0xff]
  %v35 = vld [vmem:[%s0 + $0x28] sm:$0xff]
  %v36 = vld [vmem:[%s0 + $0x30] sm:$0xff]
  %v37 = vld [vmem:[%s0 + $0x38] sm:$0xff]
  %vm38 = vcmask 64512
  %v39 = vsel %vm38, %v30, 0.0
  %40 = vadd.xlane.f32.xlu0 %v39
  %v41 = vpop.xlane.xlu0 %40
  %v42 = vsel %vm38, %v31, 0.0
  %43 = vadd.xlane.f32.xlu0 %v42
  %v44 = vpop.xlane.xlu0 %43
  %v45 = vsel %vm38, %v32, 0.0
  %46 = vadd.xlane.f32.xlu0 %v45
  %v47 = vpop.xlane.xlu0 %46
  %v48 = vsel %vm38, %v33, 0.0
  %49 = vadd.xlane.f32.xlu0 %v48
  %v50 = vpop.xlane.xlu0 %49
  %v51 = vsel %vm38, %v34, 0.0
  %52 = vadd.xlane.f32.xlu0 %v51
  %v53 = vpop.xlane.xlu0 %52
  %v54 = vsel %vm38, %v35, 0.0
  %55 = vadd.xlane.f32.xlu0 %v54
  %v56 = vpop.xlane.xlu0 %55
  %v57 = vsel %vm38, %v36, 0.0
  %58 = vadd.xlane.f32.xlu0 %v57
  %v59 = vpop.xlane.xlu0 %58
  %v60 = vsel %vm38, %v37, 0.0
  %61 = vadd.xlane.f32.xlu0 %v60
  %v62 = vpop.xlane.xlu0 %61
  %v63 = vrcp.pop 8.0
  %v64 = vmul.f32 8.0, %v63
  %v65 = vsub.f32 1.0, %v64
  %v66 = vmul.f32 %v63, %v65
  %v67 = vadd.f32 %v63, %v66
  %vm68 = vweird.f32 %v63
  %v69 = vsel %vm68, %v63, %v67
  %v70 = vmul.f32 %v41, %v69
  %v71 = vmul.f32 %v44, %v69
  %v72 = vmul.f32 %v47, %v69
  %v73 = vmul.f32 %v50, %v69
  %v74 = vmul.f32 %v53, %v69
  %v75 = vmul.f32 %v56, %v69
  %v76 = vmul.f32 %v59, %v69
  %v77 = vmul.f32 %v62, %v69
  %v78 = vsub.f32 %v30, %v70
  %v79 = vsub.f32 %v31, %v71
  %v80 = vsub.f32 %v32, %v72
  %v81 = vsub.f32 %v33, %v73
  %v82 = vsub.f32 %v34, %v74
  %v83 = vsub.f32 %v35, %v75
  %v84 = vsub.f32 %v36, %v76
  %v85 = vsub.f32 %v37, %v77
  %v86 = vmul.f32 %v78, %v78
  %v87 = vmul.f32 %v79, %v79
  %v88 = vmul.f32 %v80, %v80
  %v89 = vmul.f32 %v81, %v81
  %v90 = vmul.f32 %v82, %v82
  %v91 = vmul.f32 %v83, %v83
  %v92 = vmul.f32 %v84, %v84
  %v93 = vmul.f32 %v85, %v85
  %v94 = vsel %vm38, %v86, 0.0
  %95 = vadd.xlane.f32.xlu0 %v94
  %v96 = vpop.xlane.xlu0 %95
  %v97 = vsel %vm38, %v87, 0.0
  %98 = vadd.xlane.f32.xlu0 %v97
  %v99 = vpop.xlane.xlu0 %98
  %v100 = vsel %vm38, %v88, 0.0
  %101 = vadd.xlane.f32.xlu0 %v100
  %v102 = vpop.xlane.xlu0 %101
  %v103 = vsel %vm38, %v89, 0.0
  %104 = vadd.xlane.f32.xlu0 %v103
  %v105 = vpop.xlane.xlu0 %104
  %v106 = vsel %vm38, %v90, 0.0
  %107 = vadd.xlane.f32.xlu0 %v106
  %v108 = vpop.xlane.xlu0 %107
  %v109 = vsel %vm38, %v91, 0.0
  %110 = vadd.xlane.f32.xlu0 %v109
  %v111 = vpop.xlane.xlu0 %110
  %v112 = vsel %vm38, %v92, 0.0
  %113 = vadd.xlane.f32.xlu0 %v112
  %v114 = vpop.xlane.xlu0 %113
  %v115 = vsel %vm38, %v93, 0.0
  %116 = vadd.xlane.f32.xlu0 %v115
  %v117 = vpop.xlane.xlu0 %116
  %v118 = vmul.f32 %v96, %v69
  %v119 = vmul.f32 %v99, %v69
  %v120 = vmul.f32 %v102, %v69
  %v121 = vmul.f32 %v105, %v69
  %v122 = vmul.f32 %v108, %v69
  %v123 = vmul.f32 %v111, %v69
  %v124 = vmul.f32 %v114, %v69
  %v125 = vmul.f32 %v117, %v69
  %v126 = vadd.f32 %v118, 1e-05
  %v127 = vadd.f32 %v119, 1e-05
  %v128 = vadd.f32 %v120, 1e-05
  %v129 = vadd.f32 %v121, 1e-05
  %v130 = vadd.f32 %v122, 1e-05
  %v131 = vadd.f32 %v123, 1e-05
  %v132 = vadd.f32 %v124, 1e-05
  %v133 = vadd.f32 %v125, 1e-05
  %v134 = vrsqrt.pop %v126
  %v135 = vmul.f32 %v134, %v126
  %v136 = vmul.f32 %v135, %v134
  %v137 = vmul.f32 0.5, %v136
  %v138 = vsub.f32 1.5, %v137
  %v139 = vmul.f32 %v134, %v138
  %vm140 = vweird.f32 %v126
  %vm141 = vweird.f32 %v134
  %vm142 = vmor %vm140, %vm141
  %v143 = vsel %vm142, %v134, %v139
  %v144 = vrsqrt.pop %v127
  %v145 = vmul.f32 %v144, %v127
  %v146 = vmul.f32 %v145, %v144
  %v147 = vmul.f32 0.5, %v146
  %v148 = vsub.f32 1.5, %v147
  %v149 = vmul.f32 %v144, %v148
  %vm150 = vweird.f32 %v127
  %vm151 = vweird.f32 %v144
  %vm152 = vmor %vm150, %vm151
  %v153 = vsel %vm152, %v144, %v149
  %v154 = vrsqrt.pop %v128
  %v155 = vmul.f32 %v154, %v128
  %v156 = vmul.f32 %v155, %v154
  %v157 = vmul.f32 0.5, %v156
  %v158 = vsub.f32 1.5, %v157
  %v159 = vmul.f32 %v154, %v158
  %vm160 = vweird.f32 %v128
  %vm161 = vweird.f32 %v154
  %vm162 = vmor %vm160, %vm161
  %v163 = vsel %vm162, %v154, %v159
  %v164 = vrsqrt.pop %v129
  %v165 = vmul.f32 %v164, %v129
  %v166 = vmul.f32 %v165, %v164
  %v167 = vmul.f32 0.5, %v166
  %v168 = vsub.f32 1.5, %v167
  %v169 = vmul.f32 %v164, %v168
  %vm170 = vweird.f32 %v129
  %vm171 = vweird.f32 %v164
  %vm172 = vmor %vm170, %vm171
  %v173 = vsel %vm172, %v164, %v169
  %v174 = vrsqrt.pop %v130
  %v175 = vmul.f32 %v174, %v130
  %v176 = vmul.f32 %v175, %v174
  %v177 = vmul.f32 0.5, %v176
  %v178 = vsub.f32 1.5, %v177
  %v179 = vmul.f32 %v174, %v178
  %vm180 = vweird.f32 %v130
  %vm181 = vweird.f32 %v174
  %vm182 = vmor %vm180, %vm181
  %v183 = vsel %vm182, %v174, %v179
  %v184 = vrsqrt.pop %v131
  %v185 = vmul.f32 %v184, %v131
  %v186 = vmul.f32 %v185, %v184
  %v187 = vmul.f32 0.5, %v186
  %v188 = vsub.f32 1.5, %v187
  %v189 = vmul.f32 %v184, %v188
  %vm190 = vweird.f32 %v131
  %vm191 = vweird.f32 %v184
  %vm192 = vmor %vm190, %vm191
  %v193 = vsel %vm192, %v184, %v189
  %v194 = vrsqrt.pop %v132
  %v195 = vmul.f32 %v194, %v132
  %v196 = vmul.f32 %v195, %v194
  %v197 = vmul.f32 0.5, %v196
  %v198 = vsub.f32 1.5, %v197
  %v199 = vmul.f32 %v194, %v198
  %vm200 = vweird.f32 %v132
  %vm201 = vweird.f32 %v194
  %vm202 = vmor %vm200, %vm201
  %v203 = vsel %vm202, %v194, %v199
  %v204 = vrsqrt.pop %v133
  %v205 = vmul.f32 %v204, %v133
  %v206 = vmul.f32 %v205, %v204
  %v207 = vmul.f32 0.5, %v206
  %v208 = vsub.f32 1.5, %v207
  %v209 = vmul.f32 %v204, %v208
  %vm210 = vweird.f32 %v133
  %vm211 = vweird.f32 %v204
  %vm212 = vmor %vm210, %vm211
  %v213 = vsel %vm212, %v204, %v209
  %v214 = vmul.f32 %v78, %v143
  %v215 = vmul.f32 %v79, %v153
  %v216 = vmul.f32 %v80, %v163
  %v217 = vmul.f32 %v81, %v173
  %v218 = vmul.f32 %v82, %v183
  %v219 = vmul.f32 %v83, %v193
  %v220 = vmul.f32 %v84, %v203
  %v221 = vmul.f32 %v85, %v213
  %v222 = vld [vmem:[%s2] sm:$0x1]
  %v224 = vperm.slane %v222, 0
  %v226 = vmul.f32 %v214, %v224
  %v227 = vmul.f32 %v215, %v224
  %v228 = vmul.f32 %v216, %v224
  %v229 = vmul.f32 %v217, %v224
  %v230 = vmul.f32 %v218, %v224
  %v231 = vmul.f32 %v219, %v224
  %v232 = vmul.f32 %v220, %v224
  %v233 = vmul.f32 %v221, %v224
  %v234 = vld [vmem:[%s3] sm:$0x1]
  %v236 = vperm.slane %v234, 0
  %v238 = vadd.f32 %v226, %v236
  %v239 = vadd.f32 %v227, %v236
  %v240 = vadd.f32 %v228, %v236
  %v241 = vadd.f32 %v229, %v236
  %v242 = vadd.f32 %v230, %v236
  %v243 = vadd.f32 %v231, %v236
  %v244 = vadd.f32 %v232, %v236
  %v245 = vadd.f32 %v233, %v236
  %v246 = vpack.c.bf16 %v239, %v238
  %v247 = vpack.c.bf16 %v241, %v240
  %v248 = vpack.c.bf16 %v243, %v242
  %v249 = vpack.c.bf16 %v245, %v244
  %v250 = vld [vmem:[%s4] sm:$0xf]
  %v251 = vld [vmem:[%s5] sm:$0x1]
  %v253 = vperm.slane %v251, 0
  %v256 = vsel %vm38, %v246, 0
  %v259 = vsel %vm38, %v247, 0
  %v262 = vsel %vm38, %v248, 0
  %v265 = vsel %vm38, %v249, 0
  %vm267 = vcmask 1043456
  %v269 = vsel %vm267, %v250, 0
  %271 = vmatpush.bf16.msra.mxu0 0
  %272 = vmatpush.bf16.msra.mxu0 0
  %273 = vmatpush.bf16.msra.mxu0 0
  %274 = vmatpush.bf16.msra.mxu0 0
  %275 = vmatpush.bf16.msra.mxu0 0
  %276 = vmatpush.bf16.msra.mxu0 0
  %277 = vmatpush.bf16.msra.mxu0 0
  %278 = vmatpush.bf16.msra.mxu0 %v269
  %279 = vmatmul.bf16.gmra.mxu0 %v256
  %v280 = vpop.f32.mrf.mxu0
  %v281 = vadd.f32 %v253, %v280
  %v282 = vpop.f32.mrf.mxu0
  %v283 = vadd.f32 %v253, %v282
  %284 = vmatmul.bf16.gmra.mxu0 %v259
  %v285 = vpop.f32.mrf.mxu0
  %v286 = vadd.f32 %v253, %v285
  %v287 = vpop.f32.mrf.mxu0
  %v288 = vadd.f32 %v253, %v287
  %289 = vmatmul.bf16.gmra.mxu0 %v262
  %v290 = vpop.f32.mrf.mxu0
  %v291 = vadd.f32 %v253, %v290
  %v292 = vpop.f32.mrf.mxu0
  %v293 = vadd.f32 %v253, %v292
  %294 = vmatmul.bf16.gmra.mxu0 %v265
  %v295 = vpop.f32.mrf.mxu0
  %v296 = vadd.f32 %v253, %v295
  %v297 = vpop.f32.mrf.mxu0
  %v298 = vadd.f32 %v253, %v297
  %299 = vdwg.mxu0
  %v300 = vmax.f32 %v281, 0.0
  %v301 = vmax.f32 %v283, 0.0
  %v302 = vmax.f32 %v286, 0.0
  %v303 = vmax.f32 %v288, 0.0
  %v304 = vmax.f32 %v291, 0.0
  %v305 = vmax.f32 %v293, 0.0
  %v306 = vmax.f32 %v296, 0.0
  %v307 = vmax.f32 %v298, 0.0
  %v308 = vpack.c.bf16 %v301, %v300
  %v309 = vpack.c.bf16 %v303, %v302
  %v310 = vpack.c.bf16 %v305, %v304
  %v311 = vpack.c.bf16 %v307, %v306
  %v312 = vld [vmem:[%s6] sm:$0xf]
  %v313 = vld [vmem:[%s6 + $0x4] sm:$0xf]
  %v314 = vld [vmem:[%s7] sm:$0x1]
  %v316 = vperm.slane %v314, 0
  %v320 = vunpack.c.l.b16 %v312
  %v321 = vunpack.c.l.b16 %v313
  %v322 = vpack.c.b16 %v321, %v320
  %vm324 = vcmask 130048
  %v326 = vsel %vm324, %v308, 0
  %v329 = vsel %vm324, %v309, 0
  %v332 = vsel %vm324, %v310, 0
  %v335 = vsel %vm324, %v311, 0
  %337 = vmatpush.bf16.msra.mxu0 0
  %338 = vmatpush.bf16.msra.mxu0 0
  %339 = vmatpush.bf16.msra.mxu0 0
  %340 = vmatpush.bf16.msra.mxu0 0
  %341 = vmatpush.bf16.msra.mxu0 0
  %342 = vmatpush.bf16.msra.mxu0 0
  %343 = vmatpush.bf16.msra.mxu0 0
  %344 = vmatpush.bf16.msra.mxu0 %v322
  %345 = vmatmul.bf16.gmra.mxu0 %v326
  %v346 = vpop.f32.mrf.mxu0
  %v347 = vadd.f32 %v316, %v346
  %v348 = vpop.f32.mrf.mxu0
  %v349 = vadd.f32 %v316, %v348
  %350 = vmatmul.bf16.gmra.mxu0 %v329
  %v351 = vpop.f32.mrf.mxu0
  %v352 = vadd.f32 %v316, %v351
  %v353 = vpop.f32.mrf.mxu0
  %v354 = vadd.f32 %v316, %v353
  %355 = vmatmul.bf16.gmra.mxu0 %v332
  %v356 = vpop.f32.mrf.mxu0
  %v357 = vadd.f32 %v316, %v356
  %v358 = vpop.f32.mrf.mxu0
  %v359 = vadd.f32 %v316, %v358
  %360 = vmatmul.bf16.gmra.mxu0 %v335
  %v361 = vpop.f32.mrf.mxu0
  %v362 = vadd.f32 %v316, %v361
  %v363 = vpop.f32.mrf.mxu0
  %v364 = vadd.f32 %v316, %v363
  %365 = vdwg.mxu0
  %v366 = vld [vmem:[%s1] sm:$0xff]
  %v367 = vld [vmem:[%s1 + $0x8] sm:$0xff]
  %v368 = vld [vmem:[%s1 + $0x10] sm:$0xff]
  %v369 = vld [vmem:[%s1 + $0x18] sm:$0xff]
  %v370 = vld [vmem:[%s1 + $0x20] sm:$0xff]
  %v371 = vld [vmem:[%s1 + $0x28] sm:$0xff]
  %v372 = vld [vmem:[%s1 + $0x30] sm:$0xff]
  %v373 = vld [vmem:[%s1 + $0x38] sm:$0xff]
  %375 = vset.pattern.permute.xlu0 0
  %376 = vperm.xlu0 %375, %v366
  %v377 = vpop.permute.xlu0 %376
  %380 = vset.pattern.permute.xlu0 0
  %381 = vperm.xlu0 %380, %v367
  %v382 = vpop.permute.xlu0 %381
  %385 = vset.pattern.permute.xlu0 0
  %386 = vperm.xlu0 %385, %v368
  %v387 = vpop.permute.xlu0 %386
  %390 = vset.pattern.permute.xlu0 0
  %391 = vperm.xlu0 %390, %v369
  %v392 = vpop.permute.xlu0 %391
  %395 = vset.pattern.permute.xlu0 0
  %396 = vperm.xlu0 %395, %v370
  %v397 = vpop.permute.xlu0 %396
  %400 = vset.pattern.permute.xlu0 0
  %401 = vperm.xlu0 %400, %v371
  %v402 = vpop.permute.xlu0 %401
  %405 = vset.pattern.permute.xlu0 0
  %406 = vperm.xlu0 %405, %v372
  %v407 = vpop.permute.xlu0 %406
  %410 = vset.pattern.permute.xlu0 0
  %411 = vperm.xlu0 %410, %v373
  %v412 = vpop.permute.xlu0 %411
  %v414 = vmul.f32 %v347, %v377
  %v415 = vmul.f32 %v349, %v382
  %v416 = vmul.f32 %v352, %v387
  %v417 = vmul.f32 %v354, %v392
  %v418 = vmul.f32 %v357, %v397
  %v419 = vmul.f32 %v359, %v402
  %v420 = vmul.f32 %v362, %v407
  %v421 = vmul.f32 %v364, %v412
  %422 = vst.msk [vmem:[%s8] sm:$0xff] %vm38, %v414
  %423 = vst.msk [vmem:[%s8 + $0x8] sm:$0xff] %vm38, %v415
  %424 = vst.msk [vmem:[%s8 + $0x10] sm:$0xff] %vm38, %v416
  %425 = vst.msk [vmem:[%s8 + $0x18] sm:$0xff] %vm38, %v417
  %426 = vst.msk [vmem:[%s8 + $0x20] sm:$0xff] %vm38, %v418
  %427 = vst.msk [vmem:[%s8 + $0x28] sm:$0xff] %vm38, %v419
  %428 = vst.msk [vmem:[%s8 + $0x30] sm:$0xff] %vm38, %v420
  %429 = vst.msk [vmem:[%s8 + $0x38] sm:$0xff] %vm38, %v421
  // Predicated region
  $region34: #{_lambda_.33} parent=0 // pred_check
    _
  $region35: #{_lambda_.33} parent=0 // pred_check_branch
    %431 = sbr.rel (0) target = $region37
  $region36: #{_lambda_.33} parent=0 // pred_region
    _
  $region37: #{_lambda_.33} parent=0 // pred_fallthru
    _
  // Predicated region
  $region38: #{_lambda_.33} parent=0 // pred_check
    _
  $region39: #{_lambda_.33} parent=0 // pred_check_branch
    %433 = sbr.rel (0) target = $region41
  $region40: #{_lambda_.33} parent=0 // pred_region
    _
  $region41: #{_lambda_.33} parent=0 // pred_fallthru
    _

// kernel: _lambda_.35
$region0: #{_lambda_.35}
  #allocation0 [shape = 'u32[]', space=smem, size = 0x4, offset = 0x4, fixed_abs, tag = 'smem constant byte address 0x4 - core index']
  #allocation1 [shape = 'u32[72,128]{1,0:T(1,128)}', space=vmem, size = 0x9000, scoped, tag = 'internal scratch']
  #allocation2 [shape = 'f32[64,64]{1,0:T(8,128)}', space=vmem, size = 0x8000, scoped, tag = 'scratch operand']
  %s0 = inlined_call_operand.vmem [shape: bf16[1,8,64], index: 0, kind: input, shape index: {}]
  %s1 = inlined_call_operand.vmem [shape: bf16[1,8,64], index: 1, kind: input, shape index: {}]
  %s2 = inlined_call_operand.vmem [shape: f32[1,64,64], index: 2, kind: output, shape index: {}]
  %s3 = sld [smem:[#allocation0]]
  $region26: #{_lambda_.35} parent=0
    _
  %s5 = ssub.s32 1, %s3
  %s6 = scalar_select 0, %s5, %s3
  // Predicated region
  $region2: #{_lambda_.35} parent=0 // pred_check
    _
  $region3: #{_lambda_.35} parent=0 // pred_check_branch
    %8 = sbr.rel (0) target = $region5
  $region4: #{_lambda_.35} parent=0 // pred_region
    _
  $region5: #{_lambda_.35} parent=0 // pred_fallthru
    _
  // Predicated region
  $region6: #{_lambda_.35} parent=0 // pred_check
    _
  $region7: #{_lambda_.35} parent=0 // pred_check_branch
    %10 = sbr.rel (0) target = $region9
  $region8: #{_lambda_.35} parent=0 // pred_region
    _
  $region9: #{_lambda_.35} parent=0 // pred_fallthru
    _
  %p12 = scmp.eq.s32.totalorder 0, 0
  // Predicated region
  $region10: #{_lambda_.35} parent=0 // pred_check
    %p13 = pneg %p12
  $region11: #{_lambda_.35} parent=0 // pred_check_branch
    %15 = sbr.rel (%p13) target = $region13
  $region12: #{_lambda_.35} parent=0 // pred_region
    %vm16 = vcmask 523264
    %17 = vst.msk [vmem:[#allocation2] sm:$0xff] %vm16, 0.0
    %18 = vst.msk [vmem:[#allocation2 + $0x8] sm:$0xff] %vm16, 0.0
    %19 = vst.msk [vmem:[#allocation2 + $0x10] sm:$0xff] %vm16, 0.0
    %20 = vst.msk [vmem:[#allocation2 + $0x18] sm:$0xff] %vm16, 0.0
    %21 = vst.msk [vmem:[#allocation2 + $0x20] sm:$0xff] %vm16, 0.0
    %22 = vst.msk [vmem:[#allocation2 + $0x28] sm:$0xff] %vm16, 0.0
    %23 = vst.msk [vmem:[#allocation2 + $0x30] sm:$0xff] %vm16, 0.0
    %24 = vst.msk [vmem:[#allocation2 + $0x38] sm:$0xff] %vm16, 0.0
  $region13: #{_lambda_.35} parent=0 // pred_fallthru
    _
  %v25 = vld [vmem:[#allocation2] sm:$0xff]
  %v26 = vld [vmem:[#allocation2 + $0x8] sm:$0xff]
  %v27 = vld [vmem:[#allocation2 + $0x10] sm:$0xff]
  %v28 = vld [vmem:[#allocation2 + $0x18] sm:$0xff]
  %v29 = vld [vmem:[#allocation2 + $0x20] sm:$0xff]
  %v30 = vld [vmem:[#allocation2 + $0x28] sm:$0xff]
  %v31 = vld [vmem:[#allocation2 + $0x30] sm:$0xff]
  %v32 = vld [vmem:[#allocation2 + $0x38] sm:$0xff]
  %v33 = vld [vmem:[%s0] sm:$0xf]
  %v34 = vld [vmem:[%s1] sm:$0xf]
  %35 = vxpose.xlu0.c.b16.start [1/8] %v33, 128
  %36 = vxpose.xlu0.c.b16.cont [2/8] 0, 128
  %37 = vxpose.xlu0.c.b16.cont [3/8] 0, 128
  %38 = vxpose.xlu0.c.b16.cont [4/8] 0, 128
  %39 = vxpose.xlu0.c.b16.cont [5/8] 0, 128
  %40 = vxpose.xlu0.c.b16.cont [6/8] 0, 128
  %41 = vxpose.xlu0.c.b16.cont [7/8] 0, 128
  %42 = vxpose.xlu0.c.b16.end [8/8] 0, 128
  %v43 = vpop.trf.xlu0
  %v44 = vpop.trf.xlu0
  %v45 = vpop.trf.xlu0
  %v46 = vpop.trf.xlu0
  %v47 = vpop.trf.xlu0
  %v48 = vpop.trf.xlu0
  %v49 = vpop.trf.xlu0
  %v50 = vpop.trf.xlu0
  %vm51 = vcmask 64512
  %v53 = vsel %vm51, %v43, 0
  %v56 = vsel %vm51, %v44, 0
  %v59 = vsel %vm51, %v45, 0
  %v62 = vsel %vm51, %v46, 0
  %vm64 = vcmask 1043456
  %v66 = vsel %vm64, %v34, 0
  %68 = vmatpush.bf16.msra.mxu0 0
  %69 = vmatpush.bf16.msra.mxu0 0
  %70 = vmatpush.bf16.msra.mxu0 0
  %71 = vmatpush.bf16.msra.mxu0 0
  %72 = vmatpush.bf16.msra.mxu0 0
  %73 = vmatpush.bf16.msra.mxu0 0
  %74 = vmatpush.bf16.msra.mxu0 0
  %75 = vmatpush.bf16.msra.mxu0 %v66
  %76 = vmatmul.bf16.gmra.mxu0 %v53
  %v77 = vpop.f32.mrf.mxu0
  %v78 = vadd.f32 0.0, %v77
  %v79 = vpop.f32.mrf.mxu0
  %v80 = vadd.f32 0.0, %v79
  %81 = vmatmul.bf16.gmra.mxu0 %v56
  %v82 = vpop.f32.mrf.mxu0
  %v83 = vadd.f32 0.0, %v82
  %v84 = vpop.f32.mrf.mxu0
  %v85 = vadd.f32 0.0, %v84
  %86 = vmatmul.bf16.gmra.mxu0 %v59
  %v87 = vpop.f32.mrf.mxu0
  %v88 = vadd.f32 0.0, %v87
  %v89 = vpop.f32.mrf.mxu0
  %v90 = vadd.f32 0.0, %v89
  %91 = vmatmul.bf16.gmra.mxu0 %v62
  %v92 = vpop.f32.mrf.mxu0
  %v93 = vadd.f32 0.0, %v92
  %v94 = vpop.f32.mrf.mxu0
  %v95 = vadd.f32 0.0, %v94
  %96 = vdwg.mxu0
  %v97 = vadd.f32 %v25, %v78
  %v98 = vadd.f32 %v26, %v80
  %v99 = vadd.f32 %v27, %v83
  %v100 = vadd.f32 %v28, %v85
  %v101 = vadd.f32 %v29, %v88
  %v102 = vadd.f32 %v30, %v90
  %v103 = vadd.f32 %v31, %v93
  %v104 = vadd.f32 %v32, %v95
  %vm105 = vcmask 523264
  %106 = vst.msk [vmem:[#allocation2] sm:$0xff] %vm105, %v97
  %107 = vst.msk [vmem:[#allocation2 + $0x8] sm:$0xff] %vm105, %v98
  %108 = vst.msk [vmem:[#allocation2 + $0x10] sm:$0xff] %vm105, %v99
  %109 = vst.msk [vmem:[#allocation2 + $0x18] sm:$0xff] %vm105, %v100
  %110 = vst.msk [vmem:[#allocation2 + $0x20] sm:$0xff] %vm105, %v101
  %111 = vst.msk [vmem:[#allocation2 + $0x28] sm:$0xff] %vm105, %v102
  %112 = vst.msk [vmem:[#allocation2 + $0x30] sm:$0xff] %vm105, %v103
  %113 = vst.msk [vmem:[#allocation2 + $0x38] sm:$0xff] %vm105, %v104
  // Predicated region
  $region14: #{_lambda_.35} parent=0 // pred_check
    %p114 = pneg %p12
  $region15: #{_lambda_.35} parent=0 // pred_check_branch
    %116 = sbr.rel (%p114) target = $region17
  $region16: #{_lambda_.35} parent=0 // pred_region
    %v117 = vld [vmem:[#allocation2] sm:$0xff]
    %v118 = vld [vmem:[#allocation2 + $0x8] sm:$0xff]
    %v119 = vld [vmem:[#allocation2 + $0x10] sm:$0xff]
    %v120 = vld [vmem:[#allocation2 + $0x18] sm:$0xff]
    %v121 = vld [vmem:[#allocation2 + $0x20] sm:$0xff]
    %v122 = vld [vmem:[#allocation2 + $0x28] sm:$0xff]
    %v123 = vld [vmem:[#allocation2 + $0x30] sm:$0xff]
    %v124 = vld [vmem:[#allocation2 + $0x38] sm:$0xff]
    %125 = vst.msk [vmem:[%s2] sm:$0xff] %vm105, %v117
    %126 = vst.msk [vmem:[%s2 + $0x8] sm:$0xff] %vm105, %v118
    %127 = vst.msk [vmem:[%s2 + $0x10] sm:$0xff] %vm105, %v119
    %128 = vst.msk [vmem:[%s2 + $0x18] sm:$0xff] %vm105, %v120
    %129 = vst.msk [vmem:[%s2 + $0x20] sm:$0xff] %vm105, %v121
    %130 = vst.msk [vmem:[%s2 + $0x28] sm:$0xff] %vm105, %v122
    %131 = vst.msk [vmem:[%s2 + $0x30] sm:$0xff] %vm105, %v123
    %132 = vst.msk [vmem:[%s2 + $0x38] sm:$0xff] %vm105, %v124
  $region17: #{_lambda_.35} parent=0 // pred_fallthru
    _
  // Predicated region
  $region18: #{_lambda_.35} parent=0 // pred_check
    _
  $region19: #{_lambda_.35} parent=0 // pred_check_branch
    %134 = sbr.rel (0) target = $region21
  $region20: #{_lambda_.35} parent=0 // pred_region
    _
  $region21: #{_lambda_.35} parent=0 // pred_fallthru
    _
  // Predicated region
  $region22: #{_lambda_.35} parent=0 // pred_check
    _
  $region23: #{_lambda_.35} parent=0 // pred_check_branch
    %136 = sbr.rel (0) target = $region25
  $region24: #{_lambda_.35} parent=0 // pred_region
    _
  $region25: #{_lambda_.35} parent=0 // pred_fallthru
    _

// kernel: _lambda_.36
$region0: #{_lambda_.36}
  #allocation0 [shape = 'u32[]', space=smem, size = 0x4, offset = 0x4, fixed_abs, tag = 'smem constant byte address 0x4 - core index']
  #allocation1 [shape = 'u32[72,128]{1,0:T(1,128)}', space=vmem, size = 0x9000, scoped, tag = 'internal scratch']
  %s0 = inlined_call_operand.vmem [shape: f32[64,64], index: 0, kind: input, shape index: {}]
  %s1 = inlined_call_operand.vmem [shape: f32[64,1], index: 1, kind: input, shape index: {}]
  %s2 = inlined_call_operand.vmem [shape: bf16[64,16], index: 2, kind: input, shape index: {}]
  %s3 = inlined_call_operand.vmem [shape: f32[1,16], index: 3, kind: input, shape index: {}]
  %s4 = inlined_call_operand.vmem [shape: f32[64,16], index: 4, kind: output, shape index: {}]
  %s5 = sld [smem:[#allocation0]]
  $region26: #{_lambda_.36} parent=0
    _
  %s7 = ssub.s32 1, %s5
  %s8 = scalar_select 0, %s7, %s5
  // Predicated region
  $region2: #{_lambda_.36} parent=0 // pred_check
    _
  $region3: #{_lambda_.36} parent=0 // pred_check_branch
    %10 = sbr.rel (0) target = $region5
  $region4: #{_lambda_.36} parent=0 // pred_region
    _
  $region5: #{_lambda_.36} parent=0 // pred_fallthru
    _
  // Predicated region
  $region6: #{_lambda_.36} parent=0 // pred_check
    _
  $region7: #{_lambda_.36} parent=0 // pred_check_branch
    %12 = sbr.rel (0) target = $region9
  $region8: #{_lambda_.36} parent=0 // pred_region
    _
  $region9: #{_lambda_.36} parent=0 // pred_fallthru
    _
  // Predicated region
  $region10: #{_lambda_.36} parent=0 // pred_check
    _
  $region11: #{_lambda_.36} parent=0 // pred_check_branch
    %14 = sbr.rel (0) target = $region13
  $region12: #{_lambda_.36} parent=0 // pred_region
    _
  $region13: #{_lambda_.36} parent=0 // pred_fallthru
    _
  // Predicated region
  $region14: #{_lambda_.36} parent=0 // pred_check
    _
  $region15: #{_lambda_.36} parent=0 // pred_check_branch
    %16 = sbr.rel (0) target = $region17
  $region16: #{_lambda_.36} parent=0 // pred_region
    _
  $region17: #{_lambda_.36} parent=0 // pred_fallthru
    _
  %v18 = vld [vmem:[%s0] sm:$0xff]
  %v19 = vld [vmem:[%s0 + $0x8] sm:$0xff]
  %v20 = vld [vmem:[%s0 + $0x10] sm:$0xff]
  %v21 = vld [vmem:[%s0 + $0x18] sm:$0xff]
  %v22 = vld [vmem:[%s0 + $0x20] sm:$0xff]
  %v23 = vld [vmem:[%s0 + $0x28] sm:$0xff]
  %v24 = vld [vmem:[%s0 + $0x30] sm:$0xff]
  %v25 = vld [vmem:[%s0 + $0x38] sm:$0xff]
  %v26 = vpack.c.bf16 %v19, %v18
  %v27 = vpack.c.bf16 %v21, %v20
  %v28 = vpack.c.bf16 %v23, %v22
  %v29 = vpack.c.bf16 %v25, %v24
  %v30 = vld [vmem:[%s2] sm:$0xf]
  %v31 = vld [vmem:[%s2 + $0x4] sm:$0xf]
  %v32 = vld [vmem:[%s2 + $0x8] sm:$0xf]
  %v33 = vld [vmem:[%s2 + $0xc] sm:$0xf]
  %v34 = vld [vmem:[%s2 + $0x10] sm:$0xf]
  %v35 = vld [vmem:[%s2 + $0x14] sm:$0xf]
  %v36 = vld [vmem:[%s2 + $0x18] sm:$0xf]
  %v37 = vld [vmem:[%s2 + $0x1c] sm:$0xf]
  %v38 = vld [vmem:[%s3] sm:$0x1]
  %v40 = vperm.slane %v38, 0
  %v50 = vunpack.c.l.b16 %v30
  %v51 = vunpack.c.l.b16 %v31
  %v52 = vunpack.c.l.b16 %v32
  %v53 = vunpack.c.l.b16 %v33
  %v54 = vunpack.c.l.b16 %v34
  %v55 = vunpack.c.l.b16 %v35
  %v56 = vunpack.c.l.b16 %v36
  %v57 = vunpack.c.l.b16 %v37
  %v58 = vpack.c.b16 %v51, %v50
  %v59 = vpack.c.b16 %v53, %v52
  %v60 = vpack.c.b16 %v55, %v54
  %v61 = vpack.c.b16 %v57, %v56
  %vm66 = vcmask 523264
  %v68 = vsel %vm66, %v26, 0
  %v71 = vsel %vm66, %v27, 0
  %v74 = vsel %vm66, %v28, 0
  %v77 = vsel %vm66, %v29, 0
  %79 = vmatpush.bf16.msra.mxu0 0
  %80 = vmatpush.bf16.msra.mxu0 0
  %81 = vmatpush.bf16.msra.mxu0 0
  %82 = vmatpush.bf16.msra.mxu0 0
  %83 = vmatpush.bf16.msra.mxu0 %v61
  %84 = vmatpush.bf16.msra.mxu0 %v60
  %85 = vmatpush.bf16.msra.mxu0 %v59
  %86 = vmatpush.bf16.msra.mxu0 %v58
  %87 = vmatmul.bf16.gmra.mxu0 %v68
  %v88 = vpop.f32.mrf.mxu0
  %v89 = vadd.f32 %v40, %v88
  %v90 = vpop.f32.mrf.mxu0
  %v91 = vadd.f32 %v40, %v90
  %92 = vmatmul.bf16.gmra.mxu0 %v71
  %v93 = vpop.f32.mrf.mxu0
  %v94 = vadd.f32 %v40, %v93
  %v95 = vpop.f32.mrf.mxu0
  %v96 = vadd.f32 %v40, %v95
  %97 = vmatmul.bf16.gmra.mxu0 %v74
  %v98 = vpop.f32.mrf.mxu0
  %v99 = vadd.f32 %v40, %v98
  %v100 = vpop.f32.mrf.mxu0
  %v101 = vadd.f32 %v40, %v100
  %102 = vmatmul.bf16.gmra.mxu0 %v77
  %v103 = vpop.f32.mrf.mxu0
  %v104 = vadd.f32 %v40, %v103
  %v105 = vpop.f32.mrf.mxu0
  %v106 = vadd.f32 %v40, %v105
  %107 = vdwg.mxu0
  %v108 = vld [vmem:[%s1] sm:$0xff]
  %v109 = vld [vmem:[%s1 + $0x8] sm:$0xff]
  %v110 = vld [vmem:[%s1 + $0x10] sm:$0xff]
  %v111 = vld [vmem:[%s1 + $0x18] sm:$0xff]
  %v112 = vld [vmem:[%s1 + $0x20] sm:$0xff]
  %v113 = vld [vmem:[%s1 + $0x28] sm:$0xff]
  %v114 = vld [vmem:[%s1 + $0x30] sm:$0xff]
  %v115 = vld [vmem:[%s1 + $0x38] sm:$0xff]
  %117 = vset.pattern.permute.xlu0 0
  %118 = vperm.xlu0 %117, %v108
  %v119 = vpop.permute.xlu0 %118
  %122 = vset.pattern.permute.xlu0 0
  %123 = vperm.xlu0 %122, %v109
  %v124 = vpop.permute.xlu0 %123
  %127 = vset.pattern.permute.xlu0 0
  %128 = vperm.xlu0 %127, %v110
  %v129 = vpop.permute.xlu0 %128
  %132 = vset.pattern.permute.xlu0 0
  %133 = vperm.xlu0 %132, %v111
  %v134 = vpop.permute.xlu0 %133
  %137 = vset.pattern.permute.xlu0 0
  %138 = vperm.xlu0 %137, %v112
  %v139 = vpop.permute.xlu0 %138
  %142 = vset.pattern.permute.xlu0 0
  %143 = vperm.xlu0 %142, %v113
  %v144 = vpop.permute.xlu0 %143
  %147 = vset.pattern.permute.xlu0 0
  %148 = vperm.xlu0 %147, %v114
  %v149 = vpop.permute.xlu0 %148
  %152 = vset.pattern.permute.xlu0 0
  %153 = vperm.xlu0 %152, %v115
  %v154 = vpop.permute.xlu0 %153
  %v156 = vmul.f32 %v89, %v119
  %v157 = vmul.f32 %v91, %v124
  %v158 = vmul.f32 %v94, %v129
  %v159 = vmul.f32 %v96, %v134
  %v160 = vmul.f32 %v99, %v139
  %v161 = vmul.f32 %v101, %v144
  %v162 = vmul.f32 %v104, %v149
  %v163 = vmul.f32 %v106, %v154
  %vm164 = vcmask 130048
  %165 = vst.msk [vmem:[%s4] sm:$0xff] %vm164, %v156
  %166 = vst.msk [vmem:[%s4 + $0x8] sm:$0xff] %vm164, %v157
  %167 = vst.msk [vmem:[%s4 + $0x10] sm:$0xff] %vm164, %v158
  %168 = vst.msk [vmem:[%s4 + $0x18] sm:$0xff] %vm164, %v159
  %169 = vst.msk [vmem:[%s4 + $0x20] sm:$0xff] %vm164, %v160
  %170 = vst.msk [vmem:[%s4 + $0x28] sm:$0xff] %vm164, %v161
  %171 = vst.msk [vmem:[%s4 + $0x30] sm:$0xff] %vm164, %v162
  %172 = vst.msk [vmem:[%s4 + $0x38] sm:$0xff] %vm164, %v163
  // Predicated region
  $region18: #{_lambda_.36} parent=0 // pred_check
    _
  $region19: #{_lambda_.36} parent=0 // pred_check_branch
    %174 = sbr.rel (0) target = $region21
  $region20: #{_lambda_.36} parent=0 // pred_region
    _
  $region21: #{_lambda_.36} parent=0 // pred_fallthru
    _
  // Predicated region
  $region22: #{_lambda_.36} parent=0 // pred_check
    _
  $region23: #{_lambda_.36} parent=0 // pred_check_branch
    %176 = sbr.rel (0) target = $region25
  $region24: #{_lambda_.36} parent=0 // pred_region
    _
  $region25: #{_lambda_.36} parent=0 // pred_fallthru
    _

// kernel: _lambda_.37
$region0: #{_lambda_.37}
  #allocation0 [shape = 'u32[]', space=smem, size = 0x4, offset = 0x4, fixed_abs, tag = 'smem constant byte address 0x4 - core index']
  #allocation1 [shape = 'u32[72,128]{1,0:T(1,128)}', space=vmem, size = 0x9000, scoped, tag = 'internal scratch']
  %s0 = inlined_call_operand.vmem [shape: f32[64,16], index: 0, kind: input, shape index: {}]
  %s1 = inlined_call_operand.vmem [shape: f32[1,16], index: 1, kind: input, shape index: {}]
  %s2 = inlined_call_operand.vmem [shape: f32[1,16], index: 2, kind: input, shape index: {}]
  %s3 = inlined_call_operand.vmem [shape: bf16[16,80], index: 3, kind: input, shape index: {}]
  %s4 = inlined_call_operand.vmem [shape: f32[1,80], index: 4, kind: input, shape index: {}]
  %s5 = inlined_call_operand.vmem [shape: f32[64,80], index: 5, kind: output, shape index: {}]
  %s6 = sld [smem:[#allocation0]]
  $region30: #{_lambda_.37} parent=0
    _
  %s8 = ssub.s32 1, %s6
  %s9 = scalar_select 0, %s8, %s6
  // Predicated region
  $region2: #{_lambda_.37} parent=0 // pred_check
    _
  $region3: #{_lambda_.37} parent=0 // pred_check_branch
    %11 = sbr.rel (0) target = $region5
  $region4: #{_lambda_.37} parent=0 // pred_region
    _
  $region5: #{_lambda_.37} parent=0 // pred_fallthru
    _
  // Predicated region
  $region6: #{_lambda_.37} parent=0 // pred_check
    _
  $region7: #{_lambda_.37} parent=0 // pred_check_branch
    %13 = sbr.rel (0) target = $region9
  $region8: #{_lambda_.37} parent=0 // pred_region
    _
  $region9: #{_lambda_.37} parent=0 // pred_fallthru
    _
  // Predicated region
  $region10: #{_lambda_.37} parent=0 // pred_check
    _
  $region11: #{_lambda_.37} parent=0 // pred_check_branch
    %15 = sbr.rel (0) target = $region13
  $region12: #{_lambda_.37} parent=0 // pred_region
    _
  $region13: #{_lambda_.37} parent=0 // pred_fallthru
    _
  // Predicated region
  $region14: #{_lambda_.37} parent=0 // pred_check
    _
  $region15: #{_lambda_.37} parent=0 // pred_check_branch
    %17 = sbr.rel (0) target = $region17
  $region16: #{_lambda_.37} parent=0 // pred_region
    _
  $region17: #{_lambda_.37} parent=0 // pred_fallthru
    _
  // Predicated region
  $region18: #{_lambda_.37} parent=0 // pred_check
    _
  $region19: #{_lambda_.37} parent=0 // pred_check_branch
    %19 = sbr.rel (0) target = $region21
  $region20: #{_lambda_.37} parent=0 // pred_region
    _
  $region21: #{_lambda_.37} parent=0 // pred_fallthru
    _
  %v21 = vld [vmem:[%s0] sm:$0xff]
  %v22 = vld [vmem:[%s0 + $0x8] sm:$0xff]
  %v23 = vld [vmem:[%s0 + $0x10] sm:$0xff]
  %v24 = vld [vmem:[%s0 + $0x18] sm:$0xff]
  %v25 = vld [vmem:[%s0 + $0x20] sm:$0xff]
  %v26 = vld [vmem:[%s0 + $0x28] sm:$0xff]
  %v27 = vld [vmem:[%s0 + $0x30] sm:$0xff]
  %v28 = vld [vmem:[%s0 + $0x38] sm:$0xff]
  %vm29 = vcmask 130048
  %v30 = vsel %vm29, %v21, 0.0
  %31 = vadd.xlane.f32.xlu0 %v30
  %v32 = vpop.xlane.xlu0 %31
  %v33 = vsel %vm29, %v22, 0.0
  %34 = vadd.xlane.f32.xlu0 %v33
  %v35 = vpop.xlane.xlu0 %34
  %v36 = vsel %vm29, %v23, 0.0
  %37 = vadd.xlane.f32.xlu0 %v36
  %v38 = vpop.xlane.xlu0 %37
  %v39 = vsel %vm29, %v24, 0.0
  %40 = vadd.xlane.f32.xlu0 %v39
  %v41 = vpop.xlane.xlu0 %40
  %v42 = vsel %vm29, %v25, 0.0
  %43 = vadd.xlane.f32.xlu0 %v42
  %v44 = vpop.xlane.xlu0 %43
  %v45 = vsel %vm29, %v26, 0.0
  %46 = vadd.xlane.f32.xlu0 %v45
  %v47 = vpop.xlane.xlu0 %46
  %v48 = vsel %vm29, %v27, 0.0
  %49 = vadd.xlane.f32.xlu0 %v48
  %v50 = vpop.xlane.xlu0 %49
  %v51 = vsel %vm29, %v28, 0.0
  %52 = vadd.xlane.f32.xlu0 %v51
  %v53 = vpop.xlane.xlu0 %52
  %v54 = vrcp.pop 16.0
  %v55 = vmul.f32 16.0, %v54
  %v56 = vsub.f32 1.0, %v55
  %v57 = vmul.f32 %v54, %v56
  %v58 = vadd.f32 %v54, %v57
  %vm59 = vweird.f32 %v54
  %v60 = vsel %vm59, %v54, %v58
  %v61 = vmul.f32 %v32, %v60
  %v62 = vmul.f32 %v35, %v60
  %v63 = vmul.f32 %v38, %v60
  %v64 = vmul.f32 %v41, %v60
  %v65 = vmul.f32 %v44, %v60
  %v66 = vmul.f32 %v47, %v60
  %v67 = vmul.f32 %v50, %v60
  %v68 = vmul.f32 %v53, %v60
  %v69 = vsub.f32 %v21, %v61
  %v70 = vsub.f32 %v22, %v62
  %v71 = vsub.f32 %v23, %v63
  %v72 = vsub.f32 %v24, %v64
  %v73 = vsub.f32 %v25, %v65
  %v74 = vsub.f32 %v26, %v66
  %v75 = vsub.f32 %v27, %v67
  %v76 = vsub.f32 %v28, %v68
  %v77 = vmul.f32 %v69, %v69
  %v78 = vmul.f32 %v70, %v70
  %v79 = vmul.f32 %v71, %v71
  %v80 = vmul.f32 %v72, %v72
  %v81 = vmul.f32 %v73, %v73
  %v82 = vmul.f32 %v74, %v74
  %v83 = vmul.f32 %v75, %v75
  %v84 = vmul.f32 %v76, %v76
  %v85 = vsel %vm29, %v77, 0.0
  %86 = vadd.xlane.f32.xlu0 %v85
  %v87 = vpop.xlane.xlu0 %86
  %v88 = vsel %vm29, %v78, 0.0
  %89 = vadd.xlane.f32.xlu0 %v88
  %v90 = vpop.xlane.xlu0 %89
  %v91 = vsel %vm29, %v79, 0.0
  %92 = vadd.xlane.f32.xlu0 %v91
  %v93 = vpop.xlane.xlu0 %92
  %v94 = vsel %vm29, %v80, 0.0
  %95 = vadd.xlane.f32.xlu0 %v94
  %v96 = vpop.xlane.xlu0 %95
  %v97 = vsel %vm29, %v81, 0.0
  %98 = vadd.xlane.f32.xlu0 %v97
  %v99 = vpop.xlane.xlu0 %98
  %v100 = vsel %vm29, %v82, 0.0
  %101 = vadd.xlane.f32.xlu0 %v100
  %v102 = vpop.xlane.xlu0 %101
  %v103 = vsel %vm29, %v83, 0.0
  %104 = vadd.xlane.f32.xlu0 %v103
  %v105 = vpop.xlane.xlu0 %104
  %v106 = vsel %vm29, %v84, 0.0
  %107 = vadd.xlane.f32.xlu0 %v106
  %v108 = vpop.xlane.xlu0 %107
  %v109 = vmul.f32 %v87, %v60
  %v110 = vmul.f32 %v90, %v60
  %v111 = vmul.f32 %v93, %v60
  %v112 = vmul.f32 %v96, %v60
  %v113 = vmul.f32 %v99, %v60
  %v114 = vmul.f32 %v102, %v60
  %v115 = vmul.f32 %v105, %v60
  %v116 = vmul.f32 %v108, %v60
  %v117 = vadd.f32 %v109, 1e-05
  %v118 = vadd.f32 %v110, 1e-05
  %v119 = vadd.f32 %v111, 1e-05
  %v120 = vadd.f32 %v112, 1e-05
  %v121 = vadd.f32 %v113, 1e-05
  %v122 = vadd.f32 %v114, 1e-05
  %v123 = vadd.f32 %v115, 1e-05
  %v124 = vadd.f32 %v116, 1e-05
  %v125 = vrsqrt.pop %v117
  %v126 = vmul.f32 %v125, %v117
  %v127 = vmul.f32 %v126, %v125
  %v128 = vmul.f32 0.5, %v127
  %v129 = vsub.f32 1.5, %v128
  %v130 = vmul.f32 %v125, %v129
  %vm131 = vweird.f32 %v117
  %vm132 = vweird.f32 %v125
  %vm133 = vmor %vm131, %vm132
  %v134 = vsel %vm133, %v125, %v130
  %v135 = vrsqrt.pop %v118
  %v136 = vmul.f32 %v135, %v118
  %v137 = vmul.f32 %v136, %v135
  %v138 = vmul.f32 0.5, %v137
  %v139 = vsub.f32 1.5, %v138
  %v140 = vmul.f32 %v135, %v139
  %vm141 = vweird.f32 %v118
  %vm142 = vweird.f32 %v135
  %vm143 = vmor %vm141, %vm142
  %v144 = vsel %vm143, %v135, %v140
  %v145 = vrsqrt.pop %v119
  %v146 = vmul.f32 %v145, %v119
  %v147 = vmul.f32 %v146, %v145
  %v148 = vmul.f32 0.5, %v147
  %v149 = vsub.f32 1.5, %v148
  %v150 = vmul.f32 %v145, %v149
  %vm151 = vweird.f32 %v119
  %vm152 = vweird.f32 %v145
  %vm153 = vmor %vm151, %vm152
  %v154 = vsel %vm153, %v145, %v150
  %v155 = vrsqrt.pop %v120
  %v156 = vmul.f32 %v155, %v120
  %v157 = vmul.f32 %v156, %v155
  %v158 = vmul.f32 0.5, %v157
  %v159 = vsub.f32 1.5, %v158
  %v160 = vmul.f32 %v155, %v159
  %vm161 = vweird.f32 %v120
  %vm162 = vweird.f32 %v155
  %vm163 = vmor %vm161, %vm162
  %v164 = vsel %vm163, %v155, %v160
  %v165 = vrsqrt.pop %v121
  %v166 = vmul.f32 %v165, %v121
  %v167 = vmul.f32 %v166, %v165
  %v168 = vmul.f32 0.5, %v167
  %v169 = vsub.f32 1.5, %v168
  %v170 = vmul.f32 %v165, %v169
  %vm171 = vweird.f32 %v121
  %vm172 = vweird.f32 %v165
  %vm173 = vmor %vm171, %vm172
  %v174 = vsel %vm173, %v165, %v170
  %v175 = vrsqrt.pop %v122
  %v176 = vmul.f32 %v175, %v122
  %v177 = vmul.f32 %v176, %v175
  %v178 = vmul.f32 0.5, %v177
  %v179 = vsub.f32 1.5, %v178
  %v180 = vmul.f32 %v175, %v179
  %vm181 = vweird.f32 %v122
  %vm182 = vweird.f32 %v175
  %vm183 = vmor %vm181, %vm182
  %v184 = vsel %vm183, %v175, %v180
  %v185 = vrsqrt.pop %v123
  %v186 = vmul.f32 %v185, %v123
  %v187 = vmul.f32 %v186, %v185
  %v188 = vmul.f32 0.5, %v187
  %v189 = vsub.f32 1.5, %v188
  %v190 = vmul.f32 %v185, %v189
  %vm191 = vweird.f32 %v123
  %vm192 = vweird.f32 %v185
  %vm193 = vmor %vm191, %vm192
  %v194 = vsel %vm193, %v185, %v190
  %v195 = vrsqrt.pop %v124
  %v196 = vmul.f32 %v195, %v124
  %v197 = vmul.f32 %v196, %v195
  %v198 = vmul.f32 0.5, %v197
  %v199 = vsub.f32 1.5, %v198
  %v200 = vmul.f32 %v195, %v199
  %vm201 = vweird.f32 %v124
  %vm202 = vweird.f32 %v195
  %vm203 = vmor %vm201, %vm202
  %v204 = vsel %vm203, %v195, %v200
  %v205 = vmul.f32 %v69, %v134
  %v206 = vmul.f32 %v70, %v144
  %v207 = vmul.f32 %v71, %v154
  %v208 = vmul.f32 %v72, %v164
  %v209 = vmul.f32 %v73, %v174
  %v210 = vmul.f32 %v74, %v184
  %v211 = vmul.f32 %v75, %v194
  %v212 = vmul.f32 %v76, %v204
  %v213 = vld [vmem:[%s1] sm:$0x1]
  %v215 = vperm.slane %v213, 0
  %v217 = vmul.f32 %v205, %v215
  %v218 = vmul.f32 %v206, %v215
  %v219 = vmul.f32 %v207, %v215
  %v220 = vmul.f32 %v208, %v215
  %v221 = vmul.f32 %v209, %v215
  %v222 = vmul.f32 %v210, %v215
  %v223 = vmul.f32 %v211, %v215
  %v224 = vmul.f32 %v212, %v215
  %v225 = vld [vmem:[%s2] sm:$0x1]
  %v227 = vperm.slane %v225, 0
  %v229 = vadd.f32 %v217, %v227
  %v230 = vadd.f32 %v218, %v227
  %v231 = vadd.f32 %v219, %v227
  %v232 = vadd.f32 %v220, %v227
  %v233 = vadd.f32 %v221, %v227
  %v234 = vadd.f32 %v222, %v227
  %v235 = vadd.f32 %v223, %v227
  %v236 = vadd.f32 %v224, %v227
  %v237 = vpack.c.bf16 %v230, %v229
  %v238 = vpack.c.bf16 %v232, %v231
  %v239 = vpack.c.bf16 %v234, %v233
  %v240 = vpack.c.bf16 %v236, %v235
  %v241 = vld [vmem:[%s3] sm:$0xf]
  %v242 = vld [vmem:[%s3 + $0x4] sm:$0xf]
  %v243 = vld [vmem:[%s4] sm:$0x1]
  %v245 = vperm.slane %v243, 0
  %v249 = vunpack.c.l.b16 %v241
  %v250 = vunpack.c.l.b16 %v242
  %v251 = vpack.c.b16 %v250, %v249
  %v254 = vsel %vm29, %v237, 0
  %v257 = vsel %vm29, %v238, 0
  %v260 = vsel %vm29, %v239, 0
  %v263 = vsel %vm29, %v240, 0
  %265 = vmatpush.bf16.msra.mxu0 0
  %266 = vmatpush.bf16.msra.mxu0 0
  %267 = vmatpush.bf16.msra.mxu0 0
  %268 = vmatpush.bf16.msra.mxu0 0
  %269 = vmatpush.bf16.msra.mxu0 0
  %270 = vmatpush.bf16.msra.mxu0 0
  %271 = vmatpush.bf16.msra.mxu0 0
  %272 = vmatpush.bf16.msra.mxu0 %v251
  %273 = vmatmul.bf16.gmra.mxu0 %v254
  %v274 = vpop.f32.mrf.mxu0
  %v275 = vadd.f32 %v245, %v274
  %v276 = vpop.f32.mrf.mxu0
  %v277 = vadd.f32 %v245, %v276
  %278 = vmatmul.bf16.gmra.mxu0 %v257
  %v279 = vpop.f32.mrf.mxu0
  %v280 = vadd.f32 %v245, %v279
  %v281 = vpop.f32.mrf.mxu0
  %v282 = vadd.f32 %v245, %v281
  %283 = vmatmul.bf16.gmra.mxu0 %v260
  %v284 = vpop.f32.mrf.mxu0
  %v285 = vadd.f32 %v245, %v284
  %v286 = vpop.f32.mrf.mxu0
  %v287 = vadd.f32 %v245, %v286
  %288 = vmatmul.bf16.gmra.mxu0 %v263
  %v289 = vpop.f32.mrf.mxu0
  %v290 = vadd.f32 %v245, %v289
  %v291 = vpop.f32.mrf.mxu0
  %v292 = vadd.f32 %v245, %v291
  %293 = vdwg.mxu0
  %vm294 = vcmask 654336
  %295 = vst.msk [vmem:[%s5] sm:$0xff] %vm294, %v275
  %296 = vst.msk [vmem:[%s5 + $0x8] sm:$0xff] %vm294, %v277
  %297 = vst.msk [vmem:[%s5 + $0x10] sm:$0xff] %vm294, %v280
  %298 = vst.msk [vmem:[%s5 + $0x18] sm:$0xff] %vm294, %v282
  %299 = vst.msk [vmem:[%s5 + $0x20] sm:$0xff] %vm294, %v285
  %300 = vst.msk [vmem:[%s5 + $0x28] sm:$0xff] %vm294, %v287
  %301 = vst.msk [vmem:[%s5 + $0x30] sm:$0xff] %vm294, %v290
  %302 = vst.msk [vmem:[%s5 + $0x38] sm:$0xff] %vm294, %v292
  // Predicated region
  $region22: #{_lambda_.37} parent=0 // pred_check
    _
  $region23: #{_lambda_.37} parent=0 // pred_check_branch
    %304 = sbr.rel (0) target = $region25
  $region24: #{_lambda_.37} parent=0 // pred_region
    _
  $region25: #{_lambda_.37} parent=0 // pred_fallthru
    _
  // Predicated region
  $region26: #{_lambda_.37} parent=0 // pred_check
    _
  $region27: #{_lambda_.37} parent=0 // pred_check_branch
    %306 = sbr.rel (0) target = $region29
  $region28: #{_lambda_.37} parent=0 // pred_region
    _
  $region29: #{_lambda_.37} parent=0 // pred_fallthru
    _

// kernel: _lambda_.38
$region0: #{_lambda_.38}
  #allocation0 [shape = 'u32[]', space=smem, size = 0x4, offset = 0x4, fixed_abs, tag = 'smem constant byte address 0x4 - core index']
  #allocation1 [shape = 'u32[72,128]{1,0:T(1,128)}', space=vmem, size = 0x9000, scoped, tag = 'internal scratch']
  %s0 = inlined_call_operand.vmem [shape: bf16[16,8,8], index: 0, kind: input, shape index: {}]
  %s1 = inlined_call_operand.vmem [shape: bf16[16,8,8], index: 1, kind: input, shape index: {}]
  %s2 = inlined_call_operand.vmem [shape: f32[16,8,8], index: 2, kind: output, shape index: {}]
  %s3 = sld [smem:[#allocation0]]
  $region41: #{_lambda_.38} parent=0
    _
  %s5 = ssub.s32 1, %s3
  %s6 = scalar_select 0, %s5, %s3
  loop: start=0, step=1, limit=4
  $region2: #{_lambda_.38} parent=0 // loop_pre_header
    _
  $region3: #{_lambda_.38} parent=0 // loop_header
    %s8 = sphi 0, %s12
    %p9 = scmp.ge.s32.totalorder %s8, 4
    %s18 = sphi 0, %s20
    %s21 = sphi 0, %s18
    %s22 = sphi 0, %s21
    %s38 = sphi 0, %s22
    %s44 = sphi 0, %s46
    %s47 = sphi 0, %s44
    %s48 = sphi 0, %s47
    %s64 = sphi 0, %s48
    %s70 = sphi 0, %s72
    %s73 = sphi 0, %s70
    %s74 = sphi 0, %s73
    %s90 = sphi 0, %s74
  $region4: #{_lambda_.38} parent=0 // loop_header_branch
    %11 = sbr.rel (%p9) target = $region8
  $region5: #{_lambda_.38} parent=0 // loop_body
    %s13 = ssub.s32 %s8, 1
    %s14 = ssub.s32 %s8, 2
    %s15 = sadd.s32 %s8, 1
    %s16 = ssub.s32 %s8, %s15
    %p17 = scmp.eq.s32.totalorder %s16, 0
    %s19 = sadd.s32 %s18, 1
    %s20 = scalar_select %p17, %s18, %s19
    %p23 = pneg %p17
    %p24 = scmp.eq.s32.totalorder %s8, 1
    %p25 = por %p23, %p24
    %p26 = scmp.ne.s32.totalorder %s18, %s21
    %p27 = scmp.eq.s32.totalorder %s8, 0
    %p28 = por %p26, %p27
    %p29 = scmp.ne.s32.totalorder %s18, %s21
    %p30 = scmp.eq.s32.totalorder %s13, 1
    %p31 = por %p29, %p30
    %p32 = scmp.ne.s32.totalorder %s21, %s22
    %p33 = scmp.eq.s32.totalorder %s13, 0
    %p34 = por %p32, %p33
    %p35 = scmp.ne.s32.totalorder %s21, %s22
    %p36 = scmp.eq.s32.totalorder %s14, 1
    %p37 = por %p35, %p36
    %p39 = scmp.ne.s32.totalorder %s22, %s38
    %p40 = scmp.eq.s32.totalorder %s14, 0
    %p41 = por %p39, %p40
    %s42 = ssub.s32 %s8, %s15
    %p43 = scmp.eq.s32.totalorder %s42, 0
    %s45 = sadd.s32 %s44, 1
    %s46 = scalar_select %p43, %s44, %s45
    %p49 = pneg %p43
    %p50 = scmp.eq.s32.totalorder %s8, 1
    %p51 = por %p49, %p50
    %p52 = scmp.ne.s32.totalorder %s44, %s47
    %p53 = scmp.eq.s32.totalorder %s8, 0
    %p54 = por %p52, %p53
    %p55 = scmp.ne.s32.totalorder %s44, %s47
    %p56 = scmp.eq.s32.totalorder %s13, 1
    %p57 = por %p55, %p56
    %p58 = scmp.ne.s32.totalorder %s47, %s48
    %p59 = scmp.eq.s32.totalorder %s13, 0
    %p60 = por %p58, %p59
    %p61 = scmp.ne.s32.totalorder %s47, %s48
    %p62 = scmp.eq.s32.totalorder %s14, 1
    %p63 = por %p61, %p62
    %p65 = scmp.ne.s32.totalorder %s48, %s64
    %p66 = scmp.eq.s32.totalorder %s14, 0
    %p67 = por %p65, %p66
    %s68 = ssub.s32 %s8, %s15
    %p69 = scmp.eq.s32.totalorder %s68, 0
    %s71 = sadd.s32 %s70, 1
    %s72 = scalar_select %p69, %s70, %s71
    %p75 = pneg %p69
    %p76 = scmp.eq.s32.totalorder %s8, 1
    %p77 = por %p75, %p76
    %p78 = scmp.ne.s32.totalorder %s70, %s73
    %p79 = scmp.eq.s32.totalorder %s8, 0
    %p80 = por %p78, %p79
    %p81 = scmp.ne.s32.totalorder %s70, %s73
    %p82 = scmp.eq.s32.totalorder %s13, 1
    %p83 = por %p81, %p82
    %p84 = scmp.ne.s32.totalorder %s73, %s74
    %p85 = scmp.eq.s32.totalorder %s13, 0
    %p86 = por %p84, %p85
    %p87 = scmp.ne.s32.totalorder %s73, %s74
    %p88 = scmp.eq.s32.totalorder %s14, 1
    %p89 = por %p87, %p88
    %p91 = scmp.ne.s32.totalorder %s74, %s90
    %p92 = scmp.eq.s32.totalorder %s14, 0
    %p93 = por %p91, %p92
    %p94 = scmp.le.s32.totalorder 1, %s8
    %p95 = scmp.lt.s32.totalorder %s8, 3
    %p96 = pnand %p94, %p95
    %p97 = pneg %p96
    // Predicated region
    $region9: #{_lambda_.38} parent=5 // pred_check
      _
    $region10: #{_lambda_.38} parent=5 // pred_check_branch
      %99 = sbr.rel (%p96) target = $region12
    $region11: #{_lambda_.38} parent=5 // pred_region
      %s100 = ssub.s32 %s8, 1
    $region12: #{_lambda_.38} parent=5 // pred_fallthru
      _
    %p101 = scmp.lt.s32.totalorder %s8, 2
    // Predicated region
    $region13: #{_lambda_.38} parent=5 // pred_check
      %p102 = pneg %p101
    $region14: #{_lambda_.38} parent=5 // pred_check_branch
      %104 = sbr.rel (%p102) target = $region16
    $region15: #{_lambda_.38} parent=5 // pred_region
      // Predicated region
      $region17: #{_lambda_.38} parent=15 // pred_check
        %p105 = pneg %p28
      $region18: #{_lambda_.38} parent=15 // pred_check_branch
        %107 = sbr.rel (%p105) target = $region20
      $region19: #{_lambda_.38} parent=15 // pred_region
        %s108 = smul.u32 8, %s8
        %p109 = scmp.lt.s32.totalorder %s108, 15
        %s110 = scalar_select %p109, %s108, 15
        %s111 = smul.addr %s110, 4
        %s112 = scalar_lea.vmem %s0, %s111
        %s113 = smul.u32 8, %s8
      $region20: #{_lambda_.38} parent=15 // pred_fallthru
        _
      // Predicated region
      $region21: #{_lambda_.38} parent=15 // pred_check
        %p114 = pneg %p54
      $region22: #{_lambda_.38} parent=15 // pred_check_branch
        %116 = sbr.rel (%p114) target = $region24
      $region23: #{_lambda_.38} parent=15 // pred_region
        %s117 = smul.u32 8, %s8
        %p118 = scmp.lt.s32.totalorder %s117, 15
        %s119 = scalar_select %p118, %s117, 15
        %s120 = smul.addr %s119, 4
        %s121 = scalar_lea.vmem %s1, %s120
        %s122 = smul.u32 8, %s8
      $region24: #{_lambda_.38} parent=15 // pred_fallthru
        _
    $region16: #{_lambda_.38} parent=5 // pred_fallthru
      _
    %p123 = scmp.le.s32.totalorder 1, %s8
    %p124 = scmp.lt.s32.totalorder %s8, 3
    %p125 = pnand %p123, %p124
    %p126 = pneg %p125
    // Predicated region
    $region25: #{_lambda_.38} parent=5 // pred_check
      _
    $region26: #{_lambda_.38} parent=5 // pred_check_branch
      %128 = sbr.rel (%p125) target = $region28
    $region27: #{_lambda_.38} parent=5 // pred_region
      %s129 = ssub.s32 %s8, 1
      %s130 = smul.u32 8, %s13
      %p131 = scmp.lt.s32.totalorder %s130, 15
      %s132 = scalar_select %p131, %s130, 15
      %s133 = smul.addr %s132, 4
      %s134 = scalar_lea.vmem %s0, %s133
      %p135 = pneg %p34
      %p136 = pneg %p31
      %s137 = smul.u32 8, %s13
      %p138 = scmp.lt.s32.totalorder %s137, 15
      %s139 = scalar_select %p138, %s137, 15
      %s140 = smul.addr %s139, 4
      %s141 = scalar_lea.vmem %s1, %s140
      %p142 = pneg %p60
      %p143 = pneg %p57
      %p144 = pneg %p86
      %p145 = pneg %p83
      %s146 = smul.u32 8, %s13
      %p147 = scmp.lt.s32.totalorder %s146, 15
      %s148 = scalar_select %p147, %s146, 15
      %s149 = smul.addr %s148, 8
      %s150 = scalar_lea.vmem %s2, %s149
      %s151 = smul.u32 8, %s13
      %p152 = scmp.lt.s32.totalorder %s151, 15
      %s153 = scalar_select %p152, %s151, 15
      %s154 = smul.addr %s153, 4
      %s155 = scalar_lea.vmem %s0, %s154
      %s156 = smul.u32 8, %s13
      %s157 = smul.u32 8, %s13
      %p158 = scmp.lt.s32.totalorder %s157, 15
      %s159 = scalar_select %p158, %s157, 15
      %s160 = smul.addr %s159, 4
      %s161 = scalar_lea.vmem %s1, %s160
      %s162 = smul.u32 8, %s13
      %s163 = smul.u32 8, %s13
      %p164 = scmp.lt.s32.totalorder %s163, 15
      %s165 = scalar_select %p164, %s163, 15
      %s166 = smul.addr %s165, 8
      %s167 = scalar_lea.vmem %s2, %s166
      %s168 = smul.u32 8, %s13
      %v170 = vld [vmem:[%s155] sm:$0xf]
      %v171 = vld [vmem:[%s155 + $0x4] sm:$0xf]
      %v172 = vld [vmem:[%s155 + $0x8] sm:$0xf]
      %v173 = vld [vmem:[%s155 + $0xc] sm:$0xf]
      %v174 = vld [vmem:[%s155 + $0x10] sm:$0xf]
      %v175 = vld [vmem:[%s155 + $0x14] sm:$0xf]
      %v176 = vld [vmem:[%s155 + $0x18] sm:$0xf]
      %v177 = vld [vmem:[%s155 + $0x1c] sm:$0xf]
      %v178 = vld [vmem:[%s161] sm:$0xf]
      %v179 = vld [vmem:[%s161 + $0x4] sm:$0xf]
      %v180 = vld [vmem:[%s161 + $0x8] sm:$0xf]
      %v181 = vld [vmem:[%s161 + $0xc] sm:$0xf]
      %v182 = vld [vmem:[%s161 + $0x10] sm:$0xf]
      %v183 = vld [vmem:[%s161 + $0x14] sm:$0xf]
      %v184 = vld [vmem:[%s161 + $0x18] sm:$0xf]
      %v185 = vld [vmem:[%s161 + $0x1c] sm:$0xf]
      %vm186 = vcmask 64512
      %v188 = vsel %vm186, %v170, 0
      %vm190 = vcmask 1043456
      %v192 = vsel %vm190, %v178, 0
      %194 = vmatpush.bf16.msra.mxu0 0
      %195 = vmatpush.bf16.msra.mxu0 0
      %196 = vmatpush.bf16.msra.mxu0 0
      %197 = vmatpush.bf16.msra.mxu0 0
      %198 = vmatpush.bf16.msra.mxu0 0
      %199 = vmatpush.bf16.msra.mxu0 0
      %200 = vmatpush.bf16.msra.mxu0 0
      %201 = vmatpush.bf16.msra.mxu0 %v192
      %202 = vmatmul.bf16.gmra.mxu0 %v188
      %v203 = vpop.f32.mrf.mxu0
      %v204 = vadd.f32 0.0, %v203
      %v205 = vpop.f32.mrf.mxu0
      %206 = vdwg.mxu0
      %v208 = vsel %vm186, %v171, 0
      %v211 = vsel %vm190, %v179, 0
      %213 = vmatpush.bf16.msra.mxu0 0
      %214 = vmatpush.bf16.msra.mxu0 0
      %215 = vmatpush.bf16.msra.mxu0 0
      %216 = vmatpush.bf16.msra.mxu0 0
      %217 = vmatpush.bf16.msra.mxu0 0
      %218 = vmatpush.bf16.msra.mxu0 0
      %219 = vmatpush.bf16.msra.mxu0 0
      %220 = vmatpush.bf16.msra.mxu0 %v211
      %221 = vmatmul.bf16.gmra.mxu0 %v208
      %v222 = vpop.f32.mrf.mxu0
      %v223 = vadd.f32 0.0, %v222
      %v224 = vpop.f32.mrf.mxu0
      %225 = vdwg.mxu0
      %v227 = vsel %vm186, %v172, 0
      %v230 = vsel %vm190, %v180, 0
      %232 = vmatpush.bf16.msra.mxu0 0
      %233 = vmatpush.bf16.msra.mxu0 0
      %234 = vmatpush.bf16.msra.mxu0 0
      %235 = vmatpush.bf16.msra.mxu0 0
      %236 = vmatpush.bf16.msra.mxu0 0
      %237 = vmatpush.bf16.msra.mxu0 0
      %238 = vmatpush.bf16.msra.mxu0 0
      %239 = vmatpush.bf16.msra.mxu0 %v230
      %240 = vmatmul.bf16.gmra.mxu0 %v227
      %v241 = vpop.f32.mrf.mxu0
      %v242 = vadd.f32 0.0, %v241
      %v243 = vpop.f32.mrf.mxu0
      %244 = vdwg.mxu0
      %v246 = vsel %vm186, %v173, 0
      %v249 = vsel %vm190, %v181, 0
      %251 = vmatpush.bf16.msra.mxu0 0
      %252 = vmatpush.bf16.msra.mxu0 0
      %253 = vmatpush.bf16.msra.mxu0 0
      %254 = vmatpush.bf16.msra.mxu0 0
      %255 = vmatpush.bf16.msra.mxu0 0
      %256 = vmatpush.bf16.msra.mxu0 0
      %257 = vmatpush.bf16.msra.mxu0 0
      %258 = vmatpush.bf16.msra.mxu0 %v249
      %259 = vmatmul.bf16.gmra.mxu0 %v246
      %v260 = vpop.f32.mrf.mxu0
      %v261 = vadd.f32 0.0, %v260
      %v262 = vpop.f32.mrf.mxu0
      %263 = vdwg.mxu0
      %v265 = vsel %vm186, %v174, 0
      %v268 = vsel %vm190, %v182, 0
      %270 = vmatpush.bf16.msra.mxu0 0
      %271 = vmatpush.bf16.msra.mxu0 0
      %272 = vmatpush.bf16.msra.mxu0 0
      %273 = vmatpush.bf16.msra.mxu0 0
      %274 = vmatpush.bf16.msra.mxu0 0
      %275 = vmatpush.bf16.msra.mxu0 0
      %276 = vmatpush.bf16.msra.mxu0 0
      %277 = vmatpush.bf16.msra.mxu0 %v268
      %278 = vmatmul.bf16.gmra.mxu0 %v265
      %v279 = vpop.f32.mrf.mxu0
      %v280 = vadd.f32 0.0, %v279
      %v281 = vpop.f32.mrf.mxu0
      %282 = vdwg.mxu0
      %v284 = vsel %vm186, %v175, 0
      %v287 = vsel %vm190, %v183, 0
      %289 = vmatpush.bf16.msra.mxu0 0
      %290 = vmatpush.bf16.msra.mxu0 0
      %291 = vmatpush.bf16.msra.mxu0 0
      %292 = vmatpush.bf16.msra.mxu0 0
      %293 = vmatpush.bf16.msra.mxu0 0
      %294 = vmatpush.bf16.msra.mxu0 0
      %295 = vmatpush.bf16.msra.mxu0 0
      %296 = vmatpush.bf16.msra.mxu0 %v287
      %297 = vmatmul.bf16.gmra.mxu0 %v284
      %v298 = vpop.f32.mrf.mxu0
      %v299 = vadd.f32 0.0, %v298
      %v300 = vpop.f32.mrf.mxu0
      %301 = vdwg.mxu0
      %v303 = vsel %vm186, %v176, 0
      %v306 = vsel %vm190, %v184, 0
      %308 = vmatpush.bf16.msra.mxu0 0
      %309 = vmatpush.bf16.msra.mxu0 0
      %310 = vmatpush.bf16.msra.mxu0 0
      %311 = vmatpush.bf16.msra.mxu0 0
      %312 = vmatpush.bf16.msra.mxu0 0
      %313 = vmatpush.bf16.msra.mxu0 0
      %314 = vmatpush.bf16.msra.mxu0 0
      %315 = vmatpush.bf16.msra.mxu0 %v306
      %316 = vmatmul.bf16.gmra.mxu0 %v303
      %v317 = vpop.f32.mrf.mxu0
      %v318 = vadd.f32 0.0, %v317
      %v319 = vpop.f32.mrf.mxu0
      %320 = vdwg.mxu0
      %v322 = vsel %vm186, %v177, 0
      %v325 = vsel %vm190, %v185, 0
      %327 = vmatpush.bf16.msra.mxu0 0
      %328 = vmatpush.bf16.msra.mxu0 0
      %329 = vmatpush.bf16.msra.mxu0 0
      %330 = vmatpush.bf16.msra.mxu0 0
      %331 = vmatpush.bf16.msra.mxu0 0
      %332 = vmatpush.bf16.msra.mxu0 0
      %333 = vmatpush.bf16.msra.mxu0 0
      %334 = vmatpush.bf16.msra.mxu0 %v325
      %335 = vmatmul.bf16.gmra.mxu0 %v322
      %v336 = vpop.f32.mrf.mxu0
      %v337 = vadd.f32 0.0, %v336
      %v338 = vpop.f32.mrf.mxu0
      %339 = vdwg.mxu0
      %340 = vst.msk [vmem:[%s167] sm:$0xff] %vm186, %v204
      %341 = vst.msk [vmem:[%s167 + $0x8] sm:$0xff] %vm186, %v223
      %342 = vst.msk [vmem:[%s167 + $0x10] sm:$0xff] %vm186, %v242
      %343 = vst.msk [vmem:[%s167 + $0x18] sm:$0xff] %vm186, %v261
      %344 = vst.msk [vmem:[%s167 + $0x20] sm:$0xff] %vm186, %v280
      %345 = vst.msk [vmem:[%s167 + $0x28] sm:$0xff] %vm186, %v299
      %346 = vst.msk [vmem:[%s167 + $0x30] sm:$0xff] %vm186, %v318
      %347 = vst.msk [vmem:[%s167 + $0x38] sm:$0xff] %vm186, %v337
      %s348 = smul.u32 8, %s13
      %p349 = scmp.lt.s32.totalorder %s348, 15
      %s350 = scalar_select %p349, %s348, 15
      %s351 = smul.addr %s350, 8
      %s352 = scalar_lea.vmem %s2, %s351
      // Predicated region
      $region29: #{_lambda_.38} parent=27 // pred_check
        %p353 = pneg %p83
      $region30: #{_lambda_.38} parent=27 // pred_check_branch
        %355 = sbr.rel (%p353) target = $region32
      $region31: #{_lambda_.38} parent=27 // pred_region
        %s356 = smul.u32 8, %s13
      $region32: #{_lambda_.38} parent=27 // pred_fallthru
        _
    $region28: #{_lambda_.38} parent=5 // pred_fallthru
      _
    %p357 = scmp.le.s32.totalorder 2, %s8
    // Predicated region
    $region33: #{_lambda_.38} parent=5 // pred_check
      %p358 = pneg %p357
    $region34: #{_lambda_.38} parent=5 // pred_check_branch
      %360 = sbr.rel (%p358) target = $region36
    $region35: #{_lambda_.38} parent=5 // pred_region
      %s361 = ssub.s32 %s8, 2
      // Predicated region
      $region37: #{_lambda_.38} parent=35 // pred_check
        %p362 = pneg %p89
      $region38: #{_lambda_.38} parent=35 // pred_check_branch
        %364 = sbr.rel (%p362) target = $region40
      $region39: #{_lambda_.38} parent=35 // pred_region
        %s365 = smul.u32 8, %s14
        %p366 = scmp.lt.s32.totalorder %s365, 15
        %s367 = scalar_select %p366, %s365, 15
        %s368 = smul.addr %s367, 8
        %s369 = scalar_lea.vmem %s2, %s368
      $region40: #{_lambda_.38} parent=35 // pred_fallthru
        _
    $region36: #{_lambda_.38} parent=5 // pred_fallthru
      _
  $region6: #{_lambda_.38} parent=0 // loop_footer
    %s12 = sadd.s32 1, %s8
  $region7: #{_lambda_.38} parent=0 // loop_footer_branch
    %7 = sbr.rel target = $region3
  $region8: #{_lambda_.38} parent=0 // loop_exit
    _

// kernel: _lambda_.39
$region0: #{_lambda_.39}
  #allocation0 [shape = 'u32[]', space=smem, size = 0x4, offset = 0x4, fixed_abs, tag = 'smem constant byte address 0x4 - core index']
  #allocation1 [shape = 'u32[72,128]{1,0:T(1,128)}', space=vmem, size = 0x9000, scoped, tag = 'internal scratch']
  %s0 = inlined_call_operand.vmem [shape: f32[64,16], index: 0, kind: input, shape index: {}]
  %s1 = inlined_call_operand.vmem [shape: f32[1,16], index: 1, kind: input, shape index: {}]
  %s2 = inlined_call_operand.vmem [shape: f32[1,16], index: 2, kind: input, shape index: {}]
  %s3 = inlined_call_operand.vmem [shape: bf16[16,16], index: 3, kind: input, shape index: {}]
  %s4 = inlined_call_operand.vmem [shape: f32[1,16], index: 4, kind: input, shape index: {}]
  %s5 = inlined_call_operand.vmem [shape: f32[64,16], index: 5, kind: output, shape index: {}]
  %s6 = sld [smem:[#allocation0]]
  $region30: #{_lambda_.39} parent=0
    _
  %s8 = ssub.s32 1, %s6
  %s9 = scalar_select 0, %s8, %s6
  // Predicated region
  $region2: #{_lambda_.39} parent=0 // pred_check
    _
  $region3: #{_lambda_.39} parent=0 // pred_check_branch
    %11 = sbr.rel (0) target = $region5
  $region4: #{_lambda_.39} parent=0 // pred_region
    _
  $region5: #{_lambda_.39} parent=0 // pred_fallthru
    _
  // Predicated region
  $region6: #{_lambda_.39} parent=0 // pred_check
    _
  $region7: #{_lambda_.39} parent=0 // pred_check_branch
    %13 = sbr.rel (0) target = $region9
  $region8: #{_lambda_.39} parent=0 // pred_region
    _
  $region9: #{_lambda_.39} parent=0 // pred_fallthru
    _
  // Predicated region
  $region10: #{_lambda_.39} parent=0 // pred_check
    _
  $region11: #{_lambda_.39} parent=0 // pred_check_branch
    %15 = sbr.rel (0) target = $region13
  $region12: #{_lambda_.39} parent=0 // pred_region
    _
  $region13: #{_lambda_.39} parent=0 // pred_fallthru
    _
  // Predicated region
  $region14: #{_lambda_.39} parent=0 // pred_check
    _
  $region15: #{_lambda_.39} parent=0 // pred_check_branch
    %17 = sbr.rel (0) target = $region17
  $region16: #{_lambda_.39} parent=0 // pred_region
    _
  $region17: #{_lambda_.39} parent=0 // pred_fallthru
    _
  // Predicated region
  $region18: #{_lambda_.39} parent=0 // pred_check
    _
  $region19: #{_lambda_.39} parent=0 // pred_check_branch
    %19 = sbr.rel (0) target = $region21
  $region20: #{_lambda_.39} parent=0 // pred_region
    _
  $region21: #{_lambda_.39} parent=0 // pred_fallthru
    _
  %v21 = vld [vmem:[%s0] sm:$0xff]
  %v22 = vld [vmem:[%s0 + $0x8] sm:$0xff]
  %v23 = vld [vmem:[%s0 + $0x10] sm:$0xff]
  %v24 = vld [vmem:[%s0 + $0x18] sm:$0xff]
  %v25 = vld [vmem:[%s0 + $0x20] sm:$0xff]
  %v26 = vld [vmem:[%s0 + $0x28] sm:$0xff]
  %v27 = vld [vmem:[%s0 + $0x30] sm:$0xff]
  %v28 = vld [vmem:[%s0 + $0x38] sm:$0xff]
  %vm29 = vcmask 130048
  %v30 = vsel %vm29, %v21, 0.0
  %31 = vadd.xlane.f32.xlu0 %v30
  %v32 = vpop.xlane.xlu0 %31
  %v33 = vsel %vm29, %v22, 0.0
  %34 = vadd.xlane.f32.xlu0 %v33
  %v35 = vpop.xlane.xlu0 %34
  %v36 = vsel %vm29, %v23, 0.0
  %37 = vadd.xlane.f32.xlu0 %v36
  %v38 = vpop.xlane.xlu0 %37
  %v39 = vsel %vm29, %v24, 0.0
  %40 = vadd.xlane.f32.xlu0 %v39
  %v41 = vpop.xlane.xlu0 %40
  %v42 = vsel %vm29, %v25, 0.0
  %43 = vadd.xlane.f32.xlu0 %v42
  %v44 = vpop.xlane.xlu0 %43
  %v45 = vsel %vm29, %v26, 0.0
  %46 = vadd.xlane.f32.xlu0 %v45
  %v47 = vpop.xlane.xlu0 %46
  %v48 = vsel %vm29, %v27, 0.0
  %49 = vadd.xlane.f32.xlu0 %v48
  %v50 = vpop.xlane.xlu0 %49
  %v51 = vsel %vm29, %v28, 0.0
  %52 = vadd.xlane.f32.xlu0 %v51
  %v53 = vpop.xlane.xlu0 %52
  %v54 = vrcp.pop 16.0
  %v55 = vmul.f32 16.0, %v54
  %v56 = vsub.f32 1.0, %v55
  %v57 = vmul.f32 %v54, %v56
  %v58 = vadd.f32 %v54, %v57
  %vm59 = vweird.f32 %v54
  %v60 = vsel %vm59, %v54, %v58
  %v61 = vmul.f32 %v32, %v60
  %v62 = vmul.f32 %v35, %v60
  %v63 = vmul.f32 %v38, %v60
  %v64 = vmul.f32 %v41, %v60
  %v65 = vmul.f32 %v44, %v60
  %v66 = vmul.f32 %v47, %v60
  %v67 = vmul.f32 %v50, %v60
  %v68 = vmul.f32 %v53, %v60
  %v69 = vsub.f32 %v21, %v61
  %v70 = vsub.f32 %v22, %v62
  %v71 = vsub.f32 %v23, %v63
  %v72 = vsub.f32 %v24, %v64
  %v73 = vsub.f32 %v25, %v65
  %v74 = vsub.f32 %v26, %v66
  %v75 = vsub.f32 %v27, %v67
  %v76 = vsub.f32 %v28, %v68
  %v77 = vmul.f32 %v69, %v69
  %v78 = vmul.f32 %v70, %v70
  %v79 = vmul.f32 %v71, %v71
  %v80 = vmul.f32 %v72, %v72
  %v81 = vmul.f32 %v73, %v73
  %v82 = vmul.f32 %v74, %v74
  %v83 = vmul.f32 %v75, %v75
  %v84 = vmul.f32 %v76, %v76
  %v85 = vsel %vm29, %v77, 0.0
  %86 = vadd.xlane.f32.xlu0 %v85
  %v87 = vpop.xlane.xlu0 %86
  %v88 = vsel %vm29, %v78, 0.0
  %89 = vadd.xlane.f32.xlu0 %v88
  %v90 = vpop.xlane.xlu0 %89
  %v91 = vsel %vm29, %v79, 0.0
  %92 = vadd.xlane.f32.xlu0 %v91
  %v93 = vpop.xlane.xlu0 %92
  %v94 = vsel %vm29, %v80, 0.0
  %95 = vadd.xlane.f32.xlu0 %v94
  %v96 = vpop.xlane.xlu0 %95
  %v97 = vsel %vm29, %v81, 0.0
  %98 = vadd.xlane.f32.xlu0 %v97
  %v99 = vpop.xlane.xlu0 %98
  %v100 = vsel %vm29, %v82, 0.0
  %101 = vadd.xlane.f32.xlu0 %v100
  %v102 = vpop.xlane.xlu0 %101
  %v103 = vsel %vm29, %v83, 0.0
  %104 = vadd.xlane.f32.xlu0 %v103
  %v105 = vpop.xlane.xlu0 %104
  %v106 = vsel %vm29, %v84, 0.0
  %107 = vadd.xlane.f32.xlu0 %v106
  %v108 = vpop.xlane.xlu0 %107
  %v109 = vmul.f32 %v87, %v60
  %v110 = vmul.f32 %v90, %v60
  %v111 = vmul.f32 %v93, %v60
  %v112 = vmul.f32 %v96, %v60
  %v113 = vmul.f32 %v99, %v60
  %v114 = vmul.f32 %v102, %v60
  %v115 = vmul.f32 %v105, %v60
  %v116 = vmul.f32 %v108, %v60
  %v117 = vadd.f32 %v109, 1e-05
  %v118 = vadd.f32 %v110, 1e-05
  %v119 = vadd.f32 %v111, 1e-05
  %v120 = vadd.f32 %v112, 1e-05
  %v121 = vadd.f32 %v113, 1e-05
  %v122 = vadd.f32 %v114, 1e-05
  %v123 = vadd.f32 %v115, 1e-05
  %v124 = vadd.f32 %v116, 1e-05
  %v125 = vrsqrt.pop %v117
  %v126 = vmul.f32 %v125, %v117
  %v127 = vmul.f32 %v126, %v125
  %v128 = vmul.f32 0.5, %v127
  %v129 = vsub.f32 1.5, %v128
  %v130 = vmul.f32 %v125, %v129
  %vm131 = vweird.f32 %v117
  %vm132 = vweird.f32 %v125
  %vm133 = vmor %vm131, %vm132
  %v134 = vsel %vm133, %v125, %v130
  %v135 = vrsqrt.pop %v118
  %v136 = vmul.f32 %v135, %v118
  %v137 = vmul.f32 %v136, %v135
  %v138 = vmul.f32 0.5, %v137
  %v139 = vsub.f32 1.5, %v138
  %v140 = vmul.f32 %v135, %v139
  %vm141 = vweird.f32 %v118
  %vm142 = vweird.f32 %v135
  %vm143 = vmor %vm141, %vm142
  %v144 = vsel %vm143, %v135, %v140
  %v145 = vrsqrt.pop %v119
  %v146 = vmul.f32 %v145, %v119
  %v147 = vmul.f32 %v146, %v145
  %v148 = vmul.f32 0.5, %v147
  %v149 = vsub.f32 1.5, %v148
  %v150 = vmul.f32 %v145, %v149
  %vm151 = vweird.f32 %v119
  %vm152 = vweird.f32 %v145
  %vm153 = vmor %vm151, %vm152
  %v154 = vsel %vm153, %v145, %v150
  %v155 = vrsqrt.pop %v120
  %v156 = vmul.f32 %v155, %v120
  %v157 = vmul.f32 %v156, %v155
  %v158 = vmul.f32 0.5, %v157
  %v159 = vsub.f32 1.5, %v158
  %v160 = vmul.f32 %v155, %v159
  %vm161 = vweird.f32 %v120
  %vm162 = vweird.f32 %v155
  %vm163 = vmor %vm161, %vm162
  %v164 = vsel %vm163, %v155, %v160
  %v165 = vrsqrt.pop %v121
  %v166 = vmul.f32 %v165, %v121
  %v167 = vmul.f32 %v166, %v165
  %v168 = vmul.f32 0.5, %v167
  %v169 = vsub.f32 1.5, %v168
  %v170 = vmul.f32 %v165, %v169
  %vm171 = vweird.f32 %v121
  %vm172 = vweird.f32 %v165
  %vm173 = vmor %vm171, %vm172
  %v174 = vsel %vm173, %v165, %v170
  %v175 = vrsqrt.pop %v122
  %v176 = vmul.f32 %v175, %v122
  %v177 = vmul.f32 %v176, %v175
  %v178 = vmul.f32 0.5, %v177
  %v179 = vsub.f32 1.5, %v178
  %v180 = vmul.f32 %v175, %v179
  %vm181 = vweird.f32 %v122
  %vm182 = vweird.f32 %v175
  %vm183 = vmor %vm181, %vm182
  %v184 = vsel %vm183, %v175, %v180
  %v185 = vrsqrt.pop %v123
  %v186 = vmul.f32 %v185, %v123
  %v187 = vmul.f32 %v186, %v185
  %v188 = vmul.f32 0.5, %v187
  %v189 = vsub.f32 1.5, %v188
  %v190 = vmul.f32 %v185, %v189
  %vm191 = vweird.f32 %v123
  %vm192 = vweird.f32 %v185
  %vm193 = vmor %vm191, %vm192
  %v194 = vsel %vm193, %v185, %v190
  %v195 = vrsqrt.pop %v124
  %v196 = vmul.f32 %v195, %v124
  %v197 = vmul.f32 %v196, %v195
  %v198 = vmul.f32 0.5, %v197
  %v199 = vsub.f32 1.5, %v198
  %v200 = vmul.f32 %v195, %v199
  %vm201 = vweird.f32 %v124
  %vm202 = vweird.f32 %v195
  %vm203 = vmor %vm201, %vm202
  %v204 = vsel %vm203, %v195, %v200
  %v205 = vmul.f32 %v69, %v134
  %v206 = vmul.f32 %v70, %v144
  %v207 = vmul.f32 %v71, %v154
  %v208 = vmul.f32 %v72, %v164
  %v209 = vmul.f32 %v73, %v174
  %v210 = vmul.f32 %v74, %v184
  %v211 = vmul.f32 %v75, %v194
  %v212 = vmul.f32 %v76, %v204
  %v213 = vld [vmem:[%s1] sm:$0x1]
  %v215 = vperm.slane %v213, 0
  %v217 = vmul.f32 %v205, %v215
  %v218 = vmul.f32 %v206, %v215
  %v219 = vmul.f32 %v207, %v215
  %v220 = vmul.f32 %v208, %v215
  %v221 = vmul.f32 %v209, %v215
  %v222 = vmul.f32 %v210, %v215
  %v223 = vmul.f32 %v211, %v215
  %v224 = vmul.f32 %v212, %v215
  %v225 = vld [vmem:[%s2] sm:$0x1]
  %v227 = vperm.slane %v225, 0
  %v229 = vadd.f32 %v217, %v227
  %v230 = vadd.f32 %v218, %v227
  %v231 = vadd.f32 %v219, %v227
  %v232 = vadd.f32 %v220, %v227
  %v233 = vadd.f32 %v221, %v227
  %v234 = vadd.f32 %v222, %v227
  %v235 = vadd.f32 %v223, %v227
  %v236 = vadd.f32 %v224, %v227
  %v237 = vpack.c.bf16 %v230, %v229
  %v238 = vpack.c.bf16 %v232, %v231
  %v239 = vpack.c.bf16 %v234, %v233
  %v240 = vpack.c.bf16 %v236, %v235
  %v241 = vld [vmem:[%s3] sm:$0xf]
  %v242 = vld [vmem:[%s3 + $0x4] sm:$0xf]
  %v243 = vld [vmem:[%s4] sm:$0x1]
  %v245 = vperm.slane %v243, 0
  %v249 = vunpack.c.l.b16 %v241
  %v250 = vunpack.c.l.b16 %v242
  %v251 = vpack.c.b16 %v250, %v249
  %v254 = vsel %vm29, %v237, 0
  %v257 = vsel %vm29, %v238, 0
  %v260 = vsel %vm29, %v239, 0
  %v263 = vsel %vm29, %v240, 0
  %265 = vmatpush.bf16.msra.mxu0 0
  %266 = vmatpush.bf16.msra.mxu0 0
  %267 = vmatpush.bf16.msra.mxu0 0
  %268 = vmatpush.bf16.msra.mxu0 0
  %269 = vmatpush.bf16.msra.mxu0 0
  %270 = vmatpush.bf16.msra.mxu0 0
  %271 = vmatpush.bf16.msra.mxu0 0
  %272 = vmatpush.bf16.msra.mxu0 %v251
  %273 = vmatmul.bf16.gmra.mxu0 %v254
  %v274 = vpop.f32.mrf.mxu0
  %v275 = vadd.f32 %v245, %v274
  %v276 = vpop.f32.mrf.mxu0
  %v277 = vadd.f32 %v245, %v276
  %278 = vmatmul.bf16.gmra.mxu0 %v257
  %v279 = vpop.f32.mrf.mxu0
  %v280 = vadd.f32 %v245, %v279
  %v281 = vpop.f32.mrf.mxu0
  %v282 = vadd.f32 %v245, %v281
  %283 = vmatmul.bf16.gmra.mxu0 %v260
  %v284 = vpop.f32.mrf.mxu0
  %v285 = vadd.f32 %v245, %v284
  %v286 = vpop.f32.mrf.mxu0
  %v287 = vadd.f32 %v245, %v286
  %288 = vmatmul.bf16.gmra.mxu0 %v263
  %v289 = vpop.f32.mrf.mxu0
  %v290 = vadd.f32 %v245, %v289
  %v291 = vpop.f32.mrf.mxu0
  %v292 = vadd.f32 %v245, %v291
  %293 = vdwg.mxu0
  %294 = vst.msk [vmem:[%s5] sm:$0xff] %vm29, %v275
  %295 = vst.msk [vmem:[%s5 + $0x8] sm:$0xff] %vm29, %v277
  %296 = vst.msk [vmem:[%s5 + $0x10] sm:$0xff] %vm29, %v280
  %297 = vst.msk [vmem:[%s5 + $0x18] sm:$0xff] %vm29, %v282
  %298 = vst.msk [vmem:[%s5 + $0x20] sm:$0xff] %vm29, %v285
  %299 = vst.msk [vmem:[%s5 + $0x28] sm:$0xff] %vm29, %v287
  %300 = vst.msk [vmem:[%s5 + $0x30] sm:$0xff] %vm29, %v290
  %301 = vst.msk [vmem:[%s5 + $0x38] sm:$0xff] %vm29, %v292
  // Predicated region
  $region22: #{_lambda_.39} parent=0 // pred_check
    _
  $region23: #{_lambda_.39} parent=0 // pred_check_branch
    %303 = sbr.rel (0) target = $region25
  $region24: #{_lambda_.39} parent=0 // pred_region
    _
  $region25: #{_lambda_.39} parent=0 // pred_fallthru
    _
  // Predicated region
  $region26: #{_lambda_.39} parent=0 // pred_check
    _
  $region27: #{_lambda_.39} parent=0 // pred_check_branch
    %305 = sbr.rel (0) target = $region29
  $region28: #{_lambda_.39} parent=0 // pred_region
    _
  $region29: #{_lambda_.39} parent=0 // pred_fallthru
    _

// kernel: _lambda_.45
$region0: #{_lambda_.45}
  #allocation0 [shape = 'u32[]', space=smem, size = 0x4, offset = 0x4, fixed_abs, tag = 'smem constant byte address 0x4 - core index']
  #allocation1 [shape = 'u32[72,128]{1,0:T(1,128)}', space=vmem, size = 0x9000, scoped, tag = 'internal scratch']
  %s0 = inlined_call_operand.vmem [shape: f32[64,16], index: 0, kind: input, shape index: {}]
  %s1 = inlined_call_operand.vmem [shape: bf16[16,16], index: 1, kind: input, shape index: {}]
  %s2 = inlined_call_operand.vmem [shape: f32[1,16], index: 2, kind: input, shape index: {}]
  %s3 = inlined_call_operand.vmem [shape: f32[64,16], index: 3, kind: output, shape index: {}]
  %s4 = sld [smem:[#allocation0]]
  $region22: #{_lambda_.45} parent=0
    _
  %s6 = ssub.s32 1, %s4
  %s7 = scalar_select 0, %s6, %s4
  // Predicated region
  $region2: #{_lambda_.45} parent=0 // pred_check
    _
  $region3: #{_lambda_.45} parent=0 // pred_check_branch
    %9 = sbr.rel (0) target = $region5
  $region4: #{_lambda_.45} parent=0 // pred_region
    _
  $region5: #{_lambda_.45} parent=0 // pred_fallthru
    _
  // Predicated region
  $region6: #{_lambda_.45} parent=0 // pred_check
    _
  $region7: #{_lambda_.45} parent=0 // pred_check_branch
    %11 = sbr.rel (0) target = $region9
  $region8: #{_lambda_.45} parent=0 // pred_region
    _
  $region9: #{_lambda_.45} parent=0 // pred_fallthru
    _
  // Predicated region
  $region10: #{_lambda_.45} parent=0 // pred_check
    _
  $region11: #{_lambda_.45} parent=0 // pred_check_branch
    %13 = sbr.rel (0) target = $region13
  $region12: #{_lambda_.45} parent=0 // pred_region
    _
  $region13: #{_lambda_.45} parent=0 // pred_fallthru
    _
  %v15 = vld [vmem:[%s0] sm:$0xff]
  %v16 = vld [vmem:[%s0 + $0x8] sm:$0xff]
  %v17 = vld [vmem:[%s0 + $0x10] sm:$0xff]
  %v18 = vld [vmem:[%s0 + $0x18] sm:$0xff]
  %v19 = vld [vmem:[%s0 + $0x20] sm:$0xff]
  %v20 = vld [vmem:[%s0 + $0x28] sm:$0xff]
  %v21 = vld [vmem:[%s0 + $0x30] sm:$0xff]
  %v22 = vld [vmem:[%s0 + $0x38] sm:$0xff]
  %v23 = vpack.c.bf16 %v16, %v15
  %v24 = vpack.c.bf16 %v18, %v17
  %v25 = vpack.c.bf16 %v20, %v19
  %v26 = vpack.c.bf16 %v22, %v21
  %v27 = vld [vmem:[%s1] sm:$0xf]
  %v28 = vld [vmem:[%s1 + $0x4] sm:$0xf]
  %v29 = vld [vmem:[%s2] sm:$0x1]
  %v31 = vperm.slane %v29, 0
  %v35 = vunpack.c.l.b16 %v27
  %v36 = vunpack.c.l.b16 %v28
  %v37 = vpack.c.b16 %v36, %v35
  %vm39 = vcmask 130048
  %v41 = vsel %vm39, %v23, 0
  %v44 = vsel %vm39, %v24, 0
  %v47 = vsel %vm39, %v25, 0
  %v50 = vsel %vm39, %v26, 0
  %52 = vmatpush.bf16.msra.mxu0 0
  %53 = vmatpush.bf16.msra.mxu0 0
  %54 = vmatpush.bf16.msra.mxu0 0
  %55 = vmatpush.bf16.msra.mxu0 0
  %56 = vmatpush.bf16.msra.mxu0 0
  %57 = vmatpush.bf16.msra.mxu0 0
  %58 = vmatpush.bf16.msra.mxu0 0
  %59 = vmatpush.bf16.msra.mxu0 %v37
  %60 = vmatmul.bf16.gmra.mxu0 %v41
  %v61 = vpop.f32.mrf.mxu0
  %v62 = vadd.f32 %v31, %v61
  %v63 = vpop.f32.mrf.mxu0
  %v64 = vadd.f32 %v31, %v63
  %65 = vmatmul.bf16.gmra.mxu0 %v44
  %v66 = vpop.f32.mrf.mxu0
  %v67 = vadd.f32 %v31, %v66
  %v68 = vpop.f32.mrf.mxu0
  %v69 = vadd.f32 %v31, %v68
  %70 = vmatmul.bf16.gmra.mxu0 %v47
  %v71 = vpop.f32.mrf.mxu0
  %v72 = vadd.f32 %v31, %v71
  %v73 = vpop.f32.mrf.mxu0
  %v74 = vadd.f32 %v31, %v73
  %75 = vmatmul.bf16.gmra.mxu0 %v50
  %v76 = vpop.f32.mrf.mxu0
  %v77 = vadd.f32 %v31, %v76
  %v78 = vpop.f32.mrf.mxu0
  %v79 = vadd.f32 %v31, %v78
  %80 = vdwg.mxu0
  %81 = vst.msk [vmem:[%s3] sm:$0xff] %vm39, %v62
  %82 = vst.msk [vmem:[%s3 + $0x8] sm:$0xff] %vm39, %v64
  %83 = vst.msk [vmem:[%s3 + $0x10] sm:$0xff] %vm39, %v67
  %84 = vst.msk [vmem:[%s3 + $0x18] sm:$0xff] %vm39, %v69
  %85 = vst.msk [vmem:[%s3 + $0x20] sm:$0xff] %vm39, %v72
  %86 = vst.msk [vmem:[%s3 + $0x28] sm:$0xff] %vm39, %v74
  %87 = vst.msk [vmem:[%s3 + $0x30] sm:$0xff] %vm39, %v77
  %88 = vst.msk [vmem:[%s3 + $0x38] sm:$0xff] %vm39, %v79
  // Predicated region
  $region14: #{_lambda_.45} parent=0 // pred_check
    _
  $region15: #{_lambda_.45} parent=0 // pred_check_branch
    %90 = sbr.rel (0) target = $region17
  $region16: #{_lambda_.45} parent=0 // pred_region
    _
  $region17: #{_lambda_.45} parent=0 // pred_fallthru
    _
  // Predicated region
  $region18: #{_lambda_.45} parent=0 // pred_check
    _
  $region19: #{_lambda_.45} parent=0 // pred_check_branch
    %92 = sbr.rel (0) target = $region21
  $region20: #{_lambda_.45} parent=0 // pred_region
    _
  $region21: #{_lambda_.45} parent=0 // pred_fallthru
    _

// kernel: _lambda_.43
$region0: #{_lambda_.43}
  #allocation0 [shape = 'u32[]', space=smem, size = 0x4, offset = 0x4, fixed_abs, tag = 'smem constant byte address 0x4 - core index']
  #allocation1 [shape = 'u32[72,128]{1,0:T(1,128)}', space=vmem, size = 0x9000, scoped, tag = 'internal scratch']
  %s0 = inlined_call_operand.vmem [shape: f32[64,16], index: 0, kind: input, shape index: {}]
  %s1 = inlined_call_operand.vmem [shape: f32[1,16], index: 1, kind: input, shape index: {}]
  %s2 = inlined_call_operand.vmem [shape: f32[1,16], index: 2, kind: input, shape index: {}]
  %s3 = inlined_call_operand.vmem [shape: bf16[16,66], index: 3, kind: input, shape index: {}]
  %s4 = inlined_call_operand.vmem [shape: f32[1,66], index: 4, kind: input, shape index: {}]
  %s5 = inlined_call_operand.vmem [shape: f32[64,66], index: 5, kind: output, shape index: {}]
  %s6 = sld [smem:[#allocation0]]
  $region30: #{_lambda_.43} parent=0
    _
  %s8 = ssub.s32 1, %s6
  %s9 = scalar_select 0, %s8, %s6
  // Predicated region
  $region2: #{_lambda_.43} parent=0 // pred_check
    _
  $region3: #{_lambda_.43} parent=0 // pred_check_branch
    %11 = sbr.rel (0) target = $region5
  $region4: #{_lambda_.43} parent=0 // pred_region
    _
  $region5: #{_lambda_.43} parent=0 // pred_fallthru
    _
  // Predicated region
  $region6: #{_lambda_.43} parent=0 // pred_check
    _
  $region7: #{_lambda_.43} parent=0 // pred_check_branch
    %13 = sbr.rel (0) target = $region9
  $region8: #{_lambda_.43} parent=0 // pred_region
    _
  $region9: #{_lambda_.43} parent=0 // pred_fallthru
    _
  // Predicated region
  $region10: #{_lambda_.43} parent=0 // pred_check
    _
  $region11: #{_lambda_.43} parent=0 // pred_check_branch
    %15 = sbr.rel (0) target = $region13
  $region12: #{_lambda_.43} parent=0 // pred_region
    _
  $region13: #{_lambda_.43} parent=0 // pred_fallthru
    _
  // Predicated region
  $region14: #{_lambda_.43} parent=0 // pred_check
    _
  $region15: #{_lambda_.43} parent=0 // pred_check_branch
    %17 = sbr.rel (0) target = $region17
  $region16: #{_lambda_.43} parent=0 // pred_region
    _
  $region17: #{_lambda_.43} parent=0 // pred_fallthru
    _
  // Predicated region
  $region18: #{_lambda_.43} parent=0 // pred_check
    _
  $region19: #{_lambda_.43} parent=0 // pred_check_branch
    %19 = sbr.rel (0) target = $region21
  $region20: #{_lambda_.43} parent=0 // pred_region
    _
  $region21: #{_lambda_.43} parent=0 // pred_fallthru
    _
  %v21 = vld [vmem:[%s0] sm:$0xff]
  %v22 = vld [vmem:[%s0 + $0x8] sm:$0xff]
  %v23 = vld [vmem:[%s0 + $0x10] sm:$0xff]
  %v24 = vld [vmem:[%s0 + $0x18] sm:$0xff]
  %v25 = vld [vmem:[%s0 + $0x20] sm:$0xff]
  %v26 = vld [vmem:[%s0 + $0x28] sm:$0xff]
  %v27 = vld [vmem:[%s0 + $0x30] sm:$0xff]
  %v28 = vld [vmem:[%s0 + $0x38] sm:$0xff]
  %vm29 = vcmask 130048
  %v30 = vsel %vm29, %v21, 0.0
  %31 = vadd.xlane.f32.xlu0 %v30
  %v32 = vpop.xlane.xlu0 %31
  %v33 = vsel %vm29, %v22, 0.0
  %34 = vadd.xlane.f32.xlu0 %v33
  %v35 = vpop.xlane.xlu0 %34
  %v36 = vsel %vm29, %v23, 0.0
  %37 = vadd.xlane.f32.xlu0 %v36
  %v38 = vpop.xlane.xlu0 %37
  %v39 = vsel %vm29, %v24, 0.0
  %40 = vadd.xlane.f32.xlu0 %v39
  %v41 = vpop.xlane.xlu0 %40
  %v42 = vsel %vm29, %v25, 0.0
  %43 = vadd.xlane.f32.xlu0 %v42
  %v44 = vpop.xlane.xlu0 %43
  %v45 = vsel %vm29, %v26, 0.0
  %46 = vadd.xlane.f32.xlu0 %v45
  %v47 = vpop.xlane.xlu0 %46
  %v48 = vsel %vm29, %v27, 0.0
  %49 = vadd.xlane.f32.xlu0 %v48
  %v50 = vpop.xlane.xlu0 %49
  %v51 = vsel %vm29, %v28, 0.0
  %52 = vadd.xlane.f32.xlu0 %v51
  %v53 = vpop.xlane.xlu0 %52
  %v54 = vrcp.pop 16.0
  %v55 = vmul.f32 16.0, %v54
  %v56 = vsub.f32 1.0, %v55
  %v57 = vmul.f32 %v54, %v56
  %v58 = vadd.f32 %v54, %v57
  %vm59 = vweird.f32 %v54
  %v60 = vsel %vm59, %v54, %v58
  %v61 = vmul.f32 %v32, %v60
  %v62 = vmul.f32 %v35, %v60
  %v63 = vmul.f32 %v38, %v60
  %v64 = vmul.f32 %v41, %v60
  %v65 = vmul.f32 %v44, %v60
  %v66 = vmul.f32 %v47, %v60
  %v67 = vmul.f32 %v50, %v60
  %v68 = vmul.f32 %v53, %v60
  %v69 = vsub.f32 %v21, %v61
  %v70 = vsub.f32 %v22, %v62
  %v71 = vsub.f32 %v23, %v63
  %v72 = vsub.f32 %v24, %v64
  %v73 = vsub.f32 %v25, %v65
  %v74 = vsub.f32 %v26, %v66
  %v75 = vsub.f32 %v27, %v67
  %v76 = vsub.f32 %v28, %v68
  %v77 = vmul.f32 %v69, %v69
  %v78 = vmul.f32 %v70, %v70
  %v79 = vmul.f32 %v71, %v71
  %v80 = vmul.f32 %v72, %v72
  %v81 = vmul.f32 %v73, %v73
  %v82 = vmul.f32 %v74, %v74
  %v83 = vmul.f32 %v75, %v75
  %v84 = vmul.f32 %v76, %v76
  %v85 = vsel %vm29, %v77, 0.0
  %86 = vadd.xlane.f32.xlu0 %v85
  %v87 = vpop.xlane.xlu0 %86
  %v88 = vsel %vm29, %v78, 0.0
  %89 = vadd.xlane.f32.xlu0 %v88
  %v90 = vpop.xlane.xlu0 %89
  %v91 = vsel %vm29, %v79, 0.0
  %92 = vadd.xlane.f32.xlu0 %v91
  %v93 = vpop.xlane.xlu0 %92
  %v94 = vsel %vm29, %v80, 0.0
  %95 = vadd.xlane.f32.xlu0 %v94
  %v96 = vpop.xlane.xlu0 %95
  %v97 = vsel %vm29, %v81, 0.0
  %98 = vadd.xlane.f32.xlu0 %v97
  %v99 = vpop.xlane.xlu0 %98
  %v100 = vsel %vm29, %v82, 0.0
  %101 = vadd.xlane.f32.xlu0 %v100
  %v102 = vpop.xlane.xlu0 %101
  %v103 = vsel %vm29, %v83, 0.0
  %104 = vadd.xlane.f32.xlu0 %v103
  %v105 = vpop.xlane.xlu0 %104
  %v106 = vsel %vm29, %v84, 0.0
  %107 = vadd.xlane.f32.xlu0 %v106
  %v108 = vpop.xlane.xlu0 %107
  %v109 = vmul.f32 %v87, %v60
  %v110 = vmul.f32 %v90, %v60
  %v111 = vmul.f32 %v93, %v60
  %v112 = vmul.f32 %v96, %v60
  %v113 = vmul.f32 %v99, %v60
  %v114 = vmul.f32 %v102, %v60
  %v115 = vmul.f32 %v105, %v60
  %v116 = vmul.f32 %v108, %v60
  %v117 = vadd.f32 %v109, 1e-05
  %v118 = vadd.f32 %v110, 1e-05
  %v119 = vadd.f32 %v111, 1e-05
  %v120 = vadd.f32 %v112, 1e-05
  %v121 = vadd.f32 %v113, 1e-05
  %v122 = vadd.f32 %v114, 1e-05
  %v123 = vadd.f32 %v115, 1e-05
  %v124 = vadd.f32 %v116, 1e-05
  %v125 = vrsqrt.pop %v117
  %v126 = vmul.f32 %v125, %v117
  %v127 = vmul.f32 %v126, %v125
  %v128 = vmul.f32 0.5, %v127
  %v129 = vsub.f32 1.5, %v128
  %v130 = vmul.f32 %v125, %v129
  %vm131 = vweird.f32 %v117
  %vm132 = vweird.f32 %v125
  %vm133 = vmor %vm131, %vm132
  %v134 = vsel %vm133, %v125, %v130
  %v135 = vrsqrt.pop %v118
  %v136 = vmul.f32 %v135, %v118
  %v137 = vmul.f32 %v136, %v135
  %v138 = vmul.f32 0.5, %v137
  %v139 = vsub.f32 1.5, %v138
  %v140 = vmul.f32 %v135, %v139
  %vm141 = vweird.f32 %v118
  %vm142 = vweird.f32 %v135
  %vm143 = vmor %vm141, %vm142
  %v144 = vsel %vm143, %v135, %v140
  %v145 = vrsqrt.pop %v119
  %v146 = vmul.f32 %v145, %v119
  %v147 = vmul.f32 %v146, %v145
  %v148 = vmul.f32 0.5, %v147
  %v149 = vsub.f32 1.5, %v148
  %v150 = vmul.f32 %v145, %v149
  %vm151 = vweird.f32 %v119
  %vm152 = vweird.f32 %v145
  %vm153 = vmor %vm151, %vm152
  %v154 = vsel %vm153, %v145, %v150
  %v155 = vrsqrt.pop %v120
  %v156 = vmul.f32 %v155, %v120
  %v157 = vmul.f32 %v156, %v155
  %v158 = vmul.f32 0.5, %v157
  %v159 = vsub.f32 1.5, %v158
  %v160 = vmul.f32 %v155, %v159
  %vm161 = vweird.f32 %v120
  %vm162 = vweird.f32 %v155
  %vm163 = vmor %vm161, %vm162
  %v164 = vsel %vm163, %v155, %v160
  %v165 = vrsqrt.pop %v121
  %v166 = vmul.f32 %v165, %v121
  %v167 = vmul.f32 %v166, %v165
  %v168 = vmul.f32 0.5, %v167
  %v169 = vsub.f32 1.5, %v168
  %v170 = vmul.f32 %v165, %v169
  %vm171 = vweird.f32 %v121
  %vm172 = vweird.f32 %v165
  %vm173 = vmor %vm171, %vm172
  %v174 = vsel %vm173, %v165, %v170
  %v175 = vrsqrt.pop %v122
  %v176 = vmul.f32 %v175, %v122
  %v177 = vmul.f32 %v176, %v175
  %v178 = vmul.f32 0.5, %v177
  %v179 = vsub.f32 1.5, %v178
  %v180 = vmul.f32 %v175, %v179
  %vm181 = vweird.f32 %v122
  %vm182 = vweird.f32 %v175
  %vm183 = vmor %vm181, %vm182
  %v184 = vsel %vm183, %v175, %v180
  %v185 = vrsqrt.pop %v123
  %v186 = vmul.f32 %v185, %v123
  %v187 = vmul.f32 %v186, %v185
  %v188 = vmul.f32 0.5, %v187
  %v189 = vsub.f32 1.5, %v188
  %v190 = vmul.f32 %v185, %v189
  %vm191 = vweird.f32 %v123
  %vm192 = vweird.f32 %v185
  %vm193 = vmor %vm191, %vm192
  %v194 = vsel %vm193, %v185, %v190
  %v195 = vrsqrt.pop %v124
  %v196 = vmul.f32 %v195, %v124
  %v197 = vmul.f32 %v196, %v195
  %v198 = vmul.f32 0.5, %v197
  %v199 = vsub.f32 1.5, %v198
  %v200 = vmul.f32 %v195, %v199
  %vm201 = vweird.f32 %v124
  %vm202 = vweird.f32 %v195
  %vm203 = vmor %vm201, %vm202
  %v204 = vsel %vm203, %v195, %v200
  %v205 = vmul.f32 %v69, %v134
  %v206 = vmul.f32 %v70, %v144
  %v207 = vmul.f32 %v71, %v154
  %v208 = vmul.f32 %v72, %v164
  %v209 = vmul.f32 %v73, %v174
  %v210 = vmul.f32 %v74, %v184
  %v211 = vmul.f32 %v75, %v194
  %v212 = vmul.f32 %v76, %v204
  %v213 = vld [vmem:[%s1] sm:$0x1]
  %v215 = vperm.slane %v213, 0
  %v217 = vmul.f32 %v205, %v215
  %v218 = vmul.f32 %v206, %v215
  %v219 = vmul.f32 %v207, %v215
  %v220 = vmul.f32 %v208, %v215
  %v221 = vmul.f32 %v209, %v215
  %v222 = vmul.f32 %v210, %v215
  %v223 = vmul.f32 %v211, %v215
  %v224 = vmul.f32 %v212, %v215
  %v225 = vld [vmem:[%s2] sm:$0x1]
  %v227 = vperm.slane %v225, 0
  %v229 = vadd.f32 %v217, %v227
  %v230 = vadd.f32 %v218, %v227
  %v231 = vadd.f32 %v219, %v227
  %v232 = vadd.f32 %v220, %v227
  %v233 = vadd.f32 %v221, %v227
  %v234 = vadd.f32 %v222, %v227
  %v235 = vadd.f32 %v223, %v227
  %v236 = vadd.f32 %v224, %v227
  %v237 = vpack.c.bf16 %v230, %v229
  %v238 = vpack.c.bf16 %v232, %v231
  %v239 = vpack.c.bf16 %v234, %v233
  %v240 = vpack.c.bf16 %v236, %v235
  %v241 = vld [vmem:[%s3] sm:$0xf]
  %v242 = vld [vmem:[%s3 + $0x4] sm:$0xf]
  %v243 = vld [vmem:[%s4] sm:$0x1]
  %v245 = vperm.slane %v243, 0
  %v249 = vunpack.c.l.b16 %v241
  %v250 = vunpack.c.l.b16 %v242
  %v251 = vpack.c.b16 %v250, %v249
  %v254 = vsel %vm29, %v237, 0
  %v257 = vsel %vm29, %v238, 0
  %v260 = vsel %vm29, %v239, 0
  %v263 = vsel %vm29, %v240, 0
  %265 = vmatpush.bf16.msra.mxu0 0
  %266 = vmatpush.bf16.msra.mxu0 0
  %267 = vmatpush.bf16.msra.mxu0 0
  %268 = vmatpush.bf16.msra.mxu0 0
  %269 = vmatpush.bf16.msra.mxu0 0
  %270 = vmatpush.bf16.msra.mxu0 0
  %271 = vmatpush.bf16.msra.mxu0 0
  %272 = vmatpush.bf16.msra.mxu0 %v251
  %273 = vmatmul.bf16.gmra.mxu0 %v254
  %v274 = vpop.f32.mrf.mxu0
  %v275 = vadd.f32 %v245, %v274
  %v276 = vpop.f32.mrf.mxu0
  %v277 = vadd.f32 %v245, %v276
  %278 = vmatmul.bf16.gmra.mxu0 %v257
  %v279 = vpop.f32.mrf.mxu0
  %v280 = vadd.f32 %v245, %v279
  %v281 = vpop.f32.mrf.mxu0
  %v282 = vadd.f32 %v245, %v281
  %283 = vmatmul.bf16.gmra.mxu0 %v260
  %v284 = vpop.f32.mrf.mxu0
  %v285 = vadd.f32 %v245, %v284
  %v286 = vpop.f32.mrf.mxu0
  %v287 = vadd.f32 %v245, %v286
  %288 = vmatmul.bf16.gmra.mxu0 %v263
  %v289 = vpop.f32.mrf.mxu0
  %v290 = vadd.f32 %v245, %v289
  %v291 = vpop.f32.mrf.mxu0
  %v292 = vadd.f32 %v245, %v291
  %293 = vdwg.mxu0
  %vm294 = vcmask 539648
  %295 = vst.msk [vmem:[%s5] sm:$0xff] %vm294, %v275
  %296 = vst.msk [vmem:[%s5 + $0x8] sm:$0xff] %vm294, %v277
  %297 = vst.msk [vmem:[%s5 + $0x10] sm:$0xff] %vm294, %v280
  %298 = vst.msk [vmem:[%s5 + $0x18] sm:$0xff] %vm294, %v282
  %299 = vst.msk [vmem:[%s5 + $0x20] sm:$0xff] %vm294, %v285
  %300 = vst.msk [vmem:[%s5 + $0x28] sm:$0xff] %vm294, %v287
  %301 = vst.msk [vmem:[%s5 + $0x30] sm:$0xff] %vm294, %v290
  %302 = vst.msk [vmem:[%s5 + $0x38] sm:$0xff] %vm294, %v292
  // Predicated region
  $region22: #{_lambda_.43} parent=0 // pred_check
    _
  $region23: #{_lambda_.43} parent=0 // pred_check_branch
    %304 = sbr.rel (0) target = $region25
  $region24: #{_lambda_.43} parent=0 // pred_region
    _
  $region25: #{_lambda_.43} parent=0 // pred_fallthru
    _
  // Predicated region
  $region26: #{_lambda_.43} parent=0 // pred_check
    _
  $region27: #{_lambda_.43} parent=0 // pred_check_branch
    %306 = sbr.rel (0) target = $region29
  $region28: #{_lambda_.43} parent=0 // pred_region
    _
  $region29: #{_lambda_.43} parent=0 // pred_fallthru
    _

// kernel: _lambda_.49
$region0: #{_lambda_.49}
  #allocation0 [shape = 'u32[]', space=smem, size = 0x4, offset = 0x4, fixed_abs, tag = 'smem constant byte address 0x4 - core index']
  #allocation1 [shape = 'u32[72,128]{1,0:T(1,128)}', space=vmem, size = 0x9000, scoped, tag = 'internal scratch']
  %s0 = inlined_call_operand.vmem [shape: f32[64,16], index: 0, kind: input, shape index: {}]
  %s1 = inlined_call_operand.vmem [shape: f32[64,1], index: 1, kind: input, shape index: {}]
  %s2 = inlined_call_operand.vmem [shape: f32[1,16], index: 2, kind: input, shape index: {}]
  %s3 = inlined_call_operand.vmem [shape: f32[1,16], index: 3, kind: input, shape index: {}]
  %s4 = inlined_call_operand.vmem [shape: bf16[16,32], index: 4, kind: input, shape index: {}]
  %s5 = inlined_call_operand.vmem [shape: f32[1,32], index: 5, kind: input, shape index: {}]
  %s6 = inlined_call_operand.vmem [shape: bf16[32,16], index: 6, kind: input, shape index: {}]
  %s7 = inlined_call_operand.vmem [shape: f32[1,16], index: 7, kind: input, shape index: {}]
  %s8 = inlined_call_operand.vmem [shape: f32[64,16], index: 8, kind: output, shape index: {}]
  %s9 = sld [smem:[#allocation0]]
  $region42: #{_lambda_.49} parent=0
    _
  %s11 = ssub.s32 1, %s9
  %s12 = scalar_select 0, %s11, %s9
  // Predicated region
  $region2: #{_lambda_.49} parent=0 // pred_check
    _
  $region3: #{_lambda_.49} parent=0 // pred_check_branch
    %14 = sbr.rel (0) target = $region5
  $region4: #{_lambda_.49} parent=0 // pred_region
    _
  $region5: #{_lambda_.49} parent=0 // pred_fallthru
    _
  // Predicated region
  $region6: #{_lambda_.49} parent=0 // pred_check
    _
  $region7: #{_lambda_.49} parent=0 // pred_check_branch
    %16 = sbr.rel (0) target = $region9
  $region8: #{_lambda_.49} parent=0 // pred_region
    _
  $region9: #{_lambda_.49} parent=0 // pred_fallthru
    _
  // Predicated region
  $region10: #{_lambda_.49} parent=0 // pred_check
    _
  $region11: #{_lambda_.49} parent=0 // pred_check_branch
    %18 = sbr.rel (0) target = $region13
  $region12: #{_lambda_.49} parent=0 // pred_region
    _
  $region13: #{_lambda_.49} parent=0 // pred_fallthru
    _
  // Predicated region
  $region14: #{_lambda_.49} parent=0 // pred_check
    _
  $region15: #{_lambda_.49} parent=0 // pred_check_branch
    %20 = sbr.rel (0) target = $region17
  $region16: #{_lambda_.49} parent=0 // pred_region
    _
  $region17: #{_lambda_.49} parent=0 // pred_fallthru
    _
  // Predicated region
  $region18: #{_lambda_.49} parent=0 // pred_check
    _
  $region19: #{_lambda_.49} parent=0 // pred_check_branch
    %22 = sbr.rel (0) target = $region21
  $region20: #{_lambda_.49} parent=0 // pred_region
    _
  $region21: #{_lambda_.49} parent=0 // pred_fallthru
    _
  // Predicated region
  $region22: #{_lambda_.49} parent=0 // pred_check
    _
  $region23: #{_lambda_.49} parent=0 // pred_check_branch
    %24 = sbr.rel (0) target = $region25
  $region24: #{_lambda_.49} parent=0 // pred_region
    _
  $region25: #{_lambda_.49} parent=0 // pred_fallthru
    _
  // Predicated region
  $region26: #{_lambda_.49} parent=0 // pred_check
    _
  $region27: #{_lambda_.49} parent=0 // pred_check_branch
    %26 = sbr.rel (0) target = $region29
  $region28: #{_lambda_.49} parent=0 // pred_region
    _
  $region29: #{_lambda_.49} parent=0 // pred_fallthru
    _
  // Predicated region
  $region30: #{_lambda_.49} parent=0 // pred_check
    _
  $region31: #{_lambda_.49} parent=0 // pred_check_branch
    %28 = sbr.rel (0) target = $region33
  $region32: #{_lambda_.49} parent=0 // pred_region
    _
  $region33: #{_lambda_.49} parent=0 // pred_fallthru
    _
  %v30 = vld [vmem:[%s0] sm:$0xff]
  %v31 = vld [vmem:[%s0 + $0x8] sm:$0xff]
  %v32 = vld [vmem:[%s0 + $0x10] sm:$0xff]
  %v33 = vld [vmem:[%s0 + $0x18] sm:$0xff]
  %v34 = vld [vmem:[%s0 + $0x20] sm:$0xff]
  %v35 = vld [vmem:[%s0 + $0x28] sm:$0xff]
  %v36 = vld [vmem:[%s0 + $0x30] sm:$0xff]
  %v37 = vld [vmem:[%s0 + $0x38] sm:$0xff]
  %vm38 = vcmask 130048
  %v39 = vsel %vm38, %v30, 0.0
  %40 = vadd.xlane.f32.xlu0 %v39
  %v41 = vpop.xlane.xlu0 %40
  %v42 = vsel %vm38, %v31, 0.0
  %43 = vadd.xlane.f32.xlu0 %v42
  %v44 = vpop.xlane.xlu0 %43
  %v45 = vsel %vm38, %v32, 0.0
  %46 = vadd.xlane.f32.xlu0 %v45
  %v47 = vpop.xlane.xlu0 %46
  %v48 = vsel %vm38, %v33, 0.0
  %49 = vadd.xlane.f32.xlu0 %v48
  %v50 = vpop.xlane.xlu0 %49
  %v51 = vsel %vm38, %v34, 0.0
  %52 = vadd.xlane.f32.xlu0 %v51
  %v53 = vpop.xlane.xlu0 %52
  %v54 = vsel %vm38, %v35, 0.0
  %55 = vadd.xlane.f32.xlu0 %v54
  %v56 = vpop.xlane.xlu0 %55
  %v57 = vsel %vm38, %v36, 0.0
  %58 = vadd.xlane.f32.xlu0 %v57
  %v59 = vpop.xlane.xlu0 %58
  %v60 = vsel %vm38, %v37, 0.0
  %61 = vadd.xlane.f32.xlu0 %v60
  %v62 = vpop.xlane.xlu0 %61
  %v63 = vrcp.pop 16.0
  %v64 = vmul.f32 16.0, %v63
  %v65 = vsub.f32 1.0, %v64
  %v66 = vmul.f32 %v63, %v65
  %v67 = vadd.f32 %v63, %v66
  %vm68 = vweird.f32 %v63
  %v69 = vsel %vm68, %v63, %v67
  %v70 = vmul.f32 %v41, %v69
  %v71 = vmul.f32 %v44, %v69
  %v72 = vmul.f32 %v47, %v69
  %v73 = vmul.f32 %v50, %v69
  %v74 = vmul.f32 %v53, %v69
  %v75 = vmul.f32 %v56, %v69
  %v76 = vmul.f32 %v59, %v69
  %v77 = vmul.f32 %v62, %v69
  %v78 = vsub.f32 %v30, %v70
  %v79 = vsub.f32 %v31, %v71
  %v80 = vsub.f32 %v32, %v72
  %v81 = vsub.f32 %v33, %v73
  %v82 = vsub.f32 %v34, %v74
  %v83 = vsub.f32 %v35, %v75
  %v84 = vsub.f32 %v36, %v76
  %v85 = vsub.f32 %v37, %v77
  %v86 = vmul.f32 %v78, %v78
  %v87 = vmul.f32 %v79, %v79
  %v88 = vmul.f32 %v80, %v80
  %v89 = vmul.f32 %v81, %v81
  %v90 = vmul.f32 %v82, %v82
  %v91 = vmul.f32 %v83, %v83
  %v92 = vmul.f32 %v84, %v84
  %v93 = vmul.f32 %v85, %v85
  %v94 = vsel %vm38, %v86, 0.0
  %95 = vadd.xlane.f32.xlu0 %v94
  %v96 = vpop.xlane.xlu0 %95
  %v97 = vsel %vm38, %v87, 0.0
  %98 = vadd.xlane.f32.xlu0 %v97
  %v99 = vpop.xlane.xlu0 %98
  %v100 = vsel %vm38, %v88, 0.0
  %101 = vadd.xlane.f32.xlu0 %v100
  %v102 = vpop.xlane.xlu0 %101
  %v103 = vsel %vm38, %v89, 0.0
  %104 = vadd.xlane.f32.xlu0 %v103
  %v105 = vpop.xlane.xlu0 %104
  %v106 = vsel %vm38, %v90, 0.0
  %107 = vadd.xlane.f32.xlu0 %v106
  %v108 = vpop.xlane.xlu0 %107
  %v109 = vsel %vm38, %v91, 0.0
  %110 = vadd.xlane.f32.xlu0 %v109
  %v111 = vpop.xlane.xlu0 %110
  %v112 = vsel %vm38, %v92, 0.0
  %113 = vadd.xlane.f32.xlu0 %v112
  %v114 = vpop.xlane.xlu0 %113
  %v115 = vsel %vm38, %v93, 0.0
  %116 = vadd.xlane.f32.xlu0 %v115
  %v117 = vpop.xlane.xlu0 %116
  %v118 = vmul.f32 %v96, %v69
  %v119 = vmul.f32 %v99, %v69
  %v120 = vmul.f32 %v102, %v69
  %v121 = vmul.f32 %v105, %v69
  %v122 = vmul.f32 %v108, %v69
  %v123 = vmul.f32 %v111, %v69
  %v124 = vmul.f32 %v114, %v69
  %v125 = vmul.f32 %v117, %v69
  %v126 = vadd.f32 %v118, 1e-05
  %v127 = vadd.f32 %v119, 1e-05
  %v128 = vadd.f32 %v120, 1e-05
  %v129 = vadd.f32 %v121, 1e-05
  %v130 = vadd.f32 %v122, 1e-05
  %v131 = vadd.f32 %v123, 1e-05
  %v132 = vadd.f32 %v124, 1e-05
  %v133 = vadd.f32 %v125, 1e-05
  %v134 = vrsqrt.pop %v126
  %v135 = vmul.f32 %v134, %v126
  %v136 = vmul.f32 %v135, %v134
  %v137 = vmul.f32 0.5, %v136
  %v138 = vsub.f32 1.5, %v137
  %v139 = vmul.f32 %v134, %v138
  %vm140 = vweird.f32 %v126
  %vm141 = vweird.f32 %v134
  %vm142 = vmor %vm140, %vm141
  %v143 = vsel %vm142, %v134, %v139
  %v144 = vrsqrt.pop %v127
  %v145 = vmul.f32 %v144, %v127
  %v146 = vmul.f32 %v145, %v144
  %v147 = vmul.f32 0.5, %v146
  %v148 = vsub.f32 1.5, %v147
  %v149 = vmul.f32 %v144, %v148
  %vm150 = vweird.f32 %v127
  %vm151 = vweird.f32 %v144
  %vm152 = vmor %vm150, %vm151
  %v153 = vsel %vm152, %v144, %v149
  %v154 = vrsqrt.pop %v128
  %v155 = vmul.f32 %v154, %v128
  %v156 = vmul.f32 %v155, %v154
  %v157 = vmul.f32 0.5, %v156
  %v158 = vsub.f32 1.5, %v157
  %v159 = vmul.f32 %v154, %v158
  %vm160 = vweird.f32 %v128
  %vm161 = vweird.f32 %v154
  %vm162 = vmor %vm160, %vm161
  %v163 = vsel %vm162, %v154, %v159
  %v164 = vrsqrt.pop %v129
  %v165 = vmul.f32 %v164, %v129
  %v166 = vmul.f32 %v165, %v164
  %v167 = vmul.f32 0.5, %v166
  %v168 = vsub.f32 1.5, %v167
  %v169 = vmul.f32 %v164, %v168
  %vm170 = vweird.f32 %v129
  %vm171 = vweird.f32 %v164
  %vm172 = vmor %vm170, %vm171
  %v173 = vsel %vm172, %v164, %v169
  %v174 = vrsqrt.pop %v130
  %v175 = vmul.f32 %v174, %v130
  %v176 = vmul.f32 %v175, %v174
  %v177 = vmul.f32 0.5, %v176
  %v178 = vsub.f32 1.5, %v177
  %v179 = vmul.f32 %v174, %v178
  %vm180 = vweird.f32 %v130
  %vm181 = vweird.f32 %v174
  %vm182 = vmor %vm180, %vm181
  %v183 = vsel %vm182, %v174, %v179
  %v184 = vrsqrt.pop %v131
  %v185 = vmul.f32 %v184, %v131
  %v186 = vmul.f32 %v185, %v184
  %v187 = vmul.f32 0.5, %v186
  %v188 = vsub.f32 1.5, %v187
  %v189 = vmul.f32 %v184, %v188
  %vm190 = vweird.f32 %v131
  %vm191 = vweird.f32 %v184
  %vm192 = vmor %vm190, %vm191
  %v193 = vsel %vm192, %v184, %v189
  %v194 = vrsqrt.pop %v132
  %v195 = vmul.f32 %v194, %v132
  %v196 = vmul.f32 %v195, %v194
  %v197 = vmul.f32 0.5, %v196
  %v198 = vsub.f32 1.5, %v197
  %v199 = vmul.f32 %v194, %v198
  %vm200 = vweird.f32 %v132
  %vm201 = vweird.f32 %v194
  %vm202 = vmor %vm200, %vm201
  %v203 = vsel %vm202, %v194, %v199
  %v204 = vrsqrt.pop %v133
  %v205 = vmul.f32 %v204, %v133
  %v206 = vmul.f32 %v205, %v204
  %v207 = vmul.f32 0.5, %v206
  %v208 = vsub.f32 1.5, %v207
  %v209 = vmul.f32 %v204, %v208
  %vm210 = vweird.f32 %v133
  %vm211 = vweird.f32 %v204
  %vm212 = vmor %vm210, %vm211
  %v213 = vsel %vm212, %v204, %v209
  %v214 = vmul.f32 %v78, %v143
  %v215 = vmul.f32 %v79, %v153
  %v216 = vmul.f32 %v80, %v163
  %v217 = vmul.f32 %v81, %v173
  %v218 = vmul.f32 %v82, %v183
  %v219 = vmul.f32 %v83, %v193
  %v220 = vmul.f32 %v84, %v203
  %v221 = vmul.f32 %v85, %v213
  %v222 = vld [vmem:[%s2] sm:$0x1]
  %v224 = vperm.slane %v222, 0
  %v226 = vmul.f32 %v214, %v224
  %v227 = vmul.f32 %v215, %v224
  %v228 = vmul.f32 %v216, %v224
  %v229 = vmul.f32 %v217, %v224
  %v230 = vmul.f32 %v218, %v224
  %v231 = vmul.f32 %v219, %v224
  %v232 = vmul.f32 %v220, %v224
  %v233 = vmul.f32 %v221, %v224
  %v234 = vld [vmem:[%s3] sm:$0x1]
  %v236 = vperm.slane %v234, 0
  %v238 = vadd.f32 %v226, %v236
  %v239 = vadd.f32 %v227, %v236
  %v240 = vadd.f32 %v228, %v236
  %v241 = vadd.f32 %v229, %v236
  %v242 = vadd.f32 %v230, %v236
  %v243 = vadd.f32 %v231, %v236
  %v244 = vadd.f32 %v232, %v236
  %v245 = vadd.f32 %v233, %v236
  %v246 = vpack.c.bf16 %v239, %v238
  %v247 = vpack.c.bf16 %v241, %v240
  %v248 = vpack.c.bf16 %v243, %v242
  %v249 = vpack.c.bf16 %v245, %v244
  %v250 = vld [vmem:[%s4] sm:$0xf]
  %v251 = vld [vmem:[%s4 + $0x4] sm:$0xf]
  %v252 = vld [vmem:[%s5] sm:$0x1]
  %v254 = vperm.slane %v252, 0
  %v258 = vunpack.c.l.b16 %v250
  %v259 = vunpack.c.l.b16 %v251
  %v260 = vpack.c.b16 %v259, %v258
  %v263 = vsel %vm38, %v246, 0
  %v266 = vsel %vm38, %v247, 0
  %v269 = vsel %vm38, %v248, 0
  %v272 = vsel %vm38, %v249, 0
  %274 = vmatpush.bf16.msra.mxu0 0
  %275 = vmatpush.bf16.msra.mxu0 0
  %276 = vmatpush.bf16.msra.mxu0 0
  %277 = vmatpush.bf16.msra.mxu0 0
  %278 = vmatpush.bf16.msra.mxu0 0
  %279 = vmatpush.bf16.msra.mxu0 0
  %280 = vmatpush.bf16.msra.mxu0 0
  %281 = vmatpush.bf16.msra.mxu0 %v260
  %282 = vmatmul.bf16.gmra.mxu0 %v263
  %v283 = vpop.f32.mrf.mxu0
  %v284 = vadd.f32 %v254, %v283
  %v285 = vpop.f32.mrf.mxu0
  %v286 = vadd.f32 %v254, %v285
  %287 = vmatmul.bf16.gmra.mxu0 %v266
  %v288 = vpop.f32.mrf.mxu0
  %v289 = vadd.f32 %v254, %v288
  %v290 = vpop.f32.mrf.mxu0
  %v291 = vadd.f32 %v254, %v290
  %292 = vmatmul.bf16.gmra.mxu0 %v269
  %v293 = vpop.f32.mrf.mxu0
  %v294 = vadd.f32 %v254, %v293
  %v295 = vpop.f32.mrf.mxu0
  %v296 = vadd.f32 %v254, %v295
  %297 = vmatmul.bf16.gmra.mxu0 %v272
  %v298 = vpop.f32.mrf.mxu0
  %v299 = vadd.f32 %v254, %v298
  %v300 = vpop.f32.mrf.mxu0
  %v301 = vadd.f32 %v254, %v300
  %302 = vdwg.mxu0
  %v303 = vmax.f32 %v284, 0.0
  %v304 = vmax.f32 %v286, 0.0
  %v305 = vmax.f32 %v289, 0.0
  %v306 = vmax.f32 %v291, 0.0
  %v307 = vmax.f32 %v294, 0.0
  %v308 = vmax.f32 %v296, 0.0
  %v309 = vmax.f32 %v299, 0.0
  %v310 = vmax.f32 %v301, 0.0
  %v311 = vpack.c.bf16 %v304, %v303
  %v312 = vpack.c.bf16 %v306, %v305
  %v313 = vpack.c.bf16 %v308, %v307
  %v314 = vpack.c.bf16 %v310, %v309
  %v315 = vld [vmem:[%s6] sm:$0xf]
  %v316 = vld [vmem:[%s6 + $0x4] sm:$0xf]
  %v317 = vld [vmem:[%s6 + $0x8] sm:$0xf]
  %v318 = vld [vmem:[%s6 + $0xc] sm:$0xf]
  %v319 = vld [vmem:[%s7] sm:$0x1]
  %v321 = vperm.slane %v319, 0
  %v327 = vunpack.c.l.b16 %v315
  %v328 = vunpack.c.l.b16 %v316
  %v329 = vunpack.c.l.b16 %v317
  %v330 = vunpack.c.l.b16 %v318
  %v331 = vpack.c.b16 %v328, %v327
  %v332 = vpack.c.b16 %v330, %v329
  %vm335 = vcmask 261120
  %v337 = vsel %vm335, %v311, 0
  %v340 = vsel %vm335, %v312, 0
  %v343 = vsel %vm335, %v313, 0
  %v346 = vsel %vm335, %v314, 0
  %348 = vmatpush.bf16.msra.mxu0 0
  %349 = vmatpush.bf16.msra.mxu0 0
  %350 = vmatpush.bf16.msra.mxu0 0
  %351 = vmatpush.bf16.msra.mxu0 0
  %352 = vmatpush.bf16.msra.mxu0 0
  %353 = vmatpush.bf16.msra.mxu0 0
  %354 = vmatpush.bf16.msra.mxu0 %v332
  %355 = vmatpush.bf16.msra.mxu0 %v331
  %356 = vmatmul.bf16.gmra.mxu0 %v337
  %v357 = vpop.f32.mrf.mxu0
  %v358 = vadd.f32 %v321, %v357
  %v359 = vpop.f32.mrf.mxu0
  %v360 = vadd.f32 %v321, %v359
  %361 = vmatmul.bf16.gmra.mxu0 %v340
  %v362 = vpop.f32.mrf.mxu0
  %v363 = vadd.f32 %v321, %v362
  %v364 = vpop.f32.mrf.mxu0
  %v365 = vadd.f32 %v321, %v364
  %366 = vmatmul.bf16.gmra.mxu0 %v343
  %v367 = vpop.f32.mrf.mxu0
  %v368 = vadd.f32 %v321, %v367
  %v369 = vpop.f32.mrf.mxu0
  %v370 = vadd.f32 %v321, %v369
  %371 = vmatmul.bf16.gmra.mxu0 %v346
  %v372 = vpop.f32.mrf.mxu0
  %v373 = vadd.f32 %v321, %v372
  %v374 = vpop.f32.mrf.mxu0
  %v375 = vadd.f32 %v321, %v374
  %376 = vdwg.mxu0
  %v377 = vld [vmem:[%s1] sm:$0xff]
  %v378 = vld [vmem:[%s1 + $0x8] sm:$0xff]
  %v379 = vld [vmem:[%s1 + $0x10] sm:$0xff]
  %v380 = vld [vmem:[%s1 + $0x18] sm:$0xff]
  %v381 = vld [vmem:[%s1 + $0x20] sm:$0xff]
  %v382 = vld [vmem:[%s1 + $0x28] sm:$0xff]
  %v383 = vld [vmem:[%s1 + $0x30] sm:$0xff]
  %v384 = vld [vmem:[%s1 + $0x38] sm:$0xff]
  %386 = vset.pattern.permute.xlu0 0
  %387 = vperm.xlu0 %386, %v377
  %v388 = vpop.permute.xlu0 %387
  %391 = vset.pattern.permute.xlu0 0
  %392 = vperm.xlu0 %391, %v378
  %v393 = vpop.permute.xlu0 %392
  %396 = vset.pattern.permute.xlu0 0
  %397 = vperm.xlu0 %396, %v379
  %v398 = vpop.permute.xlu0 %397
  %401 = vset.pattern.permute.xlu0 0
  %402 = vperm.xlu0 %401, %v380
  %v403 = vpop.permute.xlu0 %402
  %406 = vset.pattern.permute.xlu0 0
  %407 = vperm.xlu0 %406, %v381
  %v408 = vpop.permute.xlu0 %407
  %411 = vset.pattern.permute.xlu0 0
  %412 = vperm.xlu0 %411, %v382
  %v413 = vpop.permute.xlu0 %412
  %416 = vset.pattern.permute.xlu0 0
  %417 = vperm.xlu0 %416, %v383
  %v418 = vpop.permute.xlu0 %417
  %421 = vset.pattern.permute.xlu0 0
  %422 = vperm.xlu0 %421, %v384
  %v423 = vpop.permute.xlu0 %422
  %v425 = vmul.f32 %v358, %v388
  %v426 = vmul.f32 %v360, %v393
  %v427 = vmul.f32 %v363, %v398
  %v428 = vmul.f32 %v365, %v403
  %v429 = vmul.f32 %v368, %v408
  %v430 = vmul.f32 %v370, %v413
  %v431 = vmul.f32 %v373, %v418
  %v432 = vmul.f32 %v375, %v423
  %433 = vst.msk [vmem:[%s8] sm:$0xff] %vm38, %v425
  %434 = vst.msk [vmem:[%s8 + $0x8] sm:$0xff] %vm38, %v426
  %435 = vst.msk [vmem:[%s8 + $0x10] sm:$0xff] %vm38, %v427
  %436 = vst.msk [vmem:[%s8 + $0x18] sm:$0xff] %vm38, %v428
  %437 = vst.msk [vmem:[%s8 + $0x20] sm:$0xff] %vm38, %v429
  %438 = vst.msk [vmem:[%s8 + $0x28] sm:$0xff] %vm38, %v430
  %439 = vst.msk [vmem:[%s8 + $0x30] sm:$0xff] %vm38, %v431
  %440 = vst.msk [vmem:[%s8 + $0x38] sm:$0xff] %vm38, %v432
  // Predicated region
  $region34: #{_lambda_.49} parent=0 // pred_check
    _
  $region35: #{_lambda_.49} parent=0 // pred_check_branch
    %442 = sbr.rel (0) target = $region37
  $region36: #{_lambda_.49} parent=0 // pred_region
    _
  $region37: #{_lambda_.49} parent=0 // pred_fallthru
    _
  // Predicated region
  $region38: #{_lambda_.49} parent=0 // pred_check
    _
  $region39: #{_lambda_.49} parent=0 // pred_check_branch
    %444 = sbr.rel (0) target = $region41
  $region40: #{_lambda_.49} parent=0 // pred_region
    _
  $region41: #{_lambda_.49} parent=0 // pred_fallthru
    _

</llo_original>
